<compile_context>
chip_gen: v7x
topology: tpu7x:2x2x1
jax: 0.10.0
libtpu: 0.0.40
codegen_flags: <defaults>
</compile_context>

<pallas_src>
import math

import jax
import jax.numpy as jnp
from jax.experimental import pallas as pl
from jax.experimental.pallas import tpu as pltpu

# ----------------------------- configuration --------------------------------
NUM_SLOTS = 4
SLOT_DIM = 32
IM_SHAPE = (8, 8)              # != (16,16) -> "else" branch of the module
PROJ_DIM = 32
QUERY_DIM = 48                 # divisible by n_heads = 12
N_LAYERS = 2
N_HEADS = 12
HEAD_DIM = QUERY_DIM // N_HEADS
D_FF = QUERY_DIM * 2
FIN_MLP_HID = QUERY_DIM        # else-branch
OUT_CHANNELS = 3               # else-branch
QUERY_MULT = 2                 # else-branch
NUM_OCTAVES = 8
POS_DIM = 2 + 2 * 2 * NUM_OCTAVES   # raw (y,x) + sin/cos per octave per coord
N_PIX = IM_SHAPE[0] * IM_SHAPE[1]

_HI = jax.lax.Precision.HIGHEST     # reference / wrapper precision only

# ----- packed bias slab layout (each row padded to BIAS_W lanes) -----
BIAS_W = PROJ_DIM * 4              # 128 (widest bias)
ROW_IM1B = 0
ROW_IM2B = 1
ROW_LAYER0 = 2
R_ALN_G, R_ALN_B, R_AO_B, R_FLN_G, R_FLN_B, R_FF1_B, R_FF2_B = range(7)
ROWS_PER_LAYER = 7
ROW_OM1B = ROW_LAYER0 + ROWS_PER_LAYER * N_LAYERS
ROW_OM2B = ROW_OM1B + 1
N_BIAS_ROWS = ROW_OM2B + 1         # 18


# ------------------------- positional encoding glue --------------------------
def compute_grid_indices(im_shape):
    h, w = im_shape
    ys = jnp.linspace(0.0, 1.0, h)
    xs = jnp.linspace(0.0, 1.0, w)
    gy, gx = jnp.meshgrid(ys, xs, indexing="ij")
    return jnp.stack([gy, gx], axis=-1).reshape(1, h * w, 2).astype(jnp.float32)


def positional_encoding(coords, num_octaves=NUM_OCTAVES):
    # TODO(synk): PositionalEncoding is not defined in the reference file; we use a
    # deterministic NeRF-style sinusoidal encoding, which fixes enc_coords.shape[2].
    octaves = 2.0 ** jnp.arange(num_octaves, dtype=jnp.float32)
    scaled = coords[..., None] * octaves * jnp.pi          # (1, N, 2, K)
    sin = jnp.sin(scaled)
    cos = jnp.cos(scaled)
    feats = jnp.concatenate([sin, cos], axis=-1).reshape(coords.shape[0], coords.shape[1], -1)
    return jnp.concatenate([coords, feats], axis=-1)        # (1, N, POS_DIM)


# ------------------------------ kernel helpers --------------------------------
def _gelu(x):
    # tanh-approximate GELU  # TODO(synk): torch.nn.GELU defaults to the exact erf form
    c = math.sqrt(2.0 / math.pi)
    return 0.5 * x * (1.0 + jnp.tanh(c * (x + 0.044715 * x * x * x)))


def _layernorm(x, g, b, eps=1e-5):
    mu = jnp.mean(x, axis=-1, keepdims=True)
    var = jnp.mean((x - mu) ** 2, axis=-1, keepdims=True)
    return (x - mu) * jax.lax.rsqrt(var + eps) * g + b


def _mm(a, b):
    # (M,K) @ (K,N) on the MXU, single-pass bf16 inputs, f32 accumulate.
    return jax.lax.dot_general(
        a.astype(jnp.bfloat16), b.astype(jnp.bfloat16),
        (((a.ndim - 1,), (0,)), ((), ())),
        preferred_element_type=jnp.float32)


def _mm_t(a, b):
    # (M,K) x (N,K) -> (M,N): contract last dim of both (rhs transposed).
    return jax.lax.dot_general(
        a.astype(jnp.bfloat16), b.astype(jnp.bfloat16),
        (((1,), (1,)), ((), ())),
        preferred_element_type=jnp.float32)


# ------------------------------- decoder kernel --------------------------------
def decoder_kernel(zh_ref, q_ref,
                   im1w, im2w, aq_w, akv_w, ao_w, ff1_w, ff2_w,
                   om1w, om2w, om3w_t, om3b,
                   sel_ref, maskkv_ref, gmask_ref, bias_ref,
                   out_ref):
    bt = zh_ref.shape[0]                         # images per grid step (static)
    qs = q_ref[...]                              # (N_PIX, 48) precomputed queries
    x = jnp.concatenate([qs] * bt, axis=0)       # (M, 48), rows ordered [image, pixel]

    def brow(r, w):                              # static (1, w) slice of packed bias slab
        return bias_ref[r:r + 1, :w]

    sel = sel_ref[...]                           # (48, S)   score-col -> slot selector
    maskkv = maskkv_ref[...]                     # (48, 96)  per-head block mask for [K|V]
    gmask = gmask_ref[...]                       # (48, 48)  head-group indicator

    # ---- init_mlp per image in the tile (slot side is tiny; unrolled) ----
    hs = []
    for b in range(bt):
        z = zh_ref[b]                                                        # (S, slot_dim)
        hb = _mm(_gelu(_mm(z, im1w[...]) + brow(ROW_IM1B, PROJ_DIM * 4)), im2w[...]) \
             + brow(ROW_IM2B, PROJ_DIM)                                      # (S, proj)
        hs.append(hb)

    for l in range(N_LAYERS):
        base = ROW_LAYER0 + ROWS_PER_LAYER * l

        # ---- pre-norm multi-head cross-attention (queries attend to slots), heads fused ----
        xn = _layernorm(x, brow(base + R_ALN_G, QUERY_DIM), brow(base + R_ALN_B, QUERY_DIM))
        q = _mm(xn, aq_w[l])                         # (M, 48); 1/sqrt(dh) folded into aq_w

        s_parts, vbs = [], []
        for b in range(bt):
            kv = _mm(hs[b], akv_w[l])                # (S, 96): fused K|V projection
            kvb = _mm(sel, kv) * maskkv              # (48, 96): block key|value matrices
            vbs.append(kvb[:, QUERY_DIM:])           # (48, 48)
            qb = q[b * N_PIX:(b + 1) * N_PIX, :]
            s_parts.append(_mm_t(qb, kvb[:, :QUERY_DIM]))   # (N_PIX, 48): all-head scores
        s = jnp.concatenate(s_parts, axis=0)         # (M, 48)
        s = s - jnp.max(s, axis=-1, keepdims=True)   # shared shift: per-head softmax exact
        e = jnp.exp(s)
        denom = _mm(e, gmask)                        # per-head denominators, expanded to 48
        # clamp: a fully-underflowed head yields 0 instead of 0*inf = NaN
        a = e * pl.reciprocal(jnp.maximum(denom, 1e-30), approx=True)
        o_parts = [_mm(a[b * N_PIX:(b + 1) * N_PIX, :], vbs[b]) for b in range(bt)]
        o = jnp.concatenate(o_parts, axis=0)         # (M, 48): concat of head outputs
        x = x + _mm(o, ao_w[l]) + brow(base + R_AO_B, QUERY_DIM)

        # ---- pre-norm feed-forward ----
        xn = _layernorm(x, brow(base + R_FLN_G, QUERY_DIM), brow(base + R_FLN_B, QUERY_DIM))
        x = x + _mm(_gelu(_mm(xn, ff1_w[l]) + brow(base + R_FF1_B, D_FF)), ff2_w[l]) \
              + brow(base + R_FF2_B, QUERY_DIM)

    # ---- output_mlp (im_shape != (16,16): Linear-GELU-Linear-GELU-Linear) ----
    y = _gelu(_mm(x, om1w[...]) + brow(ROW_OM1B, FIN_MLP_HID))
    y = _gelu(_mm(y, om2w[...]) + brow(ROW_OM2B, FIN_MLP_HID))
    # final projection emitted transposed -> lane-dense (out_channels, B_TILE*N_PIX) store
    out_ref[...] = _mm_t(om3w_t[...], y) + om3b[...]


# ------------------------------ parameter packing -------------------------------
def pack_params(p):
    def row(vec):
        v = vec.reshape(-1).astype(jnp.float32)
        return jnp.zeros((1, BIAS_W), jnp.float32).at[0, :v.shape[0]].set(v)

    rows = [row(p["im1b"]), row(p["im2b"])]
    for l in range(N_LAYERS):
        rows += [row(p["aln_g"][l]), row(p["aln_b"][l]), row(p["ao_b"][l]),
                 row(p["fln_g"][l]), row(p["fln_b"][l]),
                 row(p["ff1_b"][l]), row(p["ff2_b"][l])]
    rows += [row(p["om1b"]), row(p["om2b"])]
    bias_slab = jnp.concatenate(rows, axis=0)                  # (N_BIAS_ROWS, 128)
    assert bias_slab.shape == (N_BIAS_ROWS, BIAS_W)

    aq_w_scaled = p["aq_w"] * (1.0 / math.sqrt(HEAD_DIM))      # fold softmax scale
    akv_w = jnp.concatenate([p["ak_w"], p["av_w"]], axis=-1)   # (L, proj, 2*qd): fused K|V
    om3b_col = p["om3b"].reshape(OUT_CHANNELS, 1)
    om3w_t = jnp.transpose(p["om3w"])                          # (C, hid)

    weights = (p["im1w"], p["im2w"], aq_w_scaled, akv_w, p["ao_w"],
               p["ff1_w"], p["ff2_w"], p["om1w"], p["om2w"], om3w_t)
    return bias_slab, om3b_col, weights


def build_attention_masks():
    # Precomputed on host (was broadcasted_iota in-kernel before).
    c = jnp.arange(N_HEADS * NUM_SLOTS)
    i = jnp.arange(QUERY_DIM)
    maskf = (c[:, None] // NUM_SLOTS == i[None, :] // HEAD_DIM).astype(jnp.float32)      # (48,48)
    maskkv = jnp.concatenate([maskf, maskf], axis=1)                                      # (48,96)
    gmask = (c[:, None] // NUM_SLOTS == c[None, :] // NUM_SLOTS).astype(jnp.float32)      # (48,48)
    sel = (c[:, None] % NUM_SLOTS == jnp.arange(NUM_SLOTS)[None, :]).astype(jnp.float32)  # (48,S)
    return sel, maskkv, gmask


def _pick_b_tile(bs):
    # Largest tile whose stacked M = b_tile*N_PIX best fills the MXU (M<=256) while keeping
    # >= 2 grid steps so both v7x TensorCores get work on the "parallel" grid axis.
    for bt in (4, 2, 1):
        if bs % bt == 0 and bs // bt >= 2:
            return bt
    return 1


# --------------------------------- wrapper -------------------------------------
def transformer_decoder_forward(zh, params, enc_coords, b_tile=None):
    if zh.ndim == 1:
        zh = zh.reshape(1, NUM_SLOTS, SLOT_DIM)
    bs = zh.shape[0]
    if b_tile is None:
        b_tile = _pick_b_tile(bs)
    assert bs % b_tile == 0
    n_steps = bs // b_tile
    m_rows = b_tile * N_PIX

    # ---- batch-invariant query MLP: two tiny matmuls, done once in plain XLA ----
    coords2d = enc_coords.reshape(N_PIX, POS_DIM).astype(jnp.float32)
    hq = _gelu(jnp.dot(coords2d, params["qm1w"], precision=_HI) + params["qm1b"])
    queries = jnp.dot(hq, params["qm2w"], precision=_HI) + params["qm2b"]      # (N_PIX, 48)

    bias_slab, om3b_col, weights = pack_params(params)
    sel, maskkv, gmask = build_attention_masks()

    def _const_spec(shape):
        nd = len(shape)
        return pl.BlockSpec(shape, lambda b, _nd=nd: (0,) * _nd)

    in_specs = (
        [pl.BlockSpec((b_tile, NUM_SLOTS, SLOT_DIM), lambda b: (b, 0, 0)),     # zh tile
         _const_spec(queries.shape)]                                           # queries
        + [_const_spec(w.shape) for w in weights]
        + [_const_spec(om3b_col.shape),
           _const_spec(sel.shape), _const_spec(maskkv.shape), _const_spec(gmask.shape),
           _const_spec(bias_slab.shape)]
    )

    # advisory cost estimate
    mmf = lambda m, k, n: 2 * m * k * n
    slot_mlp = mmf(NUM_SLOTS, SLOT_DIM, PROJ_DIM * 4) + mmf(NUM_SLOTS, PROJ_DIM * 4, PROJ_DIM)
    per_layer = (3 * mmf(m_rows, QUERY_DIM, QUERY_DIM)          # q proj, denom, out proj
                 + mmf(m_rows, QUERY_DIM, D_FF) + mmf(m_rows, D_FF, QUERY_DIM)
                 + b_tile * (mmf(NUM_SLOTS, PROJ_DIM, 2 * QUERY_DIM)
                             + mmf(N_HEADS * NUM_SLOTS, NUM_SLOTS, 2 * QUERY_DIM)
                             + 2 * mmf(N_PIX, QUERY_DIM, QUERY_DIM)))
    per_step = (b_tile * slot_mlp + N_LAYERS * per_layer
                + 2 * mmf(m_rows, QUERY_DIM, FIN_MLP_HID)
                + mmf(OUT_CHANNELS, FIN_MLP_HID, m_rows))
    n_bytes = 4 * (zh.size + queries.size + bias_slab.size + om3b_col.size
                   + sel.size + maskkv.size + gmask.size
                   + sum(int(w.size) for w in weights) + bs * OUT_CHANNELS * N_PIX)
    cost = pl.CostEstimate(
        flops=int(n_steps * per_step),
        transcendentals=int(n_steps * (N_LAYERS * m_rows * (QUERY_DIM + D_FF)
                                       + 2 * m_rows * FIN_MLP_HID
                                       + b_tile * NUM_SLOTS * PROJ_DIM * 4)),
        bytes_accessed=int(n_bytes))

    out = pl.pallas_call(
        decoder_kernel,
        out_shape=jax.ShapeDtypeStruct((n_steps, OUT_CHANNELS, m_rows), jnp.float32),
        grid=(n_steps,),
        in_specs=in_specs,
        out_specs=pl.BlockSpec((None, OUT_CHANNELS, m_rows), lambda b: (b, 0, 0)),
        compiler_params=pltpu.CompilerParams(dimension_semantics=("parallel",)),
        cost_estimate=cost,
    )(zh, queries, *weights, om3b_col, sel, maskkv, gmask, bias_slab)

    # (steps, C, B_TILE*N_PIX) -> NCHW: split the lane axis back into (image-in-tile, pixel).
    out = out.reshape(n_steps, OUT_CHANNELS, b_tile, N_PIX)
    out = jnp.transpose(out, (0, 2, 1, 3))
    return out.reshape(bs, OUT_CHANNELS, IM_SHAPE[0], IM_SHAPE[1])


# ------------------------- deterministic parameter init ------------------------
def init_params(key):
    def lin(k, fan_in, fan_out):
        k1, k2 = jax.random.split(k)
        s = 1.0 / math.sqrt(fan_in)
        w = jax.random.uniform(k1, (fan_in, fan_out), jnp.float32, -s, s)
        b = jax.random.uniform(k2, (1, fan_out), jnp.float32, -s, s)
        return w, b

    ks = iter(jax.random.split(key, 64))
    p = {}
    p["im1w"], p["im1b"] = lin(next(ks), SLOT_DIM, PROJ_DIM * 4)
    p["im2w"], p["im2b"] = lin(next(ks), PROJ_DIM * 4, PROJ_DIM)
    p["qm1w"], p["qm1b"] = lin(next(ks), POS_DIM, QUERY_DIM * QUERY_MULT)
    p["qm2w"], p["qm2b"] = lin(next(ks), QUERY_DIM * QUERY_MULT, QUERY_DIM)

    aq, ak, av, ao, aob, f1w, f1b, f2w, f2b = ([] for _ in range(9))
    for _ in range(N_LAYERS):
        w, _ = lin(next(ks), QUERY_DIM, QUERY_DIM); aq.append(w)
        w, _ = lin(next(ks), PROJ_DIM, QUERY_DIM); ak.append(w)
        w, _ = lin(next(ks), PROJ_DIM, QUERY_DIM); av.append(w)
        w, b = lin(next(ks), QUERY_DIM, QUERY_DIM); ao.append(w); aob.append(b)
        w, b = lin(next(ks), QUERY_DIM, D_FF); f1w.append(w); f1b.append(b)
        w, b = lin(next(ks), D_FF, QUERY_DIM); f2w.append(w); f2b.append(b)
    p["aq_w"], p["ak_w"], p["av_w"] = jnp.stack(aq), jnp.stack(ak), jnp.stack(av)
    p["ao_w"], p["ao_b"] = jnp.stack(ao), jnp.stack(aob)
    p["ff1_w"], p["ff1_b"] = jnp.stack(f1w), jnp.stack(f1b)
    p["ff2_w"], p["ff2_b"] = jnp.stack(f2w), jnp.stack(f2b)
    p["aln_g"] = jnp.ones((N_LAYERS, 1, QUERY_DIM), jnp.float32)
    p["aln_b"] = jnp.zeros((N_LAYERS, 1, QUERY_DIM), jnp.float32)
    p["fln_g"] = jnp.ones((N_LAYERS, 1, QUERY_DIM), jnp.float32)
    p["fln_b"] = jnp.zeros((N_LAYERS, 1, QUERY_DIM), jnp.float32)

    p["om1w"], p["om1b"] = lin(next(ks), QUERY_DIM, FIN_MLP_HID)
    p["om2w"], p["om2b"] = lin(next(ks), FIN_MLP_HID, FIN_MLP_HID)
    p["om3w"], p["om3b"] = lin(next(ks), FIN_MLP_HID, OUT_CHANNELS)
    return p


# ----------------------------- pure-JAX reference ------------------------------
def reference_forward(zh, p, enc_coords):
    if zh.ndim == 1:
        zh = zh.reshape(1, NUM_SLOTS, SLOT_DIM)
    bs = zh.shape[0]
    dot = lambda a, b: jnp.dot(a, b, precision=_HI)

    hz = dot(_gelu(dot(zh, p["im1w"]) + p["im1b"]), p["im2w"]) + p["im2b"]     # (b,S,proj)
    x = dot(_gelu(dot(enc_coords, p["qm1w"]) + p["qm1b"]), p["qm2w"]) + p["qm2b"]
    x = jnp.broadcast_to(x, (bs,) + x.shape[1:])                               # (b,N,qd)

    scale = 1.0 / math.sqrt(HEAD_DIM)
    for l in range(N_LAYERS):
        xn = _layernorm(x, p["aln_g"][l], p["aln_b"][l])
        q = dot(xn, p["aq_w"][l]); k = dot(hz, p["ak_w"][l]); v = dot(hz, p["av_w"][l])
        attn = jnp.zeros_like(x)
        for hd in range(N_HEADS):
            sl = slice(hd * HEAD_DIM, (hd + 1) * HEAD_DIM)
            s = jnp.einsum("bnd,bsd->bns", q[..., sl] * scale, k[..., sl], precision=_HI)
            a = jax.nn.softmax(s, axis=-1)
            o = jnp.einsum("bns,bsd->bnd", a, v[..., sl], precision=_HI)
            attn = attn + dot(o, p["ao_w"][l][sl, :])
        x = x + attn + p["ao_b"][l]
        xn = _layernorm(x, p["fln_g"][l], p["fln_b"][l])
        x = x + dot(_gelu(dot(xn, p["ff1_w"][l]) + p["ff1_b"][l]), p["ff2_w"][l]) + p["ff2_b"][l]

    y = _gelu(dot(x, p["om1w"]) + p["om1b"])
    y = _gelu(dot(y, p["om2w"]) + p["om2b"])
    y = dot(y, p["om3w"]) + p["om3b"]
    y = y.reshape(bs, IM_SHAPE[0], IM_SHAPE[1], OUT_CHANNELS)
    return jnp.transpose(y, (0, 3, 1, 2))


# ----------------------------------- main --------------------------------------
if __name__ == "__main__":
    key = jax.random.PRNGKey(0)
    k_params, k_zh = jax.random.split(key)

    params = init_params(k_params)
    enc_coords = positional_encoding(compute_grid_indices(IM_SHAPE))           # (1, 64, 34)
    zh = jax.random.normal(k_zh, (8, NUM_SLOTS, SLOT_DIM), dtype=jnp.float32)  # (8, 4, 32)

    # Full path: B_TILE=4 (M=256 stacked rows per step), 2 parallel grid steps.
    out = jax.block_until_ready(transformer_decoder_forward(zh, params, enc_coords))
    assert out.shape == (8, OUT_CHANNELS, IM_SHAPE[0], IM_SHAPE[1]), out.shape
    assert bool(jnp.all(jnp.isfinite(out)))

    # Reference runs at f32 HIGHEST precision; the kernel uses the single-pass bf16 MXU
    # path + approx reciprocal, so the comparison tolerance is loosened accordingly.
    ref = reference_forward(zh, params, enc_coords)
    assert jnp.allclose(out, ref, atol=5e-2, rtol=5e-2), float(jnp.max(jnp.abs(out - ref)))

    # Small-batch path: B_TILE=1 keeps 2 parallel grid steps.
    out2 = jax.block_until_ready(transformer_decoder_forward(zh[:2], params, enc_coords))
    assert out2.shape == (2, OUT_CHANNELS, IM_SHAPE[0], IM_SHAPE[1])
    assert jnp.allclose(out2, ref[:2], atol=5e-2, rtol=5e-2), \
        float(jnp.max(jnp.abs(out2 - ref[:2])))

    # 1-D input path (module's zh.view(1, num_slots, slot_dim) branch), grid=(1,).
    out1 = jax.block_until_ready(
        transformer_decoder_forward(zh[0].reshape(-1), params, enc_coords))
    ref1 = reference_forward(zh[0].reshape(-1), params, enc_coords)
    assert jnp.allclose(out1, ref1, atol=5e-2, rtol=5e-2), \
        float(jnp.max(jnp.abs(out1 - ref1)))

    print("KERNEL_OK")
</pallas_src>

<mosaic_0001>
module attributes {stable_mosaic.version = 11 : i64} {
  func.func @decoder_kernel(%arg0: i32, %arg1: memref<4x4x32xf32, #tpu.memory_space<vmem>>, %arg2: memref<64x48xf32, #tpu.memory_space<vmem>>, %arg3: memref<32x128xf32, #tpu.memory_space<vmem>>, %arg4: memref<128x32xf32, #tpu.memory_space<vmem>>, %arg5: memref<2x48x48xf32, #tpu.memory_space<vmem>>, %arg6: memref<2x32x96xf32, #tpu.memory_space<vmem>>, %arg7: memref<2x48x48xf32, #tpu.memory_space<vmem>>, %arg8: memref<2x48x96xf32, #tpu.memory_space<vmem>>, %arg9: memref<2x96x48xf32, #tpu.memory_space<vmem>>, %arg10: memref<48x48xf32, #tpu.memory_space<vmem>>, %arg11: memref<48x48xf32, #tpu.memory_space<vmem>>, %arg12: memref<3x48xf32, #tpu.memory_space<vmem>>, %arg13: memref<3x1xf32, #tpu.memory_space<vmem>>, %arg14: memref<48x4xf32, #tpu.memory_space<vmem>>, %arg15: memref<48x96xf32, #tpu.memory_space<vmem>>, %arg16: memref<48x48xf32, #tpu.memory_space<vmem>>, %arg17: memref<18x128xf32, #tpu.memory_space<vmem>>, %arg18: memref<1x3x256xf32, #tpu.memory_space<vmem>>) attributes {dimension_semantics = [#tpu.dimension_semantics<parallel>], iteration_bounds = array<i64: 2>, scalar_prefetch = 0 : i64, scratch_operands = 0 : i64, tpu.core_type = #tpu.core_type<tc>, window_params = [{transform_indices = @transform_0, window_bounds = array<i64: 4, 4, 32>}, {pipeline_mode = #tpu.pipeline_mode<synchronous>, transform_indices = @transform_1, window_bounds = array<i64: 64, 48>}, {pipeline_mode = #tpu.pipeline_mode<synchronous>, transform_indices = @transform_2, window_bounds = array<i64: 32, 128>}, {pipeline_mode = #tpu.pipeline_mode<synchronous>, transform_indices = @transform_3, window_bounds = array<i64: 128, 32>}, {pipeline_mode = #tpu.pipeline_mode<synchronous>, transform_indices = @transform_4, window_bounds = array<i64: 2, 48, 48>}, {pipeline_mode = #tpu.pipeline_mode<synchronous>, transform_indices = @transform_5, window_bounds = array<i64: 2, 32, 96>}, {pipeline_mode = #tpu.pipeline_mode<synchronous>, transform_indices = @transform_6, window_bounds = array<i64: 2, 48, 48>}, {pipeline_mode = #tpu.pipeline_mode<synchronous>, transform_indices = @transform_7, window_bounds = array<i64: 2, 48, 96>}, {pipeline_mode = #tpu.pipeline_mode<synchronous>, transform_indices = @transform_8, window_bounds = array<i64: 2, 96, 48>}, {pipeline_mode = #tpu.pipeline_mode<synchronous>, transform_indices = @transform_9, window_bounds = array<i64: 48, 48>}, {pipeline_mode = #tpu.pipeline_mode<synchronous>, transform_indices = @transform_10, window_bounds = array<i64: 48, 48>}, {pipeline_mode = #tpu.pipeline_mode<synchronous>, transform_indices = @transform_11, window_bounds = array<i64: 3, 48>}, {pipeline_mode = #tpu.pipeline_mode<synchronous>, transform_indices = @transform_12, window_bounds = array<i64: 3, 1>}, {pipeline_mode = #tpu.pipeline_mode<synchronous>, transform_indices = @transform_13, window_bounds = array<i64: 48, 4>}, {pipeline_mode = #tpu.pipeline_mode<synchronous>, transform_indices = @transform_14, window_bounds = array<i64: 48, 96>}, {pipeline_mode = #tpu.pipeline_mode<synchronous>, transform_indices = @transform_15, window_bounds = array<i64: 48, 48>}, {pipeline_mode = #tpu.pipeline_mode<synchronous>, transform_indices = @transform_16, window_bounds = array<i64: 18, 128>}, {transform_indices = @transform_17, window_bounds = array<i64: 1, 3, 256>}]} {
    %c0 = arith.constant 0 : index
    %c0_0 = arith.constant 0 : index
    %0 = vector.load %arg2[%c0, %c0_0] : memref<64x48xf32, #tpu.memory_space<vmem>>, vector<64x48xf32>
    %1 = tpu.concatenate %0, %0, %0, %0 in 0 : vector<64x48xf32>, vector<64x48xf32>, vector<64x48xf32>, vector<64x48xf32> -> vector<256x48xf32>
    %c0_1 = arith.constant 0 : index
    %c0_2 = arith.constant 0 : index
    %2 = vector.load %arg14[%c0_1, %c0_2] : memref<48x4xf32, #tpu.memory_space<vmem>>, vector<48x4xf32>
    %c0_3 = arith.constant 0 : index
    %c0_4 = arith.constant 0 : index
    %3 = vector.load %arg15[%c0_3, %c0_4] : memref<48x96xf32, #tpu.memory_space<vmem>>, vector<48x96xf32>
    %c0_5 = arith.constant 0 : index
    %c0_6 = arith.constant 0 : index
    %4 = vector.load %arg16[%c0_5, %c0_6] : memref<48x48xf32, #tpu.memory_space<vmem>>, vector<48x48xf32>
    %c0_7 = arith.constant 0 : index
    %c0_8 = arith.constant 0 : index
    %c0_9 = arith.constant 0 : index
    %5 = vector.load %arg1[%c0_7, %c0_8, %c0_9] : memref<4x4x32xf32, #tpu.memory_space<vmem>>, vector<1x4x32xf32>
    %6 = vector.shape_cast %5 : vector<1x4x32xf32> to vector<4x32xf32>
    %c0_10 = arith.constant 0 : index
    %c0_11 = arith.constant 0 : index
    %7 = vector.load %arg3[%c0_10, %c0_11] : memref<32x128xf32, #tpu.memory_space<vmem>>, vector<32x128xf32>
    %8 = arith.truncf %6 : vector<4x32xf32> to vector<4x32xbf16>
    %9 = arith.truncf %7 : vector<32x128xf32> to vector<32x128xbf16>
    %cst = arith.constant dense<0.000000e+00> : vector<4x128xf32>
    %10 = tpu.matmul %8, %9, %cst {dimension_numbers = #tpu.dot_dimension_numbers<[1], [0], [0], [1], [0, 0, 1, 1], [], []>} : vector<4x32xbf16>, vector<32x128xbf16>, vector<4x128xf32> -> vector<4x128xf32>
    %c0_12 = arith.constant 0 : index
    %c0_13 = arith.constant 0 : index
    %11 = vector.load %arg17[%c0_12, %c0_13] : memref<18x128xf32, #tpu.memory_space<vmem>>, vector<1x128xf32>
    %12 = vector.broadcast %11 : vector<1x128xf32> to vector<4x128xf32>
    %13 = arith.addf %10, %12 : vector<4x128xf32>
    %cst_14 = arith.constant 5.000000e-01 : f32
    %14 = vector.broadcast %cst_14 : f32 to vector<4x128xf32>
    %15 = arith.mulf %14, %13 : vector<4x128xf32>
    %cst_15 = arith.constant 4.471500e-02 : f32
    %16 = vector.broadcast %cst_15 : f32 to vector<4x128xf32>
    %17 = arith.mulf %16, %13 : vector<4x128xf32>
    %18 = arith.mulf %17, %13 : vector<4x128xf32>
    %19 = arith.mulf %18, %13 : vector<4x128xf32>
    %20 = arith.addf %13, %19 : vector<4x128xf32>
    %cst_16 = arith.constant 0.797884583 : f32
    %21 = vector.broadcast %cst_16 : f32 to vector<4x128xf32>
    %22 = arith.mulf %21, %20 : vector<4x128xf32>
    %23 = math.tanh %22 : vector<4x128xf32>
    %cst_17 = arith.constant 1.000000e+00 : f32
    %24 = vector.broadcast %cst_17 : f32 to vector<4x128xf32>
    %25 = arith.addf %24, %23 : vector<4x128xf32>
    %26 = arith.mulf %15, %25 : vector<4x128xf32>
    %c0_18 = arith.constant 0 : index
    %c0_19 = arith.constant 0 : index
    %27 = vector.load %arg4[%c0_18, %c0_19] : memref<128x32xf32, #tpu.memory_space<vmem>>, vector<128x32xf32>
    %28 = arith.truncf %26 : vector<4x128xf32> to vector<4x128xbf16>
    %29 = arith.truncf %27 : vector<128x32xf32> to vector<128x32xbf16>
    %cst_20 = arith.constant dense<0.000000e+00> : vector<4x32xf32>
    %30 = tpu.matmul %28, %29, %cst_20 {dimension_numbers = #tpu.dot_dimension_numbers<[1], [0], [0], [1], [0, 0, 1, 1], [], []>} : vector<4x128xbf16>, vector<128x32xbf16>, vector<4x32xf32> -> vector<4x32xf32>
    %c1 = arith.constant 1 : index
    %c0_21 = arith.constant 0 : index
    %31 = vector.load %arg17[%c1, %c0_21] : memref<18x128xf32, #tpu.memory_space<vmem>>, vector<1x32xf32>
    %32 = vector.broadcast %31 : vector<1x32xf32> to vector<4x32xf32>
    %33 = arith.addf %30, %32 : vector<4x32xf32>
    %c1_22 = arith.constant 1 : index
    %c0_23 = arith.constant 0 : index
    %c0_24 = arith.constant 0 : index
    %34 = vector.load %arg1[%c1_22, %c0_23, %c0_24] : memref<4x4x32xf32, #tpu.memory_space<vmem>>, vector<1x4x32xf32>
    %35 = vector.shape_cast %34 : vector<1x4x32xf32> to vector<4x32xf32>
    %c0_25 = arith.constant 0 : index
    %c0_26 = arith.constant 0 : index
    %36 = vector.load %arg3[%c0_25, %c0_26] : memref<32x128xf32, #tpu.memory_space<vmem>>, vector<32x128xf32>
    %37 = arith.truncf %35 : vector<4x32xf32> to vector<4x32xbf16>
    %38 = arith.truncf %36 : vector<32x128xf32> to vector<32x128xbf16>
    %cst_27 = arith.constant dense<0.000000e+00> : vector<4x128xf32>
    %39 = tpu.matmul %37, %38, %cst_27 {dimension_numbers = #tpu.dot_dimension_numbers<[1], [0], [0], [1], [0, 0, 1, 1], [], []>} : vector<4x32xbf16>, vector<32x128xbf16>, vector<4x128xf32> -> vector<4x128xf32>
    %c0_28 = arith.constant 0 : index
    %c0_29 = arith.constant 0 : index
    %40 = vector.load %arg17[%c0_28, %c0_29] : memref<18x128xf32, #tpu.memory_space<vmem>>, vector<1x128xf32>
    %41 = vector.broadcast %40 : vector<1x128xf32> to vector<4x128xf32>
    %42 = arith.addf %39, %41 : vector<4x128xf32>
    %cst_30 = arith.constant 5.000000e-01 : f32
    %43 = vector.broadcast %cst_30 : f32 to vector<4x128xf32>
    %44 = arith.mulf %43, %42 : vector<4x128xf32>
    %cst_31 = arith.constant 4.471500e-02 : f32
    %45 = vector.broadcast %cst_31 : f32 to vector<4x128xf32>
    %46 = arith.mulf %45, %42 : vector<4x128xf32>
    %47 = arith.mulf %46, %42 : vector<4x128xf32>
    %48 = arith.mulf %47, %42 : vector<4x128xf32>
    %49 = arith.addf %42, %48 : vector<4x128xf32>
    %cst_32 = arith.constant 0.797884583 : f32
    %50 = vector.broadcast %cst_32 : f32 to vector<4x128xf32>
    %51 = arith.mulf %50, %49 : vector<4x128xf32>
    %52 = math.tanh %51 : vector<4x128xf32>
    %cst_33 = arith.constant 1.000000e+00 : f32
    %53 = vector.broadcast %cst_33 : f32 to vector<4x128xf32>
    %54 = arith.addf %53, %52 : vector<4x128xf32>
    %55 = arith.mulf %44, %54 : vector<4x128xf32>
    %c0_34 = arith.constant 0 : index
    %c0_35 = arith.constant 0 : index
    %56 = vector.load %arg4[%c0_34, %c0_35] : memref<128x32xf32, #tpu.memory_space<vmem>>, vector<128x32xf32>
    %57 = arith.truncf %55 : vector<4x128xf32> to vector<4x128xbf16>
    %58 = arith.truncf %56 : vector<128x32xf32> to vector<128x32xbf16>
    %cst_36 = arith.constant dense<0.000000e+00> : vector<4x32xf32>
    %59 = tpu.matmul %57, %58, %cst_36 {dimension_numbers = #tpu.dot_dimension_numbers<[1], [0], [0], [1], [0, 0, 1, 1], [], []>} : vector<4x128xbf16>, vector<128x32xbf16>, vector<4x32xf32> -> vector<4x32xf32>
    %c1_37 = arith.constant 1 : index
    %c0_38 = arith.constant 0 : index
    %60 = vector.load %arg17[%c1_37, %c0_38] : memref<18x128xf32, #tpu.memory_space<vmem>>, vector<1x32xf32>
    %61 = vector.broadcast %60 : vector<1x32xf32> to vector<4x32xf32>
    %62 = arith.addf %59, %61 : vector<4x32xf32>
    %c2 = arith.constant 2 : index
    %c0_39 = arith.constant 0 : index
    %c0_40 = arith.constant 0 : index
    %63 = vector.load %arg1[%c2, %c0_39, %c0_40] : memref<4x4x32xf32, #tpu.memory_space<vmem>>, vector<1x4x32xf32>
    %64 = vector.shape_cast %63 : vector<1x4x32xf32> to vector<4x32xf32>
    %c0_41 = arith.constant 0 : index
    %c0_42 = arith.constant 0 : index
    %65 = vector.load %arg3[%c0_41, %c0_42] : memref<32x128xf32, #tpu.memory_space<vmem>>, vector<32x128xf32>
    %66 = arith.truncf %64 : vector<4x32xf32> to vector<4x32xbf16>
    %67 = arith.truncf %65 : vector<32x128xf32> to vector<32x128xbf16>
    %cst_43 = arith.constant dense<0.000000e+00> : vector<4x128xf32>
    %68 = tpu.matmul %66, %67, %cst_43 {dimension_numbers = #tpu.dot_dimension_numbers<[1], [0], [0], [1], [0, 0, 1, 1], [], []>} : vector<4x32xbf16>, vector<32x128xbf16>, vector<4x128xf32> -> vector<4x128xf32>
    %c0_44 = arith.constant 0 : index
    %c0_45 = arith.constant 0 : index
    %69 = vector.load %arg17[%c0_44, %c0_45] : memref<18x128xf32, #tpu.memory_space<vmem>>, vector<1x128xf32>
    %70 = vector.broadcast %69 : vector<1x128xf32> to vector<4x128xf32>
    %71 = arith.addf %68, %70 : vector<4x128xf32>
    %cst_46 = arith.constant 5.000000e-01 : f32
    %72 = vector.broadcast %cst_46 : f32 to vector<4x128xf32>
    %73 = arith.mulf %72, %71 : vector<4x128xf32>
    %cst_47 = arith.constant 4.471500e-02 : f32
    %74 = vector.broadcast %cst_47 : f32 to vector<4x128xf32>
    %75 = arith.mulf %74, %71 : vector<4x128xf32>
    %76 = arith.mulf %75, %71 : vector<4x128xf32>
    %77 = arith.mulf %76, %71 : vector<4x128xf32>
    %78 = arith.addf %71, %77 : vector<4x128xf32>
    %cst_48 = arith.constant 0.797884583 : f32
    %79 = vector.broadcast %cst_48 : f32 to vector<4x128xf32>
    %80 = arith.mulf %79, %78 : vector<4x128xf32>
    %81 = math.tanh %80 : vector<4x128xf32>
    %cst_49 = arith.constant 1.000000e+00 : f32
    %82 = vector.broadcast %cst_49 : f32 to vector<4x128xf32>
    %83 = arith.addf %82, %81 : vector<4x128xf32>
    %84 = arith.mulf %73, %83 : vector<4x128xf32>
    %c0_50 = arith.constant 0 : index
    %c0_51 = arith.constant 0 : index
    %85 = vector.load %arg4[%c0_50, %c0_51] : memref<128x32xf32, #tpu.memory_space<vmem>>, vector<128x32xf32>
    %86 = arith.truncf %84 : vector<4x128xf32> to vector<4x128xbf16>
    %87 = arith.truncf %85 : vector<128x32xf32> to vector<128x32xbf16>
    %cst_52 = arith.constant dense<0.000000e+00> : vector<4x32xf32>
    %88 = tpu.matmul %86, %87, %cst_52 {dimension_numbers = #tpu.dot_dimension_numbers<[1], [0], [0], [1], [0, 0, 1, 1], [], []>} : vector<4x128xbf16>, vector<128x32xbf16>, vector<4x32xf32> -> vector<4x32xf32>
    %c1_53 = arith.constant 1 : index
    %c0_54 = arith.constant 0 : index
    %89 = vector.load %arg17[%c1_53, %c0_54] : memref<18x128xf32, #tpu.memory_space<vmem>>, vector<1x32xf32>
    %90 = vector.broadcast %89 : vector<1x32xf32> to vector<4x32xf32>
    %91 = arith.addf %88, %90 : vector<4x32xf32>
    %c3 = arith.constant 3 : index
    %c0_55 = arith.constant 0 : index
    %c0_56 = arith.constant 0 : index
    %92 = vector.load %arg1[%c3, %c0_55, %c0_56] : memref<4x4x32xf32, #tpu.memory_space<vmem>>, vector<1x4x32xf32>
    %93 = vector.shape_cast %92 : vector<1x4x32xf32> to vector<4x32xf32>
    %c0_57 = arith.constant 0 : index
    %c0_58 = arith.constant 0 : index
    %94 = vector.load %arg3[%c0_57, %c0_58] : memref<32x128xf32, #tpu.memory_space<vmem>>, vector<32x128xf32>
    %95 = arith.truncf %93 : vector<4x32xf32> to vector<4x32xbf16>
    %96 = arith.truncf %94 : vector<32x128xf32> to vector<32x128xbf16>
    %cst_59 = arith.constant dense<0.000000e+00> : vector<4x128xf32>
    %97 = tpu.matmul %95, %96, %cst_59 {dimension_numbers = #tpu.dot_dimension_numbers<[1], [0], [0], [1], [0, 0, 1, 1], [], []>} : vector<4x32xbf16>, vector<32x128xbf16>, vector<4x128xf32> -> vector<4x128xf32>
    %c0_60 = arith.constant 0 : index
    %c0_61 = arith.constant 0 : index
    %98 = vector.load %arg17[%c0_60, %c0_61] : memref<18x128xf32, #tpu.memory_space<vmem>>, vector<1x128xf32>
    %99 = vector.broadcast %98 : vector<1x128xf32> to vector<4x128xf32>
    %100 = arith.addf %97, %99 : vector<4x128xf32>
    %cst_62 = arith.constant 5.000000e-01 : f32
    %101 = vector.broadcast %cst_62 : f32 to vector<4x128xf32>
    %102 = arith.mulf %101, %100 : vector<4x128xf32>
    %cst_63 = arith.constant 4.471500e-02 : f32
    %103 = vector.broadcast %cst_63 : f32 to vector<4x128xf32>
    %104 = arith.mulf %103, %100 : vector<4x128xf32>
    %105 = arith.mulf %104, %100 : vector<4x128xf32>
    %106 = arith.mulf %105, %100 : vector<4x128xf32>
    %107 = arith.addf %100, %106 : vector<4x128xf32>
    %cst_64 = arith.constant 0.797884583 : f32
    %108 = vector.broadcast %cst_64 : f32 to vector<4x128xf32>
    %109 = arith.mulf %108, %107 : vector<4x128xf32>
    %110 = math.tanh %109 : vector<4x128xf32>
    %cst_65 = arith.constant 1.000000e+00 : f32
    %111 = vector.broadcast %cst_65 : f32 to vector<4x128xf32>
    %112 = arith.addf %111, %110 : vector<4x128xf32>
    %113 = arith.mulf %102, %112 : vector<4x128xf32>
    %c0_66 = arith.constant 0 : index
    %c0_67 = arith.constant 0 : index
    %114 = vector.load %arg4[%c0_66, %c0_67] : memref<128x32xf32, #tpu.memory_space<vmem>>, vector<128x32xf32>
    %115 = arith.truncf %113 : vector<4x128xf32> to vector<4x128xbf16>
    %116 = arith.truncf %114 : vector<128x32xf32> to vector<128x32xbf16>
    %cst_68 = arith.constant dense<0.000000e+00> : vector<4x32xf32>
    %117 = tpu.matmul %115, %116, %cst_68 {dimension_numbers = #tpu.dot_dimension_numbers<[1], [0], [0], [1], [0, 0, 1, 1], [], []>} : vector<4x128xbf16>, vector<128x32xbf16>, vector<4x32xf32> -> vector<4x32xf32>
    %c1_69 = arith.constant 1 : index
    %c0_70 = arith.constant 0 : index
    %118 = vector.load %arg17[%c1_69, %c0_70] : memref<18x128xf32, #tpu.memory_space<vmem>>, vector<1x32xf32>
    %119 = vector.broadcast %118 : vector<1x32xf32> to vector<4x32xf32>
    %120 = arith.addf %117, %119 : vector<4x32xf32>
    %c2_71 = arith.constant 2 : index
    %c0_72 = arith.constant 0 : index
    %121 = vector.load %arg17[%c2_71, %c0_72] : memref<18x128xf32, #tpu.memory_space<vmem>>, vector<1x48xf32>
    %c3_73 = arith.constant 3 : index
    %c0_74 = arith.constant 0 : index
    %122 = vector.load %arg17[%c3_73, %c0_74] : memref<18x128xf32, #tpu.memory_space<vmem>>, vector<1x48xf32>
    %cst_75 = arith.constant dense<0.000000e+00> : vector<256xf32>
    %123 = vector.multi_reduction <add>, %1, %cst_75 [1] : vector<256x48xf32> to vector<256xf32>
    %124 = vector.shape_cast %123 : vector<256xf32> to vector<256x1xf32>
    %cst_76 = arith.constant 4.800000e+01 : f32
    %125 = vector.broadcast %cst_76 : f32 to vector<256x1xf32>
    %126 = arith.divf %124, %125 : vector<256x1xf32>
    %127 = vector.broadcast %126 : vector<256x1xf32> to vector<256x48xf32>
    %128 = arith.subf %1, %127 : vector<256x48xf32>
    %129 = arith.mulf %128, %128 : vector<256x48xf32>
    %cst_77 = arith.constant dense<0.000000e+00> : vector<256xf32>
    %130 = vector.multi_reduction <add>, %129, %cst_77 [1] : vector<256x48xf32> to vector<256xf32>
    %131 = vector.shape_cast %130 : vector<256xf32> to vector<256x1xf32>
    %cst_78 = arith.constant 4.800000e+01 : f32
    %132 = vector.broadcast %cst_78 : f32 to vector<256x1xf32>
    %133 = arith.divf %131, %132 : vector<256x1xf32>
    %134 = vector.broadcast %126 : vector<256x1xf32> to vector<256x48xf32>
    %135 = arith.subf %1, %134 : vector<256x48xf32>
    %cst_79 = arith.constant 9.99999974E-6 : f32
    %136 = vector.broadcast %cst_79 : f32 to vector<256x1xf32>
    %137 = arith.addf %133, %136 : vector<256x1xf32>
    %138 = math.rsqrt %137 : vector<256x1xf32>
    %139 = vector.broadcast %138 : vector<256x1xf32> to vector<256x48xf32>
    %140 = arith.mulf %135, %139 : vector<256x48xf32>
    %141 = vector.broadcast %121 : vector<1x48xf32> to vector<256x48xf32>
    %142 = arith.mulf %140, %141 : vector<256x48xf32>
    %143 = vector.broadcast %122 : vector<1x48xf32> to vector<256x48xf32>
    %144 = arith.addf %142, %143 : vector<256x48xf32>
    %c0_80 = arith.constant 0 : index
    %c0_81 = arith.constant 0 : index
    %c0_82 = arith.constant 0 : index
    %145 = vector.load %arg5[%c0_80, %c0_81, %c0_82] : memref<2x48x48xf32, #tpu.memory_space<vmem>>, vector<1x48x48xf32>
    %146 = vector.shape_cast %145 : vector<1x48x48xf32> to vector<48x48xf32>
    %147 = arith.truncf %144 : vector<256x48xf32> to vector<256x48xbf16>
    %148 = arith.truncf %146 : vector<48x48xf32> to vector<48x48xbf16>
    %cst_83 = arith.constant dense<0.000000e+00> : vector<256x48xf32>
    %149 = tpu.matmul %147, %148, %cst_83 {dimension_numbers = #tpu.dot_dimension_numbers<[1], [0], [0], [1], [0, 0, 1, 1], [], []>} : vector<256x48xbf16>, vector<48x48xbf16>, vector<256x48xf32> -> vector<256x48xf32>
    %c0_84 = arith.constant 0 : index
    %c0_85 = arith.constant 0 : index
    %c0_86 = arith.constant 0 : index
    %150 = vector.load %arg6[%c0_84, %c0_85, %c0_86] : memref<2x32x96xf32, #tpu.memory_space<vmem>>, vector<1x32x96xf32>
    %151 = vector.shape_cast %150 : vector<1x32x96xf32> to vector<32x96xf32>
    %152 = arith.truncf %33 : vector<4x32xf32> to vector<4x32xbf16>
    %153 = arith.truncf %151 : vector<32x96xf32> to vector<32x96xbf16>
    %cst_87 = arith.constant dense<0.000000e+00> : vector<4x96xf32>
    %154 = tpu.matmul %152, %153, %cst_87 {dimension_numbers = #tpu.dot_dimension_numbers<[1], [0], [0], [1], [0, 0, 1, 1], [], []>} : vector<4x32xbf16>, vector<32x96xbf16>, vector<4x96xf32> -> vector<4x96xf32>
    %155 = arith.truncf %2 : vector<48x4xf32> to vector<48x4xbf16>
    %156 = arith.truncf %154 : vector<4x96xf32> to vector<4x96xbf16>
    %cst_88 = arith.constant dense<0.000000e+00> : vector<48x96xf32>
    %157 = tpu.matmul %155, %156, %cst_88 {dimension_numbers = #tpu.dot_dimension_numbers<[1], [0], [0], [1], [0, 0, 1, 1], [], []>} : vector<48x4xbf16>, vector<4x96xbf16>, vector<48x96xf32> -> vector<48x96xf32>
    %158 = arith.mulf %157, %3 : vector<48x96xf32>
    %159 = vector.extract_strided_slice %158 {offsets = [0, 48], sizes = [48, 48], strides = [1, 1]} : vector<48x96xf32> to vector<48x48xf32>
    %160 = vector.extract_strided_slice %149 {offsets = [0, 0], sizes = [64, 48], strides = [1, 1]} : vector<256x48xf32> to vector<64x48xf32>
    %161 = vector.extract_strided_slice %158 {offsets = [0, 0], sizes = [48, 48], strides = [1, 1]} : vector<48x96xf32> to vector<48x48xf32>
    %162 = arith.truncf %160 : vector<64x48xf32> to vector<64x48xbf16>
    %163 = arith.truncf %161 : vector<48x48xf32> to vector<48x48xbf16>
    %cst_89 = arith.constant dense<0.000000e+00> : vector<64x48xf32>
    %164 = tpu.matmul %162, %163, %cst_89 {dimension_numbers = #tpu.dot_dimension_numbers<[1], [1], [0], [0], [0, 0, 1, 0], [], []>} : vector<64x48xbf16>, vector<48x48xbf16>, vector<64x48xf32> -> vector<64x48xf32>
    %c0_90 = arith.constant 0 : index
    %c0_91 = arith.constant 0 : index
    %c0_92 = arith.constant 0 : index
    %165 = vector.load %arg6[%c0_90, %c0_91, %c0_92] : memref<2x32x96xf32, #tpu.memory_space<vmem>>, vector<1x32x96xf32>
    %166 = vector.shape_cast %165 : vector<1x32x96xf32> to vector<32x96xf32>
    %167 = arith.truncf %62 : vector<4x32xf32> to vector<4x32xbf16>
    %168 = arith.truncf %166 : vector<32x96xf32> to vector<32x96xbf16>
    %cst_93 = arith.constant dense<0.000000e+00> : vector<4x96xf32>
    %169 = tpu.matmul %167, %168, %cst_93 {dimension_numbers = #tpu.dot_dimension_numbers<[1], [0], [0], [1], [0, 0, 1, 1], [], []>} : vector<4x32xbf16>, vector<32x96xbf16>, vector<4x96xf32> -> vector<4x96xf32>
    %170 = arith.truncf %2 : vector<48x4xf32> to vector<48x4xbf16>
    %171 = arith.truncf %169 : vector<4x96xf32> to vector<4x96xbf16>
    %cst_94 = arith.constant dense<0.000000e+00> : vector<48x96xf32>
    %172 = tpu.matmul %170, %171, %cst_94 {dimension_numbers = #tpu.dot_dimension_numbers<[1], [0], [0], [1], [0, 0, 1, 1], [], []>} : vector<48x4xbf16>, vector<4x96xbf16>, vector<48x96xf32> -> vector<48x96xf32>
    %173 = arith.mulf %172, %3 : vector<48x96xf32>
    %174 = vector.extract_strided_slice %173 {offsets = [0, 48], sizes = [48, 48], strides = [1, 1]} : vector<48x96xf32> to vector<48x48xf32>
    %175 = vector.extract_strided_slice %149 {offsets = [64, 0], sizes = [64, 48], strides = [1, 1]} : vector<256x48xf32> to vector<64x48xf32>
    %176 = vector.extract_strided_slice %173 {offsets = [0, 0], sizes = [48, 48], strides = [1, 1]} : vector<48x96xf32> to vector<48x48xf32>
    %177 = arith.truncf %175 : vector<64x48xf32> to vector<64x48xbf16>
    %178 = arith.truncf %176 : vector<48x48xf32> to vector<48x48xbf16>
    %cst_95 = arith.constant dense<0.000000e+00> : vector<64x48xf32>
    %179 = tpu.matmul %177, %178, %cst_95 {dimension_numbers = #tpu.dot_dimension_numbers<[1], [1], [0], [0], [0, 0, 1, 0], [], []>} : vector<64x48xbf16>, vector<48x48xbf16>, vector<64x48xf32> -> vector<64x48xf32>
    %c0_96 = arith.constant 0 : index
    %c0_97 = arith.constant 0 : index
    %c0_98 = arith.constant 0 : index
    %180 = vector.load %arg6[%c0_96, %c0_97, %c0_98] : memref<2x32x96xf32, #tpu.memory_space<vmem>>, vector<1x32x96xf32>
    %181 = vector.shape_cast %180 : vector<1x32x96xf32> to vector<32x96xf32>
    %182 = arith.truncf %91 : vector<4x32xf32> to vector<4x32xbf16>
    %183 = arith.truncf %181 : vector<32x96xf32> to vector<32x96xbf16>
    %cst_99 = arith.constant dense<0.000000e+00> : vector<4x96xf32>
    %184 = tpu.matmul %182, %183, %cst_99 {dimension_numbers = #tpu.dot_dimension_numbers<[1], [0], [0], [1], [0, 0, 1, 1], [], []>} : vector<4x32xbf16>, vector<32x96xbf16>, vector<4x96xf32> -> vector<4x96xf32>
    %185 = arith.truncf %2 : vector<48x4xf32> to vector<48x4xbf16>
    %186 = arith.truncf %184 : vector<4x96xf32> to vector<4x96xbf16>
    %cst_100 = arith.constant dense<0.000000e+00> : vector<48x96xf32>
    %187 = tpu.matmul %185, %186, %cst_100 {dimension_numbers = #tpu.dot_dimension_numbers<[1], [0], [0], [1], [0, 0, 1, 1], [], []>} : vector<48x4xbf16>, vector<4x96xbf16>, vector<48x96xf32> -> vector<48x96xf32>
    %188 = arith.mulf %187, %3 : vector<48x96xf32>
    %189 = vector.extract_strided_slice %188 {offsets = [0, 48], sizes = [48, 48], strides = [1, 1]} : vector<48x96xf32> to vector<48x48xf32>
    %190 = vector.extract_strided_slice %149 {offsets = [128, 0], sizes = [64, 48], strides = [1, 1]} : vector<256x48xf32> to vector<64x48xf32>
    %191 = vector.extract_strided_slice %188 {offsets = [0, 0], sizes = [48, 48], strides = [1, 1]} : vector<48x96xf32> to vector<48x48xf32>
    %192 = arith.truncf %190 : vector<64x48xf32> to vector<64x48xbf16>
    %193 = arith.truncf %191 : vector<48x48xf32> to vector<48x48xbf16>
    %cst_101 = arith.constant dense<0.000000e+00> : vector<64x48xf32>
    %194 = tpu.matmul %192, %193, %cst_101 {dimension_numbers = #tpu.dot_dimension_numbers<[1], [1], [0], [0], [0, 0, 1, 0], [], []>} : vector<64x48xbf16>, vector<48x48xbf16>, vector<64x48xf32> -> vector<64x48xf32>
    %c0_102 = arith.constant 0 : index
    %c0_103 = arith.constant 0 : index
    %c0_104 = arith.constant 0 : index
    %195 = vector.load %arg6[%c0_102, %c0_103, %c0_104] : memref<2x32x96xf32, #tpu.memory_space<vmem>>, vector<1x32x96xf32>
    %196 = vector.shape_cast %195 : vector<1x32x96xf32> to vector<32x96xf32>
    %197 = arith.truncf %120 : vector<4x32xf32> to vector<4x32xbf16>
    %198 = arith.truncf %196 : vector<32x96xf32> to vector<32x96xbf16>
    %cst_105 = arith.constant dense<0.000000e+00> : vector<4x96xf32>
    %199 = tpu.matmul %197, %198, %cst_105 {dimension_numbers = #tpu.dot_dimension_numbers<[1], [0], [0], [1], [0, 0, 1, 1], [], []>} : vector<4x32xbf16>, vector<32x96xbf16>, vector<4x96xf32> -> vector<4x96xf32>
    %200 = arith.truncf %2 : vector<48x4xf32> to vector<48x4xbf16>
    %201 = arith.truncf %199 : vector<4x96xf32> to vector<4x96xbf16>
    %cst_106 = arith.constant dense<0.000000e+00> : vector<48x96xf32>
    %202 = tpu.matmul %200, %201, %cst_106 {dimension_numbers = #tpu.dot_dimension_numbers<[1], [0], [0], [1], [0, 0, 1, 1], [], []>} : vector<48x4xbf16>, vector<4x96xbf16>, vector<48x96xf32> -> vector<48x96xf32>
    %203 = arith.mulf %202, %3 : vector<48x96xf32>
    %204 = vector.extract_strided_slice %203 {offsets = [0, 48], sizes = [48, 48], strides = [1, 1]} : vector<48x96xf32> to vector<48x48xf32>
    %205 = vector.extract_strided_slice %149 {offsets = [192, 0], sizes = [64, 48], strides = [1, 1]} : vector<256x48xf32> to vector<64x48xf32>
    %206 = vector.extract_strided_slice %203 {offsets = [0, 0], sizes = [48, 48], strides = [1, 1]} : vector<48x96xf32> to vector<48x48xf32>
    %207 = arith.truncf %205 : vector<64x48xf32> to vector<64x48xbf16>
    %208 = arith.truncf %206 : vector<48x48xf32> to vector<48x48xbf16>
    %cst_107 = arith.constant dense<0.000000e+00> : vector<64x48xf32>
    %209 = tpu.matmul %207, %208, %cst_107 {dimension_numbers = #tpu.dot_dimension_numbers<[1], [1], [0], [0], [0, 0, 1, 0], [], []>} : vector<64x48xbf16>, vector<48x48xbf16>, vector<64x48xf32> -> vector<64x48xf32>
    %210 = tpu.concatenate %164, %179, %194, %209 in 0 : vector<64x48xf32>, vector<64x48xf32>, vector<64x48xf32>, vector<64x48xf32> -> vector<256x48xf32>
    %cst_108 = arith.constant dense<0xFF800000> : vector<256xf32>
    %211 = vector.multi_reduction <maximumf>, %210, %cst_108 [1] : vector<256x48xf32> to vector<256xf32>
    %212 = vector.shape_cast %211 : vector<256xf32> to vector<256x1xf32>
    %213 = vector.broadcast %212 : vector<256x1xf32> to vector<256x48xf32>
    %214 = arith.subf %210, %213 : vector<256x48xf32>
    %215 = math.exp %214 : vector<256x48xf32>
    %216 = arith.truncf %215 : vector<256x48xf32> to vector<256x48xbf16>
    %217 = arith.truncf %4 : vector<48x48xf32> to vector<48x48xbf16>
    %cst_109 = arith.constant dense<0.000000e+00> : vector<256x48xf32>
    %218 = tpu.matmul %216, %217, %cst_109 {dimension_numbers = #tpu.dot_dimension_numbers<[1], [0], [0], [1], [0, 0, 1, 1], [], []>} : vector<256x48xbf16>, vector<48x48xbf16>, vector<256x48xf32> -> vector<256x48xf32>
    %cst_110 = arith.constant 1.000000e-30 : f32
    %219 = vector.broadcast %cst_110 : f32 to vector<256x48xf32>
    %220 = arith.maximumf %218, %219 : vector<256x48xf32>
    %221 = tpu.reciprocal %220 {approx = true} : vector<256x48xf32> -> vector<256x48xf32>
    %222 = arith.mulf %215, %221 : vector<256x48xf32>
    %223 = vector.extract_strided_slice %222 {offsets = [0, 0], sizes = [64, 48], strides = [1, 1]} : vector<256x48xf32> to vector<64x48xf32>
    %224 = arith.truncf %223 : vector<64x48xf32> to vector<64x48xbf16>
    %225 = arith.truncf %159 : vector<48x48xf32> to vector<48x48xbf16>
    %cst_111 = arith.constant dense<0.000000e+00> : vector<64x48xf32>
    %226 = tpu.matmul %224, %225, %cst_111 {dimension_numbers = #tpu.dot_dimension_numbers<[1], [0], [0], [1], [0, 0, 1, 1], [], []>} : vector<64x48xbf16>, vector<48x48xbf16>, vector<64x48xf32> -> vector<64x48xf32>
    %227 = vector.extract_strided_slice %222 {offsets = [64, 0], sizes = [64, 48], strides = [1, 1]} : vector<256x48xf32> to vector<64x48xf32>
    %228 = arith.truncf %227 : vector<64x48xf32> to vector<64x48xbf16>
    %229 = arith.truncf %174 : vector<48x48xf32> to vector<48x48xbf16>
    %cst_112 = arith.constant dense<0.000000e+00> : vector<64x48xf32>
    %230 = tpu.matmul %228, %229, %cst_112 {dimension_numbers = #tpu.dot_dimension_numbers<[1], [0], [0], [1], [0, 0, 1, 1], [], []>} : vector<64x48xbf16>, vector<48x48xbf16>, vector<64x48xf32> -> vector<64x48xf32>
    %231 = vector.extract_strided_slice %222 {offsets = [128, 0], sizes = [64, 48], strides = [1, 1]} : vector<256x48xf32> to vector<64x48xf32>
    %232 = arith.truncf %231 : vector<64x48xf32> to vector<64x48xbf16>
    %233 = arith.truncf %189 : vector<48x48xf32> to vector<48x48xbf16>
    %cst_113 = arith.constant dense<0.000000e+00> : vector<64x48xf32>
    %234 = tpu.matmul %232, %233, %cst_113 {dimension_numbers = #tpu.dot_dimension_numbers<[1], [0], [0], [1], [0, 0, 1, 1], [], []>} : vector<64x48xbf16>, vector<48x48xbf16>, vector<64x48xf32> -> vector<64x48xf32>
    %235 = vector.extract_strided_slice %222 {offsets = [192, 0], sizes = [64, 48], strides = [1, 1]} : vector<256x48xf32> to vector<64x48xf32>
    %236 = arith.truncf %235 : vector<64x48xf32> to vector<64x48xbf16>
    %237 = arith.truncf %204 : vector<48x48xf32> to vector<48x48xbf16>
    %cst_114 = arith.constant dense<0.000000e+00> : vector<64x48xf32>
    %238 = tpu.matmul %236, %237, %cst_114 {dimension_numbers = #tpu.dot_dimension_numbers<[1], [0], [0], [1], [0, 0, 1, 1], [], []>} : vector<64x48xbf16>, vector<48x48xbf16>, vector<64x48xf32> -> vector<64x48xf32>
    %239 = tpu.concatenate %226, %230, %234, %238 in 0 : vector<64x48xf32>, vector<64x48xf32>, vector<64x48xf32>, vector<64x48xf32> -> vector<256x48xf32>
    %c0_115 = arith.constant 0 : index
    %c0_116 = arith.constant 0 : index
    %c0_117 = arith.constant 0 : index
    %240 = vector.load %arg7[%c0_115, %c0_116, %c0_117] : memref<2x48x48xf32, #tpu.memory_space<vmem>>, vector<1x48x48xf32>
    %241 = vector.shape_cast %240 : vector<1x48x48xf32> to vector<48x48xf32>
    %242 = arith.truncf %239 : vector<256x48xf32> to vector<256x48xbf16>
    %243 = arith.truncf %241 : vector<48x48xf32> to vector<48x48xbf16>
    %cst_118 = arith.constant dense<0.000000e+00> : vector<256x48xf32>
    %244 = tpu.matmul %242, %243, %cst_118 {dimension_numbers = #tpu.dot_dimension_numbers<[1], [0], [0], [1], [0, 0, 1, 1], [], []>} : vector<256x48xbf16>, vector<48x48xbf16>, vector<256x48xf32> -> vector<256x48xf32>
    %245 = arith.addf %1, %244 : vector<256x48xf32>
    %c4 = arith.constant 4 : index
    %c0_119 = arith.constant 0 : index
    %246 = vector.load %arg17[%c4, %c0_119] : memref<18x128xf32, #tpu.memory_space<vmem>>, vector<1x48xf32>
    %247 = vector.broadcast %246 : vector<1x48xf32> to vector<256x48xf32>
    %248 = arith.addf %245, %247 : vector<256x48xf32>
    %c5 = arith.constant 5 : index
    %c0_120 = arith.constant 0 : index
    %249 = vector.load %arg17[%c5, %c0_120] : memref<18x128xf32, #tpu.memory_space<vmem>>, vector<1x48xf32>
    %c6 = arith.constant 6 : index
    %c0_121 = arith.constant 0 : index
    %250 = vector.load %arg17[%c6, %c0_121] : memref<18x128xf32, #tpu.memory_space<vmem>>, vector<1x48xf32>
    %cst_122 = arith.constant dense<0.000000e+00> : vector<256xf32>
    %251 = vector.multi_reduction <add>, %248, %cst_122 [1] : vector<256x48xf32> to vector<256xf32>
    %252 = vector.shape_cast %251 : vector<256xf32> to vector<256x1xf32>
    %cst_123 = arith.constant 4.800000e+01 : f32
    %253 = vector.broadcast %cst_123 : f32 to vector<256x1xf32>
    %254 = arith.divf %252, %253 : vector<256x1xf32>
    %255 = vector.broadcast %254 : vector<256x1xf32> to vector<256x48xf32>
    %256 = arith.subf %248, %255 : vector<256x48xf32>
    %257 = arith.mulf %256, %256 : vector<256x48xf32>
    %cst_124 = arith.constant dense<0.000000e+00> : vector<256xf32>
    %258 = vector.multi_reduction <add>, %257, %cst_124 [1] : vector<256x48xf32> to vector<256xf32>
    %259 = vector.shape_cast %258 : vector<256xf32> to vector<256x1xf32>
    %cst_125 = arith.constant 4.800000e+01 : f32
    %260 = vector.broadcast %cst_125 : f32 to vector<256x1xf32>
    %261 = arith.divf %259, %260 : vector<256x1xf32>
    %262 = vector.broadcast %254 : vector<256x1xf32> to vector<256x48xf32>
    %263 = arith.subf %248, %262 : vector<256x48xf32>
    %cst_126 = arith.constant 9.99999974E-6 : f32
    %264 = vector.broadcast %cst_126 : f32 to vector<256x1xf32>
    %265 = arith.addf %261, %264 : vector<256x1xf32>
    %266 = math.rsqrt %265 : vector<256x1xf32>
    %267 = vector.broadcast %266 : vector<256x1xf32> to vector<256x48xf32>
    %268 = arith.mulf %263, %267 : vector<256x48xf32>
    %269 = vector.broadcast %249 : vector<1x48xf32> to vector<256x48xf32>
    %270 = arith.mulf %268, %269 : vector<256x48xf32>
    %271 = vector.broadcast %250 : vector<1x48xf32> to vector<256x48xf32>
    %272 = arith.addf %270, %271 : vector<256x48xf32>
    %c0_127 = arith.constant 0 : index
    %c0_128 = arith.constant 0 : index
    %c0_129 = arith.constant 0 : index
    %273 = vector.load %arg8[%c0_127, %c0_128, %c0_129] : memref<2x48x96xf32, #tpu.memory_space<vmem>>, vector<1x48x96xf32>
    %274 = vector.shape_cast %273 : vector<1x48x96xf32> to vector<48x96xf32>
    %275 = arith.truncf %272 : vector<256x48xf32> to vector<256x48xbf16>
    %276 = arith.truncf %274 : vector<48x96xf32> to vector<48x96xbf16>
    %cst_130 = arith.constant dense<0.000000e+00> : vector<256x96xf32>
    %277 = tpu.matmul %275, %276, %cst_130 {dimension_numbers = #tpu.dot_dimension_numbers<[1], [0], [0], [1], [0, 0, 1, 1], [], []>} : vector<256x48xbf16>, vector<48x96xbf16>, vector<256x96xf32> -> vector<256x96xf32>
    %c7 = arith.constant 7 : index
    %c0_131 = arith.constant 0 : index
    %278 = vector.load %arg17[%c7, %c0_131] : memref<18x128xf32, #tpu.memory_space<vmem>>, vector<1x96xf32>
    %279 = vector.broadcast %278 : vector<1x96xf32> to vector<256x96xf32>
    %280 = arith.addf %277, %279 : vector<256x96xf32>
    %cst_132 = arith.constant 5.000000e-01 : f32
    %281 = vector.broadcast %cst_132 : f32 to vector<256x96xf32>
    %282 = arith.mulf %281, %280 : vector<256x96xf32>
    %cst_133 = arith.constant 4.471500e-02 : f32
    %283 = vector.broadcast %cst_133 : f32 to vector<256x96xf32>
    %284 = arith.mulf %283, %280 : vector<256x96xf32>
    %285 = arith.mulf %284, %280 : vector<256x96xf32>
    %286 = arith.mulf %285, %280 : vector<256x96xf32>
    %287 = arith.addf %280, %286 : vector<256x96xf32>
    %cst_134 = arith.constant 0.797884583 : f32
    %288 = vector.broadcast %cst_134 : f32 to vector<256x96xf32>
    %289 = arith.mulf %288, %287 : vector<256x96xf32>
    %290 = math.tanh %289 : vector<256x96xf32>
    %cst_135 = arith.constant 1.000000e+00 : f32
    %291 = vector.broadcast %cst_135 : f32 to vector<256x96xf32>
    %292 = arith.addf %291, %290 : vector<256x96xf32>
    %293 = arith.mulf %282, %292 : vector<256x96xf32>
    %c0_136 = arith.constant 0 : index
    %c0_137 = arith.constant 0 : index
    %c0_138 = arith.constant 0 : index
    %294 = vector.load %arg9[%c0_136, %c0_137, %c0_138] : memref<2x96x48xf32, #tpu.memory_space<vmem>>, vector<1x96x48xf32>
    %295 = vector.shape_cast %294 : vector<1x96x48xf32> to vector<96x48xf32>
    %296 = arith.truncf %293 : vector<256x96xf32> to vector<256x96xbf16>
    %297 = arith.truncf %295 : vector<96x48xf32> to vector<96x48xbf16>
    %cst_139 = arith.constant dense<0.000000e+00> : vector<256x48xf32>
    %298 = tpu.matmul %296, %297, %cst_139 {dimension_numbers = #tpu.dot_dimension_numbers<[1], [0], [0], [1], [0, 0, 1, 1], [], []>} : vector<256x96xbf16>, vector<96x48xbf16>, vector<256x48xf32> -> vector<256x48xf32>
    %299 = arith.addf %248, %298 : vector<256x48xf32>
    %c8 = arith.constant 8 : index
    %c0_140 = arith.constant 0 : index
    %300 = vector.load %arg17[%c8, %c0_140] : memref<18x128xf32, #tpu.memory_space<vmem>>, vector<1x48xf32>
    %301 = vector.broadcast %300 : vector<1x48xf32> to vector<256x48xf32>
    %302 = arith.addf %299, %301 : vector<256x48xf32>
    %c9 = arith.constant 9 : index
    %c0_141 = arith.constant 0 : index
    %303 = vector.load %arg17[%c9, %c0_141] : memref<18x128xf32, #tpu.memory_space<vmem>>, vector<1x48xf32>
    %c10 = arith.constant 10 : index
    %c0_142 = arith.constant 0 : index
    %304 = vector.load %arg17[%c10, %c0_142] : memref<18x128xf32, #tpu.memory_space<vmem>>, vector<1x48xf32>
    %cst_143 = arith.constant dense<0.000000e+00> : vector<256xf32>
    %305 = vector.multi_reduction <add>, %302, %cst_143 [1] : vector<256x48xf32> to vector<256xf32>
    %306 = vector.shape_cast %305 : vector<256xf32> to vector<256x1xf32>
    %cst_144 = arith.constant 4.800000e+01 : f32
    %307 = vector.broadcast %cst_144 : f32 to vector<256x1xf32>
    %308 = arith.divf %306, %307 : vector<256x1xf32>
    %309 = vector.broadcast %308 : vector<256x1xf32> to vector<256x48xf32>
    %310 = arith.subf %302, %309 : vector<256x48xf32>
    %311 = arith.mulf %310, %310 : vector<256x48xf32>
    %cst_145 = arith.constant dense<0.000000e+00> : vector<256xf32>
    %312 = vector.multi_reduction <add>, %311, %cst_145 [1] : vector<256x48xf32> to vector<256xf32>
    %313 = vector.shape_cast %312 : vector<256xf32> to vector<256x1xf32>
    %cst_146 = arith.constant 4.800000e+01 : f32
    %314 = vector.broadcast %cst_146 : f32 to vector<256x1xf32>
    %315 = arith.divf %313, %314 : vector<256x1xf32>
    %316 = vector.broadcast %308 : vector<256x1xf32> to vector<256x48xf32>
    %317 = arith.subf %302, %316 : vector<256x48xf32>
    %cst_147 = arith.constant 9.99999974E-6 : f32
    %318 = vector.broadcast %cst_147 : f32 to vector<256x1xf32>
    %319 = arith.addf %315, %318 : vector<256x1xf32>
    %320 = math.rsqrt %319 : vector<256x1xf32>
    %321 = vector.broadcast %320 : vector<256x1xf32> to vector<256x48xf32>
    %322 = arith.mulf %317, %321 : vector<256x48xf32>
    %323 = vector.broadcast %303 : vector<1x48xf32> to vector<256x48xf32>
    %324 = arith.mulf %322, %323 : vector<256x48xf32>
    %325 = vector.broadcast %304 : vector<1x48xf32> to vector<256x48xf32>
    %326 = arith.addf %324, %325 : vector<256x48xf32>
    %c1_148 = arith.constant 1 : index
    %c0_149 = arith.constant 0 : index
    %c0_150 = arith.constant 0 : index
    %327 = vector.load %arg5[%c1_148, %c0_149, %c0_150] : memref<2x48x48xf32, #tpu.memory_space<vmem>>, vector<1x48x48xf32>
    %328 = vector.shape_cast %327 : vector<1x48x48xf32> to vector<48x48xf32>
    %329 = arith.truncf %326 : vector<256x48xf32> to vector<256x48xbf16>
    %330 = arith.truncf %328 : vector<48x48xf32> to vector<48x48xbf16>
    %cst_151 = arith.constant dense<0.000000e+00> : vector<256x48xf32>
    %331 = tpu.matmul %329, %330, %cst_151 {dimension_numbers = #tpu.dot_dimension_numbers<[1], [0], [0], [1], [0, 0, 1, 1], [], []>} : vector<256x48xbf16>, vector<48x48xbf16>, vector<256x48xf32> -> vector<256x48xf32>
    %c1_152 = arith.constant 1 : index
    %c0_153 = arith.constant 0 : index
    %c0_154 = arith.constant 0 : index
    %332 = vector.load %arg6[%c1_152, %c0_153, %c0_154] : memref<2x32x96xf32, #tpu.memory_space<vmem>>, vector<1x32x96xf32>
    %333 = vector.shape_cast %332 : vector<1x32x96xf32> to vector<32x96xf32>
    %334 = arith.truncf %33 : vector<4x32xf32> to vector<4x32xbf16>
    %335 = arith.truncf %333 : vector<32x96xf32> to vector<32x96xbf16>
    %cst_155 = arith.constant dense<0.000000e+00> : vector<4x96xf32>
    %336 = tpu.matmul %334, %335, %cst_155 {dimension_numbers = #tpu.dot_dimension_numbers<[1], [0], [0], [1], [0, 0, 1, 1], [], []>} : vector<4x32xbf16>, vector<32x96xbf16>, vector<4x96xf32> -> vector<4x96xf32>
    %337 = arith.truncf %2 : vector<48x4xf32> to vector<48x4xbf16>
    %338 = arith.truncf %336 : vector<4x96xf32> to vector<4x96xbf16>
    %cst_156 = arith.constant dense<0.000000e+00> : vector<48x96xf32>
    %339 = tpu.matmul %337, %338, %cst_156 {dimension_numbers = #tpu.dot_dimension_numbers<[1], [0], [0], [1], [0, 0, 1, 1], [], []>} : vector<48x4xbf16>, vector<4x96xbf16>, vector<48x96xf32> -> vector<48x96xf32>
    %340 = arith.mulf %339, %3 : vector<48x96xf32>
    %341 = vector.extract_strided_slice %340 {offsets = [0, 48], sizes = [48, 48], strides = [1, 1]} : vector<48x96xf32> to vector<48x48xf32>
    %342 = vector.extract_strided_slice %331 {offsets = [0, 0], sizes = [64, 48], strides = [1, 1]} : vector<256x48xf32> to vector<64x48xf32>
    %343 = vector.extract_strided_slice %340 {offsets = [0, 0], sizes = [48, 48], strides = [1, 1]} : vector<48x96xf32> to vector<48x48xf32>
    %344 = arith.truncf %342 : vector<64x48xf32> to vector<64x48xbf16>
    %345 = arith.truncf %343 : vector<48x48xf32> to vector<48x48xbf16>
    %cst_157 = arith.constant dense<0.000000e+00> : vector<64x48xf32>
    %346 = tpu.matmul %344, %345, %cst_157 {dimension_numbers = #tpu.dot_dimension_numbers<[1], [1], [0], [0], [0, 0, 1, 0], [], []>} : vector<64x48xbf16>, vector<48x48xbf16>, vector<64x48xf32> -> vector<64x48xf32>
    %c1_158 = arith.constant 1 : index
    %c0_159 = arith.constant 0 : index
    %c0_160 = arith.constant 0 : index
    %347 = vector.load %arg6[%c1_158, %c0_159, %c0_160] : memref<2x32x96xf32, #tpu.memory_space<vmem>>, vector<1x32x96xf32>
    %348 = vector.shape_cast %347 : vector<1x32x96xf32> to vector<32x96xf32>
    %349 = arith.truncf %62 : vector<4x32xf32> to vector<4x32xbf16>
    %350 = arith.truncf %348 : vector<32x96xf32> to vector<32x96xbf16>
    %cst_161 = arith.constant dense<0.000000e+00> : vector<4x96xf32>
    %351 = tpu.matmul %349, %350, %cst_161 {dimension_numbers = #tpu.dot_dimension_numbers<[1], [0], [0], [1], [0, 0, 1, 1], [], []>} : vector<4x32xbf16>, vector<32x96xbf16>, vector<4x96xf32> -> vector<4x96xf32>
    %352 = arith.truncf %2 : vector<48x4xf32> to vector<48x4xbf16>
    %353 = arith.truncf %351 : vector<4x96xf32> to vector<4x96xbf16>
    %cst_162 = arith.constant dense<0.000000e+00> : vector<48x96xf32>
    %354 = tpu.matmul %352, %353, %cst_162 {dimension_numbers = #tpu.dot_dimension_numbers<[1], [0], [0], [1], [0, 0, 1, 1], [], []>} : vector<48x4xbf16>, vector<4x96xbf16>, vector<48x96xf32> -> vector<48x96xf32>
    %355 = arith.mulf %354, %3 : vector<48x96xf32>
    %356 = vector.extract_strided_slice %355 {offsets = [0, 48], sizes = [48, 48], strides = [1, 1]} : vector<48x96xf32> to vector<48x48xf32>
    %357 = vector.extract_strided_slice %331 {offsets = [64, 0], sizes = [64, 48], strides = [1, 1]} : vector<256x48xf32> to vector<64x48xf32>
    %358 = vector.extract_strided_slice %355 {offsets = [0, 0], sizes = [48, 48], strides = [1, 1]} : vector<48x96xf32> to vector<48x48xf32>
    %359 = arith.truncf %357 : vector<64x48xf32> to vector<64x48xbf16>
    %360 = arith.truncf %358 : vector<48x48xf32> to vector<48x48xbf16>
    %cst_163 = arith.constant dense<0.000000e+00> : vector<64x48xf32>
    %361 = tpu.matmul %359, %360, %cst_163 {dimension_numbers = #tpu.dot_dimension_numbers<[1], [1], [0], [0], [0, 0, 1, 0], [], []>} : vector<64x48xbf16>, vector<48x48xbf16>, vector<64x48xf32> -> vector<64x48xf32>
    %c1_164 = arith.constant 1 : index
    %c0_165 = arith.constant 0 : index
    %c0_166 = arith.constant 0 : index
    %362 = vector.load %arg6[%c1_164, %c0_165, %c0_166] : memref<2x32x96xf32, #tpu.memory_space<vmem>>, vector<1x32x96xf32>
    %363 = vector.shape_cast %362 : vector<1x32x96xf32> to vector<32x96xf32>
    %364 = arith.truncf %91 : vector<4x32xf32> to vector<4x32xbf16>
    %365 = arith.truncf %363 : vector<32x96xf32> to vector<32x96xbf16>
    %cst_167 = arith.constant dense<0.000000e+00> : vector<4x96xf32>
    %366 = tpu.matmul %364, %365, %cst_167 {dimension_numbers = #tpu.dot_dimension_numbers<[1], [0], [0], [1], [0, 0, 1, 1], [], []>} : vector<4x32xbf16>, vector<32x96xbf16>, vector<4x96xf32> -> vector<4x96xf32>
    %367 = arith.truncf %2 : vector<48x4xf32> to vector<48x4xbf16>
    %368 = arith.truncf %366 : vector<4x96xf32> to vector<4x96xbf16>
    %cst_168 = arith.constant dense<0.000000e+00> : vector<48x96xf32>
    %369 = tpu.matmul %367, %368, %cst_168 {dimension_numbers = #tpu.dot_dimension_numbers<[1], [0], [0], [1], [0, 0, 1, 1], [], []>} : vector<48x4xbf16>, vector<4x96xbf16>, vector<48x96xf32> -> vector<48x96xf32>
    %370 = arith.mulf %369, %3 : vector<48x96xf32>
    %371 = vector.extract_strided_slice %370 {offsets = [0, 48], sizes = [48, 48], strides = [1, 1]} : vector<48x96xf32> to vector<48x48xf32>
    %372 = vector.extract_strided_slice %331 {offsets = [128, 0], sizes = [64, 48], strides = [1, 1]} : vector<256x48xf32> to vector<64x48xf32>
    %373 = vector.extract_strided_slice %370 {offsets = [0, 0], sizes = [48, 48], strides = [1, 1]} : vector<48x96xf32> to vector<48x48xf32>
    %374 = arith.truncf %372 : vector<64x48xf32> to vector<64x48xbf16>
    %375 = arith.truncf %373 : vector<48x48xf32> to vector<48x48xbf16>
    %cst_169 = arith.constant dense<0.000000e+00> : vector<64x48xf32>
    %376 = tpu.matmul %374, %375, %cst_169 {dimension_numbers = #tpu.dot_dimension_numbers<[1], [1], [0], [0], [0, 0, 1, 0], [], []>} : vector<64x48xbf16>, vector<48x48xbf16>, vector<64x48xf32> -> vector<64x48xf32>
    %c1_170 = arith.constant 1 : index
    %c0_171 = arith.constant 0 : index
    %c0_172 = arith.constant 0 : index
    %377 = vector.load %arg6[%c1_170, %c0_171, %c0_172] : memref<2x32x96xf32, #tpu.memory_space<vmem>>, vector<1x32x96xf32>
    %378 = vector.shape_cast %377 : vector<1x32x96xf32> to vector<32x96xf32>
    %379 = arith.truncf %120 : vector<4x32xf32> to vector<4x32xbf16>
    %380 = arith.truncf %378 : vector<32x96xf32> to vector<32x96xbf16>
    %cst_173 = arith.constant dense<0.000000e+00> : vector<4x96xf32>
    %381 = tpu.matmul %379, %380, %cst_173 {dimension_numbers = #tpu.dot_dimension_numbers<[1], [0], [0], [1], [0, 0, 1, 1], [], []>} : vector<4x32xbf16>, vector<32x96xbf16>, vector<4x96xf32> -> vector<4x96xf32>
    %382 = arith.truncf %2 : vector<48x4xf32> to vector<48x4xbf16>
    %383 = arith.truncf %381 : vector<4x96xf32> to vector<4x96xbf16>
    %cst_174 = arith.constant dense<0.000000e+00> : vector<48x96xf32>
    %384 = tpu.matmul %382, %383, %cst_174 {dimension_numbers = #tpu.dot_dimension_numbers<[1], [0], [0], [1], [0, 0, 1, 1], [], []>} : vector<48x4xbf16>, vector<4x96xbf16>, vector<48x96xf32> -> vector<48x96xf32>
    %385 = arith.mulf %384, %3 : vector<48x96xf32>
    %386 = vector.extract_strided_slice %385 {offsets = [0, 48], sizes = [48, 48], strides = [1, 1]} : vector<48x96xf32> to vector<48x48xf32>
    %387 = vector.extract_strided_slice %331 {offsets = [192, 0], sizes = [64, 48], strides = [1, 1]} : vector<256x48xf32> to vector<64x48xf32>
    %388 = vector.extract_strided_slice %385 {offsets = [0, 0], sizes = [48, 48], strides = [1, 1]} : vector<48x96xf32> to vector<48x48xf32>
    %389 = arith.truncf %387 : vector<64x48xf32> to vector<64x48xbf16>
    %390 = arith.truncf %388 : vector<48x48xf32> to vector<48x48xbf16>
    %cst_175 = arith.constant dense<0.000000e+00> : vector<64x48xf32>
    %391 = tpu.matmul %389, %390, %cst_175 {dimension_numbers = #tpu.dot_dimension_numbers<[1], [1], [0], [0], [0, 0, 1, 0], [], []>} : vector<64x48xbf16>, vector<48x48xbf16>, vector<64x48xf32> -> vector<64x48xf32>
    %392 = tpu.concatenate %346, %361, %376, %391 in 0 : vector<64x48xf32>, vector<64x48xf32>, vector<64x48xf32>, vector<64x48xf32> -> vector<256x48xf32>
    %cst_176 = arith.constant dense<0xFF800000> : vector<256xf32>
    %393 = vector.multi_reduction <maximumf>, %392, %cst_176 [1] : vector<256x48xf32> to vector<256xf32>
    %394 = vector.shape_cast %393 : vector<256xf32> to vector<256x1xf32>
    %395 = vector.broadcast %394 : vector<256x1xf32> to vector<256x48xf32>
    %396 = arith.subf %392, %395 : vector<256x48xf32>
    %397 = math.exp %396 : vector<256x48xf32>
    %398 = arith.truncf %397 : vector<256x48xf32> to vector<256x48xbf16>
    %399 = arith.truncf %4 : vector<48x48xf32> to vector<48x48xbf16>
    %cst_177 = arith.constant dense<0.000000e+00> : vector<256x48xf32>
    %400 = tpu.matmul %398, %399, %cst_177 {dimension_numbers = #tpu.dot_dimension_numbers<[1], [0], [0], [1], [0, 0, 1, 1], [], []>} : vector<256x48xbf16>, vector<48x48xbf16>, vector<256x48xf32> -> vector<256x48xf32>
    %cst_178 = arith.constant 1.000000e-30 : f32
    %401 = vector.broadcast %cst_178 : f32 to vector<256x48xf32>
    %402 = arith.maximumf %400, %401 : vector<256x48xf32>
    %403 = tpu.reciprocal %402 {approx = true} : vector<256x48xf32> -> vector<256x48xf32>
    %404 = arith.mulf %397, %403 : vector<256x48xf32>
    %405 = vector.extract_strided_slice %404 {offsets = [0, 0], sizes = [64, 48], strides = [1, 1]} : vector<256x48xf32> to vector<64x48xf32>
    %406 = arith.truncf %405 : vector<64x48xf32> to vector<64x48xbf16>
    %407 = arith.truncf %341 : vector<48x48xf32> to vector<48x48xbf16>
    %cst_179 = arith.constant dense<0.000000e+00> : vector<64x48xf32>
    %408 = tpu.matmul %406, %407, %cst_179 {dimension_numbers = #tpu.dot_dimension_numbers<[1], [0], [0], [1], [0, 0, 1, 1], [], []>} : vector<64x48xbf16>, vector<48x48xbf16>, vector<64x48xf32> -> vector<64x48xf32>
    %409 = vector.extract_strided_slice %404 {offsets = [64, 0], sizes = [64, 48], strides = [1, 1]} : vector<256x48xf32> to vector<64x48xf32>
    %410 = arith.truncf %409 : vector<64x48xf32> to vector<64x48xbf16>
    %411 = arith.truncf %356 : vector<48x48xf32> to vector<48x48xbf16>
    %cst_180 = arith.constant dense<0.000000e+00> : vector<64x48xf32>
    %412 = tpu.matmul %410, %411, %cst_180 {dimension_numbers = #tpu.dot_dimension_numbers<[1], [0], [0], [1], [0, 0, 1, 1], [], []>} : vector<64x48xbf16>, vector<48x48xbf16>, vector<64x48xf32> -> vector<64x48xf32>
    %413 = vector.extract_strided_slice %404 {offsets = [128, 0], sizes = [64, 48], strides = [1, 1]} : vector<256x48xf32> to vector<64x48xf32>
    %414 = arith.truncf %413 : vector<64x48xf32> to vector<64x48xbf16>
    %415 = arith.truncf %371 : vector<48x48xf32> to vector<48x48xbf16>
    %cst_181 = arith.constant dense<0.000000e+00> : vector<64x48xf32>
    %416 = tpu.matmul %414, %415, %cst_181 {dimension_numbers = #tpu.dot_dimension_numbers<[1], [0], [0], [1], [0, 0, 1, 1], [], []>} : vector<64x48xbf16>, vector<48x48xbf16>, vector<64x48xf32> -> vector<64x48xf32>
    %417 = vector.extract_strided_slice %404 {offsets = [192, 0], sizes = [64, 48], strides = [1, 1]} : vector<256x48xf32> to vector<64x48xf32>
    %418 = arith.truncf %417 : vector<64x48xf32> to vector<64x48xbf16>
    %419 = arith.truncf %386 : vector<48x48xf32> to vector<48x48xbf16>
    %cst_182 = arith.constant dense<0.000000e+00> : vector<64x48xf32>
    %420 = tpu.matmul %418, %419, %cst_182 {dimension_numbers = #tpu.dot_dimension_numbers<[1], [0], [0], [1], [0, 0, 1, 1], [], []>} : vector<64x48xbf16>, vector<48x48xbf16>, vector<64x48xf32> -> vector<64x48xf32>
    %421 = tpu.concatenate %408, %412, %416, %420 in 0 : vector<64x48xf32>, vector<64x48xf32>, vector<64x48xf32>, vector<64x48xf32> -> vector<256x48xf32>
    %c1_183 = arith.constant 1 : index
    %c0_184 = arith.constant 0 : index
    %c0_185 = arith.constant 0 : index
    %422 = vector.load %arg7[%c1_183, %c0_184, %c0_185] : memref<2x48x48xf32, #tpu.memory_space<vmem>>, vector<1x48x48xf32>
    %423 = vector.shape_cast %422 : vector<1x48x48xf32> to vector<48x48xf32>
    %424 = arith.truncf %421 : vector<256x48xf32> to vector<256x48xbf16>
    %425 = arith.truncf %423 : vector<48x48xf32> to vector<48x48xbf16>
    %cst_186 = arith.constant dense<0.000000e+00> : vector<256x48xf32>
    %426 = tpu.matmul %424, %425, %cst_186 {dimension_numbers = #tpu.dot_dimension_numbers<[1], [0], [0], [1], [0, 0, 1, 1], [], []>} : vector<256x48xbf16>, vector<48x48xbf16>, vector<256x48xf32> -> vector<256x48xf32>
    %427 = arith.addf %302, %426 : vector<256x48xf32>
    %c11 = arith.constant 11 : index
    %c0_187 = arith.constant 0 : index
    %428 = vector.load %arg17[%c11, %c0_187] : memref<18x128xf32, #tpu.memory_space<vmem>>, vector<1x48xf32>
    %429 = vector.broadcast %428 : vector<1x48xf32> to vector<256x48xf32>
    %430 = arith.addf %427, %429 : vector<256x48xf32>
    %c12 = arith.constant 12 : index
    %c0_188 = arith.constant 0 : index
    %431 = vector.load %arg17[%c12, %c0_188] : memref<18x128xf32, #tpu.memory_space<vmem>>, vector<1x48xf32>
    %c13 = arith.constant 13 : index
    %c0_189 = arith.constant 0 : index
    %432 = vector.load %arg17[%c13, %c0_189] : memref<18x128xf32, #tpu.memory_space<vmem>>, vector<1x48xf32>
    %cst_190 = arith.constant dense<0.000000e+00> : vector<256xf32>
    %433 = vector.multi_reduction <add>, %430, %cst_190 [1] : vector<256x48xf32> to vector<256xf32>
    %434 = vector.shape_cast %433 : vector<256xf32> to vector<256x1xf32>
    %cst_191 = arith.constant 4.800000e+01 : f32
    %435 = vector.broadcast %cst_191 : f32 to vector<256x1xf32>
    %436 = arith.divf %434, %435 : vector<256x1xf32>
    %437 = vector.broadcast %436 : vector<256x1xf32> to vector<256x48xf32>
    %438 = arith.subf %430, %437 : vector<256x48xf32>
    %439 = arith.mulf %438, %438 : vector<256x48xf32>
    %cst_192 = arith.constant dense<0.000000e+00> : vector<256xf32>
    %440 = vector.multi_reduction <add>, %439, %cst_192 [1] : vector<256x48xf32> to vector<256xf32>
    %441 = vector.shape_cast %440 : vector<256xf32> to vector<256x1xf32>
    %cst_193 = arith.constant 4.800000e+01 : f32
    %442 = vector.broadcast %cst_193 : f32 to vector<256x1xf32>
    %443 = arith.divf %441, %442 : vector<256x1xf32>
    %444 = vector.broadcast %436 : vector<256x1xf32> to vector<256x48xf32>
    %445 = arith.subf %430, %444 : vector<256x48xf32>
    %cst_194 = arith.constant 9.99999974E-6 : f32
    %446 = vector.broadcast %cst_194 : f32 to vector<256x1xf32>
    %447 = arith.addf %443, %446 : vector<256x1xf32>
    %448 = math.rsqrt %447 : vector<256x1xf32>
    %449 = vector.broadcast %448 : vector<256x1xf32> to vector<256x48xf32>
    %450 = arith.mulf %445, %449 : vector<256x48xf32>
    %451 = vector.broadcast %431 : vector<1x48xf32> to vector<256x48xf32>
    %452 = arith.mulf %450, %451 : vector<256x48xf32>
    %453 = vector.broadcast %432 : vector<1x48xf32> to vector<256x48xf32>
    %454 = arith.addf %452, %453 : vector<256x48xf32>
    %c1_195 = arith.constant 1 : index
    %c0_196 = arith.constant 0 : index
    %c0_197 = arith.constant 0 : index
    %455 = vector.load %arg8[%c1_195, %c0_196, %c0_197] : memref<2x48x96xf32, #tpu.memory_space<vmem>>, vector<1x48x96xf32>
    %456 = vector.shape_cast %455 : vector<1x48x96xf32> to vector<48x96xf32>
    %457 = arith.truncf %454 : vector<256x48xf32> to vector<256x48xbf16>
    %458 = arith.truncf %456 : vector<48x96xf32> to vector<48x96xbf16>
    %cst_198 = arith.constant dense<0.000000e+00> : vector<256x96xf32>
    %459 = tpu.matmul %457, %458, %cst_198 {dimension_numbers = #tpu.dot_dimension_numbers<[1], [0], [0], [1], [0, 0, 1, 1], [], []>} : vector<256x48xbf16>, vector<48x96xbf16>, vector<256x96xf32> -> vector<256x96xf32>
    %c14 = arith.constant 14 : index
    %c0_199 = arith.constant 0 : index
    %460 = vector.load %arg17[%c14, %c0_199] : memref<18x128xf32, #tpu.memory_space<vmem>>, vector<1x96xf32>
    %461 = vector.broadcast %460 : vector<1x96xf32> to vector<256x96xf32>
    %462 = arith.addf %459, %461 : vector<256x96xf32>
    %cst_200 = arith.constant 5.000000e-01 : f32
    %463 = vector.broadcast %cst_200 : f32 to vector<256x96xf32>
    %464 = arith.mulf %463, %462 : vector<256x96xf32>
    %cst_201 = arith.constant 4.471500e-02 : f32
    %465 = vector.broadcast %cst_201 : f32 to vector<256x96xf32>
    %466 = arith.mulf %465, %462 : vector<256x96xf32>
    %467 = arith.mulf %466, %462 : vector<256x96xf32>
    %468 = arith.mulf %467, %462 : vector<256x96xf32>
    %469 = arith.addf %462, %468 : vector<256x96xf32>
    %cst_202 = arith.constant 0.797884583 : f32
    %470 = vector.broadcast %cst_202 : f32 to vector<256x96xf32>
    %471 = arith.mulf %470, %469 : vector<256x96xf32>
    %472 = math.tanh %471 : vector<256x96xf32>
    %cst_203 = arith.constant 1.000000e+00 : f32
    %473 = vector.broadcast %cst_203 : f32 to vector<256x96xf32>
    %474 = arith.addf %473, %472 : vector<256x96xf32>
    %475 = arith.mulf %464, %474 : vector<256x96xf32>
    %c1_204 = arith.constant 1 : index
    %c0_205 = arith.constant 0 : index
    %c0_206 = arith.constant 0 : index
    %476 = vector.load %arg9[%c1_204, %c0_205, %c0_206] : memref<2x96x48xf32, #tpu.memory_space<vmem>>, vector<1x96x48xf32>
    %477 = vector.shape_cast %476 : vector<1x96x48xf32> to vector<96x48xf32>
    %478 = arith.truncf %475 : vector<256x96xf32> to vector<256x96xbf16>
    %479 = arith.truncf %477 : vector<96x48xf32> to vector<96x48xbf16>
    %cst_207 = arith.constant dense<0.000000e+00> : vector<256x48xf32>
    %480 = tpu.matmul %478, %479, %cst_207 {dimension_numbers = #tpu.dot_dimension_numbers<[1], [0], [0], [1], [0, 0, 1, 1], [], []>} : vector<256x96xbf16>, vector<96x48xbf16>, vector<256x48xf32> -> vector<256x48xf32>
    %481 = arith.addf %430, %480 : vector<256x48xf32>
    %c15 = arith.constant 15 : index
    %c0_208 = arith.constant 0 : index
    %482 = vector.load %arg17[%c15, %c0_208] : memref<18x128xf32, #tpu.memory_space<vmem>>, vector<1x48xf32>
    %483 = vector.broadcast %482 : vector<1x48xf32> to vector<256x48xf32>
    %484 = arith.addf %481, %483 : vector<256x48xf32>
    %c0_209 = arith.constant 0 : index
    %c0_210 = arith.constant 0 : index
    %485 = vector.load %arg10[%c0_209, %c0_210] : memref<48x48xf32, #tpu.memory_space<vmem>>, vector<48x48xf32>
    %486 = arith.truncf %484 : vector<256x48xf32> to vector<256x48xbf16>
    %487 = arith.truncf %485 : vector<48x48xf32> to vector<48x48xbf16>
    %cst_211 = arith.constant dense<0.000000e+00> : vector<256x48xf32>
    %488 = tpu.matmul %486, %487, %cst_211 {dimension_numbers = #tpu.dot_dimension_numbers<[1], [0], [0], [1], [0, 0, 1, 1], [], []>} : vector<256x48xbf16>, vector<48x48xbf16>, vector<256x48xf32> -> vector<256x48xf32>
    %c16 = arith.constant 16 : index
    %c0_212 = arith.constant 0 : index
    %489 = vector.load %arg17[%c16, %c0_212] : memref<18x128xf32, #tpu.memory_space<vmem>>, vector<1x48xf32>
    %490 = vector.broadcast %489 : vector<1x48xf32> to vector<256x48xf32>
    %491 = arith.addf %488, %490 : vector<256x48xf32>
    %cst_213 = arith.constant 5.000000e-01 : f32
    %492 = vector.broadcast %cst_213 : f32 to vector<256x48xf32>
    %493 = arith.mulf %492, %491 : vector<256x48xf32>
    %cst_214 = arith.constant 4.471500e-02 : f32
    %494 = vector.broadcast %cst_214 : f32 to vector<256x48xf32>
    %495 = arith.mulf %494, %491 : vector<256x48xf32>
    %496 = arith.mulf %495, %491 : vector<256x48xf32>
    %497 = arith.mulf %496, %491 : vector<256x48xf32>
    %498 = arith.addf %491, %497 : vector<256x48xf32>
    %cst_215 = arith.constant 0.797884583 : f32
    %499 = vector.broadcast %cst_215 : f32 to vector<256x48xf32>
    %500 = arith.mulf %499, %498 : vector<256x48xf32>
    %501 = math.tanh %500 : vector<256x48xf32>
    %cst_216 = arith.constant 1.000000e+00 : f32
    %502 = vector.broadcast %cst_216 : f32 to vector<256x48xf32>
    %503 = arith.addf %502, %501 : vector<256x48xf32>
    %504 = arith.mulf %493, %503 : vector<256x48xf32>
    %c0_217 = arith.constant 0 : index
    %c0_218 = arith.constant 0 : index
    %505 = vector.load %arg11[%c0_217, %c0_218] : memref<48x48xf32, #tpu.memory_space<vmem>>, vector<48x48xf32>
    %506 = arith.truncf %504 : vector<256x48xf32> to vector<256x48xbf16>
    %507 = arith.truncf %505 : vector<48x48xf32> to vector<48x48xbf16>
    %cst_219 = arith.constant dense<0.000000e+00> : vector<256x48xf32>
    %508 = tpu.matmul %506, %507, %cst_219 {dimension_numbers = #tpu.dot_dimension_numbers<[1], [0], [0], [1], [0, 0, 1, 1], [], []>} : vector<256x48xbf16>, vector<48x48xbf16>, vector<256x48xf32> -> vector<256x48xf32>
    %c17 = arith.constant 17 : index
    %c0_220 = arith.constant 0 : index
    %509 = vector.load %arg17[%c17, %c0_220] : memref<18x128xf32, #tpu.memory_space<vmem>>, vector<1x48xf32>
    %510 = vector.broadcast %509 : vector<1x48xf32> to vector<256x48xf32>
    %511 = arith.addf %508, %510 : vector<256x48xf32>
    %cst_221 = arith.constant 5.000000e-01 : f32
    %512 = vector.broadcast %cst_221 : f32 to vector<256x48xf32>
    %513 = arith.mulf %512, %511 : vector<256x48xf32>
    %cst_222 = arith.constant 4.471500e-02 : f32
    %514 = vector.broadcast %cst_222 : f32 to vector<256x48xf32>
    %515 = arith.mulf %514, %511 : vector<256x48xf32>
    %516 = arith.mulf %515, %511 : vector<256x48xf32>
    %517 = arith.mulf %516, %511 : vector<256x48xf32>
    %518 = arith.addf %511, %517 : vector<256x48xf32>
    %cst_223 = arith.constant 0.797884583 : f32
    %519 = vector.broadcast %cst_223 : f32 to vector<256x48xf32>
    %520 = arith.mulf %519, %518 : vector<256x48xf32>
    %521 = math.tanh %520 : vector<256x48xf32>
    %cst_224 = arith.constant 1.000000e+00 : f32
    %522 = vector.broadcast %cst_224 : f32 to vector<256x48xf32>
    %523 = arith.addf %522, %521 : vector<256x48xf32>
    %524 = arith.mulf %513, %523 : vector<256x48xf32>
    %c0_225 = arith.constant 0 : index
    %c0_226 = arith.constant 0 : index
    %525 = vector.load %arg12[%c0_225, %c0_226] : memref<3x48xf32, #tpu.memory_space<vmem>>, vector<3x48xf32>
    %526 = arith.truncf %525 : vector<3x48xf32> to vector<3x48xbf16>
    %527 = arith.truncf %524 : vector<256x48xf32> to vector<256x48xbf16>
    %cst_227 = arith.constant dense<0.000000e+00> : vector<3x256xf32>
    %528 = tpu.matmul %526, %527, %cst_227 {dimension_numbers = #tpu.dot_dimension_numbers<[1], [1], [0], [0], [0, 0, 1, 0], [], []>} : vector<3x48xbf16>, vector<256x48xbf16>, vector<3x256xf32> -> vector<3x256xf32>
    %c0_228 = arith.constant 0 : index
    %c0_229 = arith.constant 0 : index
    %529 = vector.load %arg13[%c0_228, %c0_229] : memref<3x1xf32, #tpu.memory_space<vmem>>, vector<3x1xf32>
    %530 = vector.broadcast %529 : vector<3x1xf32> to vector<3x256xf32>
    %531 = arith.addf %528, %530 : vector<3x256xf32>
    %c0_230 = arith.constant 0 : index
    %c0_231 = arith.constant 0 : index
    %c0_232 = arith.constant 0 : index
    %532 = vector.load %arg18[%c0_230, %c0_231, %c0_232] : memref<1x3x256xf32, #tpu.memory_space<vmem>>, vector<1x3x256xf32>
    %533 = vector.shape_cast %532 : vector<1x3x256xf32> to vector<3x256xf32>
    %534 = vector.shape_cast %531 : vector<3x256xf32> to vector<1x3x256xf32>
    tpu.vector_store %arg18[%c0_230, %c0_231, %c0_232], %534 {strides = array<i32>} : memref<1x3x256xf32, #tpu.memory_space<vmem>>, vector<1x3x256xf32>,
    return
  }
  func.func @transform_0(%arg0: i32) -> (i32, i32, i32) {
    %c0_i32 = arith.constant 0 : i32
    %c0_i32_0 = arith.constant 0 : i32
    %c0_i32_1 = arith.constant 0 : i32
    return %arg0, %c0_i32, %c0_i32_0 : i32, i32, i32
  }
  func.func @transform_1(%arg0: i32) -> (i32, i32) {
    %c0_i32 = arith.constant 0 : i32
    %c0_i32_0 = arith.constant 0 : i32
    %c0_i32_1 = arith.constant 0 : i32
    return %c0_i32, %c0_i32_0 : i32, i32
  }
  func.func @transform_2(%arg0: i32) -> (i32, i32) {
    %c0_i32 = arith.constant 0 : i32
    %c0_i32_0 = arith.constant 0 : i32
    %c0_i32_1 = arith.constant 0 : i32
    return %c0_i32, %c0_i32_0 : i32, i32
  }
  func.func @transform_3(%arg0: i32) -> (i32, i32) {
    %c0_i32 = arith.constant 0 : i32
    %c0_i32_0 = arith.constant 0 : i32
    %c0_i32_1 = arith.constant 0 : i32
    return %c0_i32, %c0_i32_0 : i32, i32
  }
  func.func @transform_4(%arg0: i32) -> (i32, i32, i32) {
    %c0_i32 = arith.constant 0 : i32
    %c0_i32_0 = arith.constant 0 : i32
    %c0_i32_1 = arith.constant 0 : i32
    %c0_i32_2 = arith.constant 0 : i32
    return %c0_i32, %c0_i32_0, %c0_i32_1 : i32, i32, i32
  }
  func.func @transform_5(%arg0: i32) -> (i32, i32, i32) {
    %c0_i32 = arith.constant 0 : i32
    %c0_i32_0 = arith.constant 0 : i32
    %c0_i32_1 = arith.constant 0 : i32
    %c0_i32_2 = arith.constant 0 : i32
    return %c0_i32, %c0_i32_0, %c0_i32_1 : i32, i32, i32
  }
  func.func @transform_6(%arg0: i32) -> (i32, i32, i32) {
    %c0_i32 = arith.constant 0 : i32
    %c0_i32_0 = arith.constant 0 : i32
    %c0_i32_1 = arith.constant 0 : i32
    %c0_i32_2 = arith.constant 0 : i32
    return %c0_i32, %c0_i32_0, %c0_i32_1 : i32, i32, i32
  }
  func.func @transform_7(%arg0: i32) -> (i32, i32, i32) {
    %c0_i32 = arith.constant 0 : i32
    %c0_i32_0 = arith.constant 0 : i32
    %c0_i32_1 = arith.constant 0 : i32
    %c0_i32_2 = arith.constant 0 : i32
    return %c0_i32, %c0_i32_0, %c0_i32_1 : i32, i32, i32
  }
  func.func @transform_8(%arg0: i32) -> (i32, i32, i32) {
    %c0_i32 = arith.constant 0 : i32
    %c0_i32_0 = arith.constant 0 : i32
    %c0_i32_1 = arith.constant 0 : i32
    %c0_i32_2 = arith.constant 0 : i32
    return %c0_i32, %c0_i32_0, %c0_i32_1 : i32, i32, i32
  }
  func.func @transform_9(%arg0: i32) -> (i32, i32) {
    %c0_i32 = arith.constant 0 : i32
    %c0_i32_0 = arith.constant 0 : i32
    %c0_i32_1 = arith.constant 0 : i32
    return %c0_i32, %c0_i32_0 : i32, i32
  }
  func.func @transform_10(%arg0: i32) -> (i32, i32) {
    %c0_i32 = arith.constant 0 : i32
    %c0_i32_0 = arith.constant 0 : i32
    %c0_i32_1 = arith.constant 0 : i32
    return %c0_i32, %c0_i32_0 : i32, i32
  }
  func.func @transform_11(%arg0: i32) -> (i32, i32) {
    %c0_i32 = arith.constant 0 : i32
    %c0_i32_0 = arith.constant 0 : i32
    %c0_i32_1 = arith.constant 0 : i32
    return %c0_i32, %c0_i32_0 : i32, i32
  }
  func.func @transform_12(%arg0: i32) -> (i32, i32) {
    %c0_i32 = arith.constant 0 : i32
    %c0_i32_0 = arith.constant 0 : i32
    %c0_i32_1 = arith.constant 0 : i32
    return %c0_i32, %c0_i32_0 : i32, i32
  }
  func.func @transform_13(%arg0: i32) -> (i32, i32) {
    %c0_i32 = arith.constant 0 : i32
    %c0_i32_0 = arith.constant 0 : i32
    %c0_i32_1 = arith.constant 0 : i32
    return %c0_i32, %c0_i32_0 : i32, i32
  }
  func.func @transform_14(%arg0: i32) -> (i32, i32) {
    %c0_i32 = arith.constant 0 : i32
    %c0_i32_0 = arith.constant 0 : i32
    %c0_i32_1 = arith.constant 0 : i32
    return %c0_i32, %c0_i32_0 : i32, i32
  }
  func.func @transform_15(%arg0: i32) -> (i32, i32) {
    %c0_i32 = arith.constant 0 : i32
    %c0_i32_0 = arith.constant 0 : i32
    %c0_i32_1 = arith.constant 0 : i32
    return %c0_i32, %c0_i32_0 : i32, i32
  }
  func.func @transform_16(%arg0: i32) -> (i32, i32) {
    %c0_i32 = arith.constant 0 : i32
    %c0_i32_0 = arith.constant 0 : i32
    %c0_i32_1 = arith.constant 0 : i32
    return %c0_i32, %c0_i32_0 : i32, i32
  }
  func.func @transform_17(%arg0: i32) -> (i32, i32, i32) {
    %c0_i32 = arith.constant 0 : i32
    %c0_i32_0 = arith.constant 0 : i32
    %c0_i32_1 = arith.constant 0 : i32
    return %arg0, %c0_i32, %c0_i32_0 : i32, i32, i32
  }
}

</mosaic_0001>

<llo_original>
// kernel: tpu_custom_call.1
$region0: #{tpu_custom_call.1}
  #allocation0 [shape = 'u32[]', space=smem, size = 0x4, offset = 0x4, fixed_abs, tag = 'smem constant byte address 0x4 - core index']
  #allocation1 [shape = 'u32[144,128]{1,0:T(1,128)}', space=vmem, size = 0x12000, scoped, tag = 'internal scratch']
  %s0 = inlined_call_operand.hbm [shape: f32[8,4,32], index: 0, kind: input, shape index: {}]
  %s1 = inlined_call_operand.vmem [shape: f32[64,48], index: 1, kind: input, shape index: {}]
  %s2 = inlined_call_operand.hbm [shape: f32[32,128], index: 2, kind: input, shape index: {}]
  %s3 = inlined_call_operand.vmem [shape: f32[128,32], index: 3, kind: input, shape index: {}]
  %s4 = inlined_call_operand.vmem [shape: f32[2,48,48], index: 4, kind: input, shape index: {}]
  %s5 = inlined_call_operand.vmem [shape: f32[2,32,96], index: 5, kind: input, shape index: {}]
  %s6 = inlined_call_operand.vmem [shape: f32[2,48,48], index: 6, kind: input, shape index: {}]
  %s7 = inlined_call_operand.vmem [shape: f32[2,48,96], index: 7, kind: input, shape index: {}]
  %s8 = inlined_call_operand.vmem [shape: f32[2,96,48], index: 8, kind: input, shape index: {}]
  %s9 = inlined_call_operand.vmem [shape: f32[48,48], index: 9, kind: input, shape index: {}]
  %s10 = inlined_call_operand.vmem [shape: f32[48,48], index: 10, kind: input, shape index: {}]
  %s11 = inlined_call_operand.hbm [shape: f32[3,48], index: 11, kind: input, shape index: {}]
  %s12 = inlined_call_operand.vmem [shape: f32[3,1], index: 12, kind: input, shape index: {}]
  %s13 = inlined_call_operand.vmem [shape: f32[48,4], index: 13, kind: input, shape index: {}]
  %s14 = inlined_call_operand.vmem [shape: f32[48,96], index: 14, kind: input, shape index: {}]
  %s15 = inlined_call_operand.vmem [shape: f32[48,48], index: 15, kind: input, shape index: {}]
  %s16 = inlined_call_operand.vmem [shape: f32[18,128], index: 16, kind: input, shape index: {}]
  %s17 = inlined_call_operand.vmem [shape: f32[2,3,256], index: 17, kind: output, shape index: {}]
  %s18 = sld [smem:[#allocation0]]
  $region113: #{tpu_custom_call.1} parent=0
    _
  %s20 = ssub.s32 1, %s18
  %s21 = scalar_select 0, %s20, %s18
  $region1: #{tpu_custom_call.1} parent=0
    #allocation2 [shape = 'u8[16384]{0}', space=vmem, size = 0x4000, scoped, tag = 'input window, operand 0']
    #allocation3 [shape = 's32[2]{0}', space=sflag, size = 0x8, scoped, tag = 'scoped memory for tpu_custom_call.1']
    #allocation4 [shape = 'u8[16384]{0}', space=vmem, size = 0x4000, scoped, tag = 'input window, operand 2, single buffered']
    #allocation5 [shape = 's32[1]{0}', space=sflag, size = 0x4, scoped, tag = 'scoped memory for tpu_custom_call.1']
    #allocation6 [shape = 'u8[2048]{0}', space=vmem, size = 0x800, scoped, tag = 'input window, operand 11, single buffered']
    %22 = vsyncpa [#allocation3], 0
    %s23 = scalar_lea.sflag [#allocation3], 1
    %24 = vsyncpa %s23, 0
    %25 = vsyncpa [#allocation5], 0
    loop: start=0, step=1, limit=4
    $region2: #{tpu_custom_call.1} parent=1 // loop_pre_header
      _
    $region3: #{tpu_custom_call.1} parent=1 // loop_header
      %s27 = sphi 0, %s31
      %p28 = scmp.ge.s32.totalorder %s27, 4
      %s37 = sphi 0, %s39
      %s40 = sphi 0, %s37
      %s41 = sphi 0, %s40
      %s57 = sphi 0, %s41
      %s61 = sphi 0, %s61
      %s63 = sphi 0, %s61
      %s64 = sphi 0, %s63
      %s78 = sphi 0, %s64
      %s82 = sphi 0, %s82
      %s84 = sphi 0, %s82
      %s85 = sphi 0, %s84
      %s99 = sphi 0, %s85
      %s103 = sphi 0, %s103
      %s105 = sphi 0, %s103
      %s106 = sphi 0, %s105
      %s120 = sphi 0, %s106
      %s124 = sphi 0, %s124
      %s126 = sphi 0, %s124
      %s127 = sphi 0, %s126
      %s141 = sphi 0, %s127
      %s145 = sphi 0, %s145
      %s147 = sphi 0, %s145
      %s148 = sphi 0, %s147
      %s162 = sphi 0, %s148
      %s166 = sphi 0, %s166
      %s168 = sphi 0, %s166
      %s169 = sphi 0, %s168
      %s183 = sphi 0, %s169
      %s187 = sphi 0, %s187
      %s189 = sphi 0, %s187
      %s190 = sphi 0, %s189
      %s204 = sphi 0, %s190
      %s208 = sphi 0, %s208
      %s210 = sphi 0, %s208
      %s211 = sphi 0, %s210
      %s225 = sphi 0, %s211
      %s229 = sphi 0, %s229
      %s231 = sphi 0, %s229
      %s232 = sphi 0, %s231
      %s246 = sphi 0, %s232
      %s250 = sphi 0, %s250
      %s252 = sphi 0, %s250
      %s253 = sphi 0, %s252
      %s267 = sphi 0, %s253
      %s271 = sphi 0, %s271
      %s273 = sphi 0, %s271
      %s274 = sphi 0, %s273
      %s288 = sphi 0, %s274
      %s292 = sphi 0, %s292
      %s294 = sphi 0, %s292
      %s295 = sphi 0, %s294
      %s309 = sphi 0, %s295
      %s313 = sphi 0, %s313
      %s315 = sphi 0, %s313
      %s316 = sphi 0, %s315
      %s330 = sphi 0, %s316
      %s334 = sphi 0, %s334
      %s336 = sphi 0, %s334
      %s337 = sphi 0, %s336
      %s351 = sphi 0, %s337
      %s355 = sphi 0, %s355
      %s357 = sphi 0, %s355
      %s358 = sphi 0, %s357
      %s372 = sphi 0, %s358
      %s376 = sphi 0, %s376
      %s378 = sphi 0, %s376
      %s379 = sphi 0, %s378
      %s393 = sphi 0, %s379
      %s399 = sphi 0, %s401
      %s402 = sphi 0, %s399
      %s403 = sphi 0, %s402
      %s419 = sphi 0, %s403
    $region4: #{tpu_custom_call.1} parent=1 // loop_header_branch
      %30 = sbr.rel (%p28) target = $region8
    $region5: #{tpu_custom_call.1} parent=1 // loop_body
      %s32 = ssub.s32 %s27, 1
      %s33 = ssub.s32 %s27, 2
      %s34 = sadd.s32 %s27, 1
      %s35 = ssub.s32 %s27, %s34
      %p36 = scmp.eq.s32.totalorder %s35, 0
      %s38 = sadd.s32 %s37, 1
      %s39 = scalar_select %p36, %s37, %s38
      %p42 = pneg %p36
      %p43 = scmp.eq.s32.totalorder %s27, 1
      %p44 = por %p42, %p43
      %p45 = scmp.ne.s32.totalorder %s37, %s40
      %p46 = scmp.eq.s32.totalorder %s27, 0
      %p47 = por %p45, %p46
      %p48 = scmp.ne.s32.totalorder %s37, %s40
      %p49 = scmp.eq.s32.totalorder %s32, 1
      %p50 = por %p48, %p49
      %p51 = scmp.ne.s32.totalorder %s40, %s41
      %p52 = scmp.eq.s32.totalorder %s32, 0
      %p53 = por %p51, %p52
      %p54 = scmp.ne.s32.totalorder %s40, %s41
      %p55 = scmp.eq.s32.totalorder %s33, 1
      %p56 = por %p54, %p55
      %p58 = scmp.ne.s32.totalorder %s41, %s57
      %p59 = scmp.eq.s32.totalorder %s33, 0
      %p60 = por %p58, %p59
      %s62 = sadd.s32 %s61, 1
      %p65 = scmp.eq.s32.totalorder %s27, 1
      %p66 = scmp.ne.s32.totalorder %s61, %s63
      %p67 = scmp.eq.s32.totalorder %s27, 0
      %p68 = por %p66, %p67
      %p69 = scmp.ne.s32.totalorder %s61, %s63
      %p70 = scmp.eq.s32.totalorder %s32, 1
      %p71 = por %p69, %p70
      %p72 = scmp.ne.s32.totalorder %s63, %s64
      %p73 = scmp.eq.s32.totalorder %s32, 0
      %p74 = por %p72, %p73
      %p75 = scmp.ne.s32.totalorder %s63, %s64
      %p76 = scmp.eq.s32.totalorder %s33, 1
      %p77 = por %p75, %p76
      %p79 = scmp.ne.s32.totalorder %s64, %s78
      %p80 = scmp.eq.s32.totalorder %s33, 0
      %p81 = por %p79, %p80
      %s83 = sadd.s32 %s82, 1
      %p86 = scmp.eq.s32.totalorder %s27, 1
      %p87 = scmp.ne.s32.totalorder %s82, %s84
      %p88 = scmp.eq.s32.totalorder %s27, 0
      %p89 = por %p87, %p88
      %p90 = scmp.ne.s32.totalorder %s82, %s84
      %p91 = scmp.eq.s32.totalorder %s32, 1
      %p92 = por %p90, %p91
      %p93 = scmp.ne.s32.totalorder %s84, %s85
      %p94 = scmp.eq.s32.totalorder %s32, 0
      %p95 = por %p93, %p94
      %p96 = scmp.ne.s32.totalorder %s84, %s85
      %p97 = scmp.eq.s32.totalorder %s33, 1
      %p98 = por %p96, %p97
      %p100 = scmp.ne.s32.totalorder %s85, %s99
      %p101 = scmp.eq.s32.totalorder %s33, 0
      %p102 = por %p100, %p101
      %s104 = sadd.s32 %s103, 1
      %p107 = scmp.eq.s32.totalorder %s27, 1
      %p108 = scmp.ne.s32.totalorder %s103, %s105
      %p109 = scmp.eq.s32.totalorder %s27, 0
      %p110 = por %p108, %p109
      %p111 = scmp.ne.s32.totalorder %s103, %s105
      %p112 = scmp.eq.s32.totalorder %s32, 1
      %p113 = por %p111, %p112
      %p114 = scmp.ne.s32.totalorder %s105, %s106
      %p115 = scmp.eq.s32.totalorder %s32, 0
      %p116 = por %p114, %p115
      %p117 = scmp.ne.s32.totalorder %s105, %s106
      %p118 = scmp.eq.s32.totalorder %s33, 1
      %p119 = por %p117, %p118
      %p121 = scmp.ne.s32.totalorder %s106, %s120
      %p122 = scmp.eq.s32.totalorder %s33, 0
      %p123 = por %p121, %p122
      %s125 = sadd.s32 %s124, 1
      %p128 = scmp.eq.s32.totalorder %s27, 1
      %p129 = scmp.ne.s32.totalorder %s124, %s126
      %p130 = scmp.eq.s32.totalorder %s27, 0
      %p131 = por %p129, %p130
      %p132 = scmp.ne.s32.totalorder %s124, %s126
      %p133 = scmp.eq.s32.totalorder %s32, 1
      %p134 = por %p132, %p133
      %p135 = scmp.ne.s32.totalorder %s126, %s127
      %p136 = scmp.eq.s32.totalorder %s32, 0
      %p137 = por %p135, %p136
      %p138 = scmp.ne.s32.totalorder %s126, %s127
      %p139 = scmp.eq.s32.totalorder %s33, 1
      %p140 = por %p138, %p139
      %p142 = scmp.ne.s32.totalorder %s127, %s141
      %p143 = scmp.eq.s32.totalorder %s33, 0
      %p144 = por %p142, %p143
      %s146 = sadd.s32 %s145, 1
      %p149 = scmp.eq.s32.totalorder %s27, 1
      %p150 = scmp.ne.s32.totalorder %s145, %s147
      %p151 = scmp.eq.s32.totalorder %s27, 0
      %p152 = por %p150, %p151
      %p153 = scmp.ne.s32.totalorder %s145, %s147
      %p154 = scmp.eq.s32.totalorder %s32, 1
      %p155 = por %p153, %p154
      %p156 = scmp.ne.s32.totalorder %s147, %s148
      %p157 = scmp.eq.s32.totalorder %s32, 0
      %p158 = por %p156, %p157
      %p159 = scmp.ne.s32.totalorder %s147, %s148
      %p160 = scmp.eq.s32.totalorder %s33, 1
      %p161 = por %p159, %p160
      %p163 = scmp.ne.s32.totalorder %s148, %s162
      %p164 = scmp.eq.s32.totalorder %s33, 0
      %p165 = por %p163, %p164
      %s167 = sadd.s32 %s166, 1
      %p170 = scmp.eq.s32.totalorder %s27, 1
      %p171 = scmp.ne.s32.totalorder %s166, %s168
      %p172 = scmp.eq.s32.totalorder %s27, 0
      %p173 = por %p171, %p172
      %p174 = scmp.ne.s32.totalorder %s166, %s168
      %p175 = scmp.eq.s32.totalorder %s32, 1
      %p176 = por %p174, %p175
      %p177 = scmp.ne.s32.totalorder %s168, %s169
      %p178 = scmp.eq.s32.totalorder %s32, 0
      %p179 = por %p177, %p178
      %p180 = scmp.ne.s32.totalorder %s168, %s169
      %p181 = scmp.eq.s32.totalorder %s33, 1
      %p182 = por %p180, %p181
      %p184 = scmp.ne.s32.totalorder %s169, %s183
      %p185 = scmp.eq.s32.totalorder %s33, 0
      %p186 = por %p184, %p185
      %s188 = sadd.s32 %s187, 1
      %p191 = scmp.eq.s32.totalorder %s27, 1
      %p192 = scmp.ne.s32.totalorder %s187, %s189
      %p193 = scmp.eq.s32.totalorder %s27, 0
      %p194 = por %p192, %p193
      %p195 = scmp.ne.s32.totalorder %s187, %s189
      %p196 = scmp.eq.s32.totalorder %s32, 1
      %p197 = por %p195, %p196
      %p198 = scmp.ne.s32.totalorder %s189, %s190
      %p199 = scmp.eq.s32.totalorder %s32, 0
      %p200 = por %p198, %p199
      %p201 = scmp.ne.s32.totalorder %s189, %s190
      %p202 = scmp.eq.s32.totalorder %s33, 1
      %p203 = por %p201, %p202
      %p205 = scmp.ne.s32.totalorder %s190, %s204
      %p206 = scmp.eq.s32.totalorder %s33, 0
      %p207 = por %p205, %p206
      %s209 = sadd.s32 %s208, 1
      %p212 = scmp.eq.s32.totalorder %s27, 1
      %p213 = scmp.ne.s32.totalorder %s208, %s210
      %p214 = scmp.eq.s32.totalorder %s27, 0
      %p215 = por %p213, %p214
      %p216 = scmp.ne.s32.totalorder %s208, %s210
      %p217 = scmp.eq.s32.totalorder %s32, 1
      %p218 = por %p216, %p217
      %p219 = scmp.ne.s32.totalorder %s210, %s211
      %p220 = scmp.eq.s32.totalorder %s32, 0
      %p221 = por %p219, %p220
      %p222 = scmp.ne.s32.totalorder %s210, %s211
      %p223 = scmp.eq.s32.totalorder %s33, 1
      %p224 = por %p222, %p223
      %p226 = scmp.ne.s32.totalorder %s211, %s225
      %p227 = scmp.eq.s32.totalorder %s33, 0
      %p228 = por %p226, %p227
      %s230 = sadd.s32 %s229, 1
      %p233 = scmp.eq.s32.totalorder %s27, 1
      %p234 = scmp.ne.s32.totalorder %s229, %s231
      %p235 = scmp.eq.s32.totalorder %s27, 0
      %p236 = por %p234, %p235
      %p237 = scmp.ne.s32.totalorder %s229, %s231
      %p238 = scmp.eq.s32.totalorder %s32, 1
      %p239 = por %p237, %p238
      %p240 = scmp.ne.s32.totalorder %s231, %s232
      %p241 = scmp.eq.s32.totalorder %s32, 0
      %p242 = por %p240, %p241
      %p243 = scmp.ne.s32.totalorder %s231, %s232
      %p244 = scmp.eq.s32.totalorder %s33, 1
      %p245 = por %p243, %p244
      %p247 = scmp.ne.s32.totalorder %s232, %s246
      %p248 = scmp.eq.s32.totalorder %s33, 0
      %p249 = por %p247, %p248
      %s251 = sadd.s32 %s250, 1
      %p254 = scmp.eq.s32.totalorder %s27, 1
      %p255 = scmp.ne.s32.totalorder %s250, %s252
      %p256 = scmp.eq.s32.totalorder %s27, 0
      %p257 = por %p255, %p256
      %p258 = scmp.ne.s32.totalorder %s250, %s252
      %p259 = scmp.eq.s32.totalorder %s32, 1
      %p260 = por %p258, %p259
      %p261 = scmp.ne.s32.totalorder %s252, %s253
      %p262 = scmp.eq.s32.totalorder %s32, 0
      %p263 = por %p261, %p262
      %p264 = scmp.ne.s32.totalorder %s252, %s253
      %p265 = scmp.eq.s32.totalorder %s33, 1
      %p266 = por %p264, %p265
      %p268 = scmp.ne.s32.totalorder %s253, %s267
      %p269 = scmp.eq.s32.totalorder %s33, 0
      %p270 = por %p268, %p269
      %s272 = sadd.s32 %s271, 1
      %p275 = scmp.eq.s32.totalorder %s27, 1
      %p276 = scmp.ne.s32.totalorder %s271, %s273
      %p277 = scmp.eq.s32.totalorder %s27, 0
      %p278 = por %p276, %p277
      %p279 = scmp.ne.s32.totalorder %s271, %s273
      %p280 = scmp.eq.s32.totalorder %s32, 1
      %p281 = por %p279, %p280
      %p282 = scmp.ne.s32.totalorder %s273, %s274
      %p283 = scmp.eq.s32.totalorder %s32, 0
      %p284 = por %p282, %p283
      %p285 = scmp.ne.s32.totalorder %s273, %s274
      %p286 = scmp.eq.s32.totalorder %s33, 1
      %p287 = por %p285, %p286
      %p289 = scmp.ne.s32.totalorder %s274, %s288
      %p290 = scmp.eq.s32.totalorder %s33, 0
      %p291 = por %p289, %p290
      %s293 = sadd.s32 %s292, 1
      %p296 = scmp.eq.s32.totalorder %s27, 1
      %p297 = scmp.ne.s32.totalorder %s292, %s294
      %p298 = scmp.eq.s32.totalorder %s27, 0
      %p299 = por %p297, %p298
      %p300 = scmp.ne.s32.totalorder %s292, %s294
      %p301 = scmp.eq.s32.totalorder %s32, 1
      %p302 = por %p300, %p301
      %p303 = scmp.ne.s32.totalorder %s294, %s295
      %p304 = scmp.eq.s32.totalorder %s32, 0
      %p305 = por %p303, %p304
      %p306 = scmp.ne.s32.totalorder %s294, %s295
      %p307 = scmp.eq.s32.totalorder %s33, 1
      %p308 = por %p306, %p307
      %p310 = scmp.ne.s32.totalorder %s295, %s309
      %p311 = scmp.eq.s32.totalorder %s33, 0
      %p312 = por %p310, %p311
      %s314 = sadd.s32 %s313, 1
      %p317 = scmp.eq.s32.totalorder %s27, 1
      %p318 = scmp.ne.s32.totalorder %s313, %s315
      %p319 = scmp.eq.s32.totalorder %s27, 0
      %p320 = por %p318, %p319
      %p321 = scmp.ne.s32.totalorder %s313, %s315
      %p322 = scmp.eq.s32.totalorder %s32, 1
      %p323 = por %p321, %p322
      %p324 = scmp.ne.s32.totalorder %s315, %s316
      %p325 = scmp.eq.s32.totalorder %s32, 0
      %p326 = por %p324, %p325
      %p327 = scmp.ne.s32.totalorder %s315, %s316
      %p328 = scmp.eq.s32.totalorder %s33, 1
      %p329 = por %p327, %p328
      %p331 = scmp.ne.s32.totalorder %s316, %s330
      %p332 = scmp.eq.s32.totalorder %s33, 0
      %p333 = por %p331, %p332
      %s335 = sadd.s32 %s334, 1
      %p338 = scmp.eq.s32.totalorder %s27, 1
      %p339 = scmp.ne.s32.totalorder %s334, %s336
      %p340 = scmp.eq.s32.totalorder %s27, 0
      %p341 = por %p339, %p340
      %p342 = scmp.ne.s32.totalorder %s334, %s336
      %p343 = scmp.eq.s32.totalorder %s32, 1
      %p344 = por %p342, %p343
      %p345 = scmp.ne.s32.totalorder %s336, %s337
      %p346 = scmp.eq.s32.totalorder %s32, 0
      %p347 = por %p345, %p346
      %p348 = scmp.ne.s32.totalorder %s336, %s337
      %p349 = scmp.eq.s32.totalorder %s33, 1
      %p350 = por %p348, %p349
      %p352 = scmp.ne.s32.totalorder %s337, %s351
      %p353 = scmp.eq.s32.totalorder %s33, 0
      %p354 = por %p352, %p353
      %s356 = sadd.s32 %s355, 1
      %p359 = scmp.eq.s32.totalorder %s27, 1
      %p360 = scmp.ne.s32.totalorder %s355, %s357
      %p361 = scmp.eq.s32.totalorder %s27, 0
      %p362 = por %p360, %p361
      %p363 = scmp.ne.s32.totalorder %s355, %s357
      %p364 = scmp.eq.s32.totalorder %s32, 1
      %p365 = por %p363, %p364
      %p366 = scmp.ne.s32.totalorder %s357, %s358
      %p367 = scmp.eq.s32.totalorder %s32, 0
      %p368 = por %p366, %p367
      %p369 = scmp.ne.s32.totalorder %s357, %s358
      %p370 = scmp.eq.s32.totalorder %s33, 1
      %p371 = por %p369, %p370
      %p373 = scmp.ne.s32.totalorder %s358, %s372
      %p374 = scmp.eq.s32.totalorder %s33, 0
      %p375 = por %p373, %p374
      %s377 = sadd.s32 %s376, 1
      %p380 = scmp.eq.s32.totalorder %s27, 1
      %p381 = scmp.ne.s32.totalorder %s376, %s378
      %p382 = scmp.eq.s32.totalorder %s27, 0
      %p383 = por %p381, %p382
      %p384 = scmp.ne.s32.totalorder %s376, %s378
      %p385 = scmp.eq.s32.totalorder %s32, 1
      %p386 = por %p384, %p385
      %p387 = scmp.ne.s32.totalorder %s378, %s379
      %p388 = scmp.eq.s32.totalorder %s32, 0
      %p389 = por %p387, %p388
      %p390 = scmp.ne.s32.totalorder %s378, %s379
      %p391 = scmp.eq.s32.totalorder %s33, 1
      %p392 = por %p390, %p391
      %p394 = scmp.ne.s32.totalorder %s379, %s393
      %p395 = scmp.eq.s32.totalorder %s33, 0
      %p396 = por %p394, %p395
      %s397 = ssub.s32 %s27, %s34
      %p398 = scmp.eq.s32.totalorder %s397, 0
      %s400 = sadd.s32 %s399, 1
      %s401 = scalar_select %p398, %s399, %s400
      %p404 = pneg %p398
      %p405 = scmp.eq.s32.totalorder %s27, 1
      %p406 = por %p404, %p405
      %p407 = scmp.ne.s32.totalorder %s399, %s402
      %p408 = scmp.eq.s32.totalorder %s27, 0
      %p409 = por %p407, %p408
      %p410 = scmp.ne.s32.totalorder %s399, %s402
      %p411 = scmp.eq.s32.totalorder %s32, 1
      %p412 = por %p410, %p411
      %p413 = scmp.ne.s32.totalorder %s402, %s403
      %p414 = scmp.eq.s32.totalorder %s32, 0
      %p415 = por %p413, %p414
      %p416 = scmp.ne.s32.totalorder %s402, %s403
      %p417 = scmp.eq.s32.totalorder %s33, 1
      %p418 = por %p416, %p417
      %p420 = scmp.ne.s32.totalorder %s403, %s419
      %p421 = scmp.eq.s32.totalorder %s33, 0
      %p422 = por %p420, %p421
      %p423 = scmp.le.s32.totalorder 1, %s27
      %p424 = scmp.lt.s32.totalorder %s27, 3
      %p425 = pnand %p423, %p424
      %p426 = pneg %p425
      // Predicated region
      $region9: #{tpu_custom_call.1} parent=5 // pred_check
        _
      $region10: #{tpu_custom_call.1} parent=5 // pred_check_branch
        %428 = sbr.rel (%p425) target = $region12
      $region11: #{tpu_custom_call.1} parent=5 // pred_region
        %s429 = ssub.s32 %s27, 1
        // Predicated region
        $region13: #{tpu_custom_call.1} parent=11 // pred_check
          %p430 = pneg %p74
        $region14: #{tpu_custom_call.1} parent=11 // pred_check_branch
          %432 = sbr.rel (%p430) target = $region16
        $region15: #{tpu_custom_call.1} parent=11 // pred_region
          _
        $region16: #{tpu_custom_call.1} parent=11 // pred_fallthru
          _
        // Predicated region
        $region17: #{tpu_custom_call.1} parent=11 // pred_check
          %p433 = pneg %p95
        $region18: #{tpu_custom_call.1} parent=11 // pred_check_branch
          %435 = sbr.rel (%p433) target = $region20
        $region19: #{tpu_custom_call.1} parent=11 // pred_region
          %s437 = ssub.s32 512, 512
          %438 = vsyncadd [#allocation5], %s437
          %s439 = sshll.u32 [#allocation4], 4
          %s440 = int_to_ptr.vmem [resolvable:$true] %s439
          %445 = dma.hbm_to_vmem [thread:$0]  %s2, 512, %s440, [#allocation5], 128, 128, 8
        $region20: #{tpu_custom_call.1} parent=11 // pred_fallthru
          _
        // Predicated region
        $region21: #{tpu_custom_call.1} parent=11 // pred_check
          %p446 = pneg %p116
        $region22: #{tpu_custom_call.1} parent=11 // pred_check_branch
          %448 = sbr.rel (%p446) target = $region24
        $region23: #{tpu_custom_call.1} parent=11 // pred_region
          _
        $region24: #{tpu_custom_call.1} parent=11 // pred_fallthru
          _
        // Predicated region
        $region25: #{tpu_custom_call.1} parent=11 // pred_check
          %p449 = pneg %p137
        $region26: #{tpu_custom_call.1} parent=11 // pred_check_branch
          %451 = sbr.rel (%p449) target = $region28
        $region27: #{tpu_custom_call.1} parent=11 // pred_region
          _
        $region28: #{tpu_custom_call.1} parent=11 // pred_fallthru
          _
        // Predicated region
        $region29: #{tpu_custom_call.1} parent=11 // pred_check
          %p452 = pneg %p158
        $region30: #{tpu_custom_call.1} parent=11 // pred_check_branch
          %454 = sbr.rel (%p452) target = $region32
        $region31: #{tpu_custom_call.1} parent=11 // pred_region
          _
        $region32: #{tpu_custom_call.1} parent=11 // pred_fallthru
          _
        // Predicated region
        $region33: #{tpu_custom_call.1} parent=11 // pred_check
          %p455 = pneg %p179
        $region34: #{tpu_custom_call.1} parent=11 // pred_check_branch
          %457 = sbr.rel (%p455) target = $region36
        $region35: #{tpu_custom_call.1} parent=11 // pred_region
          _
        $region36: #{tpu_custom_call.1} parent=11 // pred_fallthru
          _
        // Predicated region
        $region37: #{tpu_custom_call.1} parent=11 // pred_check
          %p458 = pneg %p200
        $region38: #{tpu_custom_call.1} parent=11 // pred_check_branch
          %460 = sbr.rel (%p458) target = $region40
        $region39: #{tpu_custom_call.1} parent=11 // pred_region
          _
        $region40: #{tpu_custom_call.1} parent=11 // pred_fallthru
          _
        // Predicated region
        $region41: #{tpu_custom_call.1} parent=11 // pred_check
          %p461 = pneg %p221
        $region42: #{tpu_custom_call.1} parent=11 // pred_check_branch
          %463 = sbr.rel (%p461) target = $region44
        $region43: #{tpu_custom_call.1} parent=11 // pred_region
          _
        $region44: #{tpu_custom_call.1} parent=11 // pred_fallthru
          _
        // Predicated region
        $region45: #{tpu_custom_call.1} parent=11 // pred_check
          %p464 = pneg %p242
        $region46: #{tpu_custom_call.1} parent=11 // pred_check_branch
          %466 = sbr.rel (%p464) target = $region48
        $region47: #{tpu_custom_call.1} parent=11 // pred_region
          _
        $region48: #{tpu_custom_call.1} parent=11 // pred_fallthru
          _
        // Predicated region
        $region49: #{tpu_custom_call.1} parent=11 // pred_check
          %p467 = pneg %p263
        $region50: #{tpu_custom_call.1} parent=11 // pred_check_branch
          %469 = sbr.rel (%p467) target = $region52
        $region51: #{tpu_custom_call.1} parent=11 // pred_region
          _
        $region52: #{tpu_custom_call.1} parent=11 // pred_fallthru
          _
        // Predicated region
        $region53: #{tpu_custom_call.1} parent=11 // pred_check
          %p470 = pneg %p284
        $region54: #{tpu_custom_call.1} parent=11 // pred_check_branch
          %472 = sbr.rel (%p470) target = $region56
        $region55: #{tpu_custom_call.1} parent=11 // pred_region
          %s474 = ssub.s32 64, 64
          %475 = vsyncadd [#allocation5], %s474
          %s477 = sshll.u32 [#allocation6], 4
          %s478 = int_to_ptr.vmem [resolvable:$true] %s477
          %480 = dma.hbm_to_vmem [thread:$0]  %s11, 64, %s478, [#allocation5]
        $region56: #{tpu_custom_call.1} parent=11 // pred_fallthru
          _
        // Predicated region
        $region57: #{tpu_custom_call.1} parent=11 // pred_check
          %p481 = pneg %p305
        $region58: #{tpu_custom_call.1} parent=11 // pred_check_branch
          %483 = sbr.rel (%p481) target = $region60
        $region59: #{tpu_custom_call.1} parent=11 // pred_region
          _
        $region60: #{tpu_custom_call.1} parent=11 // pred_fallthru
          _
        // Predicated region
        $region61: #{tpu_custom_call.1} parent=11 // pred_check
          %p484 = pneg %p326
        $region62: #{tpu_custom_call.1} parent=11 // pred_check_branch
          %486 = sbr.rel (%p484) target = $region64
        $region63: #{tpu_custom_call.1} parent=11 // pred_region
          _
        $region64: #{tpu_custom_call.1} parent=11 // pred_fallthru
          _
        // Predicated region
        $region65: #{tpu_custom_call.1} parent=11 // pred_check
          %p487 = pneg %p347
        $region66: #{tpu_custom_call.1} parent=11 // pred_check_branch
          %489 = sbr.rel (%p487) target = $region68
        $region67: #{tpu_custom_call.1} parent=11 // pred_region
          _
        $region68: #{tpu_custom_call.1} parent=11 // pred_fallthru
          _
        // Predicated region
        $region69: #{tpu_custom_call.1} parent=11 // pred_check
          %p490 = pneg %p368
        $region70: #{tpu_custom_call.1} parent=11 // pred_check_branch
          %492 = sbr.rel (%p490) target = $region72
        $region71: #{tpu_custom_call.1} parent=11 // pred_region
          _
        $region72: #{tpu_custom_call.1} parent=11 // pred_fallthru
          _
        // Predicated region
        $region73: #{tpu_custom_call.1} parent=11 // pred_check
          %p493 = pneg %p389
        $region74: #{tpu_custom_call.1} parent=11 // pred_check_branch
          %495 = sbr.rel (%p493) target = $region76
        $region75: #{tpu_custom_call.1} parent=11 // pred_region
          _
        $region76: #{tpu_custom_call.1} parent=11 // pred_fallthru
          _
      $region12: #{tpu_custom_call.1} parent=5 // pred_fallthru
        _
      %p496 = scmp.lt.s32.totalorder %s27, 2
      // Predicated region
      $region77: #{tpu_custom_call.1} parent=5 // pred_check
        %p497 = pneg %p496
      $region78: #{tpu_custom_call.1} parent=5 // pred_check_branch
        %499 = sbr.rel (%p497) target = $region80
      $region79: #{tpu_custom_call.1} parent=5 // pred_region
        // Predicated region
        $region81: #{tpu_custom_call.1} parent=79 // pred_check
          %p500 = pneg %p47
        $region82: #{tpu_custom_call.1} parent=79 // pred_check_branch
          %502 = sbr.rel (%p500) target = $region84
        $region83: #{tpu_custom_call.1} parent=79 // pred_region
          %s503 = sand.u32 %s37, 1
          %s504 = scalar_lea.sflag [#allocation3], %s503
          %s505 = sand.u32 %s37, 1
          %s506 = smul.addr %s505, 16
          %s507 = scalar_lea.vmem [#allocation2], %s506
          %s508 = smul.u32 4, %s27
          %s510 = ssub.s32 256, 256
          %511 = vsyncadd %s504, %s510
          %s512 = smul.addr %s508, 64
          %s513 = scalar_lea.hbm %s0, %s512
          %s514 = sshll.u32 %s507, 4
          %s515 = int_to_ptr.vmem [resolvable:$true] %s514
          %520 = dma.hbm_to_vmem [thread:$0]  %s513, 256, %s515, %s504, 64, 64, 4
        $region84: #{tpu_custom_call.1} parent=79 // pred_fallthru
          _
      $region80: #{tpu_custom_call.1} parent=5 // pred_fallthru
        _
      %p521 = scmp.le.s32.totalorder 1, %s27
      %p522 = scmp.lt.s32.totalorder %s27, 3
      %p523 = pnand %p521, %p522
      %p524 = pneg %p523
      // Predicated region
      $region85: #{tpu_custom_call.1} parent=5 // pred_check
        _
      $region86: #{tpu_custom_call.1} parent=5 // pred_check_branch
        %526 = sbr.rel (%p523) target = $region88
      $region87: #{tpu_custom_call.1} parent=5 // pred_region
        %s527 = ssub.s32 %s27, 1
        %s528 = sand.u32 %s40, 1
        %s529 = scalar_lea.sflag [#allocation3], %s528
        %s530 = sand.u32 %s40, 1
        %s531 = smul.addr %s530, 16
        %s532 = scalar_lea.vmem [#allocation2], %s531
        // Predicated region
        $region89: #{tpu_custom_call.1} parent=87 // pred_check
          %p533 = pneg %p53
        $region90: #{tpu_custom_call.1} parent=87 // pred_check_branch
          %535 = sbr.rel (%p533) target = $region92
        $region91: #{tpu_custom_call.1} parent=87 // pred_region
          %536 = dma.done %s529, 256
        $region92: #{tpu_custom_call.1} parent=87 // pred_fallthru
          _
        // Predicated region
        $region93: #{tpu_custom_call.1} parent=87 // pred_check
          %p537 = pneg %p95
        $region94: #{tpu_custom_call.1} parent=87 // pred_check_branch
          %539 = sbr.rel (%p537) target = $region96
        $region95: #{tpu_custom_call.1} parent=87 // pred_region
          %540 = dma.done [#allocation5], 512
        $region96: #{tpu_custom_call.1} parent=87 // pred_fallthru
          _
        // Predicated region
        $region97: #{tpu_custom_call.1} parent=87 // pred_check
          %p541 = pneg %p284
        $region98: #{tpu_custom_call.1} parent=87 // pred_check_branch
          %543 = sbr.rel (%p541) target = $region100
        $region99: #{tpu_custom_call.1} parent=87 // pred_region
          %544 = dma.done [#allocation5], 64
        $region100: #{tpu_custom_call.1} parent=87 // pred_fallthru
          _
        %s545 = sand.u32 %s40, 1
        %s546 = scalar_lea.sflag [#allocation3], %s545
        %s547 = sand.u32 %s40, 1
        %s548 = smul.addr %s547, 16
        %s549 = scalar_lea.vmem [#allocation2], %s548
        %p550 = pneg %p53
        %p551 = pneg %p50
        %p552 = pneg %p74
        %p553 = pneg %p71
        %p554 = pneg %p95
        %p555 = pneg %p92
        %p556 = pneg %p116
        %p557 = pneg %p113
        %p558 = pneg %p137
        %p559 = pneg %p134
        %p560 = pneg %p158
        %p561 = pneg %p155
        %p562 = pneg %p179
        %p563 = pneg %p176
        %p564 = pneg %p200
        %p565 = pneg %p197
        %p566 = pneg %p221
        %p567 = pneg %p218
        %p568 = pneg %p242
        %p569 = pneg %p239
        %p570 = pneg %p263
        %p571 = pneg %p260
        %p572 = pneg %p284
        %p573 = pneg %p281
        %p574 = pneg %p305
        %p575 = pneg %p302
        %p576 = pneg %p326
        %p577 = pneg %p323
        %p578 = pneg %p347
        %p579 = pneg %p344
        %p580 = pneg %p368
        %p581 = pneg %p365
        %p582 = pneg %p389
        %p583 = pneg %p386
        %p584 = pneg %p415
        %p585 = pneg %p412
        %p586 = scmp.lt.s32.totalorder %s32, 1
        %s587 = scalar_select %p586, %s32, 1
        %s588 = smul.addr %s587, 2
        %s589 = smul.addr %s588, 4
        %s590 = scalar_lea.vmem %s17, %s589
        %s591 = smul.u32 4, %s32
        %p592 = scmp.lt.s32.totalorder %s32, 1
        %s593 = scalar_select %p592, %s32, 1
        %s594 = smul.addr %s593, 2
        %s595 = smul.addr %s594, 4
        %s596 = scalar_lea.vmem %s17, %s595
        %v598 = vld [vmem:[%s1] sm:$0xff]
        %v599 = vld [vmem:[%s1 + $0x8] sm:$0xff]
        %v600 = vld [vmem:[%s1 + $0x10] sm:$0xff]
        %v601 = vld [vmem:[%s1 + $0x18] sm:$0xff]
        %v602 = vld [vmem:[%s1 + $0x20] sm:$0xff]
        %v603 = vld [vmem:[%s1 + $0x28] sm:$0xff]
        %v604 = vld [vmem:[%s1 + $0x30] sm:$0xff]
        %v605 = vld [vmem:[%s1 + $0x38] sm:$0xff]
        %v606 = vld [vmem:[%s13] sm:$0xff]
        %v607 = vld [vmem:[%s13 + $0x8] sm:$0xff]
        %v608 = vld [vmem:[%s13 + $0x10] sm:$0xff]
        %v609 = vld [vmem:[%s13 + $0x18] sm:$0xff]
        %v610 = vld [vmem:[%s13 + $0x20] sm:$0xff]
        %v611 = vld [vmem:[%s13 + $0x28] sm:$0xff]
        %v612 = vld [vmem:[%s14] sm:$0xff]
        %v613 = vld [vmem:[%s14 + $0x8] sm:$0xff]
        %v614 = vld [vmem:[%s14 + $0x10] sm:$0xff]
        %v615 = vld [vmem:[%s14 + $0x18] sm:$0xff]
        %v616 = vld [vmem:[%s14 + $0x20] sm:$0xff]
        %v617 = vld [vmem:[%s14 + $0x28] sm:$0xff]
        %v618 = vld [vmem:[%s15] sm:$0xff]
        %v619 = vld [vmem:[%s15 + $0x8] sm:$0xff]
        %v620 = vld [vmem:[%s15 + $0x10] sm:$0xff]
        %v621 = vld [vmem:[%s15 + $0x18] sm:$0xff]
        %v622 = vld [vmem:[%s15 + $0x20] sm:$0xff]
        %v623 = vld [vmem:[%s15 + $0x28] sm:$0xff]
        %v624 = vld [vmem:[%s532] sm:$0xf]
        %v625 = vld [vmem:[#allocation4] sm:$0xff]
        %v626 = vld [vmem:[#allocation4 + $0x8] sm:$0xff]
        %v627 = vld [vmem:[#allocation4 + $0x10] sm:$0xff]
        %v628 = vld [vmem:[#allocation4 + $0x18] sm:$0xff]
        %v629 = vpack.c.bf16 %v624, %v624
        %v630 = vpack.c.bf16 %v626, %v625
        %v631 = vpack.c.bf16 %v628, %v627
        %v632 = vld [vmem:[%s16] sm:$0x1]
        %v633 = vlaneseq
        %v634 = vshrl.u32 %v633, 7
        %v635 = vsub.s32 0, %v634
        %v636 = vrot.slane %v632, %v635
        %vm637 = vcmask 261120
        %v639 = vsel %vm637, %v629, 0
        %641 = vmatprep.subr.bf16.mxu0 0
        %642 = vmatpush1.bf16.msra.mxu0 %v630
        %643 = vmatprep.subr.bf16.mxu0 0
        %644 = vmatpush1.bf16.msra.mxu0 %v631
        %645 = vmatprep.subr.bf16.mxu0 0
        %646 = vmatpush1.bf16.msra.mxu0 0
        %647 = vmatprep.subr.bf16.mxu0 0
        %648 = vmatpush1.bf16.msra.mxu0 0
        %649 = vmatprep.subr.bf16.mxu0 0
        %650 = vmatpush1.bf16.msra.mxu0 0
        %651 = vmatprep.subr.bf16.mxu0 0
        %652 = vmatpush1.bf16.msra.mxu0 0
        %653 = vmatprep.subr.bf16.mxu0 0
        %654 = vmatpush1.bf16.msra.mxu0 0
        %655 = vmatprep.subr.bf16.mxu0 0
        %656 = vmatpush1.bf16.msra.mxu0 0
        %657 = vmatprep.subr.bf16.mxu0 0
        %658 = vmatpush1.bf16.msra.mxu0 0
        %659 = vmatprep.subr.bf16.mxu0 0
        %660 = vmatpush1.bf16.msra.mxu0 0
        %661 = vmatprep.subr.bf16.mxu0 0
        %662 = vmatpush1.bf16.msra.mxu0 0
        %663 = vmatprep.subr.bf16.mxu0 0
        %664 = vmatpush1.bf16.msra.mxu0 0
        %665 = vmatprep.subr.bf16.mxu0 0
        %666 = vmatpush1.bf16.msra.mxu0 0
        %667 = vmatprep.subr.bf16.mxu0 0
        %668 = vmatpush1.bf16.msra.mxu0 0
        %669 = vmatprep.subr.bf16.mxu0 0
        %670 = vmatpush1.bf16.msra.mxu0 0
        %671 = vmatprep.subr.bf16.mxu0 0
        %672 = vmatpush1.bf16.msra.mxu0 0
        %673 = vmatprep.mubr.bf16.mxu0 0
        %674 = vmatmul.mubr.bf16.gmra.mrb[0].mxu0 %v639
        %v675 = vpop.f32.mrb[0].mxu0
        %v676 = vadd.f32 %v636, %v675
        %v677 = vpop.f32.mrb[0].mxu0
        %v678 = vpop.f32.mrb[0].mxu0
        %v679 = vpop.f32.mrb[0].mxu0
        %680 = vdwg.mxu0
        %v681 = vmul.f32 %v676, 0.5
        %v682 = vmul.f32 %v676, 0.044715
        %v683 = vmul.f32 %v682, %v676
        %v684 = vmul.f32 %v683, %v676
        %v685 = vadd.f32 %v676, %v684
        %v686 = vmul.f32 %v685, 0.7978846
        %v687 = vtanh.pop %v686
        %v688 = vadd.f32 %v687, 1.0
        %v689 = vmul.f32 %v681, %v688
        %v690 = vld [vmem:[%s3] sm:$0xff]
        %v691 = vld [vmem:[%s3 + $0x8] sm:$0xff]
        %v692 = vld [vmem:[%s3 + $0x10] sm:$0xff]
        %v693 = vld [vmem:[%s3 + $0x18] sm:$0xff]
        %v694 = vld [vmem:[%s3 + $0x20] sm:$0xff]
        %v695 = vld [vmem:[%s3 + $0x28] sm:$0xff]
        %v696 = vld [vmem:[%s3 + $0x30] sm:$0xff]
        %v697 = vld [vmem:[%s3 + $0x38] sm:$0xff]
        %v698 = vld [vmem:[%s3 + $0x40] sm:$0xff]
        %v699 = vld [vmem:[%s3 + $0x48] sm:$0xff]
        %v700 = vld [vmem:[%s3 + $0x50] sm:$0xff]
        %v701 = vld [vmem:[%s3 + $0x58] sm:$0xff]
        %v702 = vld [vmem:[%s3 + $0x60] sm:$0xff]
        %v703 = vld [vmem:[%s3 + $0x68] sm:$0xff]
        %v704 = vld [vmem:[%s3 + $0x70] sm:$0xff]
        %v705 = vld [vmem:[%s3 + $0x78] sm:$0xff]
        %v706 = vpack.c.bf16 %v689, %v689
        %v707 = vpack.c.bf16 %v691, %v690
        %v708 = vpack.c.bf16 %v693, %v692
        %v709 = vpack.c.bf16 %v695, %v694
        %v710 = vpack.c.bf16 %v697, %v696
        %v711 = vpack.c.bf16 %v699, %v698
        %v712 = vpack.c.bf16 %v701, %v700
        %v713 = vpack.c.bf16 %v703, %v702
        %v714 = vpack.c.bf16 %v705, %v704
        %v715 = vld [vmem:[%s16 + $0x1] sm:$0x1]
        %v716 = vlaneseq
        %v717 = vshrl.u32 %v716, 7
        %v718 = vsub.s32 0, %v717
        %v719 = vrot.slane %v715, %v718
        %720 = vmatprep.subr.bf16.mxu0 0
        %721 = vmatpush1.bf16.msra.mxu0 %v707
        %722 = vmatprep.subr.bf16.mxu0 0
        %723 = vmatpush1.bf16.msra.mxu0 %v708
        %724 = vmatprep.subr.bf16.mxu0 0
        %725 = vmatpush1.bf16.msra.mxu0 %v709
        %726 = vmatprep.subr.bf16.mxu0 0
        %727 = vmatpush1.bf16.msra.mxu0 %v710
        %728 = vmatprep.subr.bf16.mxu0 0
        %729 = vmatpush1.bf16.msra.mxu0 %v711
        %730 = vmatprep.subr.bf16.mxu0 0
        %731 = vmatpush1.bf16.msra.mxu0 %v712
        %732 = vmatprep.subr.bf16.mxu0 0
        %733 = vmatpush1.bf16.msra.mxu0 %v713
        %734 = vmatprep.subr.bf16.mxu0 0
        %735 = vmatpush1.bf16.msra.mxu0 %v714
        %736 = vmatprep.subr.bf16.mxu0 0
        %737 = vmatpush1.bf16.msra.mxu0 0
        %738 = vmatprep.subr.bf16.mxu0 0
        %739 = vmatpush1.bf16.msra.mxu0 0
        %740 = vmatprep.subr.bf16.mxu0 0
        %741 = vmatpush1.bf16.msra.mxu0 0
        %742 = vmatprep.subr.bf16.mxu0 0
        %743 = vmatpush1.bf16.msra.mxu0 0
        %744 = vmatprep.subr.bf16.mxu0 0
        %745 = vmatpush1.bf16.msra.mxu0 0
        %746 = vmatprep.subr.bf16.mxu0 0
        %747 = vmatpush1.bf16.msra.mxu0 0
        %748 = vmatprep.subr.bf16.mxu0 0
        %749 = vmatpush1.bf16.msra.mxu0 0
        %750 = vmatprep.subr.bf16.mxu0 0
        %751 = vmatpush1.bf16.msra.mxu0 0
        %752 = vmatprep.mubr.bf16.mxu0 0
        %753 = vmatmul.mubr.bf16.gmra.mrb[0].mxu0 %v706
        %v754 = vpop.f32.mrb[0].mxu0
        %v755 = vadd.f32 %v719, %v754
        %v756 = vpop.f32.mrb[0].mxu0
        %v757 = vpop.f32.mrb[0].mxu0
        %v758 = vpop.f32.mrb[0].mxu0
        %759 = vdwg.mxu0
        %s760 = scalar_lea.vmem %s532, 4 [#allocation2]
        %v761 = vld [vmem:[%s760] sm:$0xf]
        %v762 = vpack.c.bf16 %v761, %v761
        %v764 = vsel %vm637, %v762, 0
        %766 = vmatprep.subr.bf16.mxu0 0
        %767 = vmatpush1.bf16.msra.mxu0 %v630
        %768 = vmatprep.subr.bf16.mxu0 0
        %769 = vmatpush1.bf16.msra.mxu0 %v631
        %770 = vmatprep.subr.bf16.mxu0 0
        %771 = vmatpush1.bf16.msra.mxu0 0
        %772 = vmatprep.subr.bf16.mxu0 0
        %773 = vmatpush1.bf16.msra.mxu0 0
        %774 = vmatprep.subr.bf16.mxu0 0
        %775 = vmatpush1.bf16.msra.mxu0 0
        %776 = vmatprep.subr.bf16.mxu0 0
        %777 = vmatpush1.bf16.msra.mxu0 0
        %778 = vmatprep.subr.bf16.mxu0 0
        %779 = vmatpush1.bf16.msra.mxu0 0
        %780 = vmatprep.subr.bf16.mxu0 0
        %781 = vmatpush1.bf16.msra.mxu0 0
        %782 = vmatprep.subr.bf16.mxu0 0
        %783 = vmatpush1.bf16.msra.mxu0 0
        %784 = vmatprep.subr.bf16.mxu0 0
        %785 = vmatpush1.bf16.msra.mxu0 0
        %786 = vmatprep.subr.bf16.mxu0 0
        %787 = vmatpush1.bf16.msra.mxu0 0
        %788 = vmatprep.subr.bf16.mxu0 0
        %789 = vmatpush1.bf16.msra.mxu0 0
        %790 = vmatprep.subr.bf16.mxu0 0
        %791 = vmatpush1.bf16.msra.mxu0 0
        %792 = vmatprep.subr.bf16.mxu0 0
        %793 = vmatpush1.bf16.msra.mxu0 0
        %794 = vmatprep.subr.bf16.mxu0 0
        %795 = vmatpush1.bf16.msra.mxu0 0
        %796 = vmatprep.subr.bf16.mxu0 0
        %797 = vmatpush1.bf16.msra.mxu0 0
        %798 = vmatprep.mubr.bf16.mxu0 0
        %799 = vmatmul.mubr.bf16.gmra.mrb[0].mxu0 %v764
        %v800 = vpop.f32.mrb[0].mxu0
        %v801 = vadd.f32 %v636, %v800
        %v802 = vpop.f32.mrb[0].mxu0
        %v803 = vpop.f32.mrb[0].mxu0
        %v804 = vpop.f32.mrb[0].mxu0
        %805 = vdwg.mxu0
        %v806 = vmul.f32 %v801, 0.5
        %v807 = vmul.f32 %v801, 0.044715
        %v808 = vmul.f32 %v807, %v801
        %v809 = vmul.f32 %v808, %v801
        %v810 = vadd.f32 %v801, %v809
        %v811 = vmul.f32 %v810, 0.7978846
        %v812 = vtanh.pop %v811
        %v813 = vadd.f32 %v812, 1.0
        %v814 = vmul.f32 %v806, %v813
        %v815 = vpack.c.bf16 %v814, %v814
        %816 = vmatprep.subr.bf16.mxu0 0
        %817 = vmatpush1.bf16.msra.mxu0 %v707
        %818 = vmatprep.subr.bf16.mxu0 0
        %819 = vmatpush1.bf16.msra.mxu0 %v708
        %820 = vmatprep.subr.bf16.mxu0 0
        %821 = vmatpush1.bf16.msra.mxu0 %v709
        %822 = vmatprep.subr.bf16.mxu0 0
        %823 = vmatpush1.bf16.msra.mxu0 %v710
        %824 = vmatprep.subr.bf16.mxu0 0
        %825 = vmatpush1.bf16.msra.mxu0 %v711
        %826 = vmatprep.subr.bf16.mxu0 0
        %827 = vmatpush1.bf16.msra.mxu0 %v712
        %828 = vmatprep.subr.bf16.mxu0 0
        %829 = vmatpush1.bf16.msra.mxu0 %v713
        %830 = vmatprep.subr.bf16.mxu0 0
        %831 = vmatpush1.bf16.msra.mxu0 %v714
        %832 = vmatprep.subr.bf16.mxu0 0
        %833 = vmatpush1.bf16.msra.mxu0 0
        %834 = vmatprep.subr.bf16.mxu0 0
        %835 = vmatpush1.bf16.msra.mxu0 0
        %836 = vmatprep.subr.bf16.mxu0 0
        %837 = vmatpush1.bf16.msra.mxu0 0
        %838 = vmatprep.subr.bf16.mxu0 0
        %839 = vmatpush1.bf16.msra.mxu0 0
        %840 = vmatprep.subr.bf16.mxu0 0
        %841 = vmatpush1.bf16.msra.mxu0 0
        %842 = vmatprep.subr.bf16.mxu0 0
        %843 = vmatpush1.bf16.msra.mxu0 0
        %844 = vmatprep.subr.bf16.mxu0 0
        %845 = vmatpush1.bf16.msra.mxu0 0
        %846 = vmatprep.subr.bf16.mxu0 0
        %847 = vmatpush1.bf16.msra.mxu0 0
        %848 = vmatprep.mubr.bf16.mxu0 0
        %849 = vmatmul.mubr.bf16.gmra.mrb[0].mxu0 %v815
        %v850 = vpop.f32.mrb[0].mxu0
        %v851 = vadd.f32 %v719, %v850
        %v852 = vpop.f32.mrb[0].mxu0
        %v853 = vpop.f32.mrb[0].mxu0
        %v854 = vpop.f32.mrb[0].mxu0
        %855 = vdwg.mxu0
        %s856 = scalar_lea.vmem %s532, 8 [#allocation2]
        %v857 = vld [vmem:[%s856] sm:$0xf]
        %v858 = vpack.c.bf16 %v857, %v857
        %v860 = vsel %vm637, %v858, 0
        %862 = vmatprep.subr.bf16.mxu0 0
        %863 = vmatpush1.bf16.msra.mxu0 %v630
        %864 = vmatprep.subr.bf16.mxu0 0
        %865 = vmatpush1.bf16.msra.mxu0 %v631
        %866 = vmatprep.subr.bf16.mxu0 0
        %867 = vmatpush1.bf16.msra.mxu0 0
        %868 = vmatprep.subr.bf16.mxu0 0
        %869 = vmatpush1.bf16.msra.mxu0 0
        %870 = vmatprep.subr.bf16.mxu0 0
        %871 = vmatpush1.bf16.msra.mxu0 0
        %872 = vmatprep.subr.bf16.mxu0 0
        %873 = vmatpush1.bf16.msra.mxu0 0
        %874 = vmatprep.subr.bf16.mxu0 0
        %875 = vmatpush1.bf16.msra.mxu0 0
        %876 = vmatprep.subr.bf16.mxu0 0
        %877 = vmatpush1.bf16.msra.mxu0 0
        %878 = vmatprep.subr.bf16.mxu0 0
        %879 = vmatpush1.bf16.msra.mxu0 0
        %880 = vmatprep.subr.bf16.mxu0 0
        %881 = vmatpush1.bf16.msra.mxu0 0
        %882 = vmatprep.subr.bf16.mxu0 0
        %883 = vmatpush1.bf16.msra.mxu0 0
        %884 = vmatprep.subr.bf16.mxu0 0
        %885 = vmatpush1.bf16.msra.mxu0 0
        %886 = vmatprep.subr.bf16.mxu0 0
        %887 = vmatpush1.bf16.msra.mxu0 0
        %888 = vmatprep.subr.bf16.mxu0 0
        %889 = vmatpush1.bf16.msra.mxu0 0
        %890 = vmatprep.subr.bf16.mxu0 0
        %891 = vmatpush1.bf16.msra.mxu0 0
        %892 = vmatprep.subr.bf16.mxu0 0
        %893 = vmatpush1.bf16.msra.mxu0 0
        %894 = vmatprep.mubr.bf16.mxu0 0
        %895 = vmatmul.mubr.bf16.gmra.mrb[0].mxu0 %v860
        %v896 = vpop.f32.mrb[0].mxu0
        %v897 = vadd.f32 %v636, %v896
        %v898 = vpop.f32.mrb[0].mxu0
        %v899 = vpop.f32.mrb[0].mxu0
        %v900 = vpop.f32.mrb[0].mxu0
        %901 = vdwg.mxu0
        %v902 = vmul.f32 %v897, 0.5
        %v903 = vmul.f32 %v897, 0.044715
        %v904 = vmul.f32 %v903, %v897
        %v905 = vmul.f32 %v904, %v897
        %v906 = vadd.f32 %v897, %v905
        %v907 = vmul.f32 %v906, 0.7978846
        %v908 = vtanh.pop %v907
        %v909 = vadd.f32 %v908, 1.0
        %v910 = vmul.f32 %v902, %v909
        %v911 = vpack.c.bf16 %v910, %v910
        %912 = vmatprep.subr.bf16.mxu0 0
        %913 = vmatpush1.bf16.msra.mxu0 %v707
        %914 = vmatprep.subr.bf16.mxu0 0
        %915 = vmatpush1.bf16.msra.mxu0 %v708
        %916 = vmatprep.subr.bf16.mxu0 0
        %917 = vmatpush1.bf16.msra.mxu0 %v709
        %918 = vmatprep.subr.bf16.mxu0 0
        %919 = vmatpush1.bf16.msra.mxu0 %v710
        %920 = vmatprep.subr.bf16.mxu0 0
        %921 = vmatpush1.bf16.msra.mxu0 %v711
        %922 = vmatprep.subr.bf16.mxu0 0
        %923 = vmatpush1.bf16.msra.mxu0 %v712
        %924 = vmatprep.subr.bf16.mxu0 0
        %925 = vmatpush1.bf16.msra.mxu0 %v713
        %926 = vmatprep.subr.bf16.mxu0 0
        %927 = vmatpush1.bf16.msra.mxu0 %v714
        %928 = vmatprep.subr.bf16.mxu0 0
        %929 = vmatpush1.bf16.msra.mxu0 0
        %930 = vmatprep.subr.bf16.mxu0 0
        %931 = vmatpush1.bf16.msra.mxu0 0
        %932 = vmatprep.subr.bf16.mxu0 0
        %933 = vmatpush1.bf16.msra.mxu0 0
        %934 = vmatprep.subr.bf16.mxu0 0
        %935 = vmatpush1.bf16.msra.mxu0 0
        %936 = vmatprep.subr.bf16.mxu0 0
        %937 = vmatpush1.bf16.msra.mxu0 0
        %938 = vmatprep.subr.bf16.mxu0 0
        %939 = vmatpush1.bf16.msra.mxu0 0
        %940 = vmatprep.subr.bf16.mxu0 0
        %941 = vmatpush1.bf16.msra.mxu0 0
        %942 = vmatprep.subr.bf16.mxu0 0
        %943 = vmatpush1.bf16.msra.mxu0 0
        %944 = vmatprep.mubr.bf16.mxu0 0
        %945 = vmatmul.mubr.bf16.gmra.mrb[0].mxu0 %v911
        %v946 = vpop.f32.mrb[0].mxu0
        %v947 = vadd.f32 %v719, %v946
        %v948 = vpop.f32.mrb[0].mxu0
        %v949 = vpop.f32.mrb[0].mxu0
        %v950 = vpop.f32.mrb[0].mxu0
        %951 = vdwg.mxu0
        %s952 = scalar_lea.vmem %s532, 12 [#allocation2]
        %v953 = vld [vmem:[%s952] sm:$0xf]
        %v954 = vpack.c.bf16 %v953, %v953
        %v956 = vsel %vm637, %v954, 0
        %958 = vmatprep.subr.bf16.mxu0 0
        %959 = vmatpush1.bf16.msra.mxu0 %v630
        %960 = vmatprep.subr.bf16.mxu0 0
        %961 = vmatpush1.bf16.msra.mxu0 %v631
        %962 = vmatprep.subr.bf16.mxu0 0
        %963 = vmatpush1.bf16.msra.mxu0 0
        %964 = vmatprep.subr.bf16.mxu0 0
        %965 = vmatpush1.bf16.msra.mxu0 0
        %966 = vmatprep.subr.bf16.mxu0 0
        %967 = vmatpush1.bf16.msra.mxu0 0
        %968 = vmatprep.subr.bf16.mxu0 0
        %969 = vmatpush1.bf16.msra.mxu0 0
        %970 = vmatprep.subr.bf16.mxu0 0
        %971 = vmatpush1.bf16.msra.mxu0 0
        %972 = vmatprep.subr.bf16.mxu0 0
        %973 = vmatpush1.bf16.msra.mxu0 0
        %974 = vmatprep.subr.bf16.mxu0 0
        %975 = vmatpush1.bf16.msra.mxu0 0
        %976 = vmatprep.subr.bf16.mxu0 0
        %977 = vmatpush1.bf16.msra.mxu0 0
        %978 = vmatprep.subr.bf16.mxu0 0
        %979 = vmatpush1.bf16.msra.mxu0 0
        %980 = vmatprep.subr.bf16.mxu0 0
        %981 = vmatpush1.bf16.msra.mxu0 0
        %982 = vmatprep.subr.bf16.mxu0 0
        %983 = vmatpush1.bf16.msra.mxu0 0
        %984 = vmatprep.subr.bf16.mxu0 0
        %985 = vmatpush1.bf16.msra.mxu0 0
        %986 = vmatprep.subr.bf16.mxu0 0
        %987 = vmatpush1.bf16.msra.mxu0 0
        %988 = vmatprep.subr.bf16.mxu0 0
        %989 = vmatpush1.bf16.msra.mxu0 0
        %990 = vmatprep.mubr.bf16.mxu0 0
        %991 = vmatmul.mubr.bf16.gmra.mrb[0].mxu0 %v956
        %v992 = vpop.f32.mrb[0].mxu0
        %v993 = vadd.f32 %v636, %v992
        %v994 = vpop.f32.mrb[0].mxu0
        %v995 = vpop.f32.mrb[0].mxu0
        %v996 = vpop.f32.mrb[0].mxu0
        %997 = vdwg.mxu0
        %v998 = vmul.f32 %v993, 0.5
        %v999 = vmul.f32 %v993, 0.044715
        %v1000 = vmul.f32 %v999, %v993
        %v1001 = vmul.f32 %v1000, %v993
        %v1002 = vadd.f32 %v993, %v1001
        %v1003 = vmul.f32 %v1002, 0.7978846
        %v1004 = vtanh.pop %v1003
        %v1005 = vadd.f32 %v1004, 1.0
        %v1006 = vmul.f32 %v998, %v1005
        %v1007 = vpack.c.bf16 %v1006, %v1006
        %1008 = vmatprep.subr.bf16.mxu0 0
        %1009 = vmatpush1.bf16.msra.mxu0 %v707
        %1010 = vmatprep.subr.bf16.mxu0 0
        %1011 = vmatpush1.bf16.msra.mxu0 %v708
        %1012 = vmatprep.subr.bf16.mxu0 0
        %1013 = vmatpush1.bf16.msra.mxu0 %v709
        %1014 = vmatprep.subr.bf16.mxu0 0
        %1015 = vmatpush1.bf16.msra.mxu0 %v710
        %1016 = vmatprep.subr.bf16.mxu0 0
        %1017 = vmatpush1.bf16.msra.mxu0 %v711
        %1018 = vmatprep.subr.bf16.mxu0 0
        %1019 = vmatpush1.bf16.msra.mxu0 %v712
        %1020 = vmatprep.subr.bf16.mxu0 0
        %1021 = vmatpush1.bf16.msra.mxu0 %v713
        %1022 = vmatprep.subr.bf16.mxu0 0
        %1023 = vmatpush1.bf16.msra.mxu0 %v714
        %1024 = vmatprep.subr.bf16.mxu0 0
        %1025 = vmatpush1.bf16.msra.mxu0 0
        %1026 = vmatprep.subr.bf16.mxu0 0
        %1027 = vmatpush1.bf16.msra.mxu0 0
        %1028 = vmatprep.subr.bf16.mxu0 0
        %1029 = vmatpush1.bf16.msra.mxu0 0
        %1030 = vmatprep.subr.bf16.mxu0 0
        %1031 = vmatpush1.bf16.msra.mxu0 0
        %1032 = vmatprep.subr.bf16.mxu0 0
        %1033 = vmatpush1.bf16.msra.mxu0 0
        %1034 = vmatprep.subr.bf16.mxu0 0
        %1035 = vmatpush1.bf16.msra.mxu0 0
        %1036 = vmatprep.subr.bf16.mxu0 0
        %1037 = vmatpush1.bf16.msra.mxu0 0
        %1038 = vmatprep.subr.bf16.mxu0 0
        %1039 = vmatpush1.bf16.msra.mxu0 0
        %1040 = vmatprep.mubr.bf16.mxu0 0
        %1041 = vmatmul.mubr.bf16.gmra.mrb[0].mxu0 %v1007
        %v1042 = vpop.f32.mrb[0].mxu0
        %v1043 = vadd.f32 %v719, %v1042
        %v1044 = vpop.f32.mrb[0].mxu0
        %v1045 = vpop.f32.mrb[0].mxu0
        %v1046 = vpop.f32.mrb[0].mxu0
        %1047 = vdwg.mxu0
        %v1048 = vld [vmem:[%s16 + $0x2] sm:$0x1]
        %v1049 = vld [vmem:[%s16 + $0x3] sm:$0x1]
        %vm1050 = vcmask 392192
        %v1051 = vsel %vm1050, %v598, 0.0
        %1052 = vadd.xlane.f32.xlu0 %v1051
        %v1053 = vpop.xlane.xlu0 %1052
        %v1054 = vsel %vm1050, %v599, 0.0
        %1055 = vadd.xlane.f32.xlu0 %v1054
        %v1056 = vpop.xlane.xlu0 %1055
        %v1057 = vsel %vm1050, %v600, 0.0
        %1058 = vadd.xlane.f32.xlu0 %v1057
        %v1059 = vpop.xlane.xlu0 %1058
        %v1060 = vsel %vm1050, %v601, 0.0
        %1061 = vadd.xlane.f32.xlu0 %v1060
        %v1062 = vpop.xlane.xlu0 %1061
        %v1063 = vsel %vm1050, %v602, 0.0
        %1064 = vadd.xlane.f32.xlu0 %v1063
        %v1065 = vpop.xlane.xlu0 %1064
        %v1066 = vsel %vm1050, %v603, 0.0
        %1067 = vadd.xlane.f32.xlu0 %v1066
        %v1068 = vpop.xlane.xlu0 %1067
        %v1069 = vsel %vm1050, %v604, 0.0
        %1070 = vadd.xlane.f32.xlu0 %v1069
        %v1071 = vpop.xlane.xlu0 %1070
        %v1072 = vsel %vm1050, %v605, 0.0
        %1073 = vadd.xlane.f32.xlu0 %v1072
        %v1074 = vpop.xlane.xlu0 %1073
        %v1075 = vrcp.pop 48.0
        %v1076 = vmul.f32 %v1053, %v1075
        %v1077 = vmul.f32 %v1056, %v1075
        %v1078 = vmul.f32 %v1059, %v1075
        %v1079 = vmul.f32 %v1062, %v1075
        %v1080 = vmul.f32 %v1065, %v1075
        %v1081 = vmul.f32 %v1068, %v1075
        %v1082 = vmul.f32 %v1071, %v1075
        %v1083 = vmul.f32 %v1074, %v1075
        %v1084 = vsub.f32 %v598, %v1076
        %v1085 = vsub.f32 %v599, %v1077
        %v1086 = vsub.f32 %v600, %v1078
        %v1087 = vsub.f32 %v601, %v1079
        %v1088 = vsub.f32 %v602, %v1080
        %v1089 = vsub.f32 %v603, %v1081
        %v1090 = vsub.f32 %v604, %v1082
        %v1091 = vsub.f32 %v605, %v1083
        %v1092 = vmul.f32 %v1084, %v1084
        %v1093 = vmul.f32 %v1085, %v1085
        %v1094 = vmul.f32 %v1086, %v1086
        %v1095 = vmul.f32 %v1087, %v1087
        %v1096 = vmul.f32 %v1088, %v1088
        %v1097 = vmul.f32 %v1089, %v1089
        %v1098 = vmul.f32 %v1090, %v1090
        %v1099 = vmul.f32 %v1091, %v1091
        %v1100 = vsel %vm1050, %v1092, 0.0
        %1101 = vadd.xlane.f32.xlu0 %v1100
        %v1102 = vpop.xlane.xlu0 %1101
        %v1103 = vsel %vm1050, %v1093, 0.0
        %1104 = vadd.xlane.f32.xlu0 %v1103
        %v1105 = vpop.xlane.xlu0 %1104
        %v1106 = vsel %vm1050, %v1094, 0.0
        %1107 = vadd.xlane.f32.xlu0 %v1106
        %v1108 = vpop.xlane.xlu0 %1107
        %v1109 = vsel %vm1050, %v1095, 0.0
        %1110 = vadd.xlane.f32.xlu0 %v1109
        %v1111 = vpop.xlane.xlu0 %1110
        %v1112 = vsel %vm1050, %v1096, 0.0
        %1113 = vadd.xlane.f32.xlu0 %v1112
        %v1114 = vpop.xlane.xlu0 %1113
        %v1115 = vsel %vm1050, %v1097, 0.0
        %1116 = vadd.xlane.f32.xlu0 %v1115
        %v1117 = vpop.xlane.xlu0 %1116
        %v1118 = vsel %vm1050, %v1098, 0.0
        %1119 = vadd.xlane.f32.xlu0 %v1118
        %v1120 = vpop.xlane.xlu0 %1119
        %v1121 = vsel %vm1050, %v1099, 0.0
        %1122 = vadd.xlane.f32.xlu0 %v1121
        %v1123 = vpop.xlane.xlu0 %1122
        %v1124 = vmul.f32 %v1102, %v1075
        %v1125 = vmul.f32 %v1105, %v1075
        %v1126 = vmul.f32 %v1108, %v1075
        %v1127 = vmul.f32 %v1111, %v1075
        %v1128 = vmul.f32 %v1114, %v1075
        %v1129 = vmul.f32 %v1117, %v1075
        %v1130 = vmul.f32 %v1120, %v1075
        %v1131 = vmul.f32 %v1123, %v1075
        %v1132 = vadd.f32 %v1124, 1e-05
        %v1133 = vadd.f32 %v1125, 1e-05
        %v1134 = vadd.f32 %v1126, 1e-05
        %v1135 = vadd.f32 %v1127, 1e-05
        %v1136 = vadd.f32 %v1128, 1e-05
        %v1137 = vadd.f32 %v1129, 1e-05
        %v1138 = vadd.f32 %v1130, 1e-05
        %v1139 = vadd.f32 %v1131, 1e-05
        %v1140 = vrsqrt.pop %v1132
        %v1141 = vrsqrt.pop %v1133
        %v1142 = vrsqrt.pop %v1134
        %v1143 = vrsqrt.pop %v1135
        %v1144 = vrsqrt.pop %v1136
        %v1145 = vrsqrt.pop %v1137
        %v1146 = vrsqrt.pop %v1138
        %v1147 = vrsqrt.pop %v1139
        %v1148 = vmul.f32 %v1084, %v1140
        %v1149 = vmul.f32 %v1085, %v1141
        %v1150 = vmul.f32 %v1086, %v1142
        %v1151 = vmul.f32 %v1087, %v1143
        %v1152 = vmul.f32 %v1088, %v1144
        %v1153 = vmul.f32 %v1089, %v1145
        %v1154 = vmul.f32 %v1090, %v1146
        %v1155 = vmul.f32 %v1091, %v1147
        %v1156 = vlaneseq
        %v1157 = vshrl.u32 %v1156, 7
        %v1158 = vsub.s32 0, %v1157
        %v1159 = vrot.slane %v1048, %v1158
        %v1160 = vmul.f32 %v1148, %v1159
        %v1161 = vmul.f32 %v1149, %v1159
        %v1162 = vmul.f32 %v1150, %v1159
        %v1163 = vmul.f32 %v1151, %v1159
        %v1164 = vmul.f32 %v1152, %v1159
        %v1165 = vmul.f32 %v1153, %v1159
        %v1166 = vmul.f32 %v1154, %v1159
        %v1167 = vmul.f32 %v1155, %v1159
        %v1168 = vlaneseq
        %v1169 = vshrl.u32 %v1168, 7
        %v1170 = vsub.s32 0, %v1169
        %v1171 = vrot.slane %v1049, %v1170
        %v1172 = vadd.f32 %v1160, %v1171
        %v1173 = vadd.f32 %v1161, %v1171
        %v1174 = vadd.f32 %v1162, %v1171
        %v1175 = vadd.f32 %v1163, %v1171
        %v1176 = vadd.f32 %v1164, %v1171
        %v1177 = vadd.f32 %v1165, %v1171
        %v1178 = vadd.f32 %v1166, %v1171
        %v1179 = vadd.f32 %v1167, %v1171
        %v1180 = vld [vmem:[%s4] sm:$0xff]
        %v1181 = vld [vmem:[%s4 + $0x8] sm:$0xff]
        %v1182 = vld [vmem:[%s4 + $0x10] sm:$0xff]
        %v1183 = vld [vmem:[%s4 + $0x18] sm:$0xff]
        %v1184 = vld [vmem:[%s4 + $0x20] sm:$0xff]
        %v1185 = vld [vmem:[%s4 + $0x28] sm:$0xff]
        %v1186 = vpack.c.bf16 %v1173, %v1172
        %v1187 = vpack.c.bf16 %v1175, %v1174
        %v1188 = vpack.c.bf16 %v1177, %v1176
        %v1189 = vpack.c.bf16 %v1179, %v1178
        %v1190 = vpack.c.bf16 %v1181, %v1180
        %v1191 = vpack.c.bf16 %v1183, %v1182
        %v1192 = vpack.c.bf16 %v1185, %v1184
        %v1194 = vsel %vm1050, %v1186, 0
        %v1197 = vsel %vm1050, %v1187, 0
        %v1200 = vsel %vm1050, %v1188, 0
        %v1203 = vsel %vm1050, %v1189, 0
        %1205 = vmatprep.subr.bf16.mxu0 0
        %1206 = vmatpush1.bf16.msra.mxu0 %v1190
        %1207 = vmatprep.subr.bf16.mxu0 0
        %1208 = vmatpush1.bf16.msra.mxu0 %v1191
        %1209 = vmatprep.subr.bf16.mxu0 0
        %1210 = vmatpush1.bf16.msra.mxu0 %v1192
        %1211 = vmatprep.subr.bf16.mxu0 0
        %1212 = vmatpush1.bf16.msra.mxu0 0
        %1213 = vmatprep.subr.bf16.mxu0 0
        %1214 = vmatpush1.bf16.msra.mxu0 0
        %1215 = vmatprep.subr.bf16.mxu0 0
        %1216 = vmatpush1.bf16.msra.mxu0 0
        %1217 = vmatprep.subr.bf16.mxu0 0
        %1218 = vmatpush1.bf16.msra.mxu0 0
        %1219 = vmatprep.subr.bf16.mxu0 0
        %1220 = vmatpush1.bf16.msra.mxu0 0
        %1221 = vmatprep.subr.bf16.mxu0 0
        %1222 = vmatpush1.bf16.msra.mxu0 0
        %1223 = vmatprep.subr.bf16.mxu0 0
        %1224 = vmatpush1.bf16.msra.mxu0 0
        %1225 = vmatprep.subr.bf16.mxu0 0
        %1226 = vmatpush1.bf16.msra.mxu0 0
        %1227 = vmatprep.subr.bf16.mxu0 0
        %1228 = vmatpush1.bf16.msra.mxu0 0
        %1229 = vmatprep.subr.bf16.mxu0 0
        %1230 = vmatpush1.bf16.msra.mxu0 0
        %1231 = vmatprep.subr.bf16.mxu0 0
        %1232 = vmatpush1.bf16.msra.mxu0 0
        %1233 = vmatprep.subr.bf16.mxu0 0
        %1234 = vmatpush1.bf16.msra.mxu0 0
        %1235 = vmatprep.subr.bf16.mxu0 0
        %1236 = vmatpush1.bf16.msra.mxu0 0
        %1237 = vmatprep.mubr.bf16.mxu0 0
        %1238 = vmatmul.mubr.bf16.gmra.mrb[0].mxu0 %v1194
        %v1239 = vpop.f32.mrb[0].mxu0
        %v1240 = vadd.f32 0.0, %v1239
        %v1241 = vpop.f32.mrb[0].mxu0
        %v1242 = vpop.f32.mrb[0].mxu0
        %v1243 = vadd.f32 0.0, %v1242
        %v1244 = vpop.f32.mrb[0].mxu0
        %1245 = vmatprep.mubr.bf16.mxu0 0
        %1246 = vmatmul.mubr.bf16.gmra.mrb[0].mxu0 %v1197
        %v1247 = vpop.f32.mrb[0].mxu0
        %v1248 = vadd.f32 0.0, %v1247
        %v1249 = vpop.f32.mrb[0].mxu0
        %v1250 = vpop.f32.mrb[0].mxu0
        %v1251 = vadd.f32 0.0, %v1250
        %v1252 = vpop.f32.mrb[0].mxu0
        %1253 = vmatprep.mubr.bf16.mxu0 0
        %1254 = vmatmul.mubr.bf16.gmra.mrb[0].mxu0 %v1200
        %v1255 = vpop.f32.mrb[0].mxu0
        %v1256 = vadd.f32 0.0, %v1255
        %v1257 = vpop.f32.mrb[0].mxu0
        %v1258 = vpop.f32.mrb[0].mxu0
        %v1259 = vadd.f32 0.0, %v1258
        %v1260 = vpop.f32.mrb[0].mxu0
        %1261 = vmatprep.mubr.bf16.mxu0 0
        %1262 = vmatmul.mubr.bf16.gmra.mrb[0].mxu0 %v1203
        %v1263 = vpop.f32.mrb[0].mxu0
        %v1264 = vadd.f32 0.0, %v1263
        %v1265 = vpop.f32.mrb[0].mxu0
        %v1266 = vpop.f32.mrb[0].mxu0
        %v1267 = vadd.f32 0.0, %v1266
        %v1268 = vpop.f32.mrb[0].mxu0
        %1269 = vmatprep.mubr.bf16.mxu0 0
        %1270 = vmatmul.mubr.bf16.gmra.mrb[0].mxu0 %v1194
        %v1271 = vpop.f32.mrb[0].mxu0
        %v1272 = vadd.f32 0.0, %v1271
        %v1273 = vpop.f32.mrb[0].mxu0
        %v1274 = vpop.f32.mrb[0].mxu0
        %v1275 = vadd.f32 0.0, %v1274
        %v1276 = vpop.f32.mrb[0].mxu0
        %1277 = vmatprep.mubr.bf16.mxu0 0
        %1278 = vmatmul.mubr.bf16.gmra.mrb[0].mxu0 %v1197
        %v1279 = vpop.f32.mrb[0].mxu0
        %v1280 = vadd.f32 0.0, %v1279
        %v1281 = vpop.f32.mrb[0].mxu0
        %v1282 = vpop.f32.mrb[0].mxu0
        %v1283 = vadd.f32 0.0, %v1282
        %v1284 = vpop.f32.mrb[0].mxu0
        %1285 = vmatprep.mubr.bf16.mxu0 0
        %1286 = vmatmul.mubr.bf16.gmra.mrb[0].mxu0 %v1200
        %v1287 = vpop.f32.mrb[0].mxu0
        %v1288 = vadd.f32 0.0, %v1287
        %v1289 = vpop.f32.mrb[0].mxu0
        %v1290 = vpop.f32.mrb[0].mxu0
        %v1291 = vadd.f32 0.0, %v1290
        %v1292 = vpop.f32.mrb[0].mxu0
        %1293 = vmatprep.mubr.bf16.mxu0 0
        %1294 = vmatmul.mubr.bf16.gmra.mrb[0].mxu0 %v1203
        %v1295 = vpop.f32.mrb[0].mxu0
        %v1296 = vadd.f32 0.0, %v1295
        %v1297 = vpop.f32.mrb[0].mxu0
        %v1298 = vpop.f32.mrb[0].mxu0
        %v1299 = vadd.f32 0.0, %v1298
        %v1300 = vpop.f32.mrb[0].mxu0
        %1301 = vmatprep.mubr.bf16.mxu0 0
        %1302 = vmatmul.mubr.bf16.gmra.mrb[0].mxu0 %v1194
        %v1303 = vpop.f32.mrb[0].mxu0
        %v1304 = vadd.f32 0.0, %v1303
        %v1305 = vpop.f32.mrb[0].mxu0
        %v1306 = vpop.f32.mrb[0].mxu0
        %v1307 = vadd.f32 0.0, %v1306
        %v1308 = vpop.f32.mrb[0].mxu0
        %1309 = vmatprep.mubr.bf16.mxu0 0
        %1310 = vmatmul.mubr.bf16.gmra.mrb[0].mxu0 %v1197
        %v1311 = vpop.f32.mrb[0].mxu0
        %v1312 = vadd.f32 0.0, %v1311
        %v1313 = vpop.f32.mrb[0].mxu0
        %v1314 = vpop.f32.mrb[0].mxu0
        %v1315 = vadd.f32 0.0, %v1314
        %v1316 = vpop.f32.mrb[0].mxu0
        %1317 = vmatprep.mubr.bf16.mxu0 0
        %1318 = vmatmul.mubr.bf16.gmra.mrb[0].mxu0 %v1200
        %v1319 = vpop.f32.mrb[0].mxu0
        %v1320 = vadd.f32 0.0, %v1319
        %v1321 = vpop.f32.mrb[0].mxu0
        %v1322 = vpop.f32.mrb[0].mxu0
        %v1323 = vadd.f32 0.0, %v1322
        %v1324 = vpop.f32.mrb[0].mxu0
        %1325 = vmatprep.mubr.bf16.mxu0 0
        %1326 = vmatmul.mubr.bf16.gmra.mrb[0].mxu0 %v1203
        %v1327 = vpop.f32.mrb[0].mxu0
        %v1328 = vadd.f32 0.0, %v1327
        %v1329 = vpop.f32.mrb[0].mxu0
        %v1330 = vpop.f32.mrb[0].mxu0
        %v1331 = vadd.f32 0.0, %v1330
        %v1332 = vpop.f32.mrb[0].mxu0
        %1333 = vmatprep.mubr.bf16.mxu0 0
        %1334 = vmatmul.mubr.bf16.gmra.mrb[0].mxu0 %v1194
        %v1335 = vpop.f32.mrb[0].mxu0
        %v1336 = vadd.f32 0.0, %v1335
        %v1337 = vpop.f32.mrb[0].mxu0
        %v1338 = vpop.f32.mrb[0].mxu0
        %v1339 = vadd.f32 0.0, %v1338
        %v1340 = vpop.f32.mrb[0].mxu0
        %1341 = vmatprep.mubr.bf16.mxu0 0
        %1342 = vmatmul.mubr.bf16.gmra.mrb[0].mxu0 %v1197
        %v1343 = vpop.f32.mrb[0].mxu0
        %v1344 = vadd.f32 0.0, %v1343
        %v1345 = vpop.f32.mrb[0].mxu0
        %v1346 = vpop.f32.mrb[0].mxu0
        %v1347 = vadd.f32 0.0, %v1346
        %v1348 = vpop.f32.mrb[0].mxu0
        %1349 = vmatprep.mubr.bf16.mxu0 0
        %1350 = vmatmul.mubr.bf16.gmra.mrb[0].mxu0 %v1200
        %v1351 = vpop.f32.mrb[0].mxu0
        %v1352 = vadd.f32 0.0, %v1351
        %v1353 = vpop.f32.mrb[0].mxu0
        %v1354 = vpop.f32.mrb[0].mxu0
        %v1355 = vadd.f32 0.0, %v1354
        %v1356 = vpop.f32.mrb[0].mxu0
        %1357 = vmatprep.mubr.bf16.mxu0 0
        %1358 = vmatmul.mubr.bf16.gmra.mrb[0].mxu0 %v1203
        %v1359 = vpop.f32.mrb[0].mxu0
        %v1360 = vadd.f32 0.0, %v1359
        %v1361 = vpop.f32.mrb[0].mxu0
        %v1362 = vpop.f32.mrb[0].mxu0
        %v1363 = vadd.f32 0.0, %v1362
        %v1364 = vpop.f32.mrb[0].mxu0
        %1365 = vdwg.mxu0
        %v1366 = vld [vmem:[%s5] sm:$0xff]
        %v1367 = vld [vmem:[%s5 + $0x8] sm:$0xff]
        %v1368 = vld [vmem:[%s5 + $0x10] sm:$0xff]
        %v1369 = vld [vmem:[%s5 + $0x18] sm:$0xff]
        %v1370 = vpack.c.bf16 %v755, %v755
        %v1371 = vpack.c.bf16 %v1367, %v1366
        %v1372 = vpack.c.bf16 %v1369, %v1368
        %v1374 = vsel %vm637, %v1370, 0
        %1376 = vmatprep.subr.bf16.mxu0 0
        %1377 = vmatpush1.bf16.msra.mxu0 %v1371
        %1378 = vmatprep.subr.bf16.mxu0 0
        %1379 = vmatpush1.bf16.msra.mxu0 %v1372
        %1380 = vmatprep.subr.bf16.mxu0 0
        %1381 = vmatpush1.bf16.msra.mxu0 0
        %1382 = vmatprep.subr.bf16.mxu0 0
        %1383 = vmatpush1.bf16.msra.mxu0 0
        %1384 = vmatprep.subr.bf16.mxu0 0
        %1385 = vmatpush1.bf16.msra.mxu0 0
        %1386 = vmatprep.subr.bf16.mxu0 0
        %1387 = vmatpush1.bf16.msra.mxu0 0
        %1388 = vmatprep.subr.bf16.mxu0 0
        %1389 = vmatpush1.bf16.msra.mxu0 0
        %1390 = vmatprep.subr.bf16.mxu0 0
        %1391 = vmatpush1.bf16.msra.mxu0 0
        %1392 = vmatprep.subr.bf16.mxu0 0
        %1393 = vmatpush1.bf16.msra.mxu0 0
        %1394 = vmatprep.subr.bf16.mxu0 0
        %1395 = vmatpush1.bf16.msra.mxu0 0
        %1396 = vmatprep.subr.bf16.mxu0 0
        %1397 = vmatpush1.bf16.msra.mxu0 0
        %1398 = vmatprep.subr.bf16.mxu0 0
        %1399 = vmatpush1.bf16.msra.mxu0 0
        %1400 = vmatprep.subr.bf16.mxu0 0
        %1401 = vmatpush1.bf16.msra.mxu0 0
        %1402 = vmatprep.subr.bf16.mxu0 0
        %1403 = vmatpush1.bf16.msra.mxu0 0
        %1404 = vmatprep.subr.bf16.mxu0 0
        %1405 = vmatpush1.bf16.msra.mxu0 0
        %1406 = vmatprep.subr.bf16.mxu0 0
        %1407 = vmatpush1.bf16.msra.mxu0 0
        %1408 = vmatprep.mubr.bf16.mxu0 0
        %1409 = vmatmul.mubr.bf16.gmra.mrb[0].mxu0 %v1374
        %v1410 = vpop.f32.mrb[0].mxu0
        %v1411 = vadd.f32 0.0, %v1410
        %v1412 = vpop.f32.mrb[0].mxu0
        %v1413 = vpop.f32.mrb[0].mxu0
        %v1414 = vpop.f32.mrb[0].mxu0
        %1415 = vdwg.mxu0
        %v1416 = vpack.c.bf16 %v607, %v606
        %v1417 = vpack.c.bf16 %v609, %v608
        %v1418 = vpack.c.bf16 %v611, %v610
        %v1419 = vpack.c.bf16 %v1411, %v1411
        %vm1420 = vcmask 31744
        %v1422 = vsel %vm1420, %v1416, 0
        %v1425 = vsel %vm1420, %v1417, 0
        %v1428 = vsel %vm1420, %v1418, 0
        %vm1430 = vcmask 1041408
        %v1432 = vsel %vm1430, %v1419, 0
        %1434 = vmatprep.subr.bf16.mxu0 0
        %1435 = vmatpush1.bf16.msra.mxu0 %v1432
        %1436 = vmatprep.subr.bf16.mxu0 0
        %1437 = vmatpush1.bf16.msra.mxu0 0
        %1438 = vmatprep.subr.bf16.mxu0 0
        %1439 = vmatpush1.bf16.msra.mxu0 0
        %1440 = vmatprep.subr.bf16.mxu0 0
        %1441 = vmatpush1.bf16.msra.mxu0 0
        %1442 = vmatprep.subr.bf16.mxu0 0
        %1443 = vmatpush1.bf16.msra.mxu0 0
        %1444 = vmatprep.subr.bf16.mxu0 0
        %1445 = vmatpush1.bf16.msra.mxu0 0
        %1446 = vmatprep.subr.bf16.mxu0 0
        %1447 = vmatpush1.bf16.msra.mxu0 0
        %1448 = vmatprep.subr.bf16.mxu0 0
        %1449 = vmatpush1.bf16.msra.mxu0 0
        %1450 = vmatprep.subr.bf16.mxu0 0
        %1451 = vmatpush1.bf16.msra.mxu0 0
        %1452 = vmatprep.subr.bf16.mxu0 0
        %1453 = vmatpush1.bf16.msra.mxu0 0
        %1454 = vmatprep.subr.bf16.mxu0 0
        %1455 = vmatpush1.bf16.msra.mxu0 0
        %1456 = vmatprep.subr.bf16.mxu0 0
        %1457 = vmatpush1.bf16.msra.mxu0 0
        %1458 = vmatprep.subr.bf16.mxu0 0
        %1459 = vmatpush1.bf16.msra.mxu0 0
        %1460 = vmatprep.subr.bf16.mxu0 0
        %1461 = vmatpush1.bf16.msra.mxu0 0
        %1462 = vmatprep.subr.bf16.mxu0 0
        %1463 = vmatpush1.bf16.msra.mxu0 0
        %1464 = vmatprep.subr.bf16.mxu0 0
        %1465 = vmatpush1.bf16.msra.mxu0 0
        %1466 = vmatprep.mubr.bf16.mxu0 0
        %1467 = vmatmul.mubr.bf16.gmra.mrb[0].mxu0 %v1422
        %v1468 = vpop.f32.mrb[0].mxu0
        %v1469 = vadd.f32 0.0, %v1468
        %v1470 = vpop.f32.mrb[0].mxu0
        %v1471 = vpop.f32.mrb[0].mxu0
        %v1472 = vadd.f32 0.0, %v1471
        %v1473 = vpop.f32.mrb[0].mxu0
        %1474 = vmatprep.mubr.bf16.mxu0 0
        %1475 = vmatmul.mubr.bf16.gmra.mrb[0].mxu0 %v1425
        %v1476 = vpop.f32.mrb[0].mxu0
        %v1477 = vadd.f32 0.0, %v1476
        %v1478 = vpop.f32.mrb[0].mxu0
        %v1479 = vpop.f32.mrb[0].mxu0
        %v1480 = vadd.f32 0.0, %v1479
        %v1481 = vpop.f32.mrb[0].mxu0
        %1482 = vmatprep.mubr.bf16.mxu0 0
        %1483 = vmatmul.mubr.bf16.gmra.mrb[0].mxu0 %v1428
        %v1484 = vpop.f32.mrb[0].mxu0
        %v1485 = vadd.f32 0.0, %v1484
        %v1486 = vpop.f32.mrb[0].mxu0
        %v1487 = vpop.f32.mrb[0].mxu0
        %v1488 = vadd.f32 0.0, %v1487
        %v1489 = vpop.f32.mrb[0].mxu0
        %1490 = vdwg.mxu0
        %v1491 = vmul.f32 %v1469, %v612
        %v1492 = vmul.f32 %v1472, %v613
        %v1493 = vmul.f32 %v1477, %v614
        %v1494 = vmul.f32 %v1480, %v615
        %v1495 = vmul.f32 %v1485, %v616
        %v1496 = vmul.f32 %v1488, %v617
        %v1497 = vpack.c.bf16 %v1243, %v1240
        %v1498 = vpack.c.bf16 %v1251, %v1248
        %v1499 = vpack.c.bf16 %v1259, %v1256
        %v1500 = vpack.c.bf16 %v1267, %v1264
        %v1501 = vpack.c.bf16 %v1492, %v1491
        %v1502 = vpack.c.bf16 %v1494, %v1493
        %v1503 = vpack.c.bf16 %v1496, %v1495
        %v1505 = vsel %vm1050, %v1497, 0
        %v1508 = vsel %vm1050, %v1498, 0
        %v1511 = vsel %vm1050, %v1499, 0
        %v1514 = vsel %vm1050, %v1500, 0
        %v1517 = vsel %vm1050, %v1501, 0
        %v1520 = vsel %vm1050, %v1502, 0
        %v1523 = vsel %vm1050, %v1503, 0
        %1525 = vmatprep.subr.bf16.mxu0 0
        %1526 = vmatpush1.bf16.xpose.msra.mxu0 %v1517
        %1527 = vmatprep.subr.bf16.mxu0 0
        %1528 = vmatpush1.bf16.xpose.msra.mxu0 %v1520
        %1529 = vmatprep.subr.bf16.mxu0 0
        %1530 = vmatpush1.bf16.xpose.msra.mxu0 %v1523
        %1531 = vmatprep.subr.bf16.mxu0 0
        %1532 = vmatpush1.bf16.xpose.msra.mxu0 0
        %1533 = vmatprep.subr.bf16.mxu0 0
        %1534 = vmatpush1.bf16.xpose.msra.mxu0 0
        %1535 = vmatprep.subr.bf16.mxu0 0
        %1536 = vmatpush1.bf16.xpose.msra.mxu0 0
        %1537 = vmatprep.subr.bf16.mxu0 0
        %1538 = vmatpush1.bf16.xpose.msra.mxu0 0
        %1539 = vmatprep.subr.bf16.mxu0 0
        %1540 = vmatpush1.bf16.xpose.msra.mxu0 0
        %1541 = vmatprep.subr.bf16.mxu0 0
        %1542 = vmatpush1.bf16.xpose.msra.mxu0 0
        %1543 = vmatprep.subr.bf16.mxu0 0
        %1544 = vmatpush1.bf16.xpose.msra.mxu0 0
        %1545 = vmatprep.subr.bf16.mxu0 0
        %1546 = vmatpush1.bf16.xpose.msra.mxu0 0
        %1547 = vmatprep.subr.bf16.mxu0 0
        %1548 = vmatpush1.bf16.xpose.msra.mxu0 0
        %1549 = vmatprep.subr.bf16.mxu0 0
        %1550 = vmatpush1.bf16.xpose.msra.mxu0 0
        %1551 = vmatprep.subr.bf16.mxu0 0
        %1552 = vmatpush1.bf16.xpose.msra.mxu0 0
        %1553 = vmatprep.subr.bf16.mxu0 0
        %1554 = vmatpush1.bf16.xpose.msra.mxu0 0
        %1555 = vmatprep.subr.bf16.mxu0 0
        %1556 = vmatpush1.bf16.xpose.msra.mxu0 0
        %1557 = vmatprep.mubr.bf16.mxu0 0
        %1558 = vmatmul.mubr.bf16.gmra.mrb[0].mxu0 %v1505
        %v1559 = vpop.f32.mrb[0].mxu0
        %v1560 = vadd.f32 0.0, %v1559
        %v1561 = vpop.f32.mrb[0].mxu0
        %v1562 = vpop.f32.mrb[0].mxu0
        %v1563 = vadd.f32 0.0, %v1562
        %v1564 = vpop.f32.mrb[0].mxu0
        %1565 = vmatprep.mubr.bf16.mxu0 0
        %1566 = vmatmul.mubr.bf16.gmra.mrb[0].mxu0 %v1508
        %v1567 = vpop.f32.mrb[0].mxu0
        %v1568 = vadd.f32 0.0, %v1567
        %v1569 = vpop.f32.mrb[0].mxu0
        %v1570 = vpop.f32.mrb[0].mxu0
        %v1571 = vadd.f32 0.0, %v1570
        %v1572 = vpop.f32.mrb[0].mxu0
        %1573 = vmatprep.mubr.bf16.mxu0 0
        %1574 = vmatmul.mubr.bf16.gmra.mrb[0].mxu0 %v1511
        %v1575 = vpop.f32.mrb[0].mxu0
        %v1576 = vadd.f32 0.0, %v1575
        %v1577 = vpop.f32.mrb[0].mxu0
        %v1578 = vpop.f32.mrb[0].mxu0
        %v1579 = vadd.f32 0.0, %v1578
        %v1580 = vpop.f32.mrb[0].mxu0
        %1581 = vmatprep.mubr.bf16.mxu0 0
        %1582 = vmatmul.mubr.bf16.gmra.mrb[0].mxu0 %v1514
        %v1583 = vpop.f32.mrb[0].mxu0
        %v1584 = vadd.f32 0.0, %v1583
        %v1585 = vpop.f32.mrb[0].mxu0
        %v1586 = vpop.f32.mrb[0].mxu0
        %v1587 = vadd.f32 0.0, %v1586
        %v1588 = vpop.f32.mrb[0].mxu0
        %1589 = vdwg.mxu0
        %v1590 = vpack.c.bf16 %v851, %v851
        %v1592 = vsel %vm637, %v1590, 0
        %1594 = vmatprep.subr.bf16.mxu0 0
        %1595 = vmatpush1.bf16.msra.mxu0 %v1371
        %1596 = vmatprep.subr.bf16.mxu0 0
        %1597 = vmatpush1.bf16.msra.mxu0 %v1372
        %1598 = vmatprep.subr.bf16.mxu0 0
        %1599 = vmatpush1.bf16.msra.mxu0 0
        %1600 = vmatprep.subr.bf16.mxu0 0
        %1601 = vmatpush1.bf16.msra.mxu0 0
        %1602 = vmatprep.subr.bf16.mxu0 0
        %1603 = vmatpush1.bf16.msra.mxu0 0
        %1604 = vmatprep.subr.bf16.mxu0 0
        %1605 = vmatpush1.bf16.msra.mxu0 0
        %1606 = vmatprep.subr.bf16.mxu0 0
        %1607 = vmatpush1.bf16.msra.mxu0 0
        %1608 = vmatprep.subr.bf16.mxu0 0
        %1609 = vmatpush1.bf16.msra.mxu0 0
        %1610 = vmatprep.subr.bf16.mxu0 0
        %1611 = vmatpush1.bf16.msra.mxu0 0
        %1612 = vmatprep.subr.bf16.mxu0 0
        %1613 = vmatpush1.bf16.msra.mxu0 0
        %1614 = vmatprep.subr.bf16.mxu0 0
        %1615 = vmatpush1.bf16.msra.mxu0 0
        %1616 = vmatprep.subr.bf16.mxu0 0
        %1617 = vmatpush1.bf16.msra.mxu0 0
        %1618 = vmatprep.subr.bf16.mxu0 0
        %1619 = vmatpush1.bf16.msra.mxu0 0
        %1620 = vmatprep.subr.bf16.mxu0 0
        %1621 = vmatpush1.bf16.msra.mxu0 0
        %1622 = vmatprep.subr.bf16.mxu0 0
        %1623 = vmatpush1.bf16.msra.mxu0 0
        %1624 = vmatprep.subr.bf16.mxu0 0
        %1625 = vmatpush1.bf16.msra.mxu0 0
        %1626 = vmatprep.mubr.bf16.mxu0 0
        %1627 = vmatmul.mubr.bf16.gmra.mrb[0].mxu0 %v1592
        %v1628 = vpop.f32.mrb[0].mxu0
        %v1629 = vadd.f32 0.0, %v1628
        %v1630 = vpop.f32.mrb[0].mxu0
        %v1631 = vpop.f32.mrb[0].mxu0
        %v1632 = vpop.f32.mrb[0].mxu0
        %1633 = vdwg.mxu0
        %v1634 = vpack.c.bf16 %v1629, %v1629
        %v1636 = vsel %vm1430, %v1634, 0
        %1638 = vmatprep.subr.bf16.mxu0 0
        %1639 = vmatpush1.bf16.msra.mxu0 %v1636
        %1640 = vmatprep.subr.bf16.mxu0 0
        %1641 = vmatpush1.bf16.msra.mxu0 0
        %1642 = vmatprep.subr.bf16.mxu0 0
        %1643 = vmatpush1.bf16.msra.mxu0 0
        %1644 = vmatprep.subr.bf16.mxu0 0
        %1645 = vmatpush1.bf16.msra.mxu0 0
        %1646 = vmatprep.subr.bf16.mxu0 0
        %1647 = vmatpush1.bf16.msra.mxu0 0
        %1648 = vmatprep.subr.bf16.mxu0 0
        %1649 = vmatpush1.bf16.msra.mxu0 0
        %1650 = vmatprep.subr.bf16.mxu0 0
        %1651 = vmatpush1.bf16.msra.mxu0 0
        %1652 = vmatprep.subr.bf16.mxu0 0
        %1653 = vmatpush1.bf16.msra.mxu0 0
        %1654 = vmatprep.subr.bf16.mxu0 0
        %1655 = vmatpush1.bf16.msra.mxu0 0
        %1656 = vmatprep.subr.bf16.mxu0 0
        %1657 = vmatpush1.bf16.msra.mxu0 0
        %1658 = vmatprep.subr.bf16.mxu0 0
        %1659 = vmatpush1.bf16.msra.mxu0 0
        %1660 = vmatprep.subr.bf16.mxu0 0
        %1661 = vmatpush1.bf16.msra.mxu0 0
        %1662 = vmatprep.subr.bf16.mxu0 0
        %1663 = vmatpush1.bf16.msra.mxu0 0
        %1664 = vmatprep.subr.bf16.mxu0 0
        %1665 = vmatpush1.bf16.msra.mxu0 0
        %1666 = vmatprep.subr.bf16.mxu0 0
        %1667 = vmatpush1.bf16.msra.mxu0 0
        %1668 = vmatprep.subr.bf16.mxu0 0
        %1669 = vmatpush1.bf16.msra.mxu0 0
        %1670 = vmatprep.mubr.bf16.mxu0 0
        %1671 = vmatmul.mubr.bf16.gmra.mrb[0].mxu0 %v1422
        %v1672 = vpop.f32.mrb[0].mxu0
        %v1673 = vadd.f32 0.0, %v1672
        %v1674 = vpop.f32.mrb[0].mxu0
        %v1675 = vpop.f32.mrb[0].mxu0
        %v1676 = vadd.f32 0.0, %v1675
        %v1677 = vpop.f32.mrb[0].mxu0
        %1678 = vmatprep.mubr.bf16.mxu0 0
        %1679 = vmatmul.mubr.bf16.gmra.mrb[0].mxu0 %v1425
        %v1680 = vpop.f32.mrb[0].mxu0
        %v1681 = vadd.f32 0.0, %v1680
        %v1682 = vpop.f32.mrb[0].mxu0
        %v1683 = vpop.f32.mrb[0].mxu0
        %v1684 = vadd.f32 0.0, %v1683
        %v1685 = vpop.f32.mrb[0].mxu0
        %1686 = vmatprep.mubr.bf16.mxu0 0
        %1687 = vmatmul.mubr.bf16.gmra.mrb[0].mxu0 %v1428
        %v1688 = vpop.f32.mrb[0].mxu0
        %v1689 = vadd.f32 0.0, %v1688
        %v1690 = vpop.f32.mrb[0].mxu0
        %v1691 = vpop.f32.mrb[0].mxu0
        %v1692 = vadd.f32 0.0, %v1691
        %v1693 = vpop.f32.mrb[0].mxu0
        %1694 = vdwg.mxu0
        %v1695 = vmul.f32 %v1673, %v612
        %v1696 = vmul.f32 %v1676, %v613
        %v1697 = vmul.f32 %v1681, %v614
        %v1698 = vmul.f32 %v1684, %v615
        %v1699 = vmul.f32 %v1689, %v616
        %v1700 = vmul.f32 %v1692, %v617
        %v1701 = vpack.c.bf16 %v1275, %v1272
        %v1702 = vpack.c.bf16 %v1283, %v1280
        %v1703 = vpack.c.bf16 %v1291, %v1288
        %v1704 = vpack.c.bf16 %v1299, %v1296
        %v1705 = vpack.c.bf16 %v1696, %v1695
        %v1706 = vpack.c.bf16 %v1698, %v1697
        %v1707 = vpack.c.bf16 %v1700, %v1699
        %v1709 = vsel %vm1050, %v1701, 0
        %v1712 = vsel %vm1050, %v1702, 0
        %v1715 = vsel %vm1050, %v1703, 0
        %v1718 = vsel %vm1050, %v1704, 0
        %v1721 = vsel %vm1050, %v1705, 0
        %v1724 = vsel %vm1050, %v1706, 0
        %v1727 = vsel %vm1050, %v1707, 0
        %1729 = vmatprep.subr.bf16.mxu0 0
        %1730 = vmatpush1.bf16.xpose.msra.mxu0 %v1721
        %1731 = vmatprep.subr.bf16.mxu0 0
        %1732 = vmatpush1.bf16.xpose.msra.mxu0 %v1724
        %1733 = vmatprep.subr.bf16.mxu0 0
        %1734 = vmatpush1.bf16.xpose.msra.mxu0 %v1727
        %1735 = vmatprep.subr.bf16.mxu0 0
        %1736 = vmatpush1.bf16.xpose.msra.mxu0 0
        %1737 = vmatprep.subr.bf16.mxu0 0
        %1738 = vmatpush1.bf16.xpose.msra.mxu0 0
        %1739 = vmatprep.subr.bf16.mxu0 0
        %1740 = vmatpush1.bf16.xpose.msra.mxu0 0
        %1741 = vmatprep.subr.bf16.mxu0 0
        %1742 = vmatpush1.bf16.xpose.msra.mxu0 0
        %1743 = vmatprep.subr.bf16.mxu0 0
        %1744 = vmatpush1.bf16.xpose.msra.mxu0 0
        %1745 = vmatprep.subr.bf16.mxu0 0
        %1746 = vmatpush1.bf16.xpose.msra.mxu0 0
        %1747 = vmatprep.subr.bf16.mxu0 0
        %1748 = vmatpush1.bf16.xpose.msra.mxu0 0
        %1749 = vmatprep.subr.bf16.mxu0 0
        %1750 = vmatpush1.bf16.xpose.msra.mxu0 0
        %1751 = vmatprep.subr.bf16.mxu0 0
        %1752 = vmatpush1.bf16.xpose.msra.mxu0 0
        %1753 = vmatprep.subr.bf16.mxu0 0
        %1754 = vmatpush1.bf16.xpose.msra.mxu0 0
        %1755 = vmatprep.subr.bf16.mxu0 0
        %1756 = vmatpush1.bf16.xpose.msra.mxu0 0
        %1757 = vmatprep.subr.bf16.mxu0 0
        %1758 = vmatpush1.bf16.xpose.msra.mxu0 0
        %1759 = vmatprep.subr.bf16.mxu0 0
        %1760 = vmatpush1.bf16.xpose.msra.mxu0 0
        %1761 = vmatprep.mubr.bf16.mxu0 0
        %1762 = vmatmul.mubr.bf16.gmra.mrb[0].mxu0 %v1709
        %v1763 = vpop.f32.mrb[0].mxu0
        %v1764 = vadd.f32 0.0, %v1763
        %v1765 = vpop.f32.mrb[0].mxu0
        %v1766 = vpop.f32.mrb[0].mxu0
        %v1767 = vadd.f32 0.0, %v1766
        %v1768 = vpop.f32.mrb[0].mxu0
        %1769 = vmatprep.mubr.bf16.mxu0 0
        %1770 = vmatmul.mubr.bf16.gmra.mrb[0].mxu0 %v1712
        %v1771 = vpop.f32.mrb[0].mxu0
        %v1772 = vadd.f32 0.0, %v1771
        %v1773 = vpop.f32.mrb[0].mxu0
        %v1774 = vpop.f32.mrb[0].mxu0
        %v1775 = vadd.f32 0.0, %v1774
        %v1776 = vpop.f32.mrb[0].mxu0
        %1777 = vmatprep.mubr.bf16.mxu0 0
        %1778 = vmatmul.mubr.bf16.gmra.mrb[0].mxu0 %v1715
        %v1779 = vpop.f32.mrb[0].mxu0
        %v1780 = vadd.f32 0.0, %v1779
        %v1781 = vpop.f32.mrb[0].mxu0
        %v1782 = vpop.f32.mrb[0].mxu0
        %v1783 = vadd.f32 0.0, %v1782
        %v1784 = vpop.f32.mrb[0].mxu0
        %1785 = vmatprep.mubr.bf16.mxu0 0
        %1786 = vmatmul.mubr.bf16.gmra.mrb[0].mxu0 %v1718
        %v1787 = vpop.f32.mrb[0].mxu0
        %v1788 = vadd.f32 0.0, %v1787
        %v1789 = vpop.f32.mrb[0].mxu0
        %v1790 = vpop.f32.mrb[0].mxu0
        %v1791 = vadd.f32 0.0, %v1790
        %v1792 = vpop.f32.mrb[0].mxu0
        %1793 = vdwg.mxu0
        %v1794 = vpack.c.bf16 %v947, %v947
        %v1796 = vsel %vm637, %v1794, 0
        %1798 = vmatprep.subr.bf16.mxu0 0
        %1799 = vmatpush1.bf16.msra.mxu0 %v1371
        %1800 = vmatprep.subr.bf16.mxu0 0
        %1801 = vmatpush1.bf16.msra.mxu0 %v1372
        %1802 = vmatprep.subr.bf16.mxu0 0
        %1803 = vmatpush1.bf16.msra.mxu0 0
        %1804 = vmatprep.subr.bf16.mxu0 0
        %1805 = vmatpush1.bf16.msra.mxu0 0
        %1806 = vmatprep.subr.bf16.mxu0 0
        %1807 = vmatpush1.bf16.msra.mxu0 0
        %1808 = vmatprep.subr.bf16.mxu0 0
        %1809 = vmatpush1.bf16.msra.mxu0 0
        %1810 = vmatprep.subr.bf16.mxu0 0
        %1811 = vmatpush1.bf16.msra.mxu0 0
        %1812 = vmatprep.subr.bf16.mxu0 0
        %1813 = vmatpush1.bf16.msra.mxu0 0
        %1814 = vmatprep.subr.bf16.mxu0 0
        %1815 = vmatpush1.bf16.msra.mxu0 0
        %1816 = vmatprep.subr.bf16.mxu0 0
        %1817 = vmatpush1.bf16.msra.mxu0 0
        %1818 = vmatprep.subr.bf16.mxu0 0
        %1819 = vmatpush1.bf16.msra.mxu0 0
        %1820 = vmatprep.subr.bf16.mxu0 0
        %1821 = vmatpush1.bf16.msra.mxu0 0
        %1822 = vmatprep.subr.bf16.mxu0 0
        %1823 = vmatpush1.bf16.msra.mxu0 0
        %1824 = vmatprep.subr.bf16.mxu0 0
        %1825 = vmatpush1.bf16.msra.mxu0 0
        %1826 = vmatprep.subr.bf16.mxu0 0
        %1827 = vmatpush1.bf16.msra.mxu0 0
        %1828 = vmatprep.subr.bf16.mxu0 0
        %1829 = vmatpush1.bf16.msra.mxu0 0
        %1830 = vmatprep.mubr.bf16.mxu0 0
        %1831 = vmatmul.mubr.bf16.gmra.mrb[0].mxu0 %v1796
        %v1832 = vpop.f32.mrb[0].mxu0
        %v1833 = vadd.f32 0.0, %v1832
        %v1834 = vpop.f32.mrb[0].mxu0
        %v1835 = vpop.f32.mrb[0].mxu0
        %v1836 = vpop.f32.mrb[0].mxu0
        %1837 = vdwg.mxu0
        %v1838 = vpack.c.bf16 %v1833, %v1833
        %v1840 = vsel %vm1430, %v1838, 0
        %1842 = vmatprep.subr.bf16.mxu0 0
        %1843 = vmatpush1.bf16.msra.mxu0 %v1840
        %1844 = vmatprep.subr.bf16.mxu0 0
        %1845 = vmatpush1.bf16.msra.mxu0 0
        %1846 = vmatprep.subr.bf16.mxu0 0
        %1847 = vmatpush1.bf16.msra.mxu0 0
        %1848 = vmatprep.subr.bf16.mxu0 0
        %1849 = vmatpush1.bf16.msra.mxu0 0
        %1850 = vmatprep.subr.bf16.mxu0 0
        %1851 = vmatpush1.bf16.msra.mxu0 0
        %1852 = vmatprep.subr.bf16.mxu0 0
        %1853 = vmatpush1.bf16.msra.mxu0 0
        %1854 = vmatprep.subr.bf16.mxu0 0
        %1855 = vmatpush1.bf16.msra.mxu0 0
        %1856 = vmatprep.subr.bf16.mxu0 0
        %1857 = vmatpush1.bf16.msra.mxu0 0
        %1858 = vmatprep.subr.bf16.mxu0 0
        %1859 = vmatpush1.bf16.msra.mxu0 0
        %1860 = vmatprep.subr.bf16.mxu0 0
        %1861 = vmatpush1.bf16.msra.mxu0 0
        %1862 = vmatprep.subr.bf16.mxu0 0
        %1863 = vmatpush1.bf16.msra.mxu0 0
        %1864 = vmatprep.subr.bf16.mxu0 0
        %1865 = vmatpush1.bf16.msra.mxu0 0
        %1866 = vmatprep.subr.bf16.mxu0 0
        %1867 = vmatpush1.bf16.msra.mxu0 0
        %1868 = vmatprep.subr.bf16.mxu0 0
        %1869 = vmatpush1.bf16.msra.mxu0 0
        %1870 = vmatprep.subr.bf16.mxu0 0
        %1871 = vmatpush1.bf16.msra.mxu0 0
        %1872 = vmatprep.subr.bf16.mxu0 0
        %1873 = vmatpush1.bf16.msra.mxu0 0
        %1874 = vmatprep.mubr.bf16.mxu0 0
        %1875 = vmatmul.mubr.bf16.gmra.mrb[0].mxu0 %v1422
        %v1876 = vpop.f32.mrb[0].mxu0
        %v1877 = vadd.f32 0.0, %v1876
        %v1878 = vpop.f32.mrb[0].mxu0
        %v1879 = vpop.f32.mrb[0].mxu0
        %v1880 = vadd.f32 0.0, %v1879
        %v1881 = vpop.f32.mrb[0].mxu0
        %1882 = vmatprep.mubr.bf16.mxu0 0
        %1883 = vmatmul.mubr.bf16.gmra.mrb[0].mxu0 %v1425
        %v1884 = vpop.f32.mrb[0].mxu0
        %v1885 = vadd.f32 0.0, %v1884
        %v1886 = vpop.f32.mrb[0].mxu0
        %v1887 = vpop.f32.mrb[0].mxu0
        %v1888 = vadd.f32 0.0, %v1887
        %v1889 = vpop.f32.mrb[0].mxu0
        %1890 = vmatprep.mubr.bf16.mxu0 0
        %1891 = vmatmul.mubr.bf16.gmra.mrb[0].mxu0 %v1428
        %v1892 = vpop.f32.mrb[0].mxu0
        %v1893 = vadd.f32 0.0, %v1892
        %v1894 = vpop.f32.mrb[0].mxu0
        %v1895 = vpop.f32.mrb[0].mxu0
        %v1896 = vadd.f32 0.0, %v1895
        %v1897 = vpop.f32.mrb[0].mxu0
        %1898 = vdwg.mxu0
        %v1899 = vmul.f32 %v1877, %v612
        %v1900 = vmul.f32 %v1880, %v613
        %v1901 = vmul.f32 %v1885, %v614
        %v1902 = vmul.f32 %v1888, %v615
        %v1903 = vmul.f32 %v1893, %v616
        %v1904 = vmul.f32 %v1896, %v617
        %v1905 = vpack.c.bf16 %v1307, %v1304
        %v1906 = vpack.c.bf16 %v1315, %v1312
        %v1907 = vpack.c.bf16 %v1323, %v1320
        %v1908 = vpack.c.bf16 %v1331, %v1328
        %v1909 = vpack.c.bf16 %v1900, %v1899
        %v1910 = vpack.c.bf16 %v1902, %v1901
        %v1911 = vpack.c.bf16 %v1904, %v1903
        %v1913 = vsel %vm1050, %v1905, 0
        %v1916 = vsel %vm1050, %v1906, 0
        %v1919 = vsel %vm1050, %v1907, 0
        %v1922 = vsel %vm1050, %v1908, 0
        %v1925 = vsel %vm1050, %v1909, 0
        %v1928 = vsel %vm1050, %v1910, 0
        %v1931 = vsel %vm1050, %v1911, 0
        %1933 = vmatprep.subr.bf16.mxu0 0
        %1934 = vmatpush1.bf16.xpose.msra.mxu0 %v1925
        %1935 = vmatprep.subr.bf16.mxu0 0
        %1936 = vmatpush1.bf16.xpose.msra.mxu0 %v1928
        %1937 = vmatprep.subr.bf16.mxu0 0
        %1938 = vmatpush1.bf16.xpose.msra.mxu0 %v1931
        %1939 = vmatprep.subr.bf16.mxu0 0
        %1940 = vmatpush1.bf16.xpose.msra.mxu0 0
        %1941 = vmatprep.subr.bf16.mxu0 0
        %1942 = vmatpush1.bf16.xpose.msra.mxu0 0
        %1943 = vmatprep.subr.bf16.mxu0 0
        %1944 = vmatpush1.bf16.xpose.msra.mxu0 0
        %1945 = vmatprep.subr.bf16.mxu0 0
        %1946 = vmatpush1.bf16.xpose.msra.mxu0 0
        %1947 = vmatprep.subr.bf16.mxu0 0
        %1948 = vmatpush1.bf16.xpose.msra.mxu0 0
        %1949 = vmatprep.subr.bf16.mxu0 0
        %1950 = vmatpush1.bf16.xpose.msra.mxu0 0
        %1951 = vmatprep.subr.bf16.mxu0 0
        %1952 = vmatpush1.bf16.xpose.msra.mxu0 0
        %1953 = vmatprep.subr.bf16.mxu0 0
        %1954 = vmatpush1.bf16.xpose.msra.mxu0 0
        %1955 = vmatprep.subr.bf16.mxu0 0
        %1956 = vmatpush1.bf16.xpose.msra.mxu0 0
        %1957 = vmatprep.subr.bf16.mxu0 0
        %1958 = vmatpush1.bf16.xpose.msra.mxu0 0
        %1959 = vmatprep.subr.bf16.mxu0 0
        %1960 = vmatpush1.bf16.xpose.msra.mxu0 0
        %1961 = vmatprep.subr.bf16.mxu0 0
        %1962 = vmatpush1.bf16.xpose.msra.mxu0 0
        %1963 = vmatprep.subr.bf16.mxu0 0
        %1964 = vmatpush1.bf16.xpose.msra.mxu0 0
        %1965 = vmatprep.mubr.bf16.mxu0 0
        %1966 = vmatmul.mubr.bf16.gmra.mrb[0].mxu0 %v1913
        %v1967 = vpop.f32.mrb[0].mxu0
        %v1968 = vadd.f32 0.0, %v1967
        %v1969 = vpop.f32.mrb[0].mxu0
        %v1970 = vpop.f32.mrb[0].mxu0
        %v1971 = vadd.f32 0.0, %v1970
        %v1972 = vpop.f32.mrb[0].mxu0
        %1973 = vmatprep.mubr.bf16.mxu0 0
        %1974 = vmatmul.mubr.bf16.gmra.mrb[0].mxu0 %v1916
        %v1975 = vpop.f32.mrb[0].mxu0
        %v1976 = vadd.f32 0.0, %v1975
        %v1977 = vpop.f32.mrb[0].mxu0
        %v1978 = vpop.f32.mrb[0].mxu0
        %v1979 = vadd.f32 0.0, %v1978
        %v1980 = vpop.f32.mrb[0].mxu0
        %1981 = vmatprep.mubr.bf16.mxu0 0
        %1982 = vmatmul.mubr.bf16.gmra.mrb[0].mxu0 %v1919
        %v1983 = vpop.f32.mrb[0].mxu0
        %v1984 = vadd.f32 0.0, %v1983
        %v1985 = vpop.f32.mrb[0].mxu0
        %v1986 = vpop.f32.mrb[0].mxu0
        %v1987 = vadd.f32 0.0, %v1986
        %v1988 = vpop.f32.mrb[0].mxu0
        %1989 = vmatprep.mubr.bf16.mxu0 0
        %1990 = vmatmul.mubr.bf16.gmra.mrb[0].mxu0 %v1922
        %v1991 = vpop.f32.mrb[0].mxu0
        %v1992 = vadd.f32 0.0, %v1991
        %v1993 = vpop.f32.mrb[0].mxu0
        %v1994 = vpop.f32.mrb[0].mxu0
        %v1995 = vadd.f32 0.0, %v1994
        %v1996 = vpop.f32.mrb[0].mxu0
        %1997 = vdwg.mxu0
        %v1998 = vpack.c.bf16 %v1043, %v1043
        %v2000 = vsel %vm637, %v1998, 0
        %2002 = vmatprep.subr.bf16.mxu0 0
        %2003 = vmatpush1.bf16.msra.mxu0 %v1371
        %2004 = vmatprep.subr.bf16.mxu0 0
        %2005 = vmatpush1.bf16.msra.mxu0 %v1372
        %2006 = vmatprep.subr.bf16.mxu0 0
        %2007 = vmatpush1.bf16.msra.mxu0 0
        %2008 = vmatprep.subr.bf16.mxu0 0
        %2009 = vmatpush1.bf16.msra.mxu0 0
        %2010 = vmatprep.subr.bf16.mxu0 0
        %2011 = vmatpush1.bf16.msra.mxu0 0
        %2012 = vmatprep.subr.bf16.mxu0 0
        %2013 = vmatpush1.bf16.msra.mxu0 0
        %2014 = vmatprep.subr.bf16.mxu0 0
        %2015 = vmatpush1.bf16.msra.mxu0 0
        %2016 = vmatprep.subr.bf16.mxu0 0
        %2017 = vmatpush1.bf16.msra.mxu0 0
        %2018 = vmatprep.subr.bf16.mxu0 0
        %2019 = vmatpush1.bf16.msra.mxu0 0
        %2020 = vmatprep.subr.bf16.mxu0 0
        %2021 = vmatpush1.bf16.msra.mxu0 0
        %2022 = vmatprep.subr.bf16.mxu0 0
        %2023 = vmatpush1.bf16.msra.mxu0 0
        %2024 = vmatprep.subr.bf16.mxu0 0
        %2025 = vmatpush1.bf16.msra.mxu0 0
        %2026 = vmatprep.subr.bf16.mxu0 0
        %2027 = vmatpush1.bf16.msra.mxu0 0
        %2028 = vmatprep.subr.bf16.mxu0 0
        %2029 = vmatpush1.bf16.msra.mxu0 0
        %2030 = vmatprep.subr.bf16.mxu0 0
        %2031 = vmatpush1.bf16.msra.mxu0 0
        %2032 = vmatprep.subr.bf16.mxu0 0
        %2033 = vmatpush1.bf16.msra.mxu0 0
        %2034 = vmatprep.mubr.bf16.mxu0 0
        %2035 = vmatmul.mubr.bf16.gmra.mrb[0].mxu0 %v2000
        %v2036 = vpop.f32.mrb[0].mxu0
        %v2037 = vadd.f32 0.0, %v2036
        %v2038 = vpop.f32.mrb[0].mxu0
        %v2039 = vpop.f32.mrb[0].mxu0
        %v2040 = vpop.f32.mrb[0].mxu0
        %2041 = vdwg.mxu0
        %v2042 = vpack.c.bf16 %v2037, %v2037
        %v2044 = vsel %vm1430, %v2042, 0
        %2046 = vmatprep.subr.bf16.mxu0 0
        %2047 = vmatpush1.bf16.msra.mxu0 %v2044
        %2048 = vmatprep.subr.bf16.mxu0 0
        %2049 = vmatpush1.bf16.msra.mxu0 0
        %2050 = vmatprep.subr.bf16.mxu0 0
        %2051 = vmatpush1.bf16.msra.mxu0 0
        %2052 = vmatprep.subr.bf16.mxu0 0
        %2053 = vmatpush1.bf16.msra.mxu0 0
        %2054 = vmatprep.subr.bf16.mxu0 0
        %2055 = vmatpush1.bf16.msra.mxu0 0
        %2056 = vmatprep.subr.bf16.mxu0 0
        %2057 = vmatpush1.bf16.msra.mxu0 0
        %2058 = vmatprep.subr.bf16.mxu0 0
        %2059 = vmatpush1.bf16.msra.mxu0 0
        %2060 = vmatprep.subr.bf16.mxu0 0
        %2061 = vmatpush1.bf16.msra.mxu0 0
        %2062 = vmatprep.subr.bf16.mxu0 0
        %2063 = vmatpush1.bf16.msra.mxu0 0
        %2064 = vmatprep.subr.bf16.mxu0 0
        %2065 = vmatpush1.bf16.msra.mxu0 0
        %2066 = vmatprep.subr.bf16.mxu0 0
        %2067 = vmatpush1.bf16.msra.mxu0 0
        %2068 = vmatprep.subr.bf16.mxu0 0
        %2069 = vmatpush1.bf16.msra.mxu0 0
        %2070 = vmatprep.subr.bf16.mxu0 0
        %2071 = vmatpush1.bf16.msra.mxu0 0
        %2072 = vmatprep.subr.bf16.mxu0 0
        %2073 = vmatpush1.bf16.msra.mxu0 0
        %2074 = vmatprep.subr.bf16.mxu0 0
        %2075 = vmatpush1.bf16.msra.mxu0 0
        %2076 = vmatprep.subr.bf16.mxu0 0
        %2077 = vmatpush1.bf16.msra.mxu0 0
        %2078 = vmatprep.mubr.bf16.mxu0 0
        %2079 = vmatmul.mubr.bf16.gmra.mrb[0].mxu0 %v1422
        %v2080 = vpop.f32.mrb[0].mxu0
        %v2081 = vadd.f32 0.0, %v2080
        %v2082 = vpop.f32.mrb[0].mxu0
        %v2083 = vpop.f32.mrb[0].mxu0
        %v2084 = vadd.f32 0.0, %v2083
        %v2085 = vpop.f32.mrb[0].mxu0
        %2086 = vmatprep.mubr.bf16.mxu0 0
        %2087 = vmatmul.mubr.bf16.gmra.mrb[0].mxu0 %v1425
        %v2088 = vpop.f32.mrb[0].mxu0
        %v2089 = vadd.f32 0.0, %v2088
        %v2090 = vpop.f32.mrb[0].mxu0
        %v2091 = vpop.f32.mrb[0].mxu0
        %v2092 = vadd.f32 0.0, %v2091
        %v2093 = vpop.f32.mrb[0].mxu0
        %2094 = vmatprep.mubr.bf16.mxu0 0
        %2095 = vmatmul.mubr.bf16.gmra.mrb[0].mxu0 %v1428
        %v2096 = vpop.f32.mrb[0].mxu0
        %v2097 = vadd.f32 0.0, %v2096
        %v2098 = vpop.f32.mrb[0].mxu0
        %v2099 = vpop.f32.mrb[0].mxu0
        %v2100 = vadd.f32 0.0, %v2099
        %v2101 = vpop.f32.mrb[0].mxu0
        %2102 = vdwg.mxu0
        %v2103 = vmul.f32 %v2081, %v612
        %v2104 = vmul.f32 %v2084, %v613
        %v2105 = vmul.f32 %v2089, %v614
        %v2106 = vmul.f32 %v2092, %v615
        %v2107 = vmul.f32 %v2097, %v616
        %v2108 = vmul.f32 %v2100, %v617
        %v2109 = vpack.c.bf16 %v1339, %v1336
        %v2110 = vpack.c.bf16 %v1347, %v1344
        %v2111 = vpack.c.bf16 %v1355, %v1352
        %v2112 = vpack.c.bf16 %v1363, %v1360
        %v2113 = vpack.c.bf16 %v2104, %v2103
        %v2114 = vpack.c.bf16 %v2106, %v2105
        %v2115 = vpack.c.bf16 %v2108, %v2107
        %v2117 = vsel %vm1050, %v2109, 0
        %v2120 = vsel %vm1050, %v2110, 0
        %v2123 = vsel %vm1050, %v2111, 0
        %v2126 = vsel %vm1050, %v2112, 0
        %v2129 = vsel %vm1050, %v2113, 0
        %v2132 = vsel %vm1050, %v2114, 0
        %v2135 = vsel %vm1050, %v2115, 0
        %2137 = vmatprep.subr.bf16.mxu0 0
        %2138 = vmatpush1.bf16.xpose.msra.mxu0 %v2129
        %2139 = vmatprep.subr.bf16.mxu0 0
        %2140 = vmatpush1.bf16.xpose.msra.mxu0 %v2132
        %2141 = vmatprep.subr.bf16.mxu0 0
        %2142 = vmatpush1.bf16.xpose.msra.mxu0 %v2135
        %2143 = vmatprep.subr.bf16.mxu0 0
        %2144 = vmatpush1.bf16.xpose.msra.mxu0 0
        %2145 = vmatprep.subr.bf16.mxu0 0
        %2146 = vmatpush1.bf16.xpose.msra.mxu0 0
        %2147 = vmatprep.subr.bf16.mxu0 0
        %2148 = vmatpush1.bf16.xpose.msra.mxu0 0
        %2149 = vmatprep.subr.bf16.mxu0 0
        %2150 = vmatpush1.bf16.xpose.msra.mxu0 0
        %2151 = vmatprep.subr.bf16.mxu0 0
        %2152 = vmatpush1.bf16.xpose.msra.mxu0 0
        %2153 = vmatprep.subr.bf16.mxu0 0
        %2154 = vmatpush1.bf16.xpose.msra.mxu0 0
        %2155 = vmatprep.subr.bf16.mxu0 0
        %2156 = vmatpush1.bf16.xpose.msra.mxu0 0
        %2157 = vmatprep.subr.bf16.mxu0 0
        %2158 = vmatpush1.bf16.xpose.msra.mxu0 0
        %2159 = vmatprep.subr.bf16.mxu0 0
        %2160 = vmatpush1.bf16.xpose.msra.mxu0 0
        %2161 = vmatprep.subr.bf16.mxu0 0
        %2162 = vmatpush1.bf16.xpose.msra.mxu0 0
        %2163 = vmatprep.subr.bf16.mxu0 0
        %2164 = vmatpush1.bf16.xpose.msra.mxu0 0
        %2165 = vmatprep.subr.bf16.mxu0 0
        %2166 = vmatpush1.bf16.xpose.msra.mxu0 0
        %2167 = vmatprep.subr.bf16.mxu0 0
        %2168 = vmatpush1.bf16.xpose.msra.mxu0 0
        %2169 = vmatprep.mubr.bf16.mxu0 0
        %2170 = vmatmul.mubr.bf16.gmra.mrb[0].mxu0 %v2117
        %v2171 = vpop.f32.mrb[0].mxu0
        %v2172 = vadd.f32 0.0, %v2171
        %v2173 = vpop.f32.mrb[0].mxu0
        %v2174 = vpop.f32.mrb[0].mxu0
        %v2175 = vadd.f32 0.0, %v2174
        %v2176 = vpop.f32.mrb[0].mxu0
        %2177 = vmatprep.mubr.bf16.mxu0 0
        %2178 = vmatmul.mubr.bf16.gmra.mrb[0].mxu0 %v2120
        %v2179 = vpop.f32.mrb[0].mxu0
        %v2180 = vadd.f32 0.0, %v2179
        %v2181 = vpop.f32.mrb[0].mxu0
        %v2182 = vpop.f32.mrb[0].mxu0
        %v2183 = vadd.f32 0.0, %v2182
        %v2184 = vpop.f32.mrb[0].mxu0
        %2185 = vmatprep.mubr.bf16.mxu0 0
        %2186 = vmatmul.mubr.bf16.gmra.mrb[0].mxu0 %v2123
        %v2187 = vpop.f32.mrb[0].mxu0
        %v2188 = vadd.f32 0.0, %v2187
        %v2189 = vpop.f32.mrb[0].mxu0
        %v2190 = vpop.f32.mrb[0].mxu0
        %v2191 = vadd.f32 0.0, %v2190
        %v2192 = vpop.f32.mrb[0].mxu0
        %2193 = vmatprep.mubr.bf16.mxu0 0
        %2194 = vmatmul.mubr.bf16.gmra.mrb[0].mxu0 %v2126
        %v2195 = vpop.f32.mrb[0].mxu0
        %v2196 = vadd.f32 0.0, %v2195
        %v2197 = vpop.f32.mrb[0].mxu0
        %v2198 = vpop.f32.mrb[0].mxu0
        %v2199 = vadd.f32 0.0, %v2198
        %v2200 = vpop.f32.mrb[0].mxu0
        %2201 = vdwg.mxu0
        %v2202 = vsel %vm1050, %v1560, -inf
        %2203 = vmax.xlane.f32.xlu0 %v2202
        %v2204 = vpop.xlane.xlu0 %2203
        %v2205 = vsel %vm1050, %v1563, -inf
        %2206 = vmax.xlane.f32.xlu0 %v2205
        %v2207 = vpop.xlane.xlu0 %2206
        %v2208 = vsel %vm1050, %v1568, -inf
        %2209 = vmax.xlane.f32.xlu0 %v2208
        %v2210 = vpop.xlane.xlu0 %2209
        %v2211 = vsel %vm1050, %v1571, -inf
        %2212 = vmax.xlane.f32.xlu0 %v2211
        %v2213 = vpop.xlane.xlu0 %2212
        %v2214 = vsel %vm1050, %v1576, -inf
        %2215 = vmax.xlane.f32.xlu0 %v2214
        %v2216 = vpop.xlane.xlu0 %2215
        %v2217 = vsel %vm1050, %v1579, -inf
        %2218 = vmax.xlane.f32.xlu0 %v2217
        %v2219 = vpop.xlane.xlu0 %2218
        %v2220 = vsel %vm1050, %v1584, -inf
        %2221 = vmax.xlane.f32.xlu0 %v2220
        %v2222 = vpop.xlane.xlu0 %2221
        %v2223 = vsel %vm1050, %v1587, -inf
        %2224 = vmax.xlane.f32.xlu0 %v2223
        %v2225 = vpop.xlane.xlu0 %2224
        %v2226 = vsel %vm1050, %v1764, -inf
        %2227 = vmax.xlane.f32.xlu0 %v2226
        %v2228 = vpop.xlane.xlu0 %2227
        %v2229 = vsel %vm1050, %v1767, -inf
        %2230 = vmax.xlane.f32.xlu0 %v2229
        %v2231 = vpop.xlane.xlu0 %2230
        %v2232 = vsel %vm1050, %v1772, -inf
        %2233 = vmax.xlane.f32.xlu0 %v2232
        %v2234 = vpop.xlane.xlu0 %2233
        %v2235 = vsel %vm1050, %v1775, -inf
        %2236 = vmax.xlane.f32.xlu0 %v2235
        %v2237 = vpop.xlane.xlu0 %2236
        %v2238 = vsel %vm1050, %v1780, -inf
        %2239 = vmax.xlane.f32.xlu0 %v2238
        %v2240 = vpop.xlane.xlu0 %2239
        %v2241 = vsel %vm1050, %v1783, -inf
        %2242 = vmax.xlane.f32.xlu0 %v2241
        %v2243 = vpop.xlane.xlu0 %2242
        %v2244 = vsel %vm1050, %v1788, -inf
        %2245 = vmax.xlane.f32.xlu0 %v2244
        %v2246 = vpop.xlane.xlu0 %2245
        %v2247 = vsel %vm1050, %v1791, -inf
        %2248 = vmax.xlane.f32.xlu0 %v2247
        %v2249 = vpop.xlane.xlu0 %2248
        %v2250 = vsel %vm1050, %v1968, -inf
        %2251 = vmax.xlane.f32.xlu0 %v2250
        %v2252 = vpop.xlane.xlu0 %2251
        %v2253 = vsel %vm1050, %v1971, -inf
        %2254 = vmax.xlane.f32.xlu0 %v2253
        %v2255 = vpop.xlane.xlu0 %2254
        %v2256 = vsel %vm1050, %v1976, -inf
        %2257 = vmax.xlane.f32.xlu0 %v2256
        %v2258 = vpop.xlane.xlu0 %2257
        %v2259 = vsel %vm1050, %v1979, -inf
        %2260 = vmax.xlane.f32.xlu0 %v2259
        %v2261 = vpop.xlane.xlu0 %2260
        %v2262 = vsel %vm1050, %v1984, -inf
        %2263 = vmax.xlane.f32.xlu0 %v2262
        %v2264 = vpop.xlane.xlu0 %2263
        %v2265 = vsel %vm1050, %v1987, -inf
        %2266 = vmax.xlane.f32.xlu0 %v2265
        %v2267 = vpop.xlane.xlu0 %2266
        %v2268 = vsel %vm1050, %v1992, -inf
        %2269 = vmax.xlane.f32.xlu0 %v2268
        %v2270 = vpop.xlane.xlu0 %2269
        %v2271 = vsel %vm1050, %v1995, -inf
        %2272 = vmax.xlane.f32.xlu0 %v2271
        %v2273 = vpop.xlane.xlu0 %2272
        %v2274 = vsel %vm1050, %v2172, -inf
        %2275 = vmax.xlane.f32.xlu0 %v2274
        %v2276 = vpop.xlane.xlu0 %2275
        %v2277 = vsel %vm1050, %v2175, -inf
        %2278 = vmax.xlane.f32.xlu0 %v2277
        %v2279 = vpop.xlane.xlu0 %2278
        %v2280 = vsel %vm1050, %v2180, -inf
        %2281 = vmax.xlane.f32.xlu0 %v2280
        %v2282 = vpop.xlane.xlu0 %2281
        %v2283 = vsel %vm1050, %v2183, -inf
        %2284 = vmax.xlane.f32.xlu0 %v2283
        %v2285 = vpop.xlane.xlu0 %2284
        %v2286 = vsel %vm1050, %v2188, -inf
        %2287 = vmax.xlane.f32.xlu0 %v2286
        %v2288 = vpop.xlane.xlu0 %2287
        %v2289 = vsel %vm1050, %v2191, -inf
        %2290 = vmax.xlane.f32.xlu0 %v2289
        %v2291 = vpop.xlane.xlu0 %2290
        %v2292 = vsel %vm1050, %v2196, -inf
        %2293 = vmax.xlane.f32.xlu0 %v2292
        %v2294 = vpop.xlane.xlu0 %2293
        %v2295 = vsel %vm1050, %v2199, -inf
        %2296 = vmax.xlane.f32.xlu0 %v2295
        %v2297 = vpop.xlane.xlu0 %2296
        %v2298 = vsub.f32 %v1560, %v2204
        %v2299 = vsub.f32 %v1563, %v2207
        %v2300 = vsub.f32 %v1568, %v2210
        %v2301 = vsub.f32 %v1571, %v2213
        %v2302 = vsub.f32 %v1576, %v2216
        %v2303 = vsub.f32 %v1579, %v2219
        %v2304 = vsub.f32 %v1584, %v2222
        %v2305 = vsub.f32 %v1587, %v2225
        %v2306 = vsub.f32 %v1764, %v2228
        %v2307 = vsub.f32 %v1767, %v2231
        %v2308 = vsub.f32 %v1772, %v2234
        %v2309 = vsub.f32 %v1775, %v2237
        %v2310 = vsub.f32 %v1780, %v2240
        %v2311 = vsub.f32 %v1783, %v2243
        %v2312 = vsub.f32 %v1788, %v2246
        %v2313 = vsub.f32 %v1791, %v2249
        %v2314 = vsub.f32 %v1968, %v2252
        %v2315 = vsub.f32 %v1971, %v2255
        %v2316 = vsub.f32 %v1976, %v2258
        %v2317 = vsub.f32 %v1979, %v2261
        %v2318 = vsub.f32 %v1984, %v2264
        %v2319 = vsub.f32 %v1987, %v2267
        %v2320 = vsub.f32 %v1992, %v2270
        %v2321 = vsub.f32 %v1995, %v2273
        %v2322 = vsub.f32 %v2172, %v2276
        %v2323 = vsub.f32 %v2175, %v2279
        %v2324 = vsub.f32 %v2180, %v2282
        %v2325 = vsub.f32 %v2183, %v2285
        %v2326 = vsub.f32 %v2188, %v2288
        %v2327 = vsub.f32 %v2191, %v2291
        %v2328 = vsub.f32 %v2196, %v2294
        %v2329 = vsub.f32 %v2199, %v2297
        %v2330 = vmul.f32 %v2298, 1.442695
        %v2331 = vpow.pop %v2330
        %v2332 = vmul.f32 %v2299, 1.442695
        %v2333 = vpow.pop %v2332
        %v2334 = vmul.f32 %v2300, 1.442695
        %v2335 = vpow.pop %v2334
        %v2336 = vmul.f32 %v2301, 1.442695
        %v2337 = vpow.pop %v2336
        %v2338 = vmul.f32 %v2302, 1.442695
        %v2339 = vpow.pop %v2338
        %v2340 = vmul.f32 %v2303, 1.442695
        %v2341 = vpow.pop %v2340
        %v2342 = vmul.f32 %v2304, 1.442695
        %v2343 = vpow.pop %v2342
        %v2344 = vmul.f32 %v2305, 1.442695
        %v2345 = vpow.pop %v2344
        %v2346 = vmul.f32 %v2306, 1.442695
        %v2347 = vpow.pop %v2346
        %v2348 = vmul.f32 %v2307, 1.442695
        %v2349 = vpow.pop %v2348
        %v2350 = vmul.f32 %v2308, 1.442695
        %v2351 = vpow.pop %v2350
        %v2352 = vmul.f32 %v2309, 1.442695
        %v2353 = vpow.pop %v2352
        %v2354 = vmul.f32 %v2310, 1.442695
        %v2355 = vpow.pop %v2354
        %v2356 = vmul.f32 %v2311, 1.442695
        %v2357 = vpow.pop %v2356
        %v2358 = vmul.f32 %v2312, 1.442695
        %v2359 = vpow.pop %v2358
        %v2360 = vmul.f32 %v2313, 1.442695
        %v2361 = vpow.pop %v2360
        %v2362 = vmul.f32 %v2314, 1.442695
        %v2363 = vpow.pop %v2362
        %v2364 = vmul.f32 %v2315, 1.442695
        %v2365 = vpow.pop %v2364
        %v2366 = vmul.f32 %v2316, 1.442695
        %v2367 = vpow.pop %v2366
        %v2368 = vmul.f32 %v2317, 1.442695
        %v2369 = vpow.pop %v2368
        %v2370 = vmul.f32 %v2318, 1.442695
        %v2371 = vpow.pop %v2370
        %v2372 = vmul.f32 %v2319, 1.442695
        %v2373 = vpow.pop %v2372
        %v2374 = vmul.f32 %v2320, 1.442695
        %v2375 = vpow.pop %v2374
        %v2376 = vmul.f32 %v2321, 1.442695
        %v2377 = vpow.pop %v2376
        %v2378 = vmul.f32 %v2322, 1.442695
        %v2379 = vpow.pop %v2378
        %v2380 = vmul.f32 %v2323, 1.442695
        %v2381 = vpow.pop %v2380
        %v2382 = vmul.f32 %v2324, 1.442695
        %v2383 = vpow.pop %v2382
        %v2384 = vmul.f32 %v2325, 1.442695
        %v2385 = vpow.pop %v2384
        %v2386 = vmul.f32 %v2326, 1.442695
        %v2387 = vpow.pop %v2386
        %v2388 = vmul.f32 %v2327, 1.442695
        %v2389 = vpow.pop %v2388
        %v2390 = vmul.f32 %v2328, 1.442695
        %v2391 = vpow.pop %v2390
        %v2392 = vmul.f32 %v2329, 1.442695
        %v2393 = vpow.pop %v2392
        %v2394 = vpack.c.bf16 %v2333, %v2331
        %v2395 = vpack.c.bf16 %v2337, %v2335
        %v2396 = vpack.c.bf16 %v2341, %v2339
        %v2397 = vpack.c.bf16 %v2345, %v2343
        %v2398 = vpack.c.bf16 %v2349, %v2347
        %v2399 = vpack.c.bf16 %v2353, %v2351
        %v2400 = vpack.c.bf16 %v2357, %v2355
        %v2401 = vpack.c.bf16 %v2361, %v2359
        %v2402 = vpack.c.bf16 %v2365, %v2363
        %v2403 = vpack.c.bf16 %v2369, %v2367
        %v2404 = vpack.c.bf16 %v2373, %v2371
        %v2405 = vpack.c.bf16 %v2377, %v2375
        %v2406 = vpack.c.bf16 %v2381, %v2379
        %v2407 = vpack.c.bf16 %v2385, %v2383
        %v2408 = vpack.c.bf16 %v2389, %v2387
        %v2409 = vpack.c.bf16 %v2393, %v2391
        %v2410 = vpack.c.bf16 %v619, %v618
        %v2411 = vpack.c.bf16 %v621, %v620
        %v2412 = vpack.c.bf16 %v623, %v622
        %v2414 = vsel %vm1050, %v2394, 0
        %v2417 = vsel %vm1050, %v2395, 0
        %v2420 = vsel %vm1050, %v2396, 0
        %v2423 = vsel %vm1050, %v2397, 0
        %v2426 = vsel %vm1050, %v2398, 0
        %v2429 = vsel %vm1050, %v2399, 0
        %v2432 = vsel %vm1050, %v2400, 0
        %v2435 = vsel %vm1050, %v2401, 0
        %v2438 = vsel %vm1050, %v2402, 0
        %v2441 = vsel %vm1050, %v2403, 0
        %v2444 = vsel %vm1050, %v2404, 0
        %v2447 = vsel %vm1050, %v2405, 0
        %v2450 = vsel %vm1050, %v2406, 0
        %v2453 = vsel %vm1050, %v2407, 0
        %v2456 = vsel %vm1050, %v2408, 0
        %v2459 = vsel %vm1050, %v2409, 0
        %2461 = vmatprep.subr.bf16.mxu0 0
        %2462 = vmatpush1.bf16.msra.mxu0 %v2410
        %2463 = vmatprep.subr.bf16.mxu0 0
        %2464 = vmatpush1.bf16.msra.mxu0 %v2411
        %2465 = vmatprep.subr.bf16.mxu0 0
        %2466 = vmatpush1.bf16.msra.mxu0 %v2412
        %2467 = vmatprep.subr.bf16.mxu0 0
        %2468 = vmatpush1.bf16.msra.mxu0 0
        %2469 = vmatprep.subr.bf16.mxu0 0
        %2470 = vmatpush1.bf16.msra.mxu0 0
        %2471 = vmatprep.subr.bf16.mxu0 0
        %2472 = vmatpush1.bf16.msra.mxu0 0
        %2473 = vmatprep.subr.bf16.mxu0 0
        %2474 = vmatpush1.bf16.msra.mxu0 0
        %2475 = vmatprep.subr.bf16.mxu0 0
        %2476 = vmatpush1.bf16.msra.mxu0 0
        %2477 = vmatprep.subr.bf16.mxu0 0
        %2478 = vmatpush1.bf16.msra.mxu0 0
        %2479 = vmatprep.subr.bf16.mxu0 0
        %2480 = vmatpush1.bf16.msra.mxu0 0
        %2481 = vmatprep.subr.bf16.mxu0 0
        %2482 = vmatpush1.bf16.msra.mxu0 0
        %2483 = vmatprep.subr.bf16.mxu0 0
        %2484 = vmatpush1.bf16.msra.mxu0 0
        %2485 = vmatprep.subr.bf16.mxu0 0
        %2486 = vmatpush1.bf16.msra.mxu0 0
        %2487 = vmatprep.subr.bf16.mxu0 0
        %2488 = vmatpush1.bf16.msra.mxu0 0
        %2489 = vmatprep.subr.bf16.mxu0 0
        %2490 = vmatpush1.bf16.msra.mxu0 0
        %2491 = vmatprep.subr.bf16.mxu0 0
        %2492 = vmatpush1.bf16.msra.mxu0 0
        %2493 = vmatprep.mubr.bf16.mxu0 0
        %2494 = vmatmul.mubr.bf16.gmra.mrb[0].mxu0 %v2414
        %v2495 = vpop.f32.mrb[0].mxu0
        %v2496 = vadd.f32 0.0, %v2495
        %v2497 = vpop.f32.mrb[0].mxu0
        %v2498 = vpop.f32.mrb[0].mxu0
        %v2499 = vadd.f32 0.0, %v2498
        %v2500 = vpop.f32.mrb[0].mxu0
        %2501 = vmatprep.mubr.bf16.mxu0 0
        %2502 = vmatmul.mubr.bf16.gmra.mrb[0].mxu0 %v2417
        %v2503 = vpop.f32.mrb[0].mxu0
        %v2504 = vadd.f32 0.0, %v2503
        %v2505 = vpop.f32.mrb[0].mxu0
        %v2506 = vpop.f32.mrb[0].mxu0
        %v2507 = vadd.f32 0.0, %v2506
        %v2508 = vpop.f32.mrb[0].mxu0
        %2509 = vmatprep.mubr.bf16.mxu0 0
        %2510 = vmatmul.mubr.bf16.gmra.mrb[0].mxu0 %v2420
        %v2511 = vpop.f32.mrb[0].mxu0
        %v2512 = vadd.f32 0.0, %v2511
        %v2513 = vpop.f32.mrb[0].mxu0
        %v2514 = vpop.f32.mrb[0].mxu0
        %v2515 = vadd.f32 0.0, %v2514
        %v2516 = vpop.f32.mrb[0].mxu0
        %2517 = vmatprep.mubr.bf16.mxu0 0
        %2518 = vmatmul.mubr.bf16.gmra.mrb[0].mxu0 %v2423
        %v2519 = vpop.f32.mrb[0].mxu0
        %v2520 = vadd.f32 0.0, %v2519
        %v2521 = vpop.f32.mrb[0].mxu0
        %v2522 = vpop.f32.mrb[0].mxu0
        %v2523 = vadd.f32 0.0, %v2522
        %v2524 = vpop.f32.mrb[0].mxu0
        %2525 = vmatprep.mubr.bf16.mxu0 0
        %2526 = vmatmul.mubr.bf16.gmra.mrb[0].mxu0 %v2426
        %v2527 = vpop.f32.mrb[0].mxu0
        %v2528 = vadd.f32 0.0, %v2527
        %v2529 = vpop.f32.mrb[0].mxu0
        %v2530 = vpop.f32.mrb[0].mxu0
        %v2531 = vadd.f32 0.0, %v2530
        %v2532 = vpop.f32.mrb[0].mxu0
        %2533 = vmatprep.mubr.bf16.mxu0 0
        %2534 = vmatmul.mubr.bf16.gmra.mrb[0].mxu0 %v2429
        %v2535 = vpop.f32.mrb[0].mxu0
        %v2536 = vadd.f32 0.0, %v2535
        %v2537 = vpop.f32.mrb[0].mxu0
        %v2538 = vpop.f32.mrb[0].mxu0
        %v2539 = vadd.f32 0.0, %v2538
        %v2540 = vpop.f32.mrb[0].mxu0
        %2541 = vmatprep.mubr.bf16.mxu0 0
        %2542 = vmatmul.mubr.bf16.gmra.mrb[0].mxu0 %v2432
        %v2543 = vpop.f32.mrb[0].mxu0
        %v2544 = vadd.f32 0.0, %v2543
        %v2545 = vpop.f32.mrb[0].mxu0
        %v2546 = vpop.f32.mrb[0].mxu0
        %v2547 = vadd.f32 0.0, %v2546
        %v2548 = vpop.f32.mrb[0].mxu0
        %2549 = vmatprep.mubr.bf16.mxu0 0
        %2550 = vmatmul.mubr.bf16.gmra.mrb[0].mxu0 %v2435
        %v2551 = vpop.f32.mrb[0].mxu0
        %v2552 = vadd.f32 0.0, %v2551
        %v2553 = vpop.f32.mrb[0].mxu0
        %v2554 = vpop.f32.mrb[0].mxu0
        %v2555 = vadd.f32 0.0, %v2554
        %v2556 = vpop.f32.mrb[0].mxu0
        %2557 = vmatprep.mubr.bf16.mxu0 0
        %2558 = vmatmul.mubr.bf16.gmra.mrb[0].mxu0 %v2438
        %v2559 = vpop.f32.mrb[0].mxu0
        %v2560 = vadd.f32 0.0, %v2559
        %v2561 = vpop.f32.mrb[0].mxu0
        %v2562 = vpop.f32.mrb[0].mxu0
        %v2563 = vadd.f32 0.0, %v2562
        %v2564 = vpop.f32.mrb[0].mxu0
        %2565 = vmatprep.mubr.bf16.mxu0 0
        %2566 = vmatmul.mubr.bf16.gmra.mrb[0].mxu0 %v2441
        %v2567 = vpop.f32.mrb[0].mxu0
        %v2568 = vadd.f32 0.0, %v2567
        %v2569 = vpop.f32.mrb[0].mxu0
        %v2570 = vpop.f32.mrb[0].mxu0
        %v2571 = vadd.f32 0.0, %v2570
        %v2572 = vpop.f32.mrb[0].mxu0
        %2573 = vmatprep.mubr.bf16.mxu0 0
        %2574 = vmatmul.mubr.bf16.gmra.mrb[0].mxu0 %v2444
        %v2575 = vpop.f32.mrb[0].mxu0
        %v2576 = vadd.f32 0.0, %v2575
        %v2577 = vpop.f32.mrb[0].mxu0
        %v2578 = vpop.f32.mrb[0].mxu0
        %v2579 = vadd.f32 0.0, %v2578
        %v2580 = vpop.f32.mrb[0].mxu0
        %2581 = vmatprep.mubr.bf16.mxu0 0
        %2582 = vmatmul.mubr.bf16.gmra.mrb[0].mxu0 %v2447
        %v2583 = vpop.f32.mrb[0].mxu0
        %v2584 = vadd.f32 0.0, %v2583
        %v2585 = vpop.f32.mrb[0].mxu0
        %v2586 = vpop.f32.mrb[0].mxu0
        %v2587 = vadd.f32 0.0, %v2586
        %v2588 = vpop.f32.mrb[0].mxu0
        %2589 = vmatprep.mubr.bf16.mxu0 0
        %2590 = vmatmul.mubr.bf16.gmra.mrb[0].mxu0 %v2450
        %v2591 = vpop.f32.mrb[0].mxu0
        %v2592 = vadd.f32 0.0, %v2591
        %v2593 = vpop.f32.mrb[0].mxu0
        %v2594 = vpop.f32.mrb[0].mxu0
        %v2595 = vadd.f32 0.0, %v2594
        %v2596 = vpop.f32.mrb[0].mxu0
        %2597 = vmatprep.mubr.bf16.mxu0 0
        %2598 = vmatmul.mubr.bf16.gmra.mrb[0].mxu0 %v2453
        %v2599 = vpop.f32.mrb[0].mxu0
        %v2600 = vadd.f32 0.0, %v2599
        %v2601 = vpop.f32.mrb[0].mxu0
        %v2602 = vpop.f32.mrb[0].mxu0
        %v2603 = vadd.f32 0.0, %v2602
        %v2604 = vpop.f32.mrb[0].mxu0
        %2605 = vmatprep.mubr.bf16.mxu0 0
        %2606 = vmatmul.mubr.bf16.gmra.mrb[0].mxu0 %v2456
        %v2607 = vpop.f32.mrb[0].mxu0
        %v2608 = vadd.f32 0.0, %v2607
        %v2609 = vpop.f32.mrb[0].mxu0
        %v2610 = vpop.f32.mrb[0].mxu0
        %v2611 = vadd.f32 0.0, %v2610
        %v2612 = vpop.f32.mrb[0].mxu0
        %2613 = vmatprep.mubr.bf16.mxu0 0
        %2614 = vmatmul.mubr.bf16.gmra.mrb[0].mxu0 %v2459
        %v2615 = vpop.f32.mrb[0].mxu0
        %v2616 = vadd.f32 0.0, %v2615
        %v2617 = vpop.f32.mrb[0].mxu0
        %v2618 = vpop.f32.mrb[0].mxu0
        %v2619 = vadd.f32 0.0, %v2618
        %v2620 = vpop.f32.mrb[0].mxu0
        %2621 = vdwg.mxu0
        %v2622 = vmax.f32 %v2496, 1e-30
        %v2623 = vmax.f32 %v2499, 1e-30
        %v2624 = vmax.f32 %v2504, 1e-30
        %v2625 = vmax.f32 %v2507, 1e-30
        %v2626 = vmax.f32 %v2512, 1e-30
        %v2627 = vmax.f32 %v2515, 1e-30
        %v2628 = vmax.f32 %v2520, 1e-30
        %v2629 = vmax.f32 %v2523, 1e-30
        %v2630 = vmax.f32 %v2528, 1e-30
        %v2631 = vmax.f32 %v2531, 1e-30
        %v2632 = vmax.f32 %v2536, 1e-30
        %v2633 = vmax.f32 %v2539, 1e-30
        %v2634 = vmax.f32 %v2544, 1e-30
        %v2635 = vmax.f32 %v2547, 1e-30
        %v2636 = vmax.f32 %v2552, 1e-30
        %v2637 = vmax.f32 %v2555, 1e-30
        %v2638 = vmax.f32 %v2560, 1e-30
        %v2639 = vmax.f32 %v2563, 1e-30
        %v2640 = vmax.f32 %v2568, 1e-30
        %v2641 = vmax.f32 %v2571, 1e-30
        %v2642 = vmax.f32 %v2576, 1e-30
        %v2643 = vmax.f32 %v2579, 1e-30
        %v2644 = vmax.f32 %v2584, 1e-30
        %v2645 = vmax.f32 %v2587, 1e-30
        %v2646 = vmax.f32 %v2592, 1e-30
        %v2647 = vmax.f32 %v2595, 1e-30
        %v2648 = vmax.f32 %v2600, 1e-30
        %v2649 = vmax.f32 %v2603, 1e-30
        %v2650 = vmax.f32 %v2608, 1e-30
        %v2651 = vmax.f32 %v2611, 1e-30
        %v2652 = vmax.f32 %v2616, 1e-30
        %v2653 = vmax.f32 %v2619, 1e-30
        %v2654 = vrcp.pop %v2622
        %v2655 = vrcp.pop %v2623
        %v2656 = vrcp.pop %v2624
        %v2657 = vrcp.pop %v2625
        %v2658 = vrcp.pop %v2626
        %v2659 = vrcp.pop %v2627
        %v2660 = vrcp.pop %v2628
        %v2661 = vrcp.pop %v2629
        %v2662 = vrcp.pop %v2630
        %v2663 = vrcp.pop %v2631
        %v2664 = vrcp.pop %v2632
        %v2665 = vrcp.pop %v2633
        %v2666 = vrcp.pop %v2634
        %v2667 = vrcp.pop %v2635
        %v2668 = vrcp.pop %v2636
        %v2669 = vrcp.pop %v2637
        %v2670 = vrcp.pop %v2638
        %v2671 = vrcp.pop %v2639
        %v2672 = vrcp.pop %v2640
        %v2673 = vrcp.pop %v2641
        %v2674 = vrcp.pop %v2642
        %v2675 = vrcp.pop %v2643
        %v2676 = vrcp.pop %v2644
        %v2677 = vrcp.pop %v2645
        %v2678 = vrcp.pop %v2646
        %v2679 = vrcp.pop %v2647
        %v2680 = vrcp.pop %v2648
        %v2681 = vrcp.pop %v2649
        %v2682 = vrcp.pop %v2650
        %v2683 = vrcp.pop %v2651
        %v2684 = vrcp.pop %v2652
        %v2685 = vrcp.pop %v2653
        %v2686 = vmul.f32 %v2331, %v2654
        %v2687 = vmul.f32 %v2333, %v2655
        %v2688 = vmul.f32 %v2335, %v2656
        %v2689 = vmul.f32 %v2337, %v2657
        %v2690 = vmul.f32 %v2339, %v2658
        %v2691 = vmul.f32 %v2341, %v2659
        %v2692 = vmul.f32 %v2343, %v2660
        %v2693 = vmul.f32 %v2345, %v2661
        %v2694 = vmul.f32 %v2347, %v2662
        %v2695 = vmul.f32 %v2349, %v2663
        %v2696 = vmul.f32 %v2351, %v2664
        %v2697 = vmul.f32 %v2353, %v2665
        %v2698 = vmul.f32 %v2355, %v2666
        %v2699 = vmul.f32 %v2357, %v2667
        %v2700 = vmul.f32 %v2359, %v2668
        %v2701 = vmul.f32 %v2361, %v2669
        %v2702 = vmul.f32 %v2363, %v2670
        %v2703 = vmul.f32 %v2365, %v2671
        %v2704 = vmul.f32 %v2367, %v2672
        %v2705 = vmul.f32 %v2369, %v2673
        %v2706 = vmul.f32 %v2371, %v2674
        %v2707 = vmul.f32 %v2373, %v2675
        %v2708 = vmul.f32 %v2375, %v2676
        %v2709 = vmul.f32 %v2377, %v2677
        %v2710 = vmul.f32 %v2379, %v2678
        %v2711 = vmul.f32 %v2381, %v2679
        %v2712 = vmul.f32 %v2383, %v2680
        %v2713 = vmul.f32 %v2385, %v2681
        %v2714 = vmul.f32 %v2387, %v2682
        %v2715 = vmul.f32 %v2389, %v2683
        %v2716 = vmul.f32 %v2391, %v2684
        %v2717 = vmul.f32 %v2393, %v2685
        %v2718 = vpack.c.bf16 %v2687, %v2686
        %v2719 = vpack.c.bf16 %v2689, %v2688
        %v2720 = vpack.c.bf16 %v2691, %v2690
        %v2721 = vpack.c.bf16 %v2693, %v2692
        %2725 = vrot.lane.b32.xlu0 %v1501, 80
        %v2726 = vpop.permute.xlu0 %2725
        %2727 = vrot.lane.b32.xlu0 %v1502, 80
        %v2728 = vpop.permute.xlu0 %2727
        %2729 = vrot.lane.b32.xlu0 %v1503, 80
        %v2730 = vpop.permute.xlu0 %2729
        %v2735 = vsel %vm1050, %v2718, 0
        %v2738 = vsel %vm1050, %v2719, 0
        %v2741 = vsel %vm1050, %v2720, 0
        %v2744 = vsel %vm1050, %v2721, 0
        %2746 = vmatprep.subr.bf16.mxu0 0
        %2747 = vmatpush1.bf16.msra.mxu0 %v2726
        %2748 = vmatprep.subr.bf16.mxu0 0
        %2749 = vmatpush1.bf16.msra.mxu0 %v2728
        %2750 = vmatprep.subr.bf16.mxu0 0
        %2751 = vmatpush1.bf16.msra.mxu0 %v2730
        %2752 = vmatprep.subr.bf16.mxu0 0
        %2753 = vmatpush1.bf16.msra.mxu0 0
        %2754 = vmatprep.subr.bf16.mxu0 0
        %2755 = vmatpush1.bf16.msra.mxu0 0
        %2756 = vmatprep.subr.bf16.mxu0 0
        %2757 = vmatpush1.bf16.msra.mxu0 0
        %2758 = vmatprep.subr.bf16.mxu0 0
        %2759 = vmatpush1.bf16.msra.mxu0 0
        %2760 = vmatprep.subr.bf16.mxu0 0
        %2761 = vmatpush1.bf16.msra.mxu0 0
        %2762 = vmatprep.subr.bf16.mxu0 0
        %2763 = vmatpush1.bf16.msra.mxu0 0
        %2764 = vmatprep.subr.bf16.mxu0 0
        %2765 = vmatpush1.bf16.msra.mxu0 0
        %2766 = vmatprep.subr.bf16.mxu0 0
        %2767 = vmatpush1.bf16.msra.mxu0 0
        %2768 = vmatprep.subr.bf16.mxu0 0
        %2769 = vmatpush1.bf16.msra.mxu0 0
        %2770 = vmatprep.subr.bf16.mxu0 0
        %2771 = vmatpush1.bf16.msra.mxu0 0
        %2772 = vmatprep.subr.bf16.mxu0 0
        %2773 = vmatpush1.bf16.msra.mxu0 0
        %2774 = vmatprep.subr.bf16.mxu0 0
        %2775 = vmatpush1.bf16.msra.mxu0 0
        %2776 = vmatprep.subr.bf16.mxu0 0
        %2777 = vmatpush1.bf16.msra.mxu0 0
        %2778 = vmatprep.mubr.bf16.mxu0 0
        %2779 = vmatmul.mubr.bf16.gmra.mrb[0].mxu0 %v2735
        %v2780 = vpop.f32.mrb[0].mxu0
        %v2781 = vadd.f32 0.0, %v2780
        %v2782 = vpop.f32.mrb[0].mxu0
        %v2783 = vpop.f32.mrb[0].mxu0
        %v2784 = vadd.f32 0.0, %v2783
        %v2785 = vpop.f32.mrb[0].mxu0
        %2786 = vmatprep.mubr.bf16.mxu0 0
        %2787 = vmatmul.mubr.bf16.gmra.mrb[0].mxu0 %v2738
        %v2788 = vpop.f32.mrb[0].mxu0
        %v2789 = vadd.f32 0.0, %v2788
        %v2790 = vpop.f32.mrb[0].mxu0
        %v2791 = vpop.f32.mrb[0].mxu0
        %v2792 = vadd.f32 0.0, %v2791
        %v2793 = vpop.f32.mrb[0].mxu0
        %2794 = vmatprep.mubr.bf16.mxu0 0
        %2795 = vmatmul.mubr.bf16.gmra.mrb[0].mxu0 %v2741
        %v2796 = vpop.f32.mrb[0].mxu0
        %v2797 = vadd.f32 0.0, %v2796
        %v2798 = vpop.f32.mrb[0].mxu0
        %v2799 = vpop.f32.mrb[0].mxu0
        %v2800 = vadd.f32 0.0, %v2799
        %v2801 = vpop.f32.mrb[0].mxu0
        %2802 = vmatprep.mubr.bf16.mxu0 0
        %2803 = vmatmul.mubr.bf16.gmra.mrb[0].mxu0 %v2744
        %v2804 = vpop.f32.mrb[0].mxu0
        %v2805 = vadd.f32 0.0, %v2804
        %v2806 = vpop.f32.mrb[0].mxu0
        %v2807 = vpop.f32.mrb[0].mxu0
        %v2808 = vadd.f32 0.0, %v2807
        %v2809 = vpop.f32.mrb[0].mxu0
        %2810 = vdwg.mxu0
        %v2811 = vpack.c.bf16 %v2695, %v2694
        %v2812 = vpack.c.bf16 %v2697, %v2696
        %v2813 = vpack.c.bf16 %v2699, %v2698
        %v2814 = vpack.c.bf16 %v2701, %v2700
        %2818 = vrot.lane.b32.xlu0 %v1705, 80
        %v2819 = vpop.permute.xlu0 %2818
        %2820 = vrot.lane.b32.xlu0 %v1706, 80
        %v2821 = vpop.permute.xlu0 %2820
        %2822 = vrot.lane.b32.xlu0 %v1707, 80
        %v2823 = vpop.permute.xlu0 %2822
        %v2828 = vsel %vm1050, %v2811, 0
        %v2831 = vsel %vm1050, %v2812, 0
        %v2834 = vsel %vm1050, %v2813, 0
        %v2837 = vsel %vm1050, %v2814, 0
        %2839 = vmatprep.subr.bf16.mxu0 0
        %2840 = vmatpush1.bf16.msra.mxu0 %v2819
        %2841 = vmatprep.subr.bf16.mxu0 0
        %2842 = vmatpush1.bf16.msra.mxu0 %v2821
        %2843 = vmatprep.subr.bf16.mxu0 0
        %2844 = vmatpush1.bf16.msra.mxu0 %v2823
        %2845 = vmatprep.subr.bf16.mxu0 0
        %2846 = vmatpush1.bf16.msra.mxu0 0
        %2847 = vmatprep.subr.bf16.mxu0 0
        %2848 = vmatpush1.bf16.msra.mxu0 0
        %2849 = vmatprep.subr.bf16.mxu0 0
        %2850 = vmatpush1.bf16.msra.mxu0 0
        %2851 = vmatprep.subr.bf16.mxu0 0
        %2852 = vmatpush1.bf16.msra.mxu0 0
        %2853 = vmatprep.subr.bf16.mxu0 0
        %2854 = vmatpush1.bf16.msra.mxu0 0
        %2855 = vmatprep.subr.bf16.mxu0 0
        %2856 = vmatpush1.bf16.msra.mxu0 0
        %2857 = vmatprep.subr.bf16.mxu0 0
        %2858 = vmatpush1.bf16.msra.mxu0 0
        %2859 = vmatprep.subr.bf16.mxu0 0
        %2860 = vmatpush1.bf16.msra.mxu0 0
        %2861 = vmatprep.subr.bf16.mxu0 0
        %2862 = vmatpush1.bf16.msra.mxu0 0
        %2863 = vmatprep.subr.bf16.mxu0 0
        %2864 = vmatpush1.bf16.msra.mxu0 0
        %2865 = vmatprep.subr.bf16.mxu0 0
        %2866 = vmatpush1.bf16.msra.mxu0 0
        %2867 = vmatprep.subr.bf16.mxu0 0
        %2868 = vmatpush1.bf16.msra.mxu0 0
        %2869 = vmatprep.subr.bf16.mxu0 0
        %2870 = vmatpush1.bf16.msra.mxu0 0
        %2871 = vmatprep.mubr.bf16.mxu0 0
        %2872 = vmatmul.mubr.bf16.gmra.mrb[0].mxu0 %v2828
        %v2873 = vpop.f32.mrb[0].mxu0
        %v2874 = vadd.f32 0.0, %v2873
        %v2875 = vpop.f32.mrb[0].mxu0
        %v2876 = vpop.f32.mrb[0].mxu0
        %v2877 = vadd.f32 0.0, %v2876
        %v2878 = vpop.f32.mrb[0].mxu0
        %2879 = vmatprep.mubr.bf16.mxu0 0
        %2880 = vmatmul.mubr.bf16.gmra.mrb[0].mxu0 %v2831
        %v2881 = vpop.f32.mrb[0].mxu0
        %v2882 = vadd.f32 0.0, %v2881
        %v2883 = vpop.f32.mrb[0].mxu0
        %v2884 = vpop.f32.mrb[0].mxu0
        %v2885 = vadd.f32 0.0, %v2884
        %v2886 = vpop.f32.mrb[0].mxu0
        %2887 = vmatprep.mubr.bf16.mxu0 0
        %2888 = vmatmul.mubr.bf16.gmra.mrb[0].mxu0 %v2834
        %v2889 = vpop.f32.mrb[0].mxu0
        %v2890 = vadd.f32 0.0, %v2889
        %v2891 = vpop.f32.mrb[0].mxu0
        %v2892 = vpop.f32.mrb[0].mxu0
        %v2893 = vadd.f32 0.0, %v2892
        %v2894 = vpop.f32.mrb[0].mxu0
        %2895 = vmatprep.mubr.bf16.mxu0 0
        %2896 = vmatmul.mubr.bf16.gmra.mrb[0].mxu0 %v2837
        %v2897 = vpop.f32.mrb[0].mxu0
        %v2898 = vadd.f32 0.0, %v2897
        %v2899 = vpop.f32.mrb[0].mxu0
        %v2900 = vpop.f32.mrb[0].mxu0
        %v2901 = vadd.f32 0.0, %v2900
        %v2902 = vpop.f32.mrb[0].mxu0
        %2903 = vdwg.mxu0
        %v2904 = vpack.c.bf16 %v2703, %v2702
        %v2905 = vpack.c.bf16 %v2705, %v2704
        %v2906 = vpack.c.bf16 %v2707, %v2706
        %v2907 = vpack.c.bf16 %v2709, %v2708
        %2911 = vrot.lane.b32.xlu0 %v1909, 80
        %v2912 = vpop.permute.xlu0 %2911
        %2913 = vrot.lane.b32.xlu0 %v1910, 80
        %v2914 = vpop.permute.xlu0 %2913
        %2915 = vrot.lane.b32.xlu0 %v1911, 80
        %v2916 = vpop.permute.xlu0 %2915
        %v2921 = vsel %vm1050, %v2904, 0
        %v2924 = vsel %vm1050, %v2905, 0
        %v2927 = vsel %vm1050, %v2906, 0
        %v2930 = vsel %vm1050, %v2907, 0
        %2932 = vmatprep.subr.bf16.mxu0 0
        %2933 = vmatpush1.bf16.msra.mxu0 %v2912
        %2934 = vmatprep.subr.bf16.mxu0 0
        %2935 = vmatpush1.bf16.msra.mxu0 %v2914
        %2936 = vmatprep.subr.bf16.mxu0 0
        %2937 = vmatpush1.bf16.msra.mxu0 %v2916
        %2938 = vmatprep.subr.bf16.mxu0 0
        %2939 = vmatpush1.bf16.msra.mxu0 0
        %2940 = vmatprep.subr.bf16.mxu0 0
        %2941 = vmatpush1.bf16.msra.mxu0 0
        %2942 = vmatprep.subr.bf16.mxu0 0
        %2943 = vmatpush1.bf16.msra.mxu0 0
        %2944 = vmatprep.subr.bf16.mxu0 0
        %2945 = vmatpush1.bf16.msra.mxu0 0
        %2946 = vmatprep.subr.bf16.mxu0 0
        %2947 = vmatpush1.bf16.msra.mxu0 0
        %2948 = vmatprep.subr.bf16.mxu0 0
        %2949 = vmatpush1.bf16.msra.mxu0 0
        %2950 = vmatprep.subr.bf16.mxu0 0
        %2951 = vmatpush1.bf16.msra.mxu0 0
        %2952 = vmatprep.subr.bf16.mxu0 0
        %2953 = vmatpush1.bf16.msra.mxu0 0
        %2954 = vmatprep.subr.bf16.mxu0 0
        %2955 = vmatpush1.bf16.msra.mxu0 0
        %2956 = vmatprep.subr.bf16.mxu0 0
        %2957 = vmatpush1.bf16.msra.mxu0 0
        %2958 = vmatprep.subr.bf16.mxu0 0
        %2959 = vmatpush1.bf16.msra.mxu0 0
        %2960 = vmatprep.subr.bf16.mxu0 0
        %2961 = vmatpush1.bf16.msra.mxu0 0
        %2962 = vmatprep.subr.bf16.mxu0 0
        %2963 = vmatpush1.bf16.msra.mxu0 0
        %2964 = vmatprep.mubr.bf16.mxu0 0
        %2965 = vmatmul.mubr.bf16.gmra.mrb[0].mxu0 %v2921
        %v2966 = vpop.f32.mrb[0].mxu0
        %v2967 = vadd.f32 0.0, %v2966
        %v2968 = vpop.f32.mrb[0].mxu0
        %v2969 = vpop.f32.mrb[0].mxu0
        %v2970 = vadd.f32 0.0, %v2969
        %v2971 = vpop.f32.mrb[0].mxu0
        %2972 = vmatprep.mubr.bf16.mxu0 0
        %2973 = vmatmul.mubr.bf16.gmra.mrb[0].mxu0 %v2924
        %v2974 = vpop.f32.mrb[0].mxu0
        %v2975 = vadd.f32 0.0, %v2974
        %v2976 = vpop.f32.mrb[0].mxu0
        %v2977 = vpop.f32.mrb[0].mxu0
        %v2978 = vadd.f32 0.0, %v2977
        %v2979 = vpop.f32.mrb[0].mxu0
        %2980 = vmatprep.mubr.bf16.mxu0 0
        %2981 = vmatmul.mubr.bf16.gmra.mrb[0].mxu0 %v2927
        %v2982 = vpop.f32.mrb[0].mxu0
        %v2983 = vadd.f32 0.0, %v2982
        %v2984 = vpop.f32.mrb[0].mxu0
        %v2985 = vpop.f32.mrb[0].mxu0
        %v2986 = vadd.f32 0.0, %v2985
        %v2987 = vpop.f32.mrb[0].mxu0
        %2988 = vmatprep.mubr.bf16.mxu0 0
        %2989 = vmatmul.mubr.bf16.gmra.mrb[0].mxu0 %v2930
        %v2990 = vpop.f32.mrb[0].mxu0
        %v2991 = vadd.f32 0.0, %v2990
        %v2992 = vpop.f32.mrb[0].mxu0
        %v2993 = vpop.f32.mrb[0].mxu0
        %v2994 = vadd.f32 0.0, %v2993
        %v2995 = vpop.f32.mrb[0].mxu0
        %2996 = vdwg.mxu0
        %v2997 = vpack.c.bf16 %v2711, %v2710
        %v2998 = vpack.c.bf16 %v2713, %v2712
        %v2999 = vpack.c.bf16 %v2715, %v2714
        %v3000 = vpack.c.bf16 %v2717, %v2716
        %3004 = vrot.lane.b32.xlu0 %v2113, 80
        %v3005 = vpop.permute.xlu0 %3004
        %3006 = vrot.lane.b32.xlu0 %v2114, 80
        %v3007 = vpop.permute.xlu0 %3006
        %3008 = vrot.lane.b32.xlu0 %v2115, 80
        %v3009 = vpop.permute.xlu0 %3008
        %v3014 = vsel %vm1050, %v2997, 0
        %v3017 = vsel %vm1050, %v2998, 0
        %v3020 = vsel %vm1050, %v2999, 0
        %v3023 = vsel %vm1050, %v3000, 0
        %3025 = vmatprep.subr.bf16.mxu0 0
        %3026 = vmatpush1.bf16.msra.mxu0 %v3005
        %3027 = vmatprep.subr.bf16.mxu0 0
        %3028 = vmatpush1.bf16.msra.mxu0 %v3007
        %3029 = vmatprep.subr.bf16.mxu0 0
        %3030 = vmatpush1.bf16.msra.mxu0 %v3009
        %3031 = vmatprep.subr.bf16.mxu0 0
        %3032 = vmatpush1.bf16.msra.mxu0 0
        %3033 = vmatprep.subr.bf16.mxu0 0
        %3034 = vmatpush1.bf16.msra.mxu0 0
        %3035 = vmatprep.subr.bf16.mxu0 0
        %3036 = vmatpush1.bf16.msra.mxu0 0
        %3037 = vmatprep.subr.bf16.mxu0 0
        %3038 = vmatpush1.bf16.msra.mxu0 0
        %3039 = vmatprep.subr.bf16.mxu0 0
        %3040 = vmatpush1.bf16.msra.mxu0 0
        %3041 = vmatprep.subr.bf16.mxu0 0
        %3042 = vmatpush1.bf16.msra.mxu0 0
        %3043 = vmatprep.subr.bf16.mxu0 0
        %3044 = vmatpush1.bf16.msra.mxu0 0
        %3045 = vmatprep.subr.bf16.mxu0 0
        %3046 = vmatpush1.bf16.msra.mxu0 0
        %3047 = vmatprep.subr.bf16.mxu0 0
        %3048 = vmatpush1.bf16.msra.mxu0 0
        %3049 = vmatprep.subr.bf16.mxu0 0
        %3050 = vmatpush1.bf16.msra.mxu0 0
        %3051 = vmatprep.subr.bf16.mxu0 0
        %3052 = vmatpush1.bf16.msra.mxu0 0
        %3053 = vmatprep.subr.bf16.mxu0 0
        %3054 = vmatpush1.bf16.msra.mxu0 0
        %3055 = vmatprep.subr.bf16.mxu0 0
        %3056 = vmatpush1.bf16.msra.mxu0 0
        %3057 = vmatprep.mubr.bf16.mxu0 0
        %3058 = vmatmul.mubr.bf16.gmra.mrb[0].mxu0 %v3014
        %v3059 = vpop.f32.mrb[0].mxu0
        %v3060 = vadd.f32 0.0, %v3059
        %v3061 = vpop.f32.mrb[0].mxu0
        %v3062 = vpop.f32.mrb[0].mxu0
        %v3063 = vadd.f32 0.0, %v3062
        %v3064 = vpop.f32.mrb[0].mxu0
        %3065 = vmatprep.mubr.bf16.mxu0 0
        %3066 = vmatmul.mubr.bf16.gmra.mrb[0].mxu0 %v3017
        %v3067 = vpop.f32.mrb[0].mxu0
        %v3068 = vadd.f32 0.0, %v3067
        %v3069 = vpop.f32.mrb[0].mxu0
        %v3070 = vpop.f32.mrb[0].mxu0
        %v3071 = vadd.f32 0.0, %v3070
        %v3072 = vpop.f32.mrb[0].mxu0
        %3073 = vmatprep.mubr.bf16.mxu0 0
        %3074 = vmatmul.mubr.bf16.gmra.mrb[0].mxu0 %v3020
        %v3075 = vpop.f32.mrb[0].mxu0
        %v3076 = vadd.f32 0.0, %v3075
        %v3077 = vpop.f32.mrb[0].mxu0
        %v3078 = vpop.f32.mrb[0].mxu0
        %v3079 = vadd.f32 0.0, %v3078
        %v3080 = vpop.f32.mrb[0].mxu0
        %3081 = vmatprep.mubr.bf16.mxu0 0
        %3082 = vmatmul.mubr.bf16.gmra.mrb[0].mxu0 %v3023
        %v3083 = vpop.f32.mrb[0].mxu0
        %v3084 = vadd.f32 0.0, %v3083
        %v3085 = vpop.f32.mrb[0].mxu0
        %v3086 = vpop.f32.mrb[0].mxu0
        %v3087 = vadd.f32 0.0, %v3086
        %v3088 = vpop.f32.mrb[0].mxu0
        %3089 = vdwg.mxu0
        %v3090 = vld [vmem:[%s6] sm:$0xff]
        %v3091 = vld [vmem:[%s6 + $0x8] sm:$0xff]
        %v3092 = vld [vmem:[%s6 + $0x10] sm:$0xff]
        %v3093 = vld [vmem:[%s6 + $0x18] sm:$0xff]
        %v3094 = vld [vmem:[%s6 + $0x20] sm:$0xff]
        %v3095 = vld [vmem:[%s6 + $0x28] sm:$0xff]
        %v3096 = vpack.c.bf16 %v2784, %v2781
        %v3097 = vpack.c.bf16 %v2792, %v2789
        %v3098 = vpack.c.bf16 %v2800, %v2797
        %v3099 = vpack.c.bf16 %v2808, %v2805
        %v3100 = vpack.c.bf16 %v2877, %v2874
        %v3101 = vpack.c.bf16 %v2885, %v2882
        %v3102 = vpack.c.bf16 %v2893, %v2890
        %v3103 = vpack.c.bf16 %v2901, %v2898
        %v3104 = vpack.c.bf16 %v2970, %v2967
        %v3105 = vpack.c.bf16 %v2978, %v2975
        %v3106 = vpack.c.bf16 %v2986, %v2983
        %v3107 = vpack.c.bf16 %v2994, %v2991
        %v3108 = vpack.c.bf16 %v3063, %v3060
        %v3109 = vpack.c.bf16 %v3071, %v3068
        %v3110 = vpack.c.bf16 %v3079, %v3076
        %v3111 = vpack.c.bf16 %v3087, %v3084
        %v3112 = vpack.c.bf16 %v3091, %v3090
        %v3113 = vpack.c.bf16 %v3093, %v3092
        %v3114 = vpack.c.bf16 %v3095, %v3094
        %v3116 = vsel %vm1050, %v3096, 0
        %v3119 = vsel %vm1050, %v3097, 0
        %v3122 = vsel %vm1050, %v3098, 0
        %v3125 = vsel %vm1050, %v3099, 0
        %v3128 = vsel %vm1050, %v3100, 0
        %v3131 = vsel %vm1050, %v3101, 0
        %v3134 = vsel %vm1050, %v3102, 0
        %v3137 = vsel %vm1050, %v3103, 0
        %v3140 = vsel %vm1050, %v3104, 0
        %v3143 = vsel %vm1050, %v3105, 0
        %v3146 = vsel %vm1050, %v3106, 0
        %v3149 = vsel %vm1050, %v3107, 0
        %v3152 = vsel %vm1050, %v3108, 0
        %v3155 = vsel %vm1050, %v3109, 0
        %v3158 = vsel %vm1050, %v3110, 0
        %v3161 = vsel %vm1050, %v3111, 0
        %3163 = vmatprep.subr.bf16.mxu0 0
        %3164 = vmatpush1.bf16.msra.mxu0 %v3112
        %3165 = vmatprep.subr.bf16.mxu0 0
        %3166 = vmatpush1.bf16.msra.mxu0 %v3113
        %3167 = vmatprep.subr.bf16.mxu0 0
        %3168 = vmatpush1.bf16.msra.mxu0 %v3114
        %3169 = vmatprep.subr.bf16.mxu0 0
        %3170 = vmatpush1.bf16.msra.mxu0 0
        %3171 = vmatprep.subr.bf16.mxu0 0
        %3172 = vmatpush1.bf16.msra.mxu0 0
        %3173 = vmatprep.subr.bf16.mxu0 0
        %3174 = vmatpush1.bf16.msra.mxu0 0
        %3175 = vmatprep.subr.bf16.mxu0 0
        %3176 = vmatpush1.bf16.msra.mxu0 0
        %3177 = vmatprep.subr.bf16.mxu0 0
        %3178 = vmatpush1.bf16.msra.mxu0 0
        %3179 = vmatprep.subr.bf16.mxu0 0
        %3180 = vmatpush1.bf16.msra.mxu0 0
        %3181 = vmatprep.subr.bf16.mxu0 0
        %3182 = vmatpush1.bf16.msra.mxu0 0
        %3183 = vmatprep.subr.bf16.mxu0 0
        %3184 = vmatpush1.bf16.msra.mxu0 0
        %3185 = vmatprep.subr.bf16.mxu0 0
        %3186 = vmatpush1.bf16.msra.mxu0 0
        %3187 = vmatprep.subr.bf16.mxu0 0
        %3188 = vmatpush1.bf16.msra.mxu0 0
        %3189 = vmatprep.subr.bf16.mxu0 0
        %3190 = vmatpush1.bf16.msra.mxu0 0
        %3191 = vmatprep.subr.bf16.mxu0 0
        %3192 = vmatpush1.bf16.msra.mxu0 0
        %3193 = vmatprep.subr.bf16.mxu0 0
        %3194 = vmatpush1.bf16.msra.mxu0 0
        %3195 = vmatprep.mubr.bf16.mxu0 0
        %3196 = vmatmul.mubr.bf16.gmra.mrb[0].mxu0 %v3116
        %v3197 = vpop.f32.mrb[0].mxu0
        %v3198 = vadd.f32 0.0, %v3197
        %v3199 = vpop.f32.mrb[0].mxu0
        %v3200 = vpop.f32.mrb[0].mxu0
        %v3201 = vadd.f32 0.0, %v3200
        %v3202 = vpop.f32.mrb[0].mxu0
        %3203 = vmatprep.mubr.bf16.mxu0 0
        %3204 = vmatmul.mubr.bf16.gmra.mrb[0].mxu0 %v3119
        %v3205 = vpop.f32.mrb[0].mxu0
        %v3206 = vadd.f32 0.0, %v3205
        %v3207 = vpop.f32.mrb[0].mxu0
        %v3208 = vpop.f32.mrb[0].mxu0
        %v3209 = vadd.f32 0.0, %v3208
        %v3210 = vpop.f32.mrb[0].mxu0
        %3211 = vmatprep.mubr.bf16.mxu0 0
        %3212 = vmatmul.mubr.bf16.gmra.mrb[0].mxu0 %v3122
        %v3213 = vpop.f32.mrb[0].mxu0
        %v3214 = vadd.f32 0.0, %v3213
        %v3215 = vpop.f32.mrb[0].mxu0
        %v3216 = vpop.f32.mrb[0].mxu0
        %v3217 = vadd.f32 0.0, %v3216
        %v3218 = vpop.f32.mrb[0].mxu0
        %3219 = vmatprep.mubr.bf16.mxu0 0
        %3220 = vmatmul.mubr.bf16.gmra.mrb[0].mxu0 %v3125
        %v3221 = vpop.f32.mrb[0].mxu0
        %v3222 = vadd.f32 0.0, %v3221
        %v3223 = vpop.f32.mrb[0].mxu0
        %v3224 = vpop.f32.mrb[0].mxu0
        %v3225 = vadd.f32 0.0, %v3224
        %v3226 = vpop.f32.mrb[0].mxu0
        %3227 = vmatprep.mubr.bf16.mxu0 0
        %3228 = vmatmul.mubr.bf16.gmra.mrb[0].mxu0 %v3128
        %v3229 = vpop.f32.mrb[0].mxu0
        %v3230 = vadd.f32 0.0, %v3229
        %v3231 = vpop.f32.mrb[0].mxu0
        %v3232 = vpop.f32.mrb[0].mxu0
        %v3233 = vadd.f32 0.0, %v3232
        %v3234 = vpop.f32.mrb[0].mxu0
        %3235 = vmatprep.mubr.bf16.mxu0 0
        %3236 = vmatmul.mubr.bf16.gmra.mrb[0].mxu0 %v3131
        %v3237 = vpop.f32.mrb[0].mxu0
        %v3238 = vadd.f32 0.0, %v3237
        %v3239 = vpop.f32.mrb[0].mxu0
        %v3240 = vpop.f32.mrb[0].mxu0
        %v3241 = vadd.f32 0.0, %v3240
        %v3242 = vpop.f32.mrb[0].mxu0
        %3243 = vmatprep.mubr.bf16.mxu0 0
        %3244 = vmatmul.mubr.bf16.gmra.mrb[0].mxu0 %v3134
        %v3245 = vpop.f32.mrb[0].mxu0
        %v3246 = vadd.f32 0.0, %v3245
        %v3247 = vpop.f32.mrb[0].mxu0
        %v3248 = vpop.f32.mrb[0].mxu0
        %v3249 = vadd.f32 0.0, %v3248
        %v3250 = vpop.f32.mrb[0].mxu0
        %3251 = vmatprep.mubr.bf16.mxu0 0
        %3252 = vmatmul.mubr.bf16.gmra.mrb[0].mxu0 %v3137
        %v3253 = vpop.f32.mrb[0].mxu0
        %v3254 = vadd.f32 0.0, %v3253
        %v3255 = vpop.f32.mrb[0].mxu0
        %v3256 = vpop.f32.mrb[0].mxu0
        %v3257 = vadd.f32 0.0, %v3256
        %v3258 = vpop.f32.mrb[0].mxu0
        %3259 = vmatprep.mubr.bf16.mxu0 0
        %3260 = vmatmul.mubr.bf16.gmra.mrb[0].mxu0 %v3140
        %v3261 = vpop.f32.mrb[0].mxu0
        %v3262 = vadd.f32 0.0, %v3261
        %v3263 = vpop.f32.mrb[0].mxu0
        %v3264 = vpop.f32.mrb[0].mxu0
        %v3265 = vadd.f32 0.0, %v3264
        %v3266 = vpop.f32.mrb[0].mxu0
        %3267 = vmatprep.mubr.bf16.mxu0 0
        %3268 = vmatmul.mubr.bf16.gmra.mrb[0].mxu0 %v3143
        %v3269 = vpop.f32.mrb[0].mxu0
        %v3270 = vadd.f32 0.0, %v3269
        %v3271 = vpop.f32.mrb[0].mxu0
        %v3272 = vpop.f32.mrb[0].mxu0
        %v3273 = vadd.f32 0.0, %v3272
        %v3274 = vpop.f32.mrb[0].mxu0
        %3275 = vmatprep.mubr.bf16.mxu0 0
        %3276 = vmatmul.mubr.bf16.gmra.mrb[0].mxu0 %v3146
        %v3277 = vpop.f32.mrb[0].mxu0
        %v3278 = vadd.f32 0.0, %v3277
        %v3279 = vpop.f32.mrb[0].mxu0
        %v3280 = vpop.f32.mrb[0].mxu0
        %v3281 = vadd.f32 0.0, %v3280
        %v3282 = vpop.f32.mrb[0].mxu0
        %3283 = vmatprep.mubr.bf16.mxu0 0
        %3284 = vmatmul.mubr.bf16.gmra.mrb[0].mxu0 %v3149
        %v3285 = vpop.f32.mrb[0].mxu0
        %v3286 = vadd.f32 0.0, %v3285
        %v3287 = vpop.f32.mrb[0].mxu0
        %v3288 = vpop.f32.mrb[0].mxu0
        %v3289 = vadd.f32 0.0, %v3288
        %v3290 = vpop.f32.mrb[0].mxu0
        %3291 = vmatprep.mubr.bf16.mxu0 0
        %3292 = vmatmul.mubr.bf16.gmra.mrb[0].mxu0 %v3152
        %v3293 = vpop.f32.mrb[0].mxu0
        %v3294 = vadd.f32 0.0, %v3293
        %v3295 = vpop.f32.mrb[0].mxu0
        %v3296 = vpop.f32.mrb[0].mxu0
        %v3297 = vadd.f32 0.0, %v3296
        %v3298 = vpop.f32.mrb[0].mxu0
        %3299 = vmatprep.mubr.bf16.mxu0 0
        %3300 = vmatmul.mubr.bf16.gmra.mrb[0].mxu0 %v3155
        %v3301 = vpop.f32.mrb[0].mxu0
        %v3302 = vadd.f32 0.0, %v3301
        %v3303 = vpop.f32.mrb[0].mxu0
        %v3304 = vpop.f32.mrb[0].mxu0
        %v3305 = vadd.f32 0.0, %v3304
        %v3306 = vpop.f32.mrb[0].mxu0
        %3307 = vmatprep.mubr.bf16.mxu0 0
        %3308 = vmatmul.mubr.bf16.gmra.mrb[0].mxu0 %v3158
        %v3309 = vpop.f32.mrb[0].mxu0
        %v3310 = vadd.f32 0.0, %v3309
        %v3311 = vpop.f32.mrb[0].mxu0
        %v3312 = vpop.f32.mrb[0].mxu0
        %v3313 = vadd.f32 0.0, %v3312
        %v3314 = vpop.f32.mrb[0].mxu0
        %3315 = vmatprep.mubr.bf16.mxu0 0
        %3316 = vmatmul.mubr.bf16.gmra.mrb[0].mxu0 %v3161
        %v3317 = vpop.f32.mrb[0].mxu0
        %v3318 = vadd.f32 0.0, %v3317
        %v3319 = vpop.f32.mrb[0].mxu0
        %v3320 = vpop.f32.mrb[0].mxu0
        %v3321 = vadd.f32 0.0, %v3320
        %v3322 = vpop.f32.mrb[0].mxu0
        %3323 = vdwg.mxu0
        %v3324 = vadd.f32 %v598, %v3198
        %v3325 = vadd.f32 %v599, %v3201
        %v3326 = vadd.f32 %v600, %v3206
        %v3327 = vadd.f32 %v601, %v3209
        %v3328 = vadd.f32 %v602, %v3214
        %v3329 = vadd.f32 %v603, %v3217
        %v3330 = vadd.f32 %v604, %v3222
        %v3331 = vadd.f32 %v605, %v3225
        %v3332 = vadd.f32 %v598, %v3230
        %v3333 = vadd.f32 %v599, %v3233
        %v3334 = vadd.f32 %v600, %v3238
        %v3335 = vadd.f32 %v601, %v3241
        %v3336 = vadd.f32 %v602, %v3246
        %v3337 = vadd.f32 %v603, %v3249
        %v3338 = vadd.f32 %v604, %v3254
        %v3339 = vadd.f32 %v605, %v3257
        %v3340 = vadd.f32 %v598, %v3262
        %v3341 = vadd.f32 %v599, %v3265
        %v3342 = vadd.f32 %v600, %v3270
        %v3343 = vadd.f32 %v601, %v3273
        %v3344 = vadd.f32 %v602, %v3278
        %v3345 = vadd.f32 %v603, %v3281
        %v3346 = vadd.f32 %v604, %v3286
        %v3347 = vadd.f32 %v605, %v3289
        %v3348 = vadd.f32 %v598, %v3294
        %v3349 = vadd.f32 %v599, %v3297
        %v3350 = vadd.f32 %v600, %v3302
        %v3351 = vadd.f32 %v601, %v3305
        %v3352 = vadd.f32 %v602, %v3310
        %v3353 = vadd.f32 %v603, %v3313
        %v3354 = vadd.f32 %v604, %v3318
        %v3355 = vadd.f32 %v605, %v3321
        %v3356 = vld [vmem:[%s16 + $0x4] sm:$0x1]
        %v3357 = vlaneseq
        %v3358 = vshrl.u32 %v3357, 7
        %v3359 = vsub.s32 0, %v3358
        %v3360 = vrot.slane %v3356, %v3359
        %v3361 = vadd.f32 %v3324, %v3360
        %v3362 = vadd.f32 %v3325, %v3360
        %v3363 = vadd.f32 %v3326, %v3360
        %v3364 = vadd.f32 %v3327, %v3360
        %v3365 = vadd.f32 %v3328, %v3360
        %v3366 = vadd.f32 %v3329, %v3360
        %v3367 = vadd.f32 %v3330, %v3360
        %v3368 = vadd.f32 %v3331, %v3360
        %v3369 = vadd.f32 %v3332, %v3360
        %v3370 = vadd.f32 %v3333, %v3360
        %v3371 = vadd.f32 %v3334, %v3360
        %v3372 = vadd.f32 %v3335, %v3360
        %v3373 = vadd.f32 %v3336, %v3360
        %v3374 = vadd.f32 %v3337, %v3360
        %v3375 = vadd.f32 %v3338, %v3360
        %v3376 = vadd.f32 %v3339, %v3360
        %v3377 = vadd.f32 %v3340, %v3360
        %v3378 = vadd.f32 %v3341, %v3360
        %v3379 = vadd.f32 %v3342, %v3360
        %v3380 = vadd.f32 %v3343, %v3360
        %v3381 = vadd.f32 %v3344, %v3360
        %v3382 = vadd.f32 %v3345, %v3360
        %v3383 = vadd.f32 %v3346, %v3360
        %v3384 = vadd.f32 %v3347, %v3360
        %v3385 = vadd.f32 %v3348, %v3360
        %v3386 = vadd.f32 %v3349, %v3360
        %v3387 = vadd.f32 %v3350, %v3360
        %v3388 = vadd.f32 %v3351, %v3360
        %v3389 = vadd.f32 %v3352, %v3360
        %v3390 = vadd.f32 %v3353, %v3360
        %v3391 = vadd.f32 %v3354, %v3360
        %v3392 = vadd.f32 %v3355, %v3360
        %v3393 = vld [vmem:[%s16 + $0x5] sm:$0x1]
        %v3394 = vld [vmem:[%s16 + $0x6] sm:$0x1]
        %v3395 = vsel %vm1050, %v3361, 0.0
        %3396 = vadd.xlane.f32.xlu0 %v3395
        %v3397 = vpop.xlane.xlu0 %3396
        %v3398 = vsel %vm1050, %v3362, 0.0
        %3399 = vadd.xlane.f32.xlu0 %v3398
        %v3400 = vpop.xlane.xlu0 %3399
        %v3401 = vsel %vm1050, %v3363, 0.0
        %3402 = vadd.xlane.f32.xlu0 %v3401
        %v3403 = vpop.xlane.xlu0 %3402
        %v3404 = vsel %vm1050, %v3364, 0.0
        %3405 = vadd.xlane.f32.xlu0 %v3404
        %v3406 = vpop.xlane.xlu0 %3405
        %v3407 = vsel %vm1050, %v3365, 0.0
        %3408 = vadd.xlane.f32.xlu0 %v3407
        %v3409 = vpop.xlane.xlu0 %3408
        %v3410 = vsel %vm1050, %v3366, 0.0
        %3411 = vadd.xlane.f32.xlu0 %v3410
        %v3412 = vpop.xlane.xlu0 %3411
        %v3413 = vsel %vm1050, %v3367, 0.0
        %3414 = vadd.xlane.f32.xlu0 %v3413
        %v3415 = vpop.xlane.xlu0 %3414
        %v3416 = vsel %vm1050, %v3368, 0.0
        %3417 = vadd.xlane.f32.xlu0 %v3416
        %v3418 = vpop.xlane.xlu0 %3417
        %v3419 = vsel %vm1050, %v3369, 0.0
        %3420 = vadd.xlane.f32.xlu0 %v3419
        %v3421 = vpop.xlane.xlu0 %3420
        %v3422 = vsel %vm1050, %v3370, 0.0
        %3423 = vadd.xlane.f32.xlu0 %v3422
        %v3424 = vpop.xlane.xlu0 %3423
        %v3425 = vsel %vm1050, %v3371, 0.0
        %3426 = vadd.xlane.f32.xlu0 %v3425
        %v3427 = vpop.xlane.xlu0 %3426
        %v3428 = vsel %vm1050, %v3372, 0.0
        %3429 = vadd.xlane.f32.xlu0 %v3428
        %v3430 = vpop.xlane.xlu0 %3429
        %v3431 = vsel %vm1050, %v3373, 0.0
        %3432 = vadd.xlane.f32.xlu0 %v3431
        %v3433 = vpop.xlane.xlu0 %3432
        %v3434 = vsel %vm1050, %v3374, 0.0
        %3435 = vadd.xlane.f32.xlu0 %v3434
        %v3436 = vpop.xlane.xlu0 %3435
        %v3437 = vsel %vm1050, %v3375, 0.0
        %3438 = vadd.xlane.f32.xlu0 %v3437
        %v3439 = vpop.xlane.xlu0 %3438
        %v3440 = vsel %vm1050, %v3376, 0.0
        %3441 = vadd.xlane.f32.xlu0 %v3440
        %v3442 = vpop.xlane.xlu0 %3441
        %v3443 = vsel %vm1050, %v3377, 0.0
        %3444 = vadd.xlane.f32.xlu0 %v3443
        %v3445 = vpop.xlane.xlu0 %3444
        %v3446 = vsel %vm1050, %v3378, 0.0
        %3447 = vadd.xlane.f32.xlu0 %v3446
        %v3448 = vpop.xlane.xlu0 %3447
        %v3449 = vsel %vm1050, %v3379, 0.0
        %3450 = vadd.xlane.f32.xlu0 %v3449
        %v3451 = vpop.xlane.xlu0 %3450
        %v3452 = vsel %vm1050, %v3380, 0.0
        %3453 = vadd.xlane.f32.xlu0 %v3452
        %v3454 = vpop.xlane.xlu0 %3453
        %v3455 = vsel %vm1050, %v3381, 0.0
        %3456 = vadd.xlane.f32.xlu0 %v3455
        %v3457 = vpop.xlane.xlu0 %3456
        %v3458 = vsel %vm1050, %v3382, 0.0
        %3459 = vadd.xlane.f32.xlu0 %v3458
        %v3460 = vpop.xlane.xlu0 %3459
        %v3461 = vsel %vm1050, %v3383, 0.0
        %3462 = vadd.xlane.f32.xlu0 %v3461
        %v3463 = vpop.xlane.xlu0 %3462
        %v3464 = vsel %vm1050, %v3384, 0.0
        %3465 = vadd.xlane.f32.xlu0 %v3464
        %v3466 = vpop.xlane.xlu0 %3465
        %v3467 = vsel %vm1050, %v3385, 0.0
        %3468 = vadd.xlane.f32.xlu0 %v3467
        %v3469 = vpop.xlane.xlu0 %3468
        %v3470 = vsel %vm1050, %v3386, 0.0
        %3471 = vadd.xlane.f32.xlu0 %v3470
        %v3472 = vpop.xlane.xlu0 %3471
        %v3473 = vsel %vm1050, %v3387, 0.0
        %3474 = vadd.xlane.f32.xlu0 %v3473
        %v3475 = vpop.xlane.xlu0 %3474
        %v3476 = vsel %vm1050, %v3388, 0.0
        %3477 = vadd.xlane.f32.xlu0 %v3476
        %v3478 = vpop.xlane.xlu0 %3477
        %v3479 = vsel %vm1050, %v3389, 0.0
        %3480 = vadd.xlane.f32.xlu0 %v3479
        %v3481 = vpop.xlane.xlu0 %3480
        %v3482 = vsel %vm1050, %v3390, 0.0
        %3483 = vadd.xlane.f32.xlu0 %v3482
        %v3484 = vpop.xlane.xlu0 %3483
        %v3485 = vsel %vm1050, %v3391, 0.0
        %3486 = vadd.xlane.f32.xlu0 %v3485
        %v3487 = vpop.xlane.xlu0 %3486
        %v3488 = vsel %vm1050, %v3392, 0.0
        %3489 = vadd.xlane.f32.xlu0 %v3488
        %v3490 = vpop.xlane.xlu0 %3489
        %v3491 = vmul.f32 %v3397, %v1075
        %v3492 = vmul.f32 %v3400, %v1075
        %v3493 = vmul.f32 %v3403, %v1075
        %v3494 = vmul.f32 %v3406, %v1075
        %v3495 = vmul.f32 %v3409, %v1075
        %v3496 = vmul.f32 %v3412, %v1075
        %v3497 = vmul.f32 %v3415, %v1075
        %v3498 = vmul.f32 %v3418, %v1075
        %v3499 = vmul.f32 %v3421, %v1075
        %v3500 = vmul.f32 %v3424, %v1075
        %v3501 = vmul.f32 %v3427, %v1075
        %v3502 = vmul.f32 %v3430, %v1075
        %v3503 = vmul.f32 %v3433, %v1075
        %v3504 = vmul.f32 %v3436, %v1075
        %v3505 = vmul.f32 %v3439, %v1075
        %v3506 = vmul.f32 %v3442, %v1075
        %v3507 = vmul.f32 %v3445, %v1075
        %v3508 = vmul.f32 %v3448, %v1075
        %v3509 = vmul.f32 %v3451, %v1075
        %v3510 = vmul.f32 %v3454, %v1075
        %v3511 = vmul.f32 %v3457, %v1075
        %v3512 = vmul.f32 %v3460, %v1075
        %v3513 = vmul.f32 %v3463, %v1075
        %v3514 = vmul.f32 %v3466, %v1075
        %v3515 = vmul.f32 %v3469, %v1075
        %v3516 = vmul.f32 %v3472, %v1075
        %v3517 = vmul.f32 %v3475, %v1075
        %v3518 = vmul.f32 %v3478, %v1075
        %v3519 = vmul.f32 %v3481, %v1075
        %v3520 = vmul.f32 %v3484, %v1075
        %v3521 = vmul.f32 %v3487, %v1075
        %v3522 = vmul.f32 %v3490, %v1075
        %v3523 = vsub.f32 %v3361, %v3491
        %v3524 = vsub.f32 %v3362, %v3492
        %v3525 = vsub.f32 %v3363, %v3493
        %v3526 = vsub.f32 %v3364, %v3494
        %v3527 = vsub.f32 %v3365, %v3495
        %v3528 = vsub.f32 %v3366, %v3496
        %v3529 = vsub.f32 %v3367, %v3497
        %v3530 = vsub.f32 %v3368, %v3498
        %v3531 = vsub.f32 %v3369, %v3499
        %v3532 = vsub.f32 %v3370, %v3500
        %v3533 = vsub.f32 %v3371, %v3501
        %v3534 = vsub.f32 %v3372, %v3502
        %v3535 = vsub.f32 %v3373, %v3503
        %v3536 = vsub.f32 %v3374, %v3504
        %v3537 = vsub.f32 %v3375, %v3505
        %v3538 = vsub.f32 %v3376, %v3506
        %v3539 = vsub.f32 %v3377, %v3507
        %v3540 = vsub.f32 %v3378, %v3508
        %v3541 = vsub.f32 %v3379, %v3509
        %v3542 = vsub.f32 %v3380, %v3510
        %v3543 = vsub.f32 %v3381, %v3511
        %v3544 = vsub.f32 %v3382, %v3512
        %v3545 = vsub.f32 %v3383, %v3513
        %v3546 = vsub.f32 %v3384, %v3514
        %v3547 = vsub.f32 %v3385, %v3515
        %v3548 = vsub.f32 %v3386, %v3516
        %v3549 = vsub.f32 %v3387, %v3517
        %v3550 = vsub.f32 %v3388, %v3518
        %v3551 = vsub.f32 %v3389, %v3519
        %v3552 = vsub.f32 %v3390, %v3520
        %v3553 = vsub.f32 %v3391, %v3521
        %v3554 = vsub.f32 %v3392, %v3522
        %v3555 = vmul.f32 %v3523, %v3523
        %v3556 = vmul.f32 %v3524, %v3524
        %v3557 = vmul.f32 %v3525, %v3525
        %v3558 = vmul.f32 %v3526, %v3526
        %v3559 = vmul.f32 %v3527, %v3527
        %v3560 = vmul.f32 %v3528, %v3528
        %v3561 = vmul.f32 %v3529, %v3529
        %v3562 = vmul.f32 %v3530, %v3530
        %v3563 = vmul.f32 %v3531, %v3531
        %v3564 = vmul.f32 %v3532, %v3532
        %v3565 = vmul.f32 %v3533, %v3533
        %v3566 = vmul.f32 %v3534, %v3534
        %v3567 = vmul.f32 %v3535, %v3535
        %v3568 = vmul.f32 %v3536, %v3536
        %v3569 = vmul.f32 %v3537, %v3537
        %v3570 = vmul.f32 %v3538, %v3538
        %v3571 = vmul.f32 %v3539, %v3539
        %v3572 = vmul.f32 %v3540, %v3540
        %v3573 = vmul.f32 %v3541, %v3541
        %v3574 = vmul.f32 %v3542, %v3542
        %v3575 = vmul.f32 %v3543, %v3543
        %v3576 = vmul.f32 %v3544, %v3544
        %v3577 = vmul.f32 %v3545, %v3545
        %v3578 = vmul.f32 %v3546, %v3546
        %v3579 = vmul.f32 %v3547, %v3547
        %v3580 = vmul.f32 %v3548, %v3548
        %v3581 = vmul.f32 %v3549, %v3549
        %v3582 = vmul.f32 %v3550, %v3550
        %v3583 = vmul.f32 %v3551, %v3551
        %v3584 = vmul.f32 %v3552, %v3552
        %v3585 = vmul.f32 %v3553, %v3553
        %v3586 = vmul.f32 %v3554, %v3554
        %v3587 = vsel %vm1050, %v3555, 0.0
        %3588 = vadd.xlane.f32.xlu0 %v3587
        %v3589 = vpop.xlane.xlu0 %3588
        %v3590 = vsel %vm1050, %v3556, 0.0
        %3591 = vadd.xlane.f32.xlu0 %v3590
        %v3592 = vpop.xlane.xlu0 %3591
        %v3593 = vsel %vm1050, %v3557, 0.0
        %3594 = vadd.xlane.f32.xlu0 %v3593
        %v3595 = vpop.xlane.xlu0 %3594
        %v3596 = vsel %vm1050, %v3558, 0.0
        %3597 = vadd.xlane.f32.xlu0 %v3596
        %v3598 = vpop.xlane.xlu0 %3597
        %v3599 = vsel %vm1050, %v3559, 0.0
        %3600 = vadd.xlane.f32.xlu0 %v3599
        %v3601 = vpop.xlane.xlu0 %3600
        %v3602 = vsel %vm1050, %v3560, 0.0
        %3603 = vadd.xlane.f32.xlu0 %v3602
        %v3604 = vpop.xlane.xlu0 %3603
        %v3605 = vsel %vm1050, %v3561, 0.0
        %3606 = vadd.xlane.f32.xlu0 %v3605
        %v3607 = vpop.xlane.xlu0 %3606
        %v3608 = vsel %vm1050, %v3562, 0.0
        %3609 = vadd.xlane.f32.xlu0 %v3608
        %v3610 = vpop.xlane.xlu0 %3609
        %v3611 = vsel %vm1050, %v3563, 0.0
        %3612 = vadd.xlane.f32.xlu0 %v3611
        %v3613 = vpop.xlane.xlu0 %3612
        %v3614 = vsel %vm1050, %v3564, 0.0
        %3615 = vadd.xlane.f32.xlu0 %v3614
        %v3616 = vpop.xlane.xlu0 %3615
        %v3617 = vsel %vm1050, %v3565, 0.0
        %3618 = vadd.xlane.f32.xlu0 %v3617
        %v3619 = vpop.xlane.xlu0 %3618
        %v3620 = vsel %vm1050, %v3566, 0.0
        %3621 = vadd.xlane.f32.xlu0 %v3620
        %v3622 = vpop.xlane.xlu0 %3621
        %v3623 = vsel %vm1050, %v3567, 0.0
        %3624 = vadd.xlane.f32.xlu0 %v3623
        %v3625 = vpop.xlane.xlu0 %3624
        %v3626 = vsel %vm1050, %v3568, 0.0
        %3627 = vadd.xlane.f32.xlu0 %v3626
        %v3628 = vpop.xlane.xlu0 %3627
        %v3629 = vsel %vm1050, %v3569, 0.0
        %3630 = vadd.xlane.f32.xlu0 %v3629
        %v3631 = vpop.xlane.xlu0 %3630
        %v3632 = vsel %vm1050, %v3570, 0.0
        %3633 = vadd.xlane.f32.xlu0 %v3632
        %v3634 = vpop.xlane.xlu0 %3633
        %v3635 = vsel %vm1050, %v3571, 0.0
        %3636 = vadd.xlane.f32.xlu0 %v3635
        %v3637 = vpop.xlane.xlu0 %3636
        %v3638 = vsel %vm1050, %v3572, 0.0
        %3639 = vadd.xlane.f32.xlu0 %v3638
        %v3640 = vpop.xlane.xlu0 %3639
        %v3641 = vsel %vm1050, %v3573, 0.0
        %3642 = vadd.xlane.f32.xlu0 %v3641
        %v3643 = vpop.xlane.xlu0 %3642
        %v3644 = vsel %vm1050, %v3574, 0.0
        %3645 = vadd.xlane.f32.xlu0 %v3644
        %v3646 = vpop.xlane.xlu0 %3645
        %v3647 = vsel %vm1050, %v3575, 0.0
        %3648 = vadd.xlane.f32.xlu0 %v3647
        %v3649 = vpop.xlane.xlu0 %3648
        %v3650 = vsel %vm1050, %v3576, 0.0
        %3651 = vadd.xlane.f32.xlu0 %v3650
        %v3652 = vpop.xlane.xlu0 %3651
        %v3653 = vsel %vm1050, %v3577, 0.0
        %3654 = vadd.xlane.f32.xlu0 %v3653
        %v3655 = vpop.xlane.xlu0 %3654
        %v3656 = vsel %vm1050, %v3578, 0.0
        %3657 = vadd.xlane.f32.xlu0 %v3656
        %v3658 = vpop.xlane.xlu0 %3657
        %v3659 = vsel %vm1050, %v3579, 0.0
        %3660 = vadd.xlane.f32.xlu0 %v3659
        %v3661 = vpop.xlane.xlu0 %3660
        %v3662 = vsel %vm1050, %v3580, 0.0
        %3663 = vadd.xlane.f32.xlu0 %v3662
        %v3664 = vpop.xlane.xlu0 %3663
        %v3665 = vsel %vm1050, %v3581, 0.0
        %3666 = vadd.xlane.f32.xlu0 %v3665
        %v3667 = vpop.xlane.xlu0 %3666
        %v3668 = vsel %vm1050, %v3582, 0.0
        %3669 = vadd.xlane.f32.xlu0 %v3668
        %v3670 = vpop.xlane.xlu0 %3669
        %v3671 = vsel %vm1050, %v3583, 0.0
        %3672 = vadd.xlane.f32.xlu0 %v3671
        %v3673 = vpop.xlane.xlu0 %3672
        %v3674 = vsel %vm1050, %v3584, 0.0
        %3675 = vadd.xlane.f32.xlu0 %v3674
        %v3676 = vpop.xlane.xlu0 %3675
        %v3677 = vsel %vm1050, %v3585, 0.0
        %3678 = vadd.xlane.f32.xlu0 %v3677
        %v3679 = vpop.xlane.xlu0 %3678
        %v3680 = vsel %vm1050, %v3586, 0.0
        %3681 = vadd.xlane.f32.xlu0 %v3680
        %v3682 = vpop.xlane.xlu0 %3681
        %v3683 = vmul.f32 %v3589, %v1075
        %v3684 = vmul.f32 %v3592, %v1075
        %v3685 = vmul.f32 %v3595, %v1075
        %v3686 = vmul.f32 %v3598, %v1075
        %v3687 = vmul.f32 %v3601, %v1075
        %v3688 = vmul.f32 %v3604, %v1075
        %v3689 = vmul.f32 %v3607, %v1075
        %v3690 = vmul.f32 %v3610, %v1075
        %v3691 = vmul.f32 %v3613, %v1075
        %v3692 = vmul.f32 %v3616, %v1075
        %v3693 = vmul.f32 %v3619, %v1075
        %v3694 = vmul.f32 %v3622, %v1075
        %v3695 = vmul.f32 %v3625, %v1075
        %v3696 = vmul.f32 %v3628, %v1075
        %v3697 = vmul.f32 %v3631, %v1075
        %v3698 = vmul.f32 %v3634, %v1075
        %v3699 = vmul.f32 %v3637, %v1075
        %v3700 = vmul.f32 %v3640, %v1075
        %v3701 = vmul.f32 %v3643, %v1075
        %v3702 = vmul.f32 %v3646, %v1075
        %v3703 = vmul.f32 %v3649, %v1075
        %v3704 = vmul.f32 %v3652, %v1075
        %v3705 = vmul.f32 %v3655, %v1075
        %v3706 = vmul.f32 %v3658, %v1075
        %v3707 = vmul.f32 %v3661, %v1075
        %v3708 = vmul.f32 %v3664, %v1075
        %v3709 = vmul.f32 %v3667, %v1075
        %v3710 = vmul.f32 %v3670, %v1075
        %v3711 = vmul.f32 %v3673, %v1075
        %v3712 = vmul.f32 %v3676, %v1075
        %v3713 = vmul.f32 %v3679, %v1075
        %v3714 = vmul.f32 %v3682, %v1075
        %v3715 = vadd.f32 %v3683, 1e-05
        %v3716 = vadd.f32 %v3684, 1e-05
        %v3717 = vadd.f32 %v3685, 1e-05
        %v3718 = vadd.f32 %v3686, 1e-05
        %v3719 = vadd.f32 %v3687, 1e-05
        %v3720 = vadd.f32 %v3688, 1e-05
        %v3721 = vadd.f32 %v3689, 1e-05
        %v3722 = vadd.f32 %v3690, 1e-05
        %v3723 = vadd.f32 %v3691, 1e-05
        %v3724 = vadd.f32 %v3692, 1e-05
        %v3725 = vadd.f32 %v3693, 1e-05
        %v3726 = vadd.f32 %v3694, 1e-05
        %v3727 = vadd.f32 %v3695, 1e-05
        %v3728 = vadd.f32 %v3696, 1e-05
        %v3729 = vadd.f32 %v3697, 1e-05
        %v3730 = vadd.f32 %v3698, 1e-05
        %v3731 = vadd.f32 %v3699, 1e-05
        %v3732 = vadd.f32 %v3700, 1e-05
        %v3733 = vadd.f32 %v3701, 1e-05
        %v3734 = vadd.f32 %v3702, 1e-05
        %v3735 = vadd.f32 %v3703, 1e-05
        %v3736 = vadd.f32 %v3704, 1e-05
        %v3737 = vadd.f32 %v3705, 1e-05
        %v3738 = vadd.f32 %v3706, 1e-05
        %v3739 = vadd.f32 %v3707, 1e-05
        %v3740 = vadd.f32 %v3708, 1e-05
        %v3741 = vadd.f32 %v3709, 1e-05
        %v3742 = vadd.f32 %v3710, 1e-05
        %v3743 = vadd.f32 %v3711, 1e-05
        %v3744 = vadd.f32 %v3712, 1e-05
        %v3745 = vadd.f32 %v3713, 1e-05
        %v3746 = vadd.f32 %v3714, 1e-05
        %v3747 = vrsqrt.pop %v3715
        %v3748 = vrsqrt.pop %v3716
        %v3749 = vrsqrt.pop %v3717
        %v3750 = vrsqrt.pop %v3718
        %v3751 = vrsqrt.pop %v3719
        %v3752 = vrsqrt.pop %v3720
        %v3753 = vrsqrt.pop %v3721
        %v3754 = vrsqrt.pop %v3722
        %v3755 = vrsqrt.pop %v3723
        %v3756 = vrsqrt.pop %v3724
        %v3757 = vrsqrt.pop %v3725
        %v3758 = vrsqrt.pop %v3726
        %v3759 = vrsqrt.pop %v3727
        %v3760 = vrsqrt.pop %v3728
        %v3761 = vrsqrt.pop %v3729
        %v3762 = vrsqrt.pop %v3730
        %v3763 = vrsqrt.pop %v3731
        %v3764 = vrsqrt.pop %v3732
        %v3765 = vrsqrt.pop %v3733
        %v3766 = vrsqrt.pop %v3734
        %v3767 = vrsqrt.pop %v3735
        %v3768 = vrsqrt.pop %v3736
        %v3769 = vrsqrt.pop %v3737
        %v3770 = vrsqrt.pop %v3738
        %v3771 = vrsqrt.pop %v3739
        %v3772 = vrsqrt.pop %v3740
        %v3773 = vrsqrt.pop %v3741
        %v3774 = vrsqrt.pop %v3742
        %v3775 = vrsqrt.pop %v3743
        %v3776 = vrsqrt.pop %v3744
        %v3777 = vrsqrt.pop %v3745
        %v3778 = vrsqrt.pop %v3746
        %v3779 = vmul.f32 %v3523, %v3747
        %v3780 = vmul.f32 %v3524, %v3748
        %v3781 = vmul.f32 %v3525, %v3749
        %v3782 = vmul.f32 %v3526, %v3750
        %v3783 = vmul.f32 %v3527, %v3751
        %v3784 = vmul.f32 %v3528, %v3752
        %v3785 = vmul.f32 %v3529, %v3753
        %v3786 = vmul.f32 %v3530, %v3754
        %v3787 = vmul.f32 %v3531, %v3755
        %v3788 = vmul.f32 %v3532, %v3756
        %v3789 = vmul.f32 %v3533, %v3757
        %v3790 = vmul.f32 %v3534, %v3758
        %v3791 = vmul.f32 %v3535, %v3759
        %v3792 = vmul.f32 %v3536, %v3760
        %v3793 = vmul.f32 %v3537, %v3761
        %v3794 = vmul.f32 %v3538, %v3762
        %v3795 = vmul.f32 %v3539, %v3763
        %v3796 = vmul.f32 %v3540, %v3764
        %v3797 = vmul.f32 %v3541, %v3765
        %v3798 = vmul.f32 %v3542, %v3766
        %v3799 = vmul.f32 %v3543, %v3767
        %v3800 = vmul.f32 %v3544, %v3768
        %v3801 = vmul.f32 %v3545, %v3769
        %v3802 = vmul.f32 %v3546, %v3770
        %v3803 = vmul.f32 %v3547, %v3771
        %v3804 = vmul.f32 %v3548, %v3772
        %v3805 = vmul.f32 %v3549, %v3773
        %v3806 = vmul.f32 %v3550, %v3774
        %v3807 = vmul.f32 %v3551, %v3775
        %v3808 = vmul.f32 %v3552, %v3776
        %v3809 = vmul.f32 %v3553, %v3777
        %v3810 = vmul.f32 %v3554, %v3778
        %v3811 = vlaneseq
        %v3812 = vshrl.u32 %v3811, 7
        %v3813 = vsub.s32 0, %v3812
        %v3814 = vrot.slane %v3393, %v3813
        %v3815 = vmul.f32 %v3779, %v3814
        %v3816 = vmul.f32 %v3780, %v3814
        %v3817 = vmul.f32 %v3781, %v3814
        %v3818 = vmul.f32 %v3782, %v3814
        %v3819 = vmul.f32 %v3783, %v3814
        %v3820 = vmul.f32 %v3784, %v3814
        %v3821 = vmul.f32 %v3785, %v3814
        %v3822 = vmul.f32 %v3786, %v3814
        %v3823 = vmul.f32 %v3787, %v3814
        %v3824 = vmul.f32 %v3788, %v3814
        %v3825 = vmul.f32 %v3789, %v3814
        %v3826 = vmul.f32 %v3790, %v3814
        %v3827 = vmul.f32 %v3791, %v3814
        %v3828 = vmul.f32 %v3792, %v3814
        %v3829 = vmul.f32 %v3793, %v3814
        %v3830 = vmul.f32 %v3794, %v3814
        %v3831 = vmul.f32 %v3795, %v3814
        %v3832 = vmul.f32 %v3796, %v3814
        %v3833 = vmul.f32 %v3797, %v3814
        %v3834 = vmul.f32 %v3798, %v3814
        %v3835 = vmul.f32 %v3799, %v3814
        %v3836 = vmul.f32 %v3800, %v3814
        %v3837 = vmul.f32 %v3801, %v3814
        %v3838 = vmul.f32 %v3802, %v3814
        %v3839 = vmul.f32 %v3803, %v3814
        %v3840 = vmul.f32 %v3804, %v3814
        %v3841 = vmul.f32 %v3805, %v3814
        %v3842 = vmul.f32 %v3806, %v3814
        %v3843 = vmul.f32 %v3807, %v3814
        %v3844 = vmul.f32 %v3808, %v3814
        %v3845 = vmul.f32 %v3809, %v3814
        %v3846 = vmul.f32 %v3810, %v3814
        %v3847 = vlaneseq
        %v3848 = vshrl.u32 %v3847, 7
        %v3849 = vsub.s32 0, %v3848
        %v3850 = vrot.slane %v3394, %v3849
        %v3851 = vadd.f32 %v3815, %v3850
        %v3852 = vadd.f32 %v3816, %v3850
        %v3853 = vadd.f32 %v3817, %v3850
        %v3854 = vadd.f32 %v3818, %v3850
        %v3855 = vadd.f32 %v3819, %v3850
        %v3856 = vadd.f32 %v3820, %v3850
        %v3857 = vadd.f32 %v3821, %v3850
        %v3858 = vadd.f32 %v3822, %v3850
        %v3859 = vadd.f32 %v3823, %v3850
        %v3860 = vadd.f32 %v3824, %v3850
        %v3861 = vadd.f32 %v3825, %v3850
        %v3862 = vadd.f32 %v3826, %v3850
        %v3863 = vadd.f32 %v3827, %v3850
        %v3864 = vadd.f32 %v3828, %v3850
        %v3865 = vadd.f32 %v3829, %v3850
        %v3866 = vadd.f32 %v3830, %v3850
        %v3867 = vadd.f32 %v3831, %v3850
        %v3868 = vadd.f32 %v3832, %v3850
        %v3869 = vadd.f32 %v3833, %v3850
        %v3870 = vadd.f32 %v3834, %v3850
        %v3871 = vadd.f32 %v3835, %v3850
        %v3872 = vadd.f32 %v3836, %v3850
        %v3873 = vadd.f32 %v3837, %v3850
        %v3874 = vadd.f32 %v3838, %v3850
        %v3875 = vadd.f32 %v3839, %v3850
        %v3876 = vadd.f32 %v3840, %v3850
        %v3877 = vadd.f32 %v3841, %v3850
        %v3878 = vadd.f32 %v3842, %v3850
        %v3879 = vadd.f32 %v3843, %v3850
        %v3880 = vadd.f32 %v3844, %v3850
        %v3881 = vadd.f32 %v3845, %v3850
        %v3882 = vadd.f32 %v3846, %v3850
        %v3883 = vld [vmem:[%s7] sm:$0xff]
        %v3884 = vld [vmem:[%s7 + $0x8] sm:$0xff]
        %v3885 = vld [vmem:[%s7 + $0x10] sm:$0xff]
        %v3886 = vld [vmem:[%s7 + $0x18] sm:$0xff]
        %v3887 = vld [vmem:[%s7 + $0x20] sm:$0xff]
        %v3888 = vld [vmem:[%s7 + $0x28] sm:$0xff]
        %v3889 = vpack.c.bf16 %v3852, %v3851
        %v3890 = vpack.c.bf16 %v3854, %v3853
        %v3891 = vpack.c.bf16 %v3856, %v3855
        %v3892 = vpack.c.bf16 %v3858, %v3857
        %v3893 = vpack.c.bf16 %v3860, %v3859
        %v3894 = vpack.c.bf16 %v3862, %v3861
        %v3895 = vpack.c.bf16 %v3864, %v3863
        %v3896 = vpack.c.bf16 %v3866, %v3865
        %v3897 = vpack.c.bf16 %v3868, %v3867
        %v3898 = vpack.c.bf16 %v3870, %v3869
        %v3899 = vpack.c.bf16 %v3872, %v3871
        %v3900 = vpack.c.bf16 %v3874, %v3873
        %v3901 = vpack.c.bf16 %v3876, %v3875
        %v3902 = vpack.c.bf16 %v3878, %v3877
        %v3903 = vpack.c.bf16 %v3880, %v3879
        %v3904 = vpack.c.bf16 %v3882, %v3881
        %v3905 = vpack.c.bf16 %v3884, %v3883
        %v3906 = vpack.c.bf16 %v3886, %v3885
        %v3907 = vpack.c.bf16 %v3888, %v3887
        %v3908 = vld [vmem:[%s16 + $0x7] sm:$0x1]
        %v3909 = vlaneseq
        %v3910 = vshrl.u32 %v3909, 7
        %v3911 = vsub.s32 0, %v3910
        %v3912 = vrot.slane %v3908, %v3911
        %v3914 = vsel %vm1050, %v3889, 0
        %v3917 = vsel %vm1050, %v3890, 0
        %v3920 = vsel %vm1050, %v3891, 0
        %v3923 = vsel %vm1050, %v3892, 0
        %v3926 = vsel %vm1050, %v3893, 0
        %v3929 = vsel %vm1050, %v3894, 0
        %v3932 = vsel %vm1050, %v3895, 0
        %v3935 = vsel %vm1050, %v3896, 0
        %v3938 = vsel %vm1050, %v3897, 0
        %v3941 = vsel %vm1050, %v3898, 0
        %v3944 = vsel %vm1050, %v3899, 0
        %v3947 = vsel %vm1050, %v3900, 0
        %v3950 = vsel %vm1050, %v3901, 0
        %v3953 = vsel %vm1050, %v3902, 0
        %v3956 = vsel %vm1050, %v3903, 0
        %v3959 = vsel %vm1050, %v3904, 0
        %3961 = vmatprep.subr.bf16.mxu0 0
        %3962 = vmatpush1.bf16.msra.mxu0 %v3905
        %3963 = vmatprep.subr.bf16.mxu0 0
        %3964 = vmatpush1.bf16.msra.mxu0 %v3906
        %3965 = vmatprep.subr.bf16.mxu0 0
        %3966 = vmatpush1.bf16.msra.mxu0 %v3907
        %3967 = vmatprep.subr.bf16.mxu0 0
        %3968 = vmatpush1.bf16.msra.mxu0 0
        %3969 = vmatprep.subr.bf16.mxu0 0
        %3970 = vmatpush1.bf16.msra.mxu0 0
        %3971 = vmatprep.subr.bf16.mxu0 0
        %3972 = vmatpush1.bf16.msra.mxu0 0
        %3973 = vmatprep.subr.bf16.mxu0 0
        %3974 = vmatpush1.bf16.msra.mxu0 0
        %3975 = vmatprep.subr.bf16.mxu0 0
        %3976 = vmatpush1.bf16.msra.mxu0 0
        %3977 = vmatprep.subr.bf16.mxu0 0
        %3978 = vmatpush1.bf16.msra.mxu0 0
        %3979 = vmatprep.subr.bf16.mxu0 0
        %3980 = vmatpush1.bf16.msra.mxu0 0
        %3981 = vmatprep.subr.bf16.mxu0 0
        %3982 = vmatpush1.bf16.msra.mxu0 0
        %3983 = vmatprep.subr.bf16.mxu0 0
        %3984 = vmatpush1.bf16.msra.mxu0 0
        %3985 = vmatprep.subr.bf16.mxu0 0
        %3986 = vmatpush1.bf16.msra.mxu0 0
        %3987 = vmatprep.subr.bf16.mxu0 0
        %3988 = vmatpush1.bf16.msra.mxu0 0
        %3989 = vmatprep.subr.bf16.mxu0 0
        %3990 = vmatpush1.bf16.msra.mxu0 0
        %3991 = vmatprep.subr.bf16.mxu0 0
        %3992 = vmatpush1.bf16.msra.mxu0 0
        %3993 = vmatprep.mubr.bf16.mxu0 0
        %3994 = vmatmul.mubr.bf16.gmra.mrb[0].mxu0 %v3914
        %v3995 = vpop.f32.mrb[0].mxu0
        %v3996 = vadd.f32 %v3912, %v3995
        %v3997 = vpop.f32.mrb[0].mxu0
        %v3998 = vpop.f32.mrb[0].mxu0
        %v3999 = vadd.f32 %v3912, %v3998
        %v4000 = vpop.f32.mrb[0].mxu0
        %4001 = vmatprep.mubr.bf16.mxu0 0
        %4002 = vmatmul.mubr.bf16.gmra.mrb[0].mxu0 %v3917
        %v4003 = vpop.f32.mrb[0].mxu0
        %v4004 = vadd.f32 %v3912, %v4003
        %v4005 = vpop.f32.mrb[0].mxu0
        %v4006 = vpop.f32.mrb[0].mxu0
        %v4007 = vadd.f32 %v3912, %v4006
        %v4008 = vpop.f32.mrb[0].mxu0
        %4009 = vmatprep.mubr.bf16.mxu0 0
        %4010 = vmatmul.mubr.bf16.gmra.mrb[0].mxu0 %v3920
        %v4011 = vpop.f32.mrb[0].mxu0
        %v4012 = vadd.f32 %v3912, %v4011
        %v4013 = vpop.f32.mrb[0].mxu0
        %v4014 = vpop.f32.mrb[0].mxu0
        %v4015 = vadd.f32 %v3912, %v4014
        %v4016 = vpop.f32.mrb[0].mxu0
        %4017 = vmatprep.mubr.bf16.mxu0 0
        %4018 = vmatmul.mubr.bf16.gmra.mrb[0].mxu0 %v3923
        %v4019 = vpop.f32.mrb[0].mxu0
        %v4020 = vadd.f32 %v3912, %v4019
        %v4021 = vpop.f32.mrb[0].mxu0
        %v4022 = vpop.f32.mrb[0].mxu0
        %v4023 = vadd.f32 %v3912, %v4022
        %v4024 = vpop.f32.mrb[0].mxu0
        %4025 = vmatprep.mubr.bf16.mxu0 0
        %4026 = vmatmul.mubr.bf16.gmra.mrb[0].mxu0 %v3926
        %v4027 = vpop.f32.mrb[0].mxu0
        %v4028 = vadd.f32 %v3912, %v4027
        %v4029 = vpop.f32.mrb[0].mxu0
        %v4030 = vpop.f32.mrb[0].mxu0
        %v4031 = vadd.f32 %v3912, %v4030
        %v4032 = vpop.f32.mrb[0].mxu0
        %4033 = vmatprep.mubr.bf16.mxu0 0
        %4034 = vmatmul.mubr.bf16.gmra.mrb[0].mxu0 %v3929
        %v4035 = vpop.f32.mrb[0].mxu0
        %v4036 = vadd.f32 %v3912, %v4035
        %v4037 = vpop.f32.mrb[0].mxu0
        %v4038 = vpop.f32.mrb[0].mxu0
        %v4039 = vadd.f32 %v3912, %v4038
        %v4040 = vpop.f32.mrb[0].mxu0
        %4041 = vmatprep.mubr.bf16.mxu0 0
        %4042 = vmatmul.mubr.bf16.gmra.mrb[0].mxu0 %v3932
        %v4043 = vpop.f32.mrb[0].mxu0
        %v4044 = vadd.f32 %v3912, %v4043
        %v4045 = vpop.f32.mrb[0].mxu0
        %v4046 = vpop.f32.mrb[0].mxu0
        %v4047 = vadd.f32 %v3912, %v4046
        %v4048 = vpop.f32.mrb[0].mxu0
        %4049 = vmatprep.mubr.bf16.mxu0 0
        %4050 = vmatmul.mubr.bf16.gmra.mrb[0].mxu0 %v3935
        %v4051 = vpop.f32.mrb[0].mxu0
        %v4052 = vadd.f32 %v3912, %v4051
        %v4053 = vpop.f32.mrb[0].mxu0
        %v4054 = vpop.f32.mrb[0].mxu0
        %v4055 = vadd.f32 %v3912, %v4054
        %v4056 = vpop.f32.mrb[0].mxu0
        %4057 = vmatprep.mubr.bf16.mxu0 0
        %4058 = vmatmul.mubr.bf16.gmra.mrb[0].mxu0 %v3938
        %v4059 = vpop.f32.mrb[0].mxu0
        %v4060 = vadd.f32 %v3912, %v4059
        %v4061 = vpop.f32.mrb[0].mxu0
        %v4062 = vpop.f32.mrb[0].mxu0
        %v4063 = vadd.f32 %v3912, %v4062
        %v4064 = vpop.f32.mrb[0].mxu0
        %4065 = vmatprep.mubr.bf16.mxu0 0
        %4066 = vmatmul.mubr.bf16.gmra.mrb[0].mxu0 %v3941
        %v4067 = vpop.f32.mrb[0].mxu0
        %v4068 = vadd.f32 %v3912, %v4067
        %v4069 = vpop.f32.mrb[0].mxu0
        %v4070 = vpop.f32.mrb[0].mxu0
        %v4071 = vadd.f32 %v3912, %v4070
        %v4072 = vpop.f32.mrb[0].mxu0
        %4073 = vmatprep.mubr.bf16.mxu0 0
        %4074 = vmatmul.mubr.bf16.gmra.mrb[0].mxu0 %v3944
        %v4075 = vpop.f32.mrb[0].mxu0
        %v4076 = vadd.f32 %v3912, %v4075
        %v4077 = vpop.f32.mrb[0].mxu0
        %v4078 = vpop.f32.mrb[0].mxu0
        %v4079 = vadd.f32 %v3912, %v4078
        %v4080 = vpop.f32.mrb[0].mxu0
        %4081 = vmatprep.mubr.bf16.mxu0 0
        %4082 = vmatmul.mubr.bf16.gmra.mrb[0].mxu0 %v3947
        %v4083 = vpop.f32.mrb[0].mxu0
        %v4084 = vadd.f32 %v3912, %v4083
        %v4085 = vpop.f32.mrb[0].mxu0
        %v4086 = vpop.f32.mrb[0].mxu0
        %v4087 = vadd.f32 %v3912, %v4086
        %v4088 = vpop.f32.mrb[0].mxu0
        %4089 = vmatprep.mubr.bf16.mxu0 0
        %4090 = vmatmul.mubr.bf16.gmra.mrb[0].mxu0 %v3950
        %v4091 = vpop.f32.mrb[0].mxu0
        %v4092 = vadd.f32 %v3912, %v4091
        %v4093 = vpop.f32.mrb[0].mxu0
        %v4094 = vpop.f32.mrb[0].mxu0
        %v4095 = vadd.f32 %v3912, %v4094
        %v4096 = vpop.f32.mrb[0].mxu0
        %4097 = vmatprep.mubr.bf16.mxu0 0
        %4098 = vmatmul.mubr.bf16.gmra.mrb[0].mxu0 %v3953
        %v4099 = vpop.f32.mrb[0].mxu0
        %v4100 = vadd.f32 %v3912, %v4099
        %v4101 = vpop.f32.mrb[0].mxu0
        %v4102 = vpop.f32.mrb[0].mxu0
        %v4103 = vadd.f32 %v3912, %v4102
        %v4104 = vpop.f32.mrb[0].mxu0
        %4105 = vmatprep.mubr.bf16.mxu0 0
        %4106 = vmatmul.mubr.bf16.gmra.mrb[0].mxu0 %v3956
        %v4107 = vpop.f32.mrb[0].mxu0
        %v4108 = vadd.f32 %v3912, %v4107
        %v4109 = vpop.f32.mrb[0].mxu0
        %v4110 = vpop.f32.mrb[0].mxu0
        %v4111 = vadd.f32 %v3912, %v4110
        %v4112 = vpop.f32.mrb[0].mxu0
        %4113 = vmatprep.mubr.bf16.mxu0 0
        %4114 = vmatmul.mubr.bf16.gmra.mrb[0].mxu0 %v3959
        %v4115 = vpop.f32.mrb[0].mxu0
        %v4116 = vadd.f32 %v3912, %v4115
        %v4117 = vpop.f32.mrb[0].mxu0
        %v4118 = vpop.f32.mrb[0].mxu0
        %v4119 = vadd.f32 %v3912, %v4118
        %v4120 = vpop.f32.mrb[0].mxu0
        %4121 = vdwg.mxu0
        %v4122 = vmul.f32 %v3996, 0.5
        %v4123 = vmul.f32 %v3999, 0.5
        %v4124 = vmul.f32 %v4004, 0.5
        %v4125 = vmul.f32 %v4007, 0.5
        %v4126 = vmul.f32 %v4012, 0.5
        %v4127 = vmul.f32 %v4015, 0.5
        %v4128 = vmul.f32 %v4020, 0.5
        %v4129 = vmul.f32 %v4023, 0.5
        %v4130 = vmul.f32 %v4028, 0.5
        %v4131 = vmul.f32 %v4031, 0.5
        %v4132 = vmul.f32 %v4036, 0.5
        %v4133 = vmul.f32 %v4039, 0.5
        %v4134 = vmul.f32 %v4044, 0.5
        %v4135 = vmul.f32 %v4047, 0.5
        %v4136 = vmul.f32 %v4052, 0.5
        %v4137 = vmul.f32 %v4055, 0.5
        %v4138 = vmul.f32 %v4060, 0.5
        %v4139 = vmul.f32 %v4063, 0.5
        %v4140 = vmul.f32 %v4068, 0.5
        %v4141 = vmul.f32 %v4071, 0.5
        %v4142 = vmul.f32 %v4076, 0.5
        %v4143 = vmul.f32 %v4079, 0.5
        %v4144 = vmul.f32 %v4084, 0.5
        %v4145 = vmul.f32 %v4087, 0.5
        %v4146 = vmul.f32 %v4092, 0.5
        %v4147 = vmul.f32 %v4095, 0.5
        %v4148 = vmul.f32 %v4100, 0.5
        %v4149 = vmul.f32 %v4103, 0.5
        %v4150 = vmul.f32 %v4108, 0.5
        %v4151 = vmul.f32 %v4111, 0.5
        %v4152 = vmul.f32 %v4116, 0.5
        %v4153 = vmul.f32 %v4119, 0.5
        %v4154 = vmul.f32 %v3996, 0.044715
        %v4155 = vmul.f32 %v3999, 0.044715
        %v4156 = vmul.f32 %v4004, 0.044715
        %v4157 = vmul.f32 %v4007, 0.044715
        %v4158 = vmul.f32 %v4012, 0.044715
        %v4159 = vmul.f32 %v4015, 0.044715
        %v4160 = vmul.f32 %v4020, 0.044715
        %v4161 = vmul.f32 %v4023, 0.044715
        %v4162 = vmul.f32 %v4028, 0.044715
        %v4163 = vmul.f32 %v4031, 0.044715
        %v4164 = vmul.f32 %v4036, 0.044715
        %v4165 = vmul.f32 %v4039, 0.044715
        %v4166 = vmul.f32 %v4044, 0.044715
        %v4167 = vmul.f32 %v4047, 0.044715
        %v4168 = vmul.f32 %v4052, 0.044715
        %v4169 = vmul.f32 %v4055, 0.044715
        %v4170 = vmul.f32 %v4060, 0.044715
        %v4171 = vmul.f32 %v4063, 0.044715
        %v4172 = vmul.f32 %v4068, 0.044715
        %v4173 = vmul.f32 %v4071, 0.044715
        %v4174 = vmul.f32 %v4076, 0.044715
        %v4175 = vmul.f32 %v4079, 0.044715
        %v4176 = vmul.f32 %v4084, 0.044715
        %v4177 = vmul.f32 %v4087, 0.044715
        %v4178 = vmul.f32 %v4092, 0.044715
        %v4179 = vmul.f32 %v4095, 0.044715
        %v4180 = vmul.f32 %v4100, 0.044715
        %v4181 = vmul.f32 %v4103, 0.044715
        %v4182 = vmul.f32 %v4108, 0.044715
        %v4183 = vmul.f32 %v4111, 0.044715
        %v4184 = vmul.f32 %v4116, 0.044715
        %v4185 = vmul.f32 %v4119, 0.044715
        %v4186 = vmul.f32 %v4154, %v3996
        %v4187 = vmul.f32 %v4155, %v3999
        %v4188 = vmul.f32 %v4156, %v4004
        %v4189 = vmul.f32 %v4157, %v4007
        %v4190 = vmul.f32 %v4158, %v4012
        %v4191 = vmul.f32 %v4159, %v4015
        %v4192 = vmul.f32 %v4160, %v4020
        %v4193 = vmul.f32 %v4161, %v4023
        %v4194 = vmul.f32 %v4162, %v4028
        %v4195 = vmul.f32 %v4163, %v4031
        %v4196 = vmul.f32 %v4164, %v4036
        %v4197 = vmul.f32 %v4165, %v4039
        %v4198 = vmul.f32 %v4166, %v4044
        %v4199 = vmul.f32 %v4167, %v4047
        %v4200 = vmul.f32 %v4168, %v4052
        %v4201 = vmul.f32 %v4169, %v4055
        %v4202 = vmul.f32 %v4170, %v4060
        %v4203 = vmul.f32 %v4171, %v4063
        %v4204 = vmul.f32 %v4172, %v4068
        %v4205 = vmul.f32 %v4173, %v4071
        %v4206 = vmul.f32 %v4174, %v4076
        %v4207 = vmul.f32 %v4175, %v4079
        %v4208 = vmul.f32 %v4176, %v4084
        %v4209 = vmul.f32 %v4177, %v4087
        %v4210 = vmul.f32 %v4178, %v4092
        %v4211 = vmul.f32 %v4179, %v4095
        %v4212 = vmul.f32 %v4180, %v4100
        %v4213 = vmul.f32 %v4181, %v4103
        %v4214 = vmul.f32 %v4182, %v4108
        %v4215 = vmul.f32 %v4183, %v4111
        %v4216 = vmul.f32 %v4184, %v4116
        %v4217 = vmul.f32 %v4185, %v4119
        %v4218 = vmul.f32 %v4186, %v3996
        %v4219 = vmul.f32 %v4187, %v3999
        %v4220 = vmul.f32 %v4188, %v4004
        %v4221 = vmul.f32 %v4189, %v4007
        %v4222 = vmul.f32 %v4190, %v4012
        %v4223 = vmul.f32 %v4191, %v4015
        %v4224 = vmul.f32 %v4192, %v4020
        %v4225 = vmul.f32 %v4193, %v4023
        %v4226 = vmul.f32 %v4194, %v4028
        %v4227 = vmul.f32 %v4195, %v4031
        %v4228 = vmul.f32 %v4196, %v4036
        %v4229 = vmul.f32 %v4197, %v4039
        %v4230 = vmul.f32 %v4198, %v4044
        %v4231 = vmul.f32 %v4199, %v4047
        %v4232 = vmul.f32 %v4200, %v4052
        %v4233 = vmul.f32 %v4201, %v4055
        %v4234 = vmul.f32 %v4202, %v4060
        %v4235 = vmul.f32 %v4203, %v4063
        %v4236 = vmul.f32 %v4204, %v4068
        %v4237 = vmul.f32 %v4205, %v4071
        %v4238 = vmul.f32 %v4206, %v4076
        %v4239 = vmul.f32 %v4207, %v4079
        %v4240 = vmul.f32 %v4208, %v4084
        %v4241 = vmul.f32 %v4209, %v4087
        %v4242 = vmul.f32 %v4210, %v4092
        %v4243 = vmul.f32 %v4211, %v4095
        %v4244 = vmul.f32 %v4212, %v4100
        %v4245 = vmul.f32 %v4213, %v4103
        %v4246 = vmul.f32 %v4214, %v4108
        %v4247 = vmul.f32 %v4215, %v4111
        %v4248 = vmul.f32 %v4216, %v4116
        %v4249 = vmul.f32 %v4217, %v4119
        %v4250 = vadd.f32 %v3996, %v4218
        %v4251 = vadd.f32 %v3999, %v4219
        %v4252 = vadd.f32 %v4004, %v4220
        %v4253 = vadd.f32 %v4007, %v4221
        %v4254 = vadd.f32 %v4012, %v4222
        %v4255 = vadd.f32 %v4015, %v4223
        %v4256 = vadd.f32 %v4020, %v4224
        %v4257 = vadd.f32 %v4023, %v4225
        %v4258 = vadd.f32 %v4028, %v4226
        %v4259 = vadd.f32 %v4031, %v4227
        %v4260 = vadd.f32 %v4036, %v4228
        %v4261 = vadd.f32 %v4039, %v4229
        %v4262 = vadd.f32 %v4044, %v4230
        %v4263 = vadd.f32 %v4047, %v4231
        %v4264 = vadd.f32 %v4052, %v4232
        %v4265 = vadd.f32 %v4055, %v4233
        %v4266 = vadd.f32 %v4060, %v4234
        %v4267 = vadd.f32 %v4063, %v4235
        %v4268 = vadd.f32 %v4068, %v4236
        %v4269 = vadd.f32 %v4071, %v4237
        %v4270 = vadd.f32 %v4076, %v4238
        %v4271 = vadd.f32 %v4079, %v4239
        %v4272 = vadd.f32 %v4084, %v4240
        %v4273 = vadd.f32 %v4087, %v4241
        %v4274 = vadd.f32 %v4092, %v4242
        %v4275 = vadd.f32 %v4095, %v4243
        %v4276 = vadd.f32 %v4100, %v4244
        %v4277 = vadd.f32 %v4103, %v4245
        %v4278 = vadd.f32 %v4108, %v4246
        %v4279 = vadd.f32 %v4111, %v4247
        %v4280 = vadd.f32 %v4116, %v4248
        %v4281 = vadd.f32 %v4119, %v4249
        %v4282 = vmul.f32 %v4250, 0.7978846
        %v4283 = vmul.f32 %v4251, 0.7978846
        %v4284 = vmul.f32 %v4252, 0.7978846
        %v4285 = vmul.f32 %v4253, 0.7978846
        %v4286 = vmul.f32 %v4254, 0.7978846
        %v4287 = vmul.f32 %v4255, 0.7978846
        %v4288 = vmul.f32 %v4256, 0.7978846
        %v4289 = vmul.f32 %v4257, 0.7978846
        %v4290 = vmul.f32 %v4258, 0.7978846
        %v4291 = vmul.f32 %v4259, 0.7978846
        %v4292 = vmul.f32 %v4260, 0.7978846
        %v4293 = vmul.f32 %v4261, 0.7978846
        %v4294 = vmul.f32 %v4262, 0.7978846
        %v4295 = vmul.f32 %v4263, 0.7978846
        %v4296 = vmul.f32 %v4264, 0.7978846
        %v4297 = vmul.f32 %v4265, 0.7978846
        %v4298 = vmul.f32 %v4266, 0.7978846
        %v4299 = vmul.f32 %v4267, 0.7978846
        %v4300 = vmul.f32 %v4268, 0.7978846
        %v4301 = vmul.f32 %v4269, 0.7978846
        %v4302 = vmul.f32 %v4270, 0.7978846
        %v4303 = vmul.f32 %v4271, 0.7978846
        %v4304 = vmul.f32 %v4272, 0.7978846
        %v4305 = vmul.f32 %v4273, 0.7978846
        %v4306 = vmul.f32 %v4274, 0.7978846
        %v4307 = vmul.f32 %v4275, 0.7978846
        %v4308 = vmul.f32 %v4276, 0.7978846
        %v4309 = vmul.f32 %v4277, 0.7978846
        %v4310 = vmul.f32 %v4278, 0.7978846
        %v4311 = vmul.f32 %v4279, 0.7978846
        %v4312 = vmul.f32 %v4280, 0.7978846
        %v4313 = vmul.f32 %v4281, 0.7978846
        %v4314 = vtanh.pop %v4282
        %v4315 = vtanh.pop %v4283
        %v4316 = vtanh.pop %v4284
        %v4317 = vtanh.pop %v4285
        %v4318 = vtanh.pop %v4286
        %v4319 = vtanh.pop %v4287
        %v4320 = vtanh.pop %v4288
        %v4321 = vtanh.pop %v4289
        %v4322 = vtanh.pop %v4290
        %v4323 = vtanh.pop %v4291
        %v4324 = vtanh.pop %v4292
        %v4325 = vtanh.pop %v4293
        %v4326 = vtanh.pop %v4294
        %v4327 = vtanh.pop %v4295
        %v4328 = vtanh.pop %v4296
        %v4329 = vtanh.pop %v4297
        %v4330 = vtanh.pop %v4298
        %v4331 = vtanh.pop %v4299
        %v4332 = vtanh.pop %v4300
        %v4333 = vtanh.pop %v4301
        %v4334 = vtanh.pop %v4302
        %v4335 = vtanh.pop %v4303
        %v4336 = vtanh.pop %v4304
        %v4337 = vtanh.pop %v4305
        %v4338 = vtanh.pop %v4306
        %v4339 = vtanh.pop %v4307
        %v4340 = vtanh.pop %v4308
        %v4341 = vtanh.pop %v4309
        %v4342 = vtanh.pop %v4310
        %v4343 = vtanh.pop %v4311
        %v4344 = vtanh.pop %v4312
        %v4345 = vtanh.pop %v4313
        %v4346 = vadd.f32 %v4314, 1.0
        %v4347 = vadd.f32 %v4315, 1.0
        %v4348 = vadd.f32 %v4316, 1.0
        %v4349 = vadd.f32 %v4317, 1.0
        %v4350 = vadd.f32 %v4318, 1.0
        %v4351 = vadd.f32 %v4319, 1.0
        %v4352 = vadd.f32 %v4320, 1.0
        %v4353 = vadd.f32 %v4321, 1.0
        %v4354 = vadd.f32 %v4322, 1.0
        %v4355 = vadd.f32 %v4323, 1.0
        %v4356 = vadd.f32 %v4324, 1.0
        %v4357 = vadd.f32 %v4325, 1.0
        %v4358 = vadd.f32 %v4326, 1.0
        %v4359 = vadd.f32 %v4327, 1.0
        %v4360 = vadd.f32 %v4328, 1.0
        %v4361 = vadd.f32 %v4329, 1.0
        %v4362 = vadd.f32 %v4330, 1.0
        %v4363 = vadd.f32 %v4331, 1.0
        %v4364 = vadd.f32 %v4332, 1.0
        %v4365 = vadd.f32 %v4333, 1.0
        %v4366 = vadd.f32 %v4334, 1.0
        %v4367 = vadd.f32 %v4335, 1.0
        %v4368 = vadd.f32 %v4336, 1.0
        %v4369 = vadd.f32 %v4337, 1.0
        %v4370 = vadd.f32 %v4338, 1.0
        %v4371 = vadd.f32 %v4339, 1.0
        %v4372 = vadd.f32 %v4340, 1.0
        %v4373 = vadd.f32 %v4341, 1.0
        %v4374 = vadd.f32 %v4342, 1.0
        %v4375 = vadd.f32 %v4343, 1.0
        %v4376 = vadd.f32 %v4344, 1.0
        %v4377 = vadd.f32 %v4345, 1.0
        %v4378 = vmul.f32 %v4122, %v4346
        %v4379 = vmul.f32 %v4123, %v4347
        %v4380 = vmul.f32 %v4124, %v4348
        %v4381 = vmul.f32 %v4125, %v4349
        %v4382 = vmul.f32 %v4126, %v4350
        %v4383 = vmul.f32 %v4127, %v4351
        %v4384 = vmul.f32 %v4128, %v4352
        %v4385 = vmul.f32 %v4129, %v4353
        %v4386 = vmul.f32 %v4130, %v4354
        %v4387 = vmul.f32 %v4131, %v4355
        %v4388 = vmul.f32 %v4132, %v4356
        %v4389 = vmul.f32 %v4133, %v4357
        %v4390 = vmul.f32 %v4134, %v4358
        %v4391 = vmul.f32 %v4135, %v4359
        %v4392 = vmul.f32 %v4136, %v4360
        %v4393 = vmul.f32 %v4137, %v4361
        %v4394 = vmul.f32 %v4138, %v4362
        %v4395 = vmul.f32 %v4139, %v4363
        %v4396 = vmul.f32 %v4140, %v4364
        %v4397 = vmul.f32 %v4141, %v4365
        %v4398 = vmul.f32 %v4142, %v4366
        %v4399 = vmul.f32 %v4143, %v4367
        %v4400 = vmul.f32 %v4144, %v4368
        %v4401 = vmul.f32 %v4145, %v4369
        %v4402 = vmul.f32 %v4146, %v4370
        %v4403 = vmul.f32 %v4147, %v4371
        %v4404 = vmul.f32 %v4148, %v4372
        %v4405 = vmul.f32 %v4149, %v4373
        %v4406 = vmul.f32 %v4150, %v4374
        %v4407 = vmul.f32 %v4151, %v4375
        %v4408 = vmul.f32 %v4152, %v4376
        %v4409 = vmul.f32 %v4153, %v4377
        %v4410 = vld [vmem:[%s8] sm:$0xff]
        %v4411 = vld [vmem:[%s8 + $0x8] sm:$0xff]
        %v4412 = vld [vmem:[%s8 + $0x10] sm:$0xff]
        %v4413 = vld [vmem:[%s8 + $0x18] sm:$0xff]
        %v4414 = vld [vmem:[%s8 + $0x20] sm:$0xff]
        %v4415 = vld [vmem:[%s8 + $0x28] sm:$0xff]
        %v4416 = vld [vmem:[%s8 + $0x30] sm:$0xff]
        %v4417 = vld [vmem:[%s8 + $0x38] sm:$0xff]
        %v4418 = vld [vmem:[%s8 + $0x40] sm:$0xff]
        %v4419 = vld [vmem:[%s8 + $0x48] sm:$0xff]
        %v4420 = vld [vmem:[%s8 + $0x50] sm:$0xff]
        %v4421 = vld [vmem:[%s8 + $0x58] sm:$0xff]
        %v4422 = vpack.c.bf16 %v4379, %v4378
        %v4423 = vpack.c.bf16 %v4381, %v4380
        %v4424 = vpack.c.bf16 %v4383, %v4382
        %v4425 = vpack.c.bf16 %v4385, %v4384
        %v4426 = vpack.c.bf16 %v4387, %v4386
        %v4427 = vpack.c.bf16 %v4389, %v4388
        %v4428 = vpack.c.bf16 %v4391, %v4390
        %v4429 = vpack.c.bf16 %v4393, %v4392
        %v4430 = vpack.c.bf16 %v4395, %v4394
        %v4431 = vpack.c.bf16 %v4397, %v4396
        %v4432 = vpack.c.bf16 %v4399, %v4398
        %v4433 = vpack.c.bf16 %v4401, %v4400
        %v4434 = vpack.c.bf16 %v4403, %v4402
        %v4435 = vpack.c.bf16 %v4405, %v4404
        %v4436 = vpack.c.bf16 %v4407, %v4406
        %v4437 = vpack.c.bf16 %v4409, %v4408
        %v4438 = vpack.c.bf16 %v4411, %v4410
        %v4439 = vpack.c.bf16 %v4413, %v4412
        %v4440 = vpack.c.bf16 %v4415, %v4414
        %v4441 = vpack.c.bf16 %v4417, %v4416
        %v4442 = vpack.c.bf16 %v4419, %v4418
        %v4443 = vpack.c.bf16 %v4421, %v4420
        %vm4444 = vcmask 785408
        %v4446 = vsel %vm4444, %v4422, 0
        %v4449 = vsel %vm4444, %v4423, 0
        %v4452 = vsel %vm4444, %v4424, 0
        %v4455 = vsel %vm4444, %v4425, 0
        %v4458 = vsel %vm4444, %v4426, 0
        %v4461 = vsel %vm4444, %v4427, 0
        %v4464 = vsel %vm4444, %v4428, 0
        %v4467 = vsel %vm4444, %v4429, 0
        %v4470 = vsel %vm4444, %v4430, 0
        %v4473 = vsel %vm4444, %v4431, 0
        %v4476 = vsel %vm4444, %v4432, 0
        %v4479 = vsel %vm4444, %v4433, 0
        %v4482 = vsel %vm4444, %v4434, 0
        %v4485 = vsel %vm4444, %v4435, 0
        %v4488 = vsel %vm4444, %v4436, 0
        %v4491 = vsel %vm4444, %v4437, 0
        %4493 = vmatprep.subr.bf16.mxu0 0
        %4494 = vmatpush1.bf16.msra.mxu0 %v4438
        %4495 = vmatprep.subr.bf16.mxu0 0
        %4496 = vmatpush1.bf16.msra.mxu0 %v4439
        %4497 = vmatprep.subr.bf16.mxu0 0
        %4498 = vmatpush1.bf16.msra.mxu0 %v4440
        %4499 = vmatprep.subr.bf16.mxu0 0
        %4500 = vmatpush1.bf16.msra.mxu0 %v4441
        %4501 = vmatprep.subr.bf16.mxu0 0
        %4502 = vmatpush1.bf16.msra.mxu0 %v4442
        %4503 = vmatprep.subr.bf16.mxu0 0
        %4504 = vmatpush1.bf16.msra.mxu0 %v4443
        %4505 = vmatprep.subr.bf16.mxu0 0
        %4506 = vmatpush1.bf16.msra.mxu0 0
        %4507 = vmatprep.subr.bf16.mxu0 0
        %4508 = vmatpush1.bf16.msra.mxu0 0
        %4509 = vmatprep.subr.bf16.mxu0 0
        %4510 = vmatpush1.bf16.msra.mxu0 0
        %4511 = vmatprep.subr.bf16.mxu0 0
        %4512 = vmatpush1.bf16.msra.mxu0 0
        %4513 = vmatprep.subr.bf16.mxu0 0
        %4514 = vmatpush1.bf16.msra.mxu0 0
        %4515 = vmatprep.subr.bf16.mxu0 0
        %4516 = vmatpush1.bf16.msra.mxu0 0
        %4517 = vmatprep.subr.bf16.mxu0 0
        %4518 = vmatpush1.bf16.msra.mxu0 0
        %4519 = vmatprep.subr.bf16.mxu0 0
        %4520 = vmatpush1.bf16.msra.mxu0 0
        %4521 = vmatprep.subr.bf16.mxu0 0
        %4522 = vmatpush1.bf16.msra.mxu0 0
        %4523 = vmatprep.subr.bf16.mxu0 0
        %4524 = vmatpush1.bf16.msra.mxu0 0
        %4525 = vmatprep.mubr.bf16.mxu0 0
        %4526 = vmatmul.mubr.bf16.gmra.mrb[0].mxu0 %v4446
        %v4527 = vpop.f32.mrb[0].mxu0
        %v4528 = vadd.f32 0.0, %v4527
        %v4529 = vpop.f32.mrb[0].mxu0
        %v4530 = vpop.f32.mrb[0].mxu0
        %v4531 = vadd.f32 0.0, %v4530
        %v4532 = vpop.f32.mrb[0].mxu0
        %4533 = vmatprep.mubr.bf16.mxu0 0
        %4534 = vmatmul.mubr.bf16.gmra.mrb[0].mxu0 %v4449
        %v4535 = vpop.f32.mrb[0].mxu0
        %v4536 = vadd.f32 0.0, %v4535
        %v4537 = vpop.f32.mrb[0].mxu0
        %v4538 = vpop.f32.mrb[0].mxu0
        %v4539 = vadd.f32 0.0, %v4538
        %v4540 = vpop.f32.mrb[0].mxu0
        %4541 = vmatprep.mubr.bf16.mxu0 0
        %4542 = vmatmul.mubr.bf16.gmra.mrb[0].mxu0 %v4452
        %v4543 = vpop.f32.mrb[0].mxu0
        %v4544 = vadd.f32 0.0, %v4543
        %v4545 = vpop.f32.mrb[0].mxu0
        %v4546 = vpop.f32.mrb[0].mxu0
        %v4547 = vadd.f32 0.0, %v4546
        %v4548 = vpop.f32.mrb[0].mxu0
        %4549 = vmatprep.mubr.bf16.mxu0 0
        %4550 = vmatmul.mubr.bf16.gmra.mrb[0].mxu0 %v4455
        %v4551 = vpop.f32.mrb[0].mxu0
        %v4552 = vadd.f32 0.0, %v4551
        %v4553 = vpop.f32.mrb[0].mxu0
        %v4554 = vpop.f32.mrb[0].mxu0
        %v4555 = vadd.f32 0.0, %v4554
        %v4556 = vpop.f32.mrb[0].mxu0
        %4557 = vmatprep.mubr.bf16.mxu0 0
        %4558 = vmatmul.mubr.bf16.gmra.mrb[0].mxu0 %v4458
        %v4559 = vpop.f32.mrb[0].mxu0
        %v4560 = vadd.f32 0.0, %v4559
        %v4561 = vpop.f32.mrb[0].mxu0
        %v4562 = vpop.f32.mrb[0].mxu0
        %v4563 = vadd.f32 0.0, %v4562
        %v4564 = vpop.f32.mrb[0].mxu0
        %4565 = vmatprep.mubr.bf16.mxu0 0
        %4566 = vmatmul.mubr.bf16.gmra.mrb[0].mxu0 %v4461
        %v4567 = vpop.f32.mrb[0].mxu0
        %v4568 = vadd.f32 0.0, %v4567
        %v4569 = vpop.f32.mrb[0].mxu0
        %v4570 = vpop.f32.mrb[0].mxu0
        %v4571 = vadd.f32 0.0, %v4570
        %v4572 = vpop.f32.mrb[0].mxu0
        %4573 = vmatprep.mubr.bf16.mxu0 0
        %4574 = vmatmul.mubr.bf16.gmra.mrb[0].mxu0 %v4464
        %v4575 = vpop.f32.mrb[0].mxu0
        %v4576 = vadd.f32 0.0, %v4575
        %v4577 = vpop.f32.mrb[0].mxu0
        %v4578 = vpop.f32.mrb[0].mxu0
        %v4579 = vadd.f32 0.0, %v4578
        %v4580 = vpop.f32.mrb[0].mxu0
        %4581 = vmatprep.mubr.bf16.mxu0 0
        %4582 = vmatmul.mubr.bf16.gmra.mrb[0].mxu0 %v4467
        %v4583 = vpop.f32.mrb[0].mxu0
        %v4584 = vadd.f32 0.0, %v4583
        %v4585 = vpop.f32.mrb[0].mxu0
        %v4586 = vpop.f32.mrb[0].mxu0
        %v4587 = vadd.f32 0.0, %v4586
        %v4588 = vpop.f32.mrb[0].mxu0
        %4589 = vmatprep.mubr.bf16.mxu0 0
        %4590 = vmatmul.mubr.bf16.gmra.mrb[0].mxu0 %v4470
        %v4591 = vpop.f32.mrb[0].mxu0
        %v4592 = vadd.f32 0.0, %v4591
        %v4593 = vpop.f32.mrb[0].mxu0
        %v4594 = vpop.f32.mrb[0].mxu0
        %v4595 = vadd.f32 0.0, %v4594
        %v4596 = vpop.f32.mrb[0].mxu0
        %4597 = vmatprep.mubr.bf16.mxu0 0
        %4598 = vmatmul.mubr.bf16.gmra.mrb[0].mxu0 %v4473
        %v4599 = vpop.f32.mrb[0].mxu0
        %v4600 = vadd.f32 0.0, %v4599
        %v4601 = vpop.f32.mrb[0].mxu0
        %v4602 = vpop.f32.mrb[0].mxu0
        %v4603 = vadd.f32 0.0, %v4602
        %v4604 = vpop.f32.mrb[0].mxu0
        %4605 = vmatprep.mubr.bf16.mxu0 0
        %4606 = vmatmul.mubr.bf16.gmra.mrb[0].mxu0 %v4476
        %v4607 = vpop.f32.mrb[0].mxu0
        %v4608 = vadd.f32 0.0, %v4607
        %v4609 = vpop.f32.mrb[0].mxu0
        %v4610 = vpop.f32.mrb[0].mxu0
        %v4611 = vadd.f32 0.0, %v4610
        %v4612 = vpop.f32.mrb[0].mxu0
        %4613 = vmatprep.mubr.bf16.mxu0 0
        %4614 = vmatmul.mubr.bf16.gmra.mrb[0].mxu0 %v4479
        %v4615 = vpop.f32.mrb[0].mxu0
        %v4616 = vadd.f32 0.0, %v4615
        %v4617 = vpop.f32.mrb[0].mxu0
        %v4618 = vpop.f32.mrb[0].mxu0
        %v4619 = vadd.f32 0.0, %v4618
        %v4620 = vpop.f32.mrb[0].mxu0
        %4621 = vmatprep.mubr.bf16.mxu0 0
        %4622 = vmatmul.mubr.bf16.gmra.mrb[0].mxu0 %v4482
        %v4623 = vpop.f32.mrb[0].mxu0
        %v4624 = vadd.f32 0.0, %v4623
        %v4625 = vpop.f32.mrb[0].mxu0
        %v4626 = vpop.f32.mrb[0].mxu0
        %v4627 = vadd.f32 0.0, %v4626
        %v4628 = vpop.f32.mrb[0].mxu0
        %4629 = vmatprep.mubr.bf16.mxu0 0
        %4630 = vmatmul.mubr.bf16.gmra.mrb[0].mxu0 %v4485
        %v4631 = vpop.f32.mrb[0].mxu0
        %v4632 = vadd.f32 0.0, %v4631
        %v4633 = vpop.f32.mrb[0].mxu0
        %v4634 = vpop.f32.mrb[0].mxu0
        %v4635 = vadd.f32 0.0, %v4634
        %v4636 = vpop.f32.mrb[0].mxu0
        %4637 = vmatprep.mubr.bf16.mxu0 0
        %4638 = vmatmul.mubr.bf16.gmra.mrb[0].mxu0 %v4488
        %v4639 = vpop.f32.mrb[0].mxu0
        %v4640 = vadd.f32 0.0, %v4639
        %v4641 = vpop.f32.mrb[0].mxu0
        %v4642 = vpop.f32.mrb[0].mxu0
        %v4643 = vadd.f32 0.0, %v4642
        %v4644 = vpop.f32.mrb[0].mxu0
        %4645 = vmatprep.mubr.bf16.mxu0 0
        %4646 = vmatmul.mubr.bf16.gmra.mrb[0].mxu0 %v4491
        %v4647 = vpop.f32.mrb[0].mxu0
        %v4648 = vadd.f32 0.0, %v4647
        %v4649 = vpop.f32.mrb[0].mxu0
        %v4650 = vpop.f32.mrb[0].mxu0
        %v4651 = vadd.f32 0.0, %v4650
        %v4652 = vpop.f32.mrb[0].mxu0
        %4653 = vdwg.mxu0
        %v4654 = vadd.f32 %v3361, %v4528
        %v4655 = vadd.f32 %v3362, %v4531
        %v4656 = vadd.f32 %v3363, %v4536
        %v4657 = vadd.f32 %v3364, %v4539
        %v4658 = vadd.f32 %v3365, %v4544
        %v4659 = vadd.f32 %v3366, %v4547
        %v4660 = vadd.f32 %v3367, %v4552
        %v4661 = vadd.f32 %v3368, %v4555
        %v4662 = vadd.f32 %v3369, %v4560
        %v4663 = vadd.f32 %v3370, %v4563
        %v4664 = vadd.f32 %v3371, %v4568
        %v4665 = vadd.f32 %v3372, %v4571
        %v4666 = vadd.f32 %v3373, %v4576
        %v4667 = vadd.f32 %v3374, %v4579
        %v4668 = vadd.f32 %v3375, %v4584
        %v4669 = vadd.f32 %v3376, %v4587
        %v4670 = vadd.f32 %v3377, %v4592
        %v4671 = vadd.f32 %v3378, %v4595
        %v4672 = vadd.f32 %v3379, %v4600
        %v4673 = vadd.f32 %v3380, %v4603
        %v4674 = vadd.f32 %v3381, %v4608
        %v4675 = vadd.f32 %v3382, %v4611
        %v4676 = vadd.f32 %v3383, %v4616
        %v4677 = vadd.f32 %v3384, %v4619
        %v4678 = vadd.f32 %v3385, %v4624
        %v4679 = vadd.f32 %v3386, %v4627
        %v4680 = vadd.f32 %v3387, %v4632
        %v4681 = vadd.f32 %v3388, %v4635
        %v4682 = vadd.f32 %v3389, %v4640
        %v4683 = vadd.f32 %v3390, %v4643
        %v4684 = vadd.f32 %v3391, %v4648
        %v4685 = vadd.f32 %v3392, %v4651
        %v4686 = vld [vmem:[%s16 + $0x8] sm:$0x1]
        %v4687 = vlaneseq
        %v4688 = vshrl.u32 %v4687, 7
        %v4689 = vsub.s32 0, %v4688
        %v4690 = vrot.slane %v4686, %v4689
        %v4691 = vadd.f32 %v4654, %v4690
        %v4692 = vadd.f32 %v4655, %v4690
        %v4693 = vadd.f32 %v4656, %v4690
        %v4694 = vadd.f32 %v4657, %v4690
        %v4695 = vadd.f32 %v4658, %v4690
        %v4696 = vadd.f32 %v4659, %v4690
        %v4697 = vadd.f32 %v4660, %v4690
        %v4698 = vadd.f32 %v4661, %v4690
        %v4699 = vadd.f32 %v4662, %v4690
        %v4700 = vadd.f32 %v4663, %v4690
        %v4701 = vadd.f32 %v4664, %v4690
        %v4702 = vadd.f32 %v4665, %v4690
        %v4703 = vadd.f32 %v4666, %v4690
        %v4704 = vadd.f32 %v4667, %v4690
        %v4705 = vadd.f32 %v4668, %v4690
        %v4706 = vadd.f32 %v4669, %v4690
        %v4707 = vadd.f32 %v4670, %v4690
        %v4708 = vadd.f32 %v4671, %v4690
        %v4709 = vadd.f32 %v4672, %v4690
        %v4710 = vadd.f32 %v4673, %v4690
        %v4711 = vadd.f32 %v4674, %v4690
        %v4712 = vadd.f32 %v4675, %v4690
        %v4713 = vadd.f32 %v4676, %v4690
        %v4714 = vadd.f32 %v4677, %v4690
        %v4715 = vadd.f32 %v4678, %v4690
        %v4716 = vadd.f32 %v4679, %v4690
        %v4717 = vadd.f32 %v4680, %v4690
        %v4718 = vadd.f32 %v4681, %v4690
        %v4719 = vadd.f32 %v4682, %v4690
        %v4720 = vadd.f32 %v4683, %v4690
        %v4721 = vadd.f32 %v4684, %v4690
        %v4722 = vadd.f32 %v4685, %v4690
        %v4723 = vld [vmem:[%s16 + $0x9] sm:$0x1]
        %v4724 = vld [vmem:[%s16 + $0xa] sm:$0x1]
        %v4725 = vsel %vm1050, %v4691, 0.0
        %4726 = vadd.xlane.f32.xlu0 %v4725
        %v4727 = vpop.xlane.xlu0 %4726
        %v4728 = vsel %vm1050, %v4692, 0.0
        %4729 = vadd.xlane.f32.xlu0 %v4728
        %v4730 = vpop.xlane.xlu0 %4729
        %v4731 = vsel %vm1050, %v4693, 0.0
        %4732 = vadd.xlane.f32.xlu0 %v4731
        %v4733 = vpop.xlane.xlu0 %4732
        %v4734 = vsel %vm1050, %v4694, 0.0
        %4735 = vadd.xlane.f32.xlu0 %v4734
        %v4736 = vpop.xlane.xlu0 %4735
        %v4737 = vsel %vm1050, %v4695, 0.0
        %4738 = vadd.xlane.f32.xlu0 %v4737
        %v4739 = vpop.xlane.xlu0 %4738
        %v4740 = vsel %vm1050, %v4696, 0.0
        %4741 = vadd.xlane.f32.xlu0 %v4740
        %v4742 = vpop.xlane.xlu0 %4741
        %v4743 = vsel %vm1050, %v4697, 0.0
        %4744 = vadd.xlane.f32.xlu0 %v4743
        %v4745 = vpop.xlane.xlu0 %4744
        %v4746 = vsel %vm1050, %v4698, 0.0
        %4747 = vadd.xlane.f32.xlu0 %v4746
        %v4748 = vpop.xlane.xlu0 %4747
        %v4749 = vsel %vm1050, %v4699, 0.0
        %4750 = vadd.xlane.f32.xlu0 %v4749
        %v4751 = vpop.xlane.xlu0 %4750
        %v4752 = vsel %vm1050, %v4700, 0.0
        %4753 = vadd.xlane.f32.xlu0 %v4752
        %v4754 = vpop.xlane.xlu0 %4753
        %v4755 = vsel %vm1050, %v4701, 0.0
        %4756 = vadd.xlane.f32.xlu0 %v4755
        %v4757 = vpop.xlane.xlu0 %4756
        %v4758 = vsel %vm1050, %v4702, 0.0
        %4759 = vadd.xlane.f32.xlu0 %v4758
        %v4760 = vpop.xlane.xlu0 %4759
        %v4761 = vsel %vm1050, %v4703, 0.0
        %4762 = vadd.xlane.f32.xlu0 %v4761
        %v4763 = vpop.xlane.xlu0 %4762
        %v4764 = vsel %vm1050, %v4704, 0.0
        %4765 = vadd.xlane.f32.xlu0 %v4764
        %v4766 = vpop.xlane.xlu0 %4765
        %v4767 = vsel %vm1050, %v4705, 0.0
        %4768 = vadd.xlane.f32.xlu0 %v4767
        %v4769 = vpop.xlane.xlu0 %4768
        %v4770 = vsel %vm1050, %v4706, 0.0
        %4771 = vadd.xlane.f32.xlu0 %v4770
        %v4772 = vpop.xlane.xlu0 %4771
        %v4773 = vsel %vm1050, %v4707, 0.0
        %4774 = vadd.xlane.f32.xlu0 %v4773
        %v4775 = vpop.xlane.xlu0 %4774
        %v4776 = vsel %vm1050, %v4708, 0.0
        %4777 = vadd.xlane.f32.xlu0 %v4776
        %v4778 = vpop.xlane.xlu0 %4777
        %v4779 = vsel %vm1050, %v4709, 0.0
        %4780 = vadd.xlane.f32.xlu0 %v4779
        %v4781 = vpop.xlane.xlu0 %4780
        %v4782 = vsel %vm1050, %v4710, 0.0
        %4783 = vadd.xlane.f32.xlu0 %v4782
        %v4784 = vpop.xlane.xlu0 %4783
        %v4785 = vsel %vm1050, %v4711, 0.0
        %4786 = vadd.xlane.f32.xlu0 %v4785
        %v4787 = vpop.xlane.xlu0 %4786
        %v4788 = vsel %vm1050, %v4712, 0.0
        %4789 = vadd.xlane.f32.xlu0 %v4788
        %v4790 = vpop.xlane.xlu0 %4789
        %v4791 = vsel %vm1050, %v4713, 0.0
        %4792 = vadd.xlane.f32.xlu0 %v4791
        %v4793 = vpop.xlane.xlu0 %4792
        %v4794 = vsel %vm1050, %v4714, 0.0
        %4795 = vadd.xlane.f32.xlu0 %v4794
        %v4796 = vpop.xlane.xlu0 %4795
        %v4797 = vsel %vm1050, %v4715, 0.0
        %4798 = vadd.xlane.f32.xlu0 %v4797
        %v4799 = vpop.xlane.xlu0 %4798
        %v4800 = vsel %vm1050, %v4716, 0.0
        %4801 = vadd.xlane.f32.xlu0 %v4800
        %v4802 = vpop.xlane.xlu0 %4801
        %v4803 = vsel %vm1050, %v4717, 0.0
        %4804 = vadd.xlane.f32.xlu0 %v4803
        %v4805 = vpop.xlane.xlu0 %4804
        %v4806 = vsel %vm1050, %v4718, 0.0
        %4807 = vadd.xlane.f32.xlu0 %v4806
        %v4808 = vpop.xlane.xlu0 %4807
        %v4809 = vsel %vm1050, %v4719, 0.0
        %4810 = vadd.xlane.f32.xlu0 %v4809
        %v4811 = vpop.xlane.xlu0 %4810
        %v4812 = vsel %vm1050, %v4720, 0.0
        %4813 = vadd.xlane.f32.xlu0 %v4812
        %v4814 = vpop.xlane.xlu0 %4813
        %v4815 = vsel %vm1050, %v4721, 0.0
        %4816 = vadd.xlane.f32.xlu0 %v4815
        %v4817 = vpop.xlane.xlu0 %4816
        %v4818 = vsel %vm1050, %v4722, 0.0
        %4819 = vadd.xlane.f32.xlu0 %v4818
        %v4820 = vpop.xlane.xlu0 %4819
        %v4821 = vmul.f32 %v4727, %v1075
        %v4822 = vmul.f32 %v4730, %v1075
        %v4823 = vmul.f32 %v4733, %v1075
        %v4824 = vmul.f32 %v4736, %v1075
        %v4825 = vmul.f32 %v4739, %v1075
        %v4826 = vmul.f32 %v4742, %v1075
        %v4827 = vmul.f32 %v4745, %v1075
        %v4828 = vmul.f32 %v4748, %v1075
        %v4829 = vmul.f32 %v4751, %v1075
        %v4830 = vmul.f32 %v4754, %v1075
        %v4831 = vmul.f32 %v4757, %v1075
        %v4832 = vmul.f32 %v4760, %v1075
        %v4833 = vmul.f32 %v4763, %v1075
        %v4834 = vmul.f32 %v4766, %v1075
        %v4835 = vmul.f32 %v4769, %v1075
        %v4836 = vmul.f32 %v4772, %v1075
        %v4837 = vmul.f32 %v4775, %v1075
        %v4838 = vmul.f32 %v4778, %v1075
        %v4839 = vmul.f32 %v4781, %v1075
        %v4840 = vmul.f32 %v4784, %v1075
        %v4841 = vmul.f32 %v4787, %v1075
        %v4842 = vmul.f32 %v4790, %v1075
        %v4843 = vmul.f32 %v4793, %v1075
        %v4844 = vmul.f32 %v4796, %v1075
        %v4845 = vmul.f32 %v4799, %v1075
        %v4846 = vmul.f32 %v4802, %v1075
        %v4847 = vmul.f32 %v4805, %v1075
        %v4848 = vmul.f32 %v4808, %v1075
        %v4849 = vmul.f32 %v4811, %v1075
        %v4850 = vmul.f32 %v4814, %v1075
        %v4851 = vmul.f32 %v4817, %v1075
        %v4852 = vmul.f32 %v4820, %v1075
        %v4853 = vsub.f32 %v4691, %v4821
        %v4854 = vsub.f32 %v4692, %v4822
        %v4855 = vsub.f32 %v4693, %v4823
        %v4856 = vsub.f32 %v4694, %v4824
        %v4857 = vsub.f32 %v4695, %v4825
        %v4858 = vsub.f32 %v4696, %v4826
        %v4859 = vsub.f32 %v4697, %v4827
        %v4860 = vsub.f32 %v4698, %v4828
        %v4861 = vsub.f32 %v4699, %v4829
        %v4862 = vsub.f32 %v4700, %v4830
        %v4863 = vsub.f32 %v4701, %v4831
        %v4864 = vsub.f32 %v4702, %v4832
        %v4865 = vsub.f32 %v4703, %v4833
        %v4866 = vsub.f32 %v4704, %v4834
        %v4867 = vsub.f32 %v4705, %v4835
        %v4868 = vsub.f32 %v4706, %v4836
        %v4869 = vsub.f32 %v4707, %v4837
        %v4870 = vsub.f32 %v4708, %v4838
        %v4871 = vsub.f32 %v4709, %v4839
        %v4872 = vsub.f32 %v4710, %v4840
        %v4873 = vsub.f32 %v4711, %v4841
        %v4874 = vsub.f32 %v4712, %v4842
        %v4875 = vsub.f32 %v4713, %v4843
        %v4876 = vsub.f32 %v4714, %v4844
        %v4877 = vsub.f32 %v4715, %v4845
        %v4878 = vsub.f32 %v4716, %v4846
        %v4879 = vsub.f32 %v4717, %v4847
        %v4880 = vsub.f32 %v4718, %v4848
        %v4881 = vsub.f32 %v4719, %v4849
        %v4882 = vsub.f32 %v4720, %v4850
        %v4883 = vsub.f32 %v4721, %v4851
        %v4884 = vsub.f32 %v4722, %v4852
        %v4885 = vmul.f32 %v4853, %v4853
        %v4886 = vmul.f32 %v4854, %v4854
        %v4887 = vmul.f32 %v4855, %v4855
        %v4888 = vmul.f32 %v4856, %v4856
        %v4889 = vmul.f32 %v4857, %v4857
        %v4890 = vmul.f32 %v4858, %v4858
        %v4891 = vmul.f32 %v4859, %v4859
        %v4892 = vmul.f32 %v4860, %v4860
        %v4893 = vmul.f32 %v4861, %v4861
        %v4894 = vmul.f32 %v4862, %v4862
        %v4895 = vmul.f32 %v4863, %v4863
        %v4896 = vmul.f32 %v4864, %v4864
        %v4897 = vmul.f32 %v4865, %v4865
        %v4898 = vmul.f32 %v4866, %v4866
        %v4899 = vmul.f32 %v4867, %v4867
        %v4900 = vmul.f32 %v4868, %v4868
        %v4901 = vmul.f32 %v4869, %v4869
        %v4902 = vmul.f32 %v4870, %v4870
        %v4903 = vmul.f32 %v4871, %v4871
        %v4904 = vmul.f32 %v4872, %v4872
        %v4905 = vmul.f32 %v4873, %v4873
        %v4906 = vmul.f32 %v4874, %v4874
        %v4907 = vmul.f32 %v4875, %v4875
        %v4908 = vmul.f32 %v4876, %v4876
        %v4909 = vmul.f32 %v4877, %v4877
        %v4910 = vmul.f32 %v4878, %v4878
        %v4911 = vmul.f32 %v4879, %v4879
        %v4912 = vmul.f32 %v4880, %v4880
        %v4913 = vmul.f32 %v4881, %v4881
        %v4914 = vmul.f32 %v4882, %v4882
        %v4915 = vmul.f32 %v4883, %v4883
        %v4916 = vmul.f32 %v4884, %v4884
        %v4917 = vsel %vm1050, %v4885, 0.0
        %4918 = vadd.xlane.f32.xlu0 %v4917
        %v4919 = vpop.xlane.xlu0 %4918
        %v4920 = vsel %vm1050, %v4886, 0.0
        %4921 = vadd.xlane.f32.xlu0 %v4920
        %v4922 = vpop.xlane.xlu0 %4921
        %v4923 = vsel %vm1050, %v4887, 0.0
        %4924 = vadd.xlane.f32.xlu0 %v4923
        %v4925 = vpop.xlane.xlu0 %4924
        %v4926 = vsel %vm1050, %v4888, 0.0
        %4927 = vadd.xlane.f32.xlu0 %v4926
        %v4928 = vpop.xlane.xlu0 %4927
        %v4929 = vsel %vm1050, %v4889, 0.0
        %4930 = vadd.xlane.f32.xlu0 %v4929
        %v4931 = vpop.xlane.xlu0 %4930
        %v4932 = vsel %vm1050, %v4890, 0.0
        %4933 = vadd.xlane.f32.xlu0 %v4932
        %v4934 = vpop.xlane.xlu0 %4933
        %v4935 = vsel %vm1050, %v4891, 0.0
        %4936 = vadd.xlane.f32.xlu0 %v4935
        %v4937 = vpop.xlane.xlu0 %4936
        %v4938 = vsel %vm1050, %v4892, 0.0
        %4939 = vadd.xlane.f32.xlu0 %v4938
        %v4940 = vpop.xlane.xlu0 %4939
        %v4941 = vsel %vm1050, %v4893, 0.0
        %4942 = vadd.xlane.f32.xlu0 %v4941
        %v4943 = vpop.xlane.xlu0 %4942
        %v4944 = vsel %vm1050, %v4894, 0.0
        %4945 = vadd.xlane.f32.xlu0 %v4944
        %v4946 = vpop.xlane.xlu0 %4945
        %v4947 = vsel %vm1050, %v4895, 0.0
        %4948 = vadd.xlane.f32.xlu0 %v4947
        %v4949 = vpop.xlane.xlu0 %4948
        %v4950 = vsel %vm1050, %v4896, 0.0
        %4951 = vadd.xlane.f32.xlu0 %v4950
        %v4952 = vpop.xlane.xlu0 %4951
        %v4953 = vsel %vm1050, %v4897, 0.0
        %4954 = vadd.xlane.f32.xlu0 %v4953
        %v4955 = vpop.xlane.xlu0 %4954
        %v4956 = vsel %vm1050, %v4898, 0.0
        %4957 = vadd.xlane.f32.xlu0 %v4956
        %v4958 = vpop.xlane.xlu0 %4957
        %v4959 = vsel %vm1050, %v4899, 0.0
        %4960 = vadd.xlane.f32.xlu0 %v4959
        %v4961 = vpop.xlane.xlu0 %4960
        %v4962 = vsel %vm1050, %v4900, 0.0
        %4963 = vadd.xlane.f32.xlu0 %v4962
        %v4964 = vpop.xlane.xlu0 %4963
        %v4965 = vsel %vm1050, %v4901, 0.0
        %4966 = vadd.xlane.f32.xlu0 %v4965
        %v4967 = vpop.xlane.xlu0 %4966
        %v4968 = vsel %vm1050, %v4902, 0.0
        %4969 = vadd.xlane.f32.xlu0 %v4968
        %v4970 = vpop.xlane.xlu0 %4969
        %v4971 = vsel %vm1050, %v4903, 0.0
        %4972 = vadd.xlane.f32.xlu0 %v4971
        %v4973 = vpop.xlane.xlu0 %4972
        %v4974 = vsel %vm1050, %v4904, 0.0
        %4975 = vadd.xlane.f32.xlu0 %v4974
        %v4976 = vpop.xlane.xlu0 %4975
        %v4977 = vsel %vm1050, %v4905, 0.0
        %4978 = vadd.xlane.f32.xlu0 %v4977
        %v4979 = vpop.xlane.xlu0 %4978
        %v4980 = vsel %vm1050, %v4906, 0.0
        %4981 = vadd.xlane.f32.xlu0 %v4980
        %v4982 = vpop.xlane.xlu0 %4981
        %v4983 = vsel %vm1050, %v4907, 0.0
        %4984 = vadd.xlane.f32.xlu0 %v4983
        %v4985 = vpop.xlane.xlu0 %4984
        %v4986 = vsel %vm1050, %v4908, 0.0
        %4987 = vadd.xlane.f32.xlu0 %v4986
        %v4988 = vpop.xlane.xlu0 %4987
        %v4989 = vsel %vm1050, %v4909, 0.0
        %4990 = vadd.xlane.f32.xlu0 %v4989
        %v4991 = vpop.xlane.xlu0 %4990
        %v4992 = vsel %vm1050, %v4910, 0.0
        %4993 = vadd.xlane.f32.xlu0 %v4992
        %v4994 = vpop.xlane.xlu0 %4993
        %v4995 = vsel %vm1050, %v4911, 0.0
        %4996 = vadd.xlane.f32.xlu0 %v4995
        %v4997 = vpop.xlane.xlu0 %4996
        %v4998 = vsel %vm1050, %v4912, 0.0
        %4999 = vadd.xlane.f32.xlu0 %v4998
        %v5000 = vpop.xlane.xlu0 %4999
        %v5001 = vsel %vm1050, %v4913, 0.0
        %5002 = vadd.xlane.f32.xlu0 %v5001
        %v5003 = vpop.xlane.xlu0 %5002
        %v5004 = vsel %vm1050, %v4914, 0.0
        %5005 = vadd.xlane.f32.xlu0 %v5004
        %v5006 = vpop.xlane.xlu0 %5005
        %v5007 = vsel %vm1050, %v4915, 0.0
        %5008 = vadd.xlane.f32.xlu0 %v5007
        %v5009 = vpop.xlane.xlu0 %5008
        %v5010 = vsel %vm1050, %v4916, 0.0
        %5011 = vadd.xlane.f32.xlu0 %v5010
        %v5012 = vpop.xlane.xlu0 %5011
        %v5013 = vmul.f32 %v4919, %v1075
        %v5014 = vmul.f32 %v4922, %v1075
        %v5015 = vmul.f32 %v4925, %v1075
        %v5016 = vmul.f32 %v4928, %v1075
        %v5017 = vmul.f32 %v4931, %v1075
        %v5018 = vmul.f32 %v4934, %v1075
        %v5019 = vmul.f32 %v4937, %v1075
        %v5020 = vmul.f32 %v4940, %v1075
        %v5021 = vmul.f32 %v4943, %v1075
        %v5022 = vmul.f32 %v4946, %v1075
        %v5023 = vmul.f32 %v4949, %v1075
        %v5024 = vmul.f32 %v4952, %v1075
        %v5025 = vmul.f32 %v4955, %v1075
        %v5026 = vmul.f32 %v4958, %v1075
        %v5027 = vmul.f32 %v4961, %v1075
        %v5028 = vmul.f32 %v4964, %v1075
        %v5029 = vmul.f32 %v4967, %v1075
        %v5030 = vmul.f32 %v4970, %v1075
        %v5031 = vmul.f32 %v4973, %v1075
        %v5032 = vmul.f32 %v4976, %v1075
        %v5033 = vmul.f32 %v4979, %v1075
        %v5034 = vmul.f32 %v4982, %v1075
        %v5035 = vmul.f32 %v4985, %v1075
        %v5036 = vmul.f32 %v4988, %v1075
        %v5037 = vmul.f32 %v4991, %v1075
        %v5038 = vmul.f32 %v4994, %v1075
        %v5039 = vmul.f32 %v4997, %v1075
        %v5040 = vmul.f32 %v5000, %v1075
        %v5041 = vmul.f32 %v5003, %v1075
        %v5042 = vmul.f32 %v5006, %v1075
        %v5043 = vmul.f32 %v5009, %v1075
        %v5044 = vmul.f32 %v5012, %v1075
        %v5045 = vadd.f32 %v5013, 1e-05
        %v5046 = vadd.f32 %v5014, 1e-05
        %v5047 = vadd.f32 %v5015, 1e-05
        %v5048 = vadd.f32 %v5016, 1e-05
        %v5049 = vadd.f32 %v5017, 1e-05
        %v5050 = vadd.f32 %v5018, 1e-05
        %v5051 = vadd.f32 %v5019, 1e-05
        %v5052 = vadd.f32 %v5020, 1e-05
        %v5053 = vadd.f32 %v5021, 1e-05
        %v5054 = vadd.f32 %v5022, 1e-05
        %v5055 = vadd.f32 %v5023, 1e-05
        %v5056 = vadd.f32 %v5024, 1e-05
        %v5057 = vadd.f32 %v5025, 1e-05
        %v5058 = vadd.f32 %v5026, 1e-05
        %v5059 = vadd.f32 %v5027, 1e-05
        %v5060 = vadd.f32 %v5028, 1e-05
        %v5061 = vadd.f32 %v5029, 1e-05
        %v5062 = vadd.f32 %v5030, 1e-05
        %v5063 = vadd.f32 %v5031, 1e-05
        %v5064 = vadd.f32 %v5032, 1e-05
        %v5065 = vadd.f32 %v5033, 1e-05
        %v5066 = vadd.f32 %v5034, 1e-05
        %v5067 = vadd.f32 %v5035, 1e-05
        %v5068 = vadd.f32 %v5036, 1e-05
        %v5069 = vadd.f32 %v5037, 1e-05
        %v5070 = vadd.f32 %v5038, 1e-05
        %v5071 = vadd.f32 %v5039, 1e-05
        %v5072 = vadd.f32 %v5040, 1e-05
        %v5073 = vadd.f32 %v5041, 1e-05
        %v5074 = vadd.f32 %v5042, 1e-05
        %v5075 = vadd.f32 %v5043, 1e-05
        %v5076 = vadd.f32 %v5044, 1e-05
        %v5077 = vrsqrt.pop %v5045
        %v5078 = vrsqrt.pop %v5046
        %v5079 = vrsqrt.pop %v5047
        %v5080 = vrsqrt.pop %v5048
        %v5081 = vrsqrt.pop %v5049
        %v5082 = vrsqrt.pop %v5050
        %v5083 = vrsqrt.pop %v5051
        %v5084 = vrsqrt.pop %v5052
        %v5085 = vrsqrt.pop %v5053
        %v5086 = vrsqrt.pop %v5054
        %v5087 = vrsqrt.pop %v5055
        %v5088 = vrsqrt.pop %v5056
        %v5089 = vrsqrt.pop %v5057
        %v5090 = vrsqrt.pop %v5058
        %v5091 = vrsqrt.pop %v5059
        %v5092 = vrsqrt.pop %v5060
        %v5093 = vrsqrt.pop %v5061
        %v5094 = vrsqrt.pop %v5062
        %v5095 = vrsqrt.pop %v5063
        %v5096 = vrsqrt.pop %v5064
        %v5097 = vrsqrt.pop %v5065
        %v5098 = vrsqrt.pop %v5066
        %v5099 = vrsqrt.pop %v5067
        %v5100 = vrsqrt.pop %v5068
        %v5101 = vrsqrt.pop %v5069
        %v5102 = vrsqrt.pop %v5070
        %v5103 = vrsqrt.pop %v5071
        %v5104 = vrsqrt.pop %v5072
        %v5105 = vrsqrt.pop %v5073
        %v5106 = vrsqrt.pop %v5074
        %v5107 = vrsqrt.pop %v5075
        %v5108 = vrsqrt.pop %v5076
        %v5109 = vmul.f32 %v4853, %v5077
        %v5110 = vmul.f32 %v4854, %v5078
        %v5111 = vmul.f32 %v4855, %v5079
        %v5112 = vmul.f32 %v4856, %v5080
        %v5113 = vmul.f32 %v4857, %v5081
        %v5114 = vmul.f32 %v4858, %v5082
        %v5115 = vmul.f32 %v4859, %v5083
        %v5116 = vmul.f32 %v4860, %v5084
        %v5117 = vmul.f32 %v4861, %v5085
        %v5118 = vmul.f32 %v4862, %v5086
        %v5119 = vmul.f32 %v4863, %v5087
        %v5120 = vmul.f32 %v4864, %v5088
        %v5121 = vmul.f32 %v4865, %v5089
        %v5122 = vmul.f32 %v4866, %v5090
        %v5123 = vmul.f32 %v4867, %v5091
        %v5124 = vmul.f32 %v4868, %v5092
        %v5125 = vmul.f32 %v4869, %v5093
        %v5126 = vmul.f32 %v4870, %v5094
        %v5127 = vmul.f32 %v4871, %v5095
        %v5128 = vmul.f32 %v4872, %v5096
        %v5129 = vmul.f32 %v4873, %v5097
        %v5130 = vmul.f32 %v4874, %v5098
        %v5131 = vmul.f32 %v4875, %v5099
        %v5132 = vmul.f32 %v4876, %v5100
        %v5133 = vmul.f32 %v4877, %v5101
        %v5134 = vmul.f32 %v4878, %v5102
        %v5135 = vmul.f32 %v4879, %v5103
        %v5136 = vmul.f32 %v4880, %v5104
        %v5137 = vmul.f32 %v4881, %v5105
        %v5138 = vmul.f32 %v4882, %v5106
        %v5139 = vmul.f32 %v4883, %v5107
        %v5140 = vmul.f32 %v4884, %v5108
        %v5141 = vlaneseq
        %v5142 = vshrl.u32 %v5141, 7
        %v5143 = vsub.s32 0, %v5142
        %v5144 = vrot.slane %v4723, %v5143
        %v5145 = vmul.f32 %v5109, %v5144
        %v5146 = vmul.f32 %v5110, %v5144
        %v5147 = vmul.f32 %v5111, %v5144
        %v5148 = vmul.f32 %v5112, %v5144
        %v5149 = vmul.f32 %v5113, %v5144
        %v5150 = vmul.f32 %v5114, %v5144
        %v5151 = vmul.f32 %v5115, %v5144
        %v5152 = vmul.f32 %v5116, %v5144
        %v5153 = vmul.f32 %v5117, %v5144
        %v5154 = vmul.f32 %v5118, %v5144
        %v5155 = vmul.f32 %v5119, %v5144
        %v5156 = vmul.f32 %v5120, %v5144
        %v5157 = vmul.f32 %v5121, %v5144
        %v5158 = vmul.f32 %v5122, %v5144
        %v5159 = vmul.f32 %v5123, %v5144
        %v5160 = vmul.f32 %v5124, %v5144
        %v5161 = vmul.f32 %v5125, %v5144
        %v5162 = vmul.f32 %v5126, %v5144
        %v5163 = vmul.f32 %v5127, %v5144
        %v5164 = vmul.f32 %v5128, %v5144
        %v5165 = vmul.f32 %v5129, %v5144
        %v5166 = vmul.f32 %v5130, %v5144
        %v5167 = vmul.f32 %v5131, %v5144
        %v5168 = vmul.f32 %v5132, %v5144
        %v5169 = vmul.f32 %v5133, %v5144
        %v5170 = vmul.f32 %v5134, %v5144
        %v5171 = vmul.f32 %v5135, %v5144
        %v5172 = vmul.f32 %v5136, %v5144
        %v5173 = vmul.f32 %v5137, %v5144
        %v5174 = vmul.f32 %v5138, %v5144
        %v5175 = vmul.f32 %v5139, %v5144
        %v5176 = vmul.f32 %v5140, %v5144
        %v5177 = vlaneseq
        %v5178 = vshrl.u32 %v5177, 7
        %v5179 = vsub.s32 0, %v5178
        %v5180 = vrot.slane %v4724, %v5179
        %v5181 = vadd.f32 %v5145, %v5180
        %v5182 = vadd.f32 %v5146, %v5180
        %v5183 = vadd.f32 %v5147, %v5180
        %v5184 = vadd.f32 %v5148, %v5180
        %v5185 = vadd.f32 %v5149, %v5180
        %v5186 = vadd.f32 %v5150, %v5180
        %v5187 = vadd.f32 %v5151, %v5180
        %v5188 = vadd.f32 %v5152, %v5180
        %v5189 = vadd.f32 %v5153, %v5180
        %v5190 = vadd.f32 %v5154, %v5180
        %v5191 = vadd.f32 %v5155, %v5180
        %v5192 = vadd.f32 %v5156, %v5180
        %v5193 = vadd.f32 %v5157, %v5180
        %v5194 = vadd.f32 %v5158, %v5180
        %v5195 = vadd.f32 %v5159, %v5180
        %v5196 = vadd.f32 %v5160, %v5180
        %v5197 = vadd.f32 %v5161, %v5180
        %v5198 = vadd.f32 %v5162, %v5180
        %v5199 = vadd.f32 %v5163, %v5180
        %v5200 = vadd.f32 %v5164, %v5180
        %v5201 = vadd.f32 %v5165, %v5180
        %v5202 = vadd.f32 %v5166, %v5180
        %v5203 = vadd.f32 %v5167, %v5180
        %v5204 = vadd.f32 %v5168, %v5180
        %v5205 = vadd.f32 %v5169, %v5180
        %v5206 = vadd.f32 %v5170, %v5180
        %v5207 = vadd.f32 %v5171, %v5180
        %v5208 = vadd.f32 %v5172, %v5180
        %v5209 = vadd.f32 %v5173, %v5180
        %v5210 = vadd.f32 %v5174, %v5180
        %v5211 = vadd.f32 %v5175, %v5180
        %v5212 = vadd.f32 %v5176, %v5180
        %s5213 = scalar_lea.vmem %s4, 48
        %v5214 = vld [vmem:[%s5213] sm:$0xff]
        %v5215 = vld [vmem:[%s5213 + $0x8] sm:$0xff]
        %v5216 = vld [vmem:[%s5213 + $0x10] sm:$0xff]
        %v5217 = vld [vmem:[%s5213 + $0x18] sm:$0xff]
        %v5218 = vld [vmem:[%s5213 + $0x20] sm:$0xff]
        %v5219 = vld [vmem:[%s5213 + $0x28] sm:$0xff]
        %v5220 = vpack.c.bf16 %v5182, %v5181
        %v5221 = vpack.c.bf16 %v5184, %v5183
        %v5222 = vpack.c.bf16 %v5186, %v5185
        %v5223 = vpack.c.bf16 %v5188, %v5187
        %v5224 = vpack.c.bf16 %v5190, %v5189
        %v5225 = vpack.c.bf16 %v5192, %v5191
        %v5226 = vpack.c.bf16 %v5194, %v5193
        %v5227 = vpack.c.bf16 %v5196, %v5195
        %v5228 = vpack.c.bf16 %v5198, %v5197
        %v5229 = vpack.c.bf16 %v5200, %v5199
        %v5230 = vpack.c.bf16 %v5202, %v5201
        %v5231 = vpack.c.bf16 %v5204, %v5203
        %v5232 = vpack.c.bf16 %v5206, %v5205
        %v5233 = vpack.c.bf16 %v5208, %v5207
        %v5234 = vpack.c.bf16 %v5210, %v5209
        %v5235 = vpack.c.bf16 %v5212, %v5211
        %v5236 = vpack.c.bf16 %v5215, %v5214
        %v5237 = vpack.c.bf16 %v5217, %v5216
        %v5238 = vpack.c.bf16 %v5219, %v5218
        %v5240 = vsel %vm1050, %v5220, 0
        %v5243 = vsel %vm1050, %v5221, 0
        %v5246 = vsel %vm1050, %v5222, 0
        %v5249 = vsel %vm1050, %v5223, 0
        %v5252 = vsel %vm1050, %v5224, 0
        %v5255 = vsel %vm1050, %v5225, 0
        %v5258 = vsel %vm1050, %v5226, 0
        %v5261 = vsel %vm1050, %v5227, 0
        %v5264 = vsel %vm1050, %v5228, 0
        %v5267 = vsel %vm1050, %v5229, 0
        %v5270 = vsel %vm1050, %v5230, 0
        %v5273 = vsel %vm1050, %v5231, 0
        %v5276 = vsel %vm1050, %v5232, 0
        %v5279 = vsel %vm1050, %v5233, 0
        %v5282 = vsel %vm1050, %v5234, 0
        %v5285 = vsel %vm1050, %v5235, 0
        %5287 = vmatprep.subr.bf16.mxu0 0
        %5288 = vmatpush1.bf16.msra.mxu0 %v5236
        %5289 = vmatprep.subr.bf16.mxu0 0
        %5290 = vmatpush1.bf16.msra.mxu0 %v5237
        %5291 = vmatprep.subr.bf16.mxu0 0
        %5292 = vmatpush1.bf16.msra.mxu0 %v5238
        %5293 = vmatprep.subr.bf16.mxu0 0
        %5294 = vmatpush1.bf16.msra.mxu0 0
        %5295 = vmatprep.subr.bf16.mxu0 0
        %5296 = vmatpush1.bf16.msra.mxu0 0
        %5297 = vmatprep.subr.bf16.mxu0 0
        %5298 = vmatpush1.bf16.msra.mxu0 0
        %5299 = vmatprep.subr.bf16.mxu0 0
        %5300 = vmatpush1.bf16.msra.mxu0 0
        %5301 = vmatprep.subr.bf16.mxu0 0
        %5302 = vmatpush1.bf16.msra.mxu0 0
        %5303 = vmatprep.subr.bf16.mxu0 0
        %5304 = vmatpush1.bf16.msra.mxu0 0
        %5305 = vmatprep.subr.bf16.mxu0 0
        %5306 = vmatpush1.bf16.msra.mxu0 0
        %5307 = vmatprep.subr.bf16.mxu0 0
        %5308 = vmatpush1.bf16.msra.mxu0 0
        %5309 = vmatprep.subr.bf16.mxu0 0
        %5310 = vmatpush1.bf16.msra.mxu0 0
        %5311 = vmatprep.subr.bf16.mxu0 0
        %5312 = vmatpush1.bf16.msra.mxu0 0
        %5313 = vmatprep.subr.bf16.mxu0 0
        %5314 = vmatpush1.bf16.msra.mxu0 0
        %5315 = vmatprep.subr.bf16.mxu0 0
        %5316 = vmatpush1.bf16.msra.mxu0 0
        %5317 = vmatprep.subr.bf16.mxu0 0
        %5318 = vmatpush1.bf16.msra.mxu0 0
        %5319 = vmatprep.mubr.bf16.mxu0 0
        %5320 = vmatmul.mubr.bf16.gmra.mrb[0].mxu0 %v5240
        %v5321 = vpop.f32.mrb[0].mxu0
        %v5322 = vadd.f32 0.0, %v5321
        %v5323 = vpop.f32.mrb[0].mxu0
        %v5324 = vpop.f32.mrb[0].mxu0
        %v5325 = vadd.f32 0.0, %v5324
        %v5326 = vpop.f32.mrb[0].mxu0
        %5327 = vmatprep.mubr.bf16.mxu0 0
        %5328 = vmatmul.mubr.bf16.gmra.mrb[0].mxu0 %v5243
        %v5329 = vpop.f32.mrb[0].mxu0
        %v5330 = vadd.f32 0.0, %v5329
        %v5331 = vpop.f32.mrb[0].mxu0
        %v5332 = vpop.f32.mrb[0].mxu0
        %v5333 = vadd.f32 0.0, %v5332
        %v5334 = vpop.f32.mrb[0].mxu0
        %5335 = vmatprep.mubr.bf16.mxu0 0
        %5336 = vmatmul.mubr.bf16.gmra.mrb[0].mxu0 %v5246
        %v5337 = vpop.f32.mrb[0].mxu0
        %v5338 = vadd.f32 0.0, %v5337
        %v5339 = vpop.f32.mrb[0].mxu0
        %v5340 = vpop.f32.mrb[0].mxu0
        %v5341 = vadd.f32 0.0, %v5340
        %v5342 = vpop.f32.mrb[0].mxu0
        %5343 = vmatprep.mubr.bf16.mxu0 0
        %5344 = vmatmul.mubr.bf16.gmra.mrb[0].mxu0 %v5249
        %v5345 = vpop.f32.mrb[0].mxu0
        %v5346 = vadd.f32 0.0, %v5345
        %v5347 = vpop.f32.mrb[0].mxu0
        %v5348 = vpop.f32.mrb[0].mxu0
        %v5349 = vadd.f32 0.0, %v5348
        %v5350 = vpop.f32.mrb[0].mxu0
        %5351 = vmatprep.mubr.bf16.mxu0 0
        %5352 = vmatmul.mubr.bf16.gmra.mrb[0].mxu0 %v5252
        %v5353 = vpop.f32.mrb[0].mxu0
        %v5354 = vadd.f32 0.0, %v5353
        %v5355 = vpop.f32.mrb[0].mxu0
        %v5356 = vpop.f32.mrb[0].mxu0
        %v5357 = vadd.f32 0.0, %v5356
        %v5358 = vpop.f32.mrb[0].mxu0
        %5359 = vmatprep.mubr.bf16.mxu0 0
        %5360 = vmatmul.mubr.bf16.gmra.mrb[0].mxu0 %v5255
        %v5361 = vpop.f32.mrb[0].mxu0
        %v5362 = vadd.f32 0.0, %v5361
        %v5363 = vpop.f32.mrb[0].mxu0
        %v5364 = vpop.f32.mrb[0].mxu0
        %v5365 = vadd.f32 0.0, %v5364
        %v5366 = vpop.f32.mrb[0].mxu0
        %5367 = vmatprep.mubr.bf16.mxu0 0
        %5368 = vmatmul.mubr.bf16.gmra.mrb[0].mxu0 %v5258
        %v5369 = vpop.f32.mrb[0].mxu0
        %v5370 = vadd.f32 0.0, %v5369
        %v5371 = vpop.f32.mrb[0].mxu0
        %v5372 = vpop.f32.mrb[0].mxu0
        %v5373 = vadd.f32 0.0, %v5372
        %v5374 = vpop.f32.mrb[0].mxu0
        %5375 = vmatprep.mubr.bf16.mxu0 0
        %5376 = vmatmul.mubr.bf16.gmra.mrb[0].mxu0 %v5261
        %v5377 = vpop.f32.mrb[0].mxu0
        %v5378 = vadd.f32 0.0, %v5377
        %v5379 = vpop.f32.mrb[0].mxu0
        %v5380 = vpop.f32.mrb[0].mxu0
        %v5381 = vadd.f32 0.0, %v5380
        %v5382 = vpop.f32.mrb[0].mxu0
        %5383 = vmatprep.mubr.bf16.mxu0 0
        %5384 = vmatmul.mubr.bf16.gmra.mrb[0].mxu0 %v5264
        %v5385 = vpop.f32.mrb[0].mxu0
        %v5386 = vadd.f32 0.0, %v5385
        %v5387 = vpop.f32.mrb[0].mxu0
        %v5388 = vpop.f32.mrb[0].mxu0
        %v5389 = vadd.f32 0.0, %v5388
        %v5390 = vpop.f32.mrb[0].mxu0
        %5391 = vmatprep.mubr.bf16.mxu0 0
        %5392 = vmatmul.mubr.bf16.gmra.mrb[0].mxu0 %v5267
        %v5393 = vpop.f32.mrb[0].mxu0
        %v5394 = vadd.f32 0.0, %v5393
        %v5395 = vpop.f32.mrb[0].mxu0
        %v5396 = vpop.f32.mrb[0].mxu0
        %v5397 = vadd.f32 0.0, %v5396
        %v5398 = vpop.f32.mrb[0].mxu0
        %5399 = vmatprep.mubr.bf16.mxu0 0
        %5400 = vmatmul.mubr.bf16.gmra.mrb[0].mxu0 %v5270
        %v5401 = vpop.f32.mrb[0].mxu0
        %v5402 = vadd.f32 0.0, %v5401
        %v5403 = vpop.f32.mrb[0].mxu0
        %v5404 = vpop.f32.mrb[0].mxu0
        %v5405 = vadd.f32 0.0, %v5404
        %v5406 = vpop.f32.mrb[0].mxu0
        %5407 = vmatprep.mubr.bf16.mxu0 0
        %5408 = vmatmul.mubr.bf16.gmra.mrb[0].mxu0 %v5273
        %v5409 = vpop.f32.mrb[0].mxu0
        %v5410 = vadd.f32 0.0, %v5409
        %v5411 = vpop.f32.mrb[0].mxu0
        %v5412 = vpop.f32.mrb[0].mxu0
        %v5413 = vadd.f32 0.0, %v5412
        %v5414 = vpop.f32.mrb[0].mxu0
        %5415 = vmatprep.mubr.bf16.mxu0 0
        %5416 = vmatmul.mubr.bf16.gmra.mrb[0].mxu0 %v5276
        %v5417 = vpop.f32.mrb[0].mxu0
        %v5418 = vadd.f32 0.0, %v5417
        %v5419 = vpop.f32.mrb[0].mxu0
        %v5420 = vpop.f32.mrb[0].mxu0
        %v5421 = vadd.f32 0.0, %v5420
        %v5422 = vpop.f32.mrb[0].mxu0
        %5423 = vmatprep.mubr.bf16.mxu0 0
        %5424 = vmatmul.mubr.bf16.gmra.mrb[0].mxu0 %v5279
        %v5425 = vpop.f32.mrb[0].mxu0
        %v5426 = vadd.f32 0.0, %v5425
        %v5427 = vpop.f32.mrb[0].mxu0
        %v5428 = vpop.f32.mrb[0].mxu0
        %v5429 = vadd.f32 0.0, %v5428
        %v5430 = vpop.f32.mrb[0].mxu0
        %5431 = vmatprep.mubr.bf16.mxu0 0
        %5432 = vmatmul.mubr.bf16.gmra.mrb[0].mxu0 %v5282
        %v5433 = vpop.f32.mrb[0].mxu0
        %v5434 = vadd.f32 0.0, %v5433
        %v5435 = vpop.f32.mrb[0].mxu0
        %v5436 = vpop.f32.mrb[0].mxu0
        %v5437 = vadd.f32 0.0, %v5436
        %v5438 = vpop.f32.mrb[0].mxu0
        %5439 = vmatprep.mubr.bf16.mxu0 0
        %5440 = vmatmul.mubr.bf16.gmra.mrb[0].mxu0 %v5285
        %v5441 = vpop.f32.mrb[0].mxu0
        %v5442 = vadd.f32 0.0, %v5441
        %v5443 = vpop.f32.mrb[0].mxu0
        %v5444 = vpop.f32.mrb[0].mxu0
        %v5445 = vadd.f32 0.0, %v5444
        %v5446 = vpop.f32.mrb[0].mxu0
        %5447 = vdwg.mxu0
        %s5448 = scalar_lea.vmem %s5, 32
        %v5449 = vld [vmem:[%s5448] sm:$0xff]
        %v5450 = vld [vmem:[%s5448 + $0x8] sm:$0xff]
        %v5451 = vld [vmem:[%s5448 + $0x10] sm:$0xff]
        %v5452 = vld [vmem:[%s5448 + $0x18] sm:$0xff]
        %v5453 = vpack.c.bf16 %v5450, %v5449
        %v5454 = vpack.c.bf16 %v5452, %v5451
        %5455 = vmatprep.subr.bf16.mxu0 0
        %5456 = vmatpush1.bf16.msra.mxu0 %v5453
        %5457 = vmatprep.subr.bf16.mxu0 0
        %5458 = vmatpush1.bf16.msra.mxu0 %v5454
        %5459 = vmatprep.subr.bf16.mxu0 0
        %5460 = vmatpush1.bf16.msra.mxu0 0
        %5461 = vmatprep.subr.bf16.mxu0 0
        %5462 = vmatpush1.bf16.msra.mxu0 0
        %5463 = vmatprep.subr.bf16.mxu0 0
        %5464 = vmatpush1.bf16.msra.mxu0 0
        %5465 = vmatprep.subr.bf16.mxu0 0
        %5466 = vmatpush1.bf16.msra.mxu0 0
        %5467 = vmatprep.subr.bf16.mxu0 0
        %5468 = vmatpush1.bf16.msra.mxu0 0
        %5469 = vmatprep.subr.bf16.mxu0 0
        %5470 = vmatpush1.bf16.msra.mxu0 0
        %5471 = vmatprep.subr.bf16.mxu0 0
        %5472 = vmatpush1.bf16.msra.mxu0 0
        %5473 = vmatprep.subr.bf16.mxu0 0
        %5474 = vmatpush1.bf16.msra.mxu0 0
        %5475 = vmatprep.subr.bf16.mxu0 0
        %5476 = vmatpush1.bf16.msra.mxu0 0
        %5477 = vmatprep.subr.bf16.mxu0 0
        %5478 = vmatpush1.bf16.msra.mxu0 0
        %5479 = vmatprep.subr.bf16.mxu0 0
        %5480 = vmatpush1.bf16.msra.mxu0 0
        %5481 = vmatprep.subr.bf16.mxu0 0
        %5482 = vmatpush1.bf16.msra.mxu0 0
        %5483 = vmatprep.subr.bf16.mxu0 0
        %5484 = vmatpush1.bf16.msra.mxu0 0
        %5485 = vmatprep.subr.bf16.mxu0 0
        %5486 = vmatpush1.bf16.msra.mxu0 0
        %5487 = vmatprep.mubr.bf16.mxu0 0
        %5488 = vmatmul.mubr.bf16.gmra.mrb[0].mxu0 %v1374
        %v5489 = vpop.f32.mrb[0].mxu0
        %v5490 = vadd.f32 0.0, %v5489
        %v5491 = vpop.f32.mrb[0].mxu0
        %v5492 = vpop.f32.mrb[0].mxu0
        %v5493 = vpop.f32.mrb[0].mxu0
        %5494 = vdwg.mxu0
        %v5495 = vpack.c.bf16 %v5490, %v5490
        %v5497 = vsel %vm1430, %v5495, 0
        %5499 = vmatprep.subr.bf16.mxu0 0
        %5500 = vmatpush1.bf16.msra.mxu0 %v5497
        %5501 = vmatprep.subr.bf16.mxu0 0
        %5502 = vmatpush1.bf16.msra.mxu0 0
        %5503 = vmatprep.subr.bf16.mxu0 0
        %5504 = vmatpush1.bf16.msra.mxu0 0
        %5505 = vmatprep.subr.bf16.mxu0 0
        %5506 = vmatpush1.bf16.msra.mxu0 0
        %5507 = vmatprep.subr.bf16.mxu0 0
        %5508 = vmatpush1.bf16.msra.mxu0 0
        %5509 = vmatprep.subr.bf16.mxu0 0
        %5510 = vmatpush1.bf16.msra.mxu0 0
        %5511 = vmatprep.subr.bf16.mxu0 0
        %5512 = vmatpush1.bf16.msra.mxu0 0
        %5513 = vmatprep.subr.bf16.mxu0 0
        %5514 = vmatpush1.bf16.msra.mxu0 0
        %5515 = vmatprep.subr.bf16.mxu0 0
        %5516 = vmatpush1.bf16.msra.mxu0 0
        %5517 = vmatprep.subr.bf16.mxu0 0
        %5518 = vmatpush1.bf16.msra.mxu0 0
        %5519 = vmatprep.subr.bf16.mxu0 0
        %5520 = vmatpush1.bf16.msra.mxu0 0
        %5521 = vmatprep.subr.bf16.mxu0 0
        %5522 = vmatpush1.bf16.msra.mxu0 0
        %5523 = vmatprep.subr.bf16.mxu0 0
        %5524 = vmatpush1.bf16.msra.mxu0 0
        %5525 = vmatprep.subr.bf16.mxu0 0
        %5526 = vmatpush1.bf16.msra.mxu0 0
        %5527 = vmatprep.subr.bf16.mxu0 0
        %5528 = vmatpush1.bf16.msra.mxu0 0
        %5529 = vmatprep.subr.bf16.mxu0 0
        %5530 = vmatpush1.bf16.msra.mxu0 0
        %5531 = vmatprep.mubr.bf16.mxu0 0
        %5532 = vmatmul.mubr.bf16.gmra.mrb[0].mxu0 %v1422
        %v5533 = vpop.f32.mrb[0].mxu0
        %v5534 = vadd.f32 0.0, %v5533
        %v5535 = vpop.f32.mrb[0].mxu0
        %v5536 = vpop.f32.mrb[0].mxu0
        %v5537 = vadd.f32 0.0, %v5536
        %v5538 = vpop.f32.mrb[0].mxu0
        %5539 = vmatprep.mubr.bf16.mxu0 0
        %5540 = vmatmul.mubr.bf16.gmra.mrb[0].mxu0 %v1425
        %v5541 = vpop.f32.mrb[0].mxu0
        %v5542 = vadd.f32 0.0, %v5541
        %v5543 = vpop.f32.mrb[0].mxu0
        %v5544 = vpop.f32.mrb[0].mxu0
        %v5545 = vadd.f32 0.0, %v5544
        %v5546 = vpop.f32.mrb[0].mxu0
        %5547 = vmatprep.mubr.bf16.mxu0 0
        %5548 = vmatmul.mubr.bf16.gmra.mrb[0].mxu0 %v1428
        %v5549 = vpop.f32.mrb[0].mxu0
        %v5550 = vadd.f32 0.0, %v5549
        %v5551 = vpop.f32.mrb[0].mxu0
        %v5552 = vpop.f32.mrb[0].mxu0
        %v5553 = vadd.f32 0.0, %v5552
        %v5554 = vpop.f32.mrb[0].mxu0
        %5555 = vdwg.mxu0
        %v5556 = vmul.f32 %v5534, %v612
        %v5557 = vmul.f32 %v5537, %v613
        %v5558 = vmul.f32 %v5542, %v614
        %v5559 = vmul.f32 %v5545, %v615
        %v5560 = vmul.f32 %v5550, %v616
        %v5561 = vmul.f32 %v5553, %v617
        %v5562 = vpack.c.bf16 %v5325, %v5322
        %v5563 = vpack.c.bf16 %v5333, %v5330
        %v5564 = vpack.c.bf16 %v5341, %v5338
        %v5565 = vpack.c.bf16 %v5349, %v5346
        %v5566 = vpack.c.bf16 %v5557, %v5556
        %v5567 = vpack.c.bf16 %v5559, %v5558
        %v5568 = vpack.c.bf16 %v5561, %v5560
        %v5570 = vsel %vm1050, %v5562, 0
        %v5573 = vsel %vm1050, %v5563, 0
        %v5576 = vsel %vm1050, %v5564, 0
        %v5579 = vsel %vm1050, %v5565, 0
        %v5582 = vsel %vm1050, %v5566, 0
        %v5585 = vsel %vm1050, %v5567, 0
        %v5588 = vsel %vm1050, %v5568, 0
        %5590 = vmatprep.subr.bf16.mxu0 0
        %5591 = vmatpush1.bf16.xpose.msra.mxu0 %v5582
        %5592 = vmatprep.subr.bf16.mxu0 0
        %5593 = vmatpush1.bf16.xpose.msra.mxu0 %v5585
        %5594 = vmatprep.subr.bf16.mxu0 0
        %5595 = vmatpush1.bf16.xpose.msra.mxu0 %v5588
        %5596 = vmatprep.subr.bf16.mxu0 0
        %5597 = vmatpush1.bf16.xpose.msra.mxu0 0
        %5598 = vmatprep.subr.bf16.mxu0 0
        %5599 = vmatpush1.bf16.xpose.msra.mxu0 0
        %5600 = vmatprep.subr.bf16.mxu0 0
        %5601 = vmatpush1.bf16.xpose.msra.mxu0 0
        %5602 = vmatprep.subr.bf16.mxu0 0
        %5603 = vmatpush1.bf16.xpose.msra.mxu0 0
        %5604 = vmatprep.subr.bf16.mxu0 0
        %5605 = vmatpush1.bf16.xpose.msra.mxu0 0
        %5606 = vmatprep.subr.bf16.mxu0 0
        %5607 = vmatpush1.bf16.xpose.msra.mxu0 0
        %5608 = vmatprep.subr.bf16.mxu0 0
        %5609 = vmatpush1.bf16.xpose.msra.mxu0 0
        %5610 = vmatprep.subr.bf16.mxu0 0
        %5611 = vmatpush1.bf16.xpose.msra.mxu0 0
        %5612 = vmatprep.subr.bf16.mxu0 0
        %5613 = vmatpush1.bf16.xpose.msra.mxu0 0
        %5614 = vmatprep.subr.bf16.mxu0 0
        %5615 = vmatpush1.bf16.xpose.msra.mxu0 0
        %5616 = vmatprep.subr.bf16.mxu0 0
        %5617 = vmatpush1.bf16.xpose.msra.mxu0 0
        %5618 = vmatprep.subr.bf16.mxu0 0
        %5619 = vmatpush1.bf16.xpose.msra.mxu0 0
        %5620 = vmatprep.subr.bf16.mxu0 0
        %5621 = vmatpush1.bf16.xpose.msra.mxu0 0
        %5622 = vmatprep.mubr.bf16.mxu0 0
        %5623 = vmatmul.mubr.bf16.gmra.mrb[0].mxu0 %v5570
        %v5624 = vpop.f32.mrb[0].mxu0
        %v5625 = vadd.f32 0.0, %v5624
        %v5626 = vpop.f32.mrb[0].mxu0
        %v5627 = vpop.f32.mrb[0].mxu0
        %v5628 = vadd.f32 0.0, %v5627
        %v5629 = vpop.f32.mrb[0].mxu0
        %5630 = vmatprep.mubr.bf16.mxu0 0
        %5631 = vmatmul.mubr.bf16.gmra.mrb[0].mxu0 %v5573
        %v5632 = vpop.f32.mrb[0].mxu0
        %v5633 = vadd.f32 0.0, %v5632
        %v5634 = vpop.f32.mrb[0].mxu0
        %v5635 = vpop.f32.mrb[0].mxu0
        %v5636 = vadd.f32 0.0, %v5635
        %v5637 = vpop.f32.mrb[0].mxu0
        %5638 = vmatprep.mubr.bf16.mxu0 0
        %5639 = vmatmul.mubr.bf16.gmra.mrb[0].mxu0 %v5576
        %v5640 = vpop.f32.mrb[0].mxu0
        %v5641 = vadd.f32 0.0, %v5640
        %v5642 = vpop.f32.mrb[0].mxu0
        %v5643 = vpop.f32.mrb[0].mxu0
        %v5644 = vadd.f32 0.0, %v5643
        %v5645 = vpop.f32.mrb[0].mxu0
        %5646 = vmatprep.mubr.bf16.mxu0 0
        %5647 = vmatmul.mubr.bf16.gmra.mrb[0].mxu0 %v5579
        %v5648 = vpop.f32.mrb[0].mxu0
        %v5649 = vadd.f32 0.0, %v5648
        %v5650 = vpop.f32.mrb[0].mxu0
        %v5651 = vpop.f32.mrb[0].mxu0
        %v5652 = vadd.f32 0.0, %v5651
        %v5653 = vpop.f32.mrb[0].mxu0
        %5654 = vdwg.mxu0
        %5655 = vmatprep.subr.bf16.mxu0 0
        %5656 = vmatpush1.bf16.msra.mxu0 %v5453
        %5657 = vmatprep.subr.bf16.mxu0 0
        %5658 = vmatpush1.bf16.msra.mxu0 %v5454
        %5659 = vmatprep.subr.bf16.mxu0 0
        %5660 = vmatpush1.bf16.msra.mxu0 0
        %5661 = vmatprep.subr.bf16.mxu0 0
        %5662 = vmatpush1.bf16.msra.mxu0 0
        %5663 = vmatprep.subr.bf16.mxu0 0
        %5664 = vmatpush1.bf16.msra.mxu0 0
        %5665 = vmatprep.subr.bf16.mxu0 0
        %5666 = vmatpush1.bf16.msra.mxu0 0
        %5667 = vmatprep.subr.bf16.mxu0 0
        %5668 = vmatpush1.bf16.msra.mxu0 0
        %5669 = vmatprep.subr.bf16.mxu0 0
        %5670 = vmatpush1.bf16.msra.mxu0 0
        %5671 = vmatprep.subr.bf16.mxu0 0
        %5672 = vmatpush1.bf16.msra.mxu0 0
        %5673 = vmatprep.subr.bf16.mxu0 0
        %5674 = vmatpush1.bf16.msra.mxu0 0
        %5675 = vmatprep.subr.bf16.mxu0 0
        %5676 = vmatpush1.bf16.msra.mxu0 0
        %5677 = vmatprep.subr.bf16.mxu0 0
        %5678 = vmatpush1.bf16.msra.mxu0 0
        %5679 = vmatprep.subr.bf16.mxu0 0
        %5680 = vmatpush1.bf16.msra.mxu0 0
        %5681 = vmatprep.subr.bf16.mxu0 0
        %5682 = vmatpush1.bf16.msra.mxu0 0
        %5683 = vmatprep.subr.bf16.mxu0 0
        %5684 = vmatpush1.bf16.msra.mxu0 0
        %5685 = vmatprep.subr.bf16.mxu0 0
        %5686 = vmatpush1.bf16.msra.mxu0 0
        %5687 = vmatprep.mubr.bf16.mxu0 0
        %5688 = vmatmul.mubr.bf16.gmra.mrb[0].mxu0 %v1592
        %v5689 = vpop.f32.mrb[0].mxu0
        %v5690 = vadd.f32 0.0, %v5689
        %v5691 = vpop.f32.mrb[0].mxu0
        %v5692 = vpop.f32.mrb[0].mxu0
        %v5693 = vpop.f32.mrb[0].mxu0
        %5694 = vdwg.mxu0
        %v5695 = vpack.c.bf16 %v5690, %v5690
        %v5697 = vsel %vm1430, %v5695, 0
        %5699 = vmatprep.subr.bf16.mxu0 0
        %5700 = vmatpush1.bf16.msra.mxu0 %v5697
        %5701 = vmatprep.subr.bf16.mxu0 0
        %5702 = vmatpush1.bf16.msra.mxu0 0
        %5703 = vmatprep.subr.bf16.mxu0 0
        %5704 = vmatpush1.bf16.msra.mxu0 0
        %5705 = vmatprep.subr.bf16.mxu0 0
        %5706 = vmatpush1.bf16.msra.mxu0 0
        %5707 = vmatprep.subr.bf16.mxu0 0
        %5708 = vmatpush1.bf16.msra.mxu0 0
        %5709 = vmatprep.subr.bf16.mxu0 0
        %5710 = vmatpush1.bf16.msra.mxu0 0
        %5711 = vmatprep.subr.bf16.mxu0 0
        %5712 = vmatpush1.bf16.msra.mxu0 0
        %5713 = vmatprep.subr.bf16.mxu0 0
        %5714 = vmatpush1.bf16.msra.mxu0 0
        %5715 = vmatprep.subr.bf16.mxu0 0
        %5716 = vmatpush1.bf16.msra.mxu0 0
        %5717 = vmatprep.subr.bf16.mxu0 0
        %5718 = vmatpush1.bf16.msra.mxu0 0
        %5719 = vmatprep.subr.bf16.mxu0 0
        %5720 = vmatpush1.bf16.msra.mxu0 0
        %5721 = vmatprep.subr.bf16.mxu0 0
        %5722 = vmatpush1.bf16.msra.mxu0 0
        %5723 = vmatprep.subr.bf16.mxu0 0
        %5724 = vmatpush1.bf16.msra.mxu0 0
        %5725 = vmatprep.subr.bf16.mxu0 0
        %5726 = vmatpush1.bf16.msra.mxu0 0
        %5727 = vmatprep.subr.bf16.mxu0 0
        %5728 = vmatpush1.bf16.msra.mxu0 0
        %5729 = vmatprep.subr.bf16.mxu0 0
        %5730 = vmatpush1.bf16.msra.mxu0 0
        %5731 = vmatprep.mubr.bf16.mxu0 0
        %5732 = vmatmul.mubr.bf16.gmra.mrb[0].mxu0 %v1422
        %v5733 = vpop.f32.mrb[0].mxu0
        %v5734 = vadd.f32 0.0, %v5733
        %v5735 = vpop.f32.mrb[0].mxu0
        %v5736 = vpop.f32.mrb[0].mxu0
        %v5737 = vadd.f32 0.0, %v5736
        %v5738 = vpop.f32.mrb[0].mxu0
        %5739 = vmatprep.mubr.bf16.mxu0 0
        %5740 = vmatmul.mubr.bf16.gmra.mrb[0].mxu0 %v1425
        %v5741 = vpop.f32.mrb[0].mxu0
        %v5742 = vadd.f32 0.0, %v5741
        %v5743 = vpop.f32.mrb[0].mxu0
        %v5744 = vpop.f32.mrb[0].mxu0
        %v5745 = vadd.f32 0.0, %v5744
        %v5746 = vpop.f32.mrb[0].mxu0
        %5747 = vmatprep.mubr.bf16.mxu0 0
        %5748 = vmatmul.mubr.bf16.gmra.mrb[0].mxu0 %v1428
        %v5749 = vpop.f32.mrb[0].mxu0
        %v5750 = vadd.f32 0.0, %v5749
        %v5751 = vpop.f32.mrb[0].mxu0
        %v5752 = vpop.f32.mrb[0].mxu0
        %v5753 = vadd.f32 0.0, %v5752
        %v5754 = vpop.f32.mrb[0].mxu0
        %5755 = vdwg.mxu0
        %v5756 = vmul.f32 %v5734, %v612
        %v5757 = vmul.f32 %v5737, %v613
        %v5758 = vmul.f32 %v5742, %v614
        %v5759 = vmul.f32 %v5745, %v615
        %v5760 = vmul.f32 %v5750, %v616
        %v5761 = vmul.f32 %v5753, %v617
        %v5762 = vpack.c.bf16 %v5357, %v5354
        %v5763 = vpack.c.bf16 %v5365, %v5362
        %v5764 = vpack.c.bf16 %v5373, %v5370
        %v5765 = vpack.c.bf16 %v5381, %v5378
        %v5766 = vpack.c.bf16 %v5757, %v5756
        %v5767 = vpack.c.bf16 %v5759, %v5758
        %v5768 = vpack.c.bf16 %v5761, %v5760
        %v5770 = vsel %vm1050, %v5762, 0
        %v5773 = vsel %vm1050, %v5763, 0
        %v5776 = vsel %vm1050, %v5764, 0
        %v5779 = vsel %vm1050, %v5765, 0
        %v5782 = vsel %vm1050, %v5766, 0
        %v5785 = vsel %vm1050, %v5767, 0
        %v5788 = vsel %vm1050, %v5768, 0
        %5790 = vmatprep.subr.bf16.mxu0 0
        %5791 = vmatpush1.bf16.xpose.msra.mxu0 %v5782
        %5792 = vmatprep.subr.bf16.mxu0 0
        %5793 = vmatpush1.bf16.xpose.msra.mxu0 %v5785
        %5794 = vmatprep.subr.bf16.mxu0 0
        %5795 = vmatpush1.bf16.xpose.msra.mxu0 %v5788
        %5796 = vmatprep.subr.bf16.mxu0 0
        %5797 = vmatpush1.bf16.xpose.msra.mxu0 0
        %5798 = vmatprep.subr.bf16.mxu0 0
        %5799 = vmatpush1.bf16.xpose.msra.mxu0 0
        %5800 = vmatprep.subr.bf16.mxu0 0
        %5801 = vmatpush1.bf16.xpose.msra.mxu0 0
        %5802 = vmatprep.subr.bf16.mxu0 0
        %5803 = vmatpush1.bf16.xpose.msra.mxu0 0
        %5804 = vmatprep.subr.bf16.mxu0 0
        %5805 = vmatpush1.bf16.xpose.msra.mxu0 0
        %5806 = vmatprep.subr.bf16.mxu0 0
        %5807 = vmatpush1.bf16.xpose.msra.mxu0 0
        %5808 = vmatprep.subr.bf16.mxu0 0
        %5809 = vmatpush1.bf16.xpose.msra.mxu0 0
        %5810 = vmatprep.subr.bf16.mxu0 0
        %5811 = vmatpush1.bf16.xpose.msra.mxu0 0
        %5812 = vmatprep.subr.bf16.mxu0 0
        %5813 = vmatpush1.bf16.xpose.msra.mxu0 0
        %5814 = vmatprep.subr.bf16.mxu0 0
        %5815 = vmatpush1.bf16.xpose.msra.mxu0 0
        %5816 = vmatprep.subr.bf16.mxu0 0
        %5817 = vmatpush1.bf16.xpose.msra.mxu0 0
        %5818 = vmatprep.subr.bf16.mxu0 0
        %5819 = vmatpush1.bf16.xpose.msra.mxu0 0
        %5820 = vmatprep.subr.bf16.mxu0 0
        %5821 = vmatpush1.bf16.xpose.msra.mxu0 0
        %5822 = vmatprep.mubr.bf16.mxu0 0
        %5823 = vmatmul.mubr.bf16.gmra.mrb[0].mxu0 %v5770
        %v5824 = vpop.f32.mrb[0].mxu0
        %v5825 = vadd.f32 0.0, %v5824
        %v5826 = vpop.f32.mrb[0].mxu0
        %v5827 = vpop.f32.mrb[0].mxu0
        %v5828 = vadd.f32 0.0, %v5827
        %v5829 = vpop.f32.mrb[0].mxu0
        %5830 = vmatprep.mubr.bf16.mxu0 0
        %5831 = vmatmul.mubr.bf16.gmra.mrb[0].mxu0 %v5773
        %v5832 = vpop.f32.mrb[0].mxu0
        %v5833 = vadd.f32 0.0, %v5832
        %v5834 = vpop.f32.mrb[0].mxu0
        %v5835 = vpop.f32.mrb[0].mxu0
        %v5836 = vadd.f32 0.0, %v5835
        %v5837 = vpop.f32.mrb[0].mxu0
        %5838 = vmatprep.mubr.bf16.mxu0 0
        %5839 = vmatmul.mubr.bf16.gmra.mrb[0].mxu0 %v5776
        %v5840 = vpop.f32.mrb[0].mxu0
        %v5841 = vadd.f32 0.0, %v5840
        %v5842 = vpop.f32.mrb[0].mxu0
        %v5843 = vpop.f32.mrb[0].mxu0
        %v5844 = vadd.f32 0.0, %v5843
        %v5845 = vpop.f32.mrb[0].mxu0
        %5846 = vmatprep.mubr.bf16.mxu0 0
        %5847 = vmatmul.mubr.bf16.gmra.mrb[0].mxu0 %v5779
        %v5848 = vpop.f32.mrb[0].mxu0
        %v5849 = vadd.f32 0.0, %v5848
        %v5850 = vpop.f32.mrb[0].mxu0
        %v5851 = vpop.f32.mrb[0].mxu0
        %v5852 = vadd.f32 0.0, %v5851
        %v5853 = vpop.f32.mrb[0].mxu0
        %5854 = vdwg.mxu0
        %5855 = vmatprep.subr.bf16.mxu0 0
        %5856 = vmatpush1.bf16.msra.mxu0 %v5453
        %5857 = vmatprep.subr.bf16.mxu0 0
        %5858 = vmatpush1.bf16.msra.mxu0 %v5454
        %5859 = vmatprep.subr.bf16.mxu0 0
        %5860 = vmatpush1.bf16.msra.mxu0 0
        %5861 = vmatprep.subr.bf16.mxu0 0
        %5862 = vmatpush1.bf16.msra.mxu0 0
        %5863 = vmatprep.subr.bf16.mxu0 0
        %5864 = vmatpush1.bf16.msra.mxu0 0
        %5865 = vmatprep.subr.bf16.mxu0 0
        %5866 = vmatpush1.bf16.msra.mxu0 0
        %5867 = vmatprep.subr.bf16.mxu0 0
        %5868 = vmatpush1.bf16.msra.mxu0 0
        %5869 = vmatprep.subr.bf16.mxu0 0
        %5870 = vmatpush1.bf16.msra.mxu0 0
        %5871 = vmatprep.subr.bf16.mxu0 0
        %5872 = vmatpush1.bf16.msra.mxu0 0
        %5873 = vmatprep.subr.bf16.mxu0 0
        %5874 = vmatpush1.bf16.msra.mxu0 0
        %5875 = vmatprep.subr.bf16.mxu0 0
        %5876 = vmatpush1.bf16.msra.mxu0 0
        %5877 = vmatprep.subr.bf16.mxu0 0
        %5878 = vmatpush1.bf16.msra.mxu0 0
        %5879 = vmatprep.subr.bf16.mxu0 0
        %5880 = vmatpush1.bf16.msra.mxu0 0
        %5881 = vmatprep.subr.bf16.mxu0 0
        %5882 = vmatpush1.bf16.msra.mxu0 0
        %5883 = vmatprep.subr.bf16.mxu0 0
        %5884 = vmatpush1.bf16.msra.mxu0 0
        %5885 = vmatprep.subr.bf16.mxu0 0
        %5886 = vmatpush1.bf16.msra.mxu0 0
        %5887 = vmatprep.mubr.bf16.mxu0 0
        %5888 = vmatmul.mubr.bf16.gmra.mrb[0].mxu0 %v1796
        %v5889 = vpop.f32.mrb[0].mxu0
        %v5890 = vadd.f32 0.0, %v5889
        %v5891 = vpop.f32.mrb[0].mxu0
        %v5892 = vpop.f32.mrb[0].mxu0
        %v5893 = vpop.f32.mrb[0].mxu0
        %5894 = vdwg.mxu0
        %v5895 = vpack.c.bf16 %v5890, %v5890
        %v5897 = vsel %vm1430, %v5895, 0
        %5899 = vmatprep.subr.bf16.mxu0 0
        %5900 = vmatpush1.bf16.msra.mxu0 %v5897
        %5901 = vmatprep.subr.bf16.mxu0 0
        %5902 = vmatpush1.bf16.msra.mxu0 0
        %5903 = vmatprep.subr.bf16.mxu0 0
        %5904 = vmatpush1.bf16.msra.mxu0 0
        %5905 = vmatprep.subr.bf16.mxu0 0
        %5906 = vmatpush1.bf16.msra.mxu0 0
        %5907 = vmatprep.subr.bf16.mxu0 0
        %5908 = vmatpush1.bf16.msra.mxu0 0
        %5909 = vmatprep.subr.bf16.mxu0 0
        %5910 = vmatpush1.bf16.msra.mxu0 0
        %5911 = vmatprep.subr.bf16.mxu0 0
        %5912 = vmatpush1.bf16.msra.mxu0 0
        %5913 = vmatprep.subr.bf16.mxu0 0
        %5914 = vmatpush1.bf16.msra.mxu0 0
        %5915 = vmatprep.subr.bf16.mxu0 0
        %5916 = vmatpush1.bf16.msra.mxu0 0
        %5917 = vmatprep.subr.bf16.mxu0 0
        %5918 = vmatpush1.bf16.msra.mxu0 0
        %5919 = vmatprep.subr.bf16.mxu0 0
        %5920 = vmatpush1.bf16.msra.mxu0 0
        %5921 = vmatprep.subr.bf16.mxu0 0
        %5922 = vmatpush1.bf16.msra.mxu0 0
        %5923 = vmatprep.subr.bf16.mxu0 0
        %5924 = vmatpush1.bf16.msra.mxu0 0
        %5925 = vmatprep.subr.bf16.mxu0 0
        %5926 = vmatpush1.bf16.msra.mxu0 0
        %5927 = vmatprep.subr.bf16.mxu0 0
        %5928 = vmatpush1.bf16.msra.mxu0 0
        %5929 = vmatprep.subr.bf16.mxu0 0
        %5930 = vmatpush1.bf16.msra.mxu0 0
        %5931 = vmatprep.mubr.bf16.mxu0 0
        %5932 = vmatmul.mubr.bf16.gmra.mrb[0].mxu0 %v1422
        %v5933 = vpop.f32.mrb[0].mxu0
        %v5934 = vadd.f32 0.0, %v5933
        %v5935 = vpop.f32.mrb[0].mxu0
        %v5936 = vpop.f32.mrb[0].mxu0
        %v5937 = vadd.f32 0.0, %v5936
        %v5938 = vpop.f32.mrb[0].mxu0
        %5939 = vmatprep.mubr.bf16.mxu0 0
        %5940 = vmatmul.mubr.bf16.gmra.mrb[0].mxu0 %v1425
        %v5941 = vpop.f32.mrb[0].mxu0
        %v5942 = vadd.f32 0.0, %v5941
        %v5943 = vpop.f32.mrb[0].mxu0
        %v5944 = vpop.f32.mrb[0].mxu0
        %v5945 = vadd.f32 0.0, %v5944
        %v5946 = vpop.f32.mrb[0].mxu0
        %5947 = vmatprep.mubr.bf16.mxu0 0
        %5948 = vmatmul.mubr.bf16.gmra.mrb[0].mxu0 %v1428
        %v5949 = vpop.f32.mrb[0].mxu0
        %v5950 = vadd.f32 0.0, %v5949
        %v5951 = vpop.f32.mrb[0].mxu0
        %v5952 = vpop.f32.mrb[0].mxu0
        %v5953 = vadd.f32 0.0, %v5952
        %v5954 = vpop.f32.mrb[0].mxu0
        %5955 = vdwg.mxu0
        %v5956 = vmul.f32 %v5934, %v612
        %v5957 = vmul.f32 %v5937, %v613
        %v5958 = vmul.f32 %v5942, %v614
        %v5959 = vmul.f32 %v5945, %v615
        %v5960 = vmul.f32 %v5950, %v616
        %v5961 = vmul.f32 %v5953, %v617
        %v5962 = vpack.c.bf16 %v5389, %v5386
        %v5963 = vpack.c.bf16 %v5397, %v5394
        %v5964 = vpack.c.bf16 %v5405, %v5402
        %v5965 = vpack.c.bf16 %v5413, %v5410
        %v5966 = vpack.c.bf16 %v5957, %v5956
        %v5967 = vpack.c.bf16 %v5959, %v5958
        %v5968 = vpack.c.bf16 %v5961, %v5960
        %v5970 = vsel %vm1050, %v5962, 0
        %v5973 = vsel %vm1050, %v5963, 0
        %v5976 = vsel %vm1050, %v5964, 0
        %v5979 = vsel %vm1050, %v5965, 0
        %v5982 = vsel %vm1050, %v5966, 0
        %v5985 = vsel %vm1050, %v5967, 0
        %v5988 = vsel %vm1050, %v5968, 0
        %5990 = vmatprep.subr.bf16.mxu0 0
        %5991 = vmatpush1.bf16.xpose.msra.mxu0 %v5982
        %5992 = vmatprep.subr.bf16.mxu0 0
        %5993 = vmatpush1.bf16.xpose.msra.mxu0 %v5985
        %5994 = vmatprep.subr.bf16.mxu0 0
        %5995 = vmatpush1.bf16.xpose.msra.mxu0 %v5988
        %5996 = vmatprep.subr.bf16.mxu0 0
        %5997 = vmatpush1.bf16.xpose.msra.mxu0 0
        %5998 = vmatprep.subr.bf16.mxu0 0
        %5999 = vmatpush1.bf16.xpose.msra.mxu0 0
        %6000 = vmatprep.subr.bf16.mxu0 0
        %6001 = vmatpush1.bf16.xpose.msra.mxu0 0
        %6002 = vmatprep.subr.bf16.mxu0 0
        %6003 = vmatpush1.bf16.xpose.msra.mxu0 0
        %6004 = vmatprep.subr.bf16.mxu0 0
        %6005 = vmatpush1.bf16.xpose.msra.mxu0 0
        %6006 = vmatprep.subr.bf16.mxu0 0
        %6007 = vmatpush1.bf16.xpose.msra.mxu0 0
        %6008 = vmatprep.subr.bf16.mxu0 0
        %6009 = vmatpush1.bf16.xpose.msra.mxu0 0
        %6010 = vmatprep.subr.bf16.mxu0 0
        %6011 = vmatpush1.bf16.xpose.msra.mxu0 0
        %6012 = vmatprep.subr.bf16.mxu0 0
        %6013 = vmatpush1.bf16.xpose.msra.mxu0 0
        %6014 = vmatprep.subr.bf16.mxu0 0
        %6015 = vmatpush1.bf16.xpose.msra.mxu0 0
        %6016 = vmatprep.subr.bf16.mxu0 0
        %6017 = vmatpush1.bf16.xpose.msra.mxu0 0
        %6018 = vmatprep.subr.bf16.mxu0 0
        %6019 = vmatpush1.bf16.xpose.msra.mxu0 0
        %6020 = vmatprep.subr.bf16.mxu0 0
        %6021 = vmatpush1.bf16.xpose.msra.mxu0 0
        %6022 = vmatprep.mubr.bf16.mxu0 0
        %6023 = vmatmul.mubr.bf16.gmra.mrb[0].mxu0 %v5970
        %v6024 = vpop.f32.mrb[0].mxu0
        %v6025 = vadd.f32 0.0, %v6024
        %v6026 = vpop.f32.mrb[0].mxu0
        %v6027 = vpop.f32.mrb[0].mxu0
        %v6028 = vadd.f32 0.0, %v6027
        %v6029 = vpop.f32.mrb[0].mxu0
        %6030 = vmatprep.mubr.bf16.mxu0 0
        %6031 = vmatmul.mubr.bf16.gmra.mrb[0].mxu0 %v5973
        %v6032 = vpop.f32.mrb[0].mxu0
        %v6033 = vadd.f32 0.0, %v6032
        %v6034 = vpop.f32.mrb[0].mxu0
        %v6035 = vpop.f32.mrb[0].mxu0
        %v6036 = vadd.f32 0.0, %v6035
        %v6037 = vpop.f32.mrb[0].mxu0
        %6038 = vmatprep.mubr.bf16.mxu0 0
        %6039 = vmatmul.mubr.bf16.gmra.mrb[0].mxu0 %v5976
        %v6040 = vpop.f32.mrb[0].mxu0
        %v6041 = vadd.f32 0.0, %v6040
        %v6042 = vpop.f32.mrb[0].mxu0
        %v6043 = vpop.f32.mrb[0].mxu0
        %v6044 = vadd.f32 0.0, %v6043
        %v6045 = vpop.f32.mrb[0].mxu0
        %6046 = vmatprep.mubr.bf16.mxu0 0
        %6047 = vmatmul.mubr.bf16.gmra.mrb[0].mxu0 %v5979
        %v6048 = vpop.f32.mrb[0].mxu0
        %v6049 = vadd.f32 0.0, %v6048
        %v6050 = vpop.f32.mrb[0].mxu0
        %v6051 = vpop.f32.mrb[0].mxu0
        %v6052 = vadd.f32 0.0, %v6051
        %v6053 = vpop.f32.mrb[0].mxu0
        %6054 = vdwg.mxu0
        %6055 = vmatprep.subr.bf16.mxu0 0
        %6056 = vmatpush1.bf16.msra.mxu0 %v5453
        %6057 = vmatprep.subr.bf16.mxu0 0
        %6058 = vmatpush1.bf16.msra.mxu0 %v5454
        %6059 = vmatprep.subr.bf16.mxu0 0
        %6060 = vmatpush1.bf16.msra.mxu0 0
        %6061 = vmatprep.subr.bf16.mxu0 0
        %6062 = vmatpush1.bf16.msra.mxu0 0
        %6063 = vmatprep.subr.bf16.mxu0 0
        %6064 = vmatpush1.bf16.msra.mxu0 0
        %6065 = vmatprep.subr.bf16.mxu0 0
        %6066 = vmatpush1.bf16.msra.mxu0 0
        %6067 = vmatprep.subr.bf16.mxu0 0
        %6068 = vmatpush1.bf16.msra.mxu0 0
        %6069 = vmatprep.subr.bf16.mxu0 0
        %6070 = vmatpush1.bf16.msra.mxu0 0
        %6071 = vmatprep.subr.bf16.mxu0 0
        %6072 = vmatpush1.bf16.msra.mxu0 0
        %6073 = vmatprep.subr.bf16.mxu0 0
        %6074 = vmatpush1.bf16.msra.mxu0 0
        %6075 = vmatprep.subr.bf16.mxu0 0
        %6076 = vmatpush1.bf16.msra.mxu0 0
        %6077 = vmatprep.subr.bf16.mxu0 0
        %6078 = vmatpush1.bf16.msra.mxu0 0
        %6079 = vmatprep.subr.bf16.mxu0 0
        %6080 = vmatpush1.bf16.msra.mxu0 0
        %6081 = vmatprep.subr.bf16.mxu0 0
        %6082 = vmatpush1.bf16.msra.mxu0 0
        %6083 = vmatprep.subr.bf16.mxu0 0
        %6084 = vmatpush1.bf16.msra.mxu0 0
        %6085 = vmatprep.subr.bf16.mxu0 0
        %6086 = vmatpush1.bf16.msra.mxu0 0
        %6087 = vmatprep.mubr.bf16.mxu0 0
        %6088 = vmatmul.mubr.bf16.gmra.mrb[0].mxu0 %v2000
        %v6089 = vpop.f32.mrb[0].mxu0
        %v6090 = vadd.f32 0.0, %v6089
        %v6091 = vpop.f32.mrb[0].mxu0
        %v6092 = vpop.f32.mrb[0].mxu0
        %v6093 = vpop.f32.mrb[0].mxu0
        %6094 = vdwg.mxu0
        %v6095 = vpack.c.bf16 %v6090, %v6090
        %v6097 = vsel %vm1430, %v6095, 0
        %6099 = vmatprep.subr.bf16.mxu0 0
        %6100 = vmatpush1.bf16.msra.mxu0 %v6097
        %6101 = vmatprep.subr.bf16.mxu0 0
        %6102 = vmatpush1.bf16.msra.mxu0 0
        %6103 = vmatprep.subr.bf16.mxu0 0
        %6104 = vmatpush1.bf16.msra.mxu0 0
        %6105 = vmatprep.subr.bf16.mxu0 0
        %6106 = vmatpush1.bf16.msra.mxu0 0
        %6107 = vmatprep.subr.bf16.mxu0 0
        %6108 = vmatpush1.bf16.msra.mxu0 0
        %6109 = vmatprep.subr.bf16.mxu0 0
        %6110 = vmatpush1.bf16.msra.mxu0 0
        %6111 = vmatprep.subr.bf16.mxu0 0
        %6112 = vmatpush1.bf16.msra.mxu0 0
        %6113 = vmatprep.subr.bf16.mxu0 0
        %6114 = vmatpush1.bf16.msra.mxu0 0
        %6115 = vmatprep.subr.bf16.mxu0 0
        %6116 = vmatpush1.bf16.msra.mxu0 0
        %6117 = vmatprep.subr.bf16.mxu0 0
        %6118 = vmatpush1.bf16.msra.mxu0 0
        %6119 = vmatprep.subr.bf16.mxu0 0
        %6120 = vmatpush1.bf16.msra.mxu0 0
        %6121 = vmatprep.subr.bf16.mxu0 0
        %6122 = vmatpush1.bf16.msra.mxu0 0
        %6123 = vmatprep.subr.bf16.mxu0 0
        %6124 = vmatpush1.bf16.msra.mxu0 0
        %6125 = vmatprep.subr.bf16.mxu0 0
        %6126 = vmatpush1.bf16.msra.mxu0 0
        %6127 = vmatprep.subr.bf16.mxu0 0
        %6128 = vmatpush1.bf16.msra.mxu0 0
        %6129 = vmatprep.subr.bf16.mxu0 0
        %6130 = vmatpush1.bf16.msra.mxu0 0
        %6131 = vmatprep.mubr.bf16.mxu0 0
        %6132 = vmatmul.mubr.bf16.gmra.mrb[0].mxu0 %v1422
        %v6133 = vpop.f32.mrb[0].mxu0
        %v6134 = vadd.f32 0.0, %v6133
        %v6135 = vpop.f32.mrb[0].mxu0
        %v6136 = vpop.f32.mrb[0].mxu0
        %v6137 = vadd.f32 0.0, %v6136
        %v6138 = vpop.f32.mrb[0].mxu0
        %6139 = vmatprep.mubr.bf16.mxu0 0
        %6140 = vmatmul.mubr.bf16.gmra.mrb[0].mxu0 %v1425
        %v6141 = vpop.f32.mrb[0].mxu0
        %v6142 = vadd.f32 0.0, %v6141
        %v6143 = vpop.f32.mrb[0].mxu0
        %v6144 = vpop.f32.mrb[0].mxu0
        %v6145 = vadd.f32 0.0, %v6144
        %v6146 = vpop.f32.mrb[0].mxu0
        %6147 = vmatprep.mubr.bf16.mxu0 0
        %6148 = vmatmul.mubr.bf16.gmra.mrb[0].mxu0 %v1428
        %v6149 = vpop.f32.mrb[0].mxu0
        %v6150 = vadd.f32 0.0, %v6149
        %v6151 = vpop.f32.mrb[0].mxu0
        %v6152 = vpop.f32.mrb[0].mxu0
        %v6153 = vadd.f32 0.0, %v6152
        %v6154 = vpop.f32.mrb[0].mxu0
        %6155 = vdwg.mxu0
        %v6156 = vmul.f32 %v6134, %v612
        %v6157 = vmul.f32 %v6137, %v613
        %v6158 = vmul.f32 %v6142, %v614
        %v6159 = vmul.f32 %v6145, %v615
        %v6160 = vmul.f32 %v6150, %v616
        %v6161 = vmul.f32 %v6153, %v617
        %v6162 = vpack.c.bf16 %v5421, %v5418
        %v6163 = vpack.c.bf16 %v5429, %v5426
        %v6164 = vpack.c.bf16 %v5437, %v5434
        %v6165 = vpack.c.bf16 %v5445, %v5442
        %v6166 = vpack.c.bf16 %v6157, %v6156
        %v6167 = vpack.c.bf16 %v6159, %v6158
        %v6168 = vpack.c.bf16 %v6161, %v6160
        %v6170 = vsel %vm1050, %v6162, 0
        %v6173 = vsel %vm1050, %v6163, 0
        %v6176 = vsel %vm1050, %v6164, 0
        %v6179 = vsel %vm1050, %v6165, 0
        %v6182 = vsel %vm1050, %v6166, 0
        %v6185 = vsel %vm1050, %v6167, 0
        %v6188 = vsel %vm1050, %v6168, 0
        %6190 = vmatprep.subr.bf16.mxu0 0
        %6191 = vmatpush1.bf16.xpose.msra.mxu0 %v6182
        %6192 = vmatprep.subr.bf16.mxu0 0
        %6193 = vmatpush1.bf16.xpose.msra.mxu0 %v6185
        %6194 = vmatprep.subr.bf16.mxu0 0
        %6195 = vmatpush1.bf16.xpose.msra.mxu0 %v6188
        %6196 = vmatprep.subr.bf16.mxu0 0
        %6197 = vmatpush1.bf16.xpose.msra.mxu0 0
        %6198 = vmatprep.subr.bf16.mxu0 0
        %6199 = vmatpush1.bf16.xpose.msra.mxu0 0
        %6200 = vmatprep.subr.bf16.mxu0 0
        %6201 = vmatpush1.bf16.xpose.msra.mxu0 0
        %6202 = vmatprep.subr.bf16.mxu0 0
        %6203 = vmatpush1.bf16.xpose.msra.mxu0 0
        %6204 = vmatprep.subr.bf16.mxu0 0
        %6205 = vmatpush1.bf16.xpose.msra.mxu0 0
        %6206 = vmatprep.subr.bf16.mxu0 0
        %6207 = vmatpush1.bf16.xpose.msra.mxu0 0
        %6208 = vmatprep.subr.bf16.mxu0 0
        %6209 = vmatpush1.bf16.xpose.msra.mxu0 0
        %6210 = vmatprep.subr.bf16.mxu0 0
        %6211 = vmatpush1.bf16.xpose.msra.mxu0 0
        %6212 = vmatprep.subr.bf16.mxu0 0
        %6213 = vmatpush1.bf16.xpose.msra.mxu0 0
        %6214 = vmatprep.subr.bf16.mxu0 0
        %6215 = vmatpush1.bf16.xpose.msra.mxu0 0
        %6216 = vmatprep.subr.bf16.mxu0 0
        %6217 = vmatpush1.bf16.xpose.msra.mxu0 0
        %6218 = vmatprep.subr.bf16.mxu0 0
        %6219 = vmatpush1.bf16.xpose.msra.mxu0 0
        %6220 = vmatprep.subr.bf16.mxu0 0
        %6221 = vmatpush1.bf16.xpose.msra.mxu0 0
        %6222 = vmatprep.mubr.bf16.mxu0 0
        %6223 = vmatmul.mubr.bf16.gmra.mrb[0].mxu0 %v6170
        %v6224 = vpop.f32.mrb[0].mxu0
        %v6225 = vadd.f32 0.0, %v6224
        %v6226 = vpop.f32.mrb[0].mxu0
        %v6227 = vpop.f32.mrb[0].mxu0
        %v6228 = vadd.f32 0.0, %v6227
        %v6229 = vpop.f32.mrb[0].mxu0
        %6230 = vmatprep.mubr.bf16.mxu0 0
        %6231 = vmatmul.mubr.bf16.gmra.mrb[0].mxu0 %v6173
        %v6232 = vpop.f32.mrb[0].mxu0
        %v6233 = vadd.f32 0.0, %v6232
        %v6234 = vpop.f32.mrb[0].mxu0
        %v6235 = vpop.f32.mrb[0].mxu0
        %v6236 = vadd.f32 0.0, %v6235
        %v6237 = vpop.f32.mrb[0].mxu0
        %6238 = vmatprep.mubr.bf16.mxu0 0
        %6239 = vmatmul.mubr.bf16.gmra.mrb[0].mxu0 %v6176
        %v6240 = vpop.f32.mrb[0].mxu0
        %v6241 = vadd.f32 0.0, %v6240
        %v6242 = vpop.f32.mrb[0].mxu0
        %v6243 = vpop.f32.mrb[0].mxu0
        %v6244 = vadd.f32 0.0, %v6243
        %v6245 = vpop.f32.mrb[0].mxu0
        %6246 = vmatprep.mubr.bf16.mxu0 0
        %6247 = vmatmul.mubr.bf16.gmra.mrb[0].mxu0 %v6179
        %v6248 = vpop.f32.mrb[0].mxu0
        %v6249 = vadd.f32 0.0, %v6248
        %v6250 = vpop.f32.mrb[0].mxu0
        %v6251 = vpop.f32.mrb[0].mxu0
        %v6252 = vadd.f32 0.0, %v6251
        %v6253 = vpop.f32.mrb[0].mxu0
        %6254 = vdwg.mxu0
        %v6255 = vsel %vm1050, %v5625, -inf
        %6256 = vmax.xlane.f32.xlu0 %v6255
        %v6257 = vpop.xlane.xlu0 %6256
        %v6258 = vsel %vm1050, %v5628, -inf
        %6259 = vmax.xlane.f32.xlu0 %v6258
        %v6260 = vpop.xlane.xlu0 %6259
        %v6261 = vsel %vm1050, %v5633, -inf
        %6262 = vmax.xlane.f32.xlu0 %v6261
        %v6263 = vpop.xlane.xlu0 %6262
        %v6264 = vsel %vm1050, %v5636, -inf
        %6265 = vmax.xlane.f32.xlu0 %v6264
        %v6266 = vpop.xlane.xlu0 %6265
        %v6267 = vsel %vm1050, %v5641, -inf
        %6268 = vmax.xlane.f32.xlu0 %v6267
        %v6269 = vpop.xlane.xlu0 %6268
        %v6270 = vsel %vm1050, %v5644, -inf
        %6271 = vmax.xlane.f32.xlu0 %v6270
        %v6272 = vpop.xlane.xlu0 %6271
        %v6273 = vsel %vm1050, %v5649, -inf
        %6274 = vmax.xlane.f32.xlu0 %v6273
        %v6275 = vpop.xlane.xlu0 %6274
        %v6276 = vsel %vm1050, %v5652, -inf
        %6277 = vmax.xlane.f32.xlu0 %v6276
        %v6278 = vpop.xlane.xlu0 %6277
        %v6279 = vsel %vm1050, %v5825, -inf
        %6280 = vmax.xlane.f32.xlu0 %v6279
        %v6281 = vpop.xlane.xlu0 %6280
        %v6282 = vsel %vm1050, %v5828, -inf
        %6283 = vmax.xlane.f32.xlu0 %v6282
        %v6284 = vpop.xlane.xlu0 %6283
        %v6285 = vsel %vm1050, %v5833, -inf
        %6286 = vmax.xlane.f32.xlu0 %v6285
        %v6287 = vpop.xlane.xlu0 %6286
        %v6288 = vsel %vm1050, %v5836, -inf
        %6289 = vmax.xlane.f32.xlu0 %v6288
        %v6290 = vpop.xlane.xlu0 %6289
        %v6291 = vsel %vm1050, %v5841, -inf
        %6292 = vmax.xlane.f32.xlu0 %v6291
        %v6293 = vpop.xlane.xlu0 %6292
        %v6294 = vsel %vm1050, %v5844, -inf
        %6295 = vmax.xlane.f32.xlu0 %v6294
        %v6296 = vpop.xlane.xlu0 %6295
        %v6297 = vsel %vm1050, %v5849, -inf
        %6298 = vmax.xlane.f32.xlu0 %v6297
        %v6299 = vpop.xlane.xlu0 %6298
        %v6300 = vsel %vm1050, %v5852, -inf
        %6301 = vmax.xlane.f32.xlu0 %v6300
        %v6302 = vpop.xlane.xlu0 %6301
        %v6303 = vsel %vm1050, %v6025, -inf
        %6304 = vmax.xlane.f32.xlu0 %v6303
        %v6305 = vpop.xlane.xlu0 %6304
        %v6306 = vsel %vm1050, %v6028, -inf
        %6307 = vmax.xlane.f32.xlu0 %v6306
        %v6308 = vpop.xlane.xlu0 %6307
        %v6309 = vsel %vm1050, %v6033, -inf
        %6310 = vmax.xlane.f32.xlu0 %v6309
        %v6311 = vpop.xlane.xlu0 %6310
        %v6312 = vsel %vm1050, %v6036, -inf
        %6313 = vmax.xlane.f32.xlu0 %v6312
        %v6314 = vpop.xlane.xlu0 %6313
        %v6315 = vsel %vm1050, %v6041, -inf
        %6316 = vmax.xlane.f32.xlu0 %v6315
        %v6317 = vpop.xlane.xlu0 %6316
        %v6318 = vsel %vm1050, %v6044, -inf
        %6319 = vmax.xlane.f32.xlu0 %v6318
        %v6320 = vpop.xlane.xlu0 %6319
        %v6321 = vsel %vm1050, %v6049, -inf
        %6322 = vmax.xlane.f32.xlu0 %v6321
        %v6323 = vpop.xlane.xlu0 %6322
        %v6324 = vsel %vm1050, %v6052, -inf
        %6325 = vmax.xlane.f32.xlu0 %v6324
        %v6326 = vpop.xlane.xlu0 %6325
        %v6327 = vsel %vm1050, %v6225, -inf
        %6328 = vmax.xlane.f32.xlu0 %v6327
        %v6329 = vpop.xlane.xlu0 %6328
        %v6330 = vsel %vm1050, %v6228, -inf
        %6331 = vmax.xlane.f32.xlu0 %v6330
        %v6332 = vpop.xlane.xlu0 %6331
        %v6333 = vsel %vm1050, %v6233, -inf
        %6334 = vmax.xlane.f32.xlu0 %v6333
        %v6335 = vpop.xlane.xlu0 %6334
        %v6336 = vsel %vm1050, %v6236, -inf
        %6337 = vmax.xlane.f32.xlu0 %v6336
        %v6338 = vpop.xlane.xlu0 %6337
        %v6339 = vsel %vm1050, %v6241, -inf
        %6340 = vmax.xlane.f32.xlu0 %v6339
        %v6341 = vpop.xlane.xlu0 %6340
        %v6342 = vsel %vm1050, %v6244, -inf
        %6343 = vmax.xlane.f32.xlu0 %v6342
        %v6344 = vpop.xlane.xlu0 %6343
        %v6345 = vsel %vm1050, %v6249, -inf
        %6346 = vmax.xlane.f32.xlu0 %v6345
        %v6347 = vpop.xlane.xlu0 %6346
        %v6348 = vsel %vm1050, %v6252, -inf
        %6349 = vmax.xlane.f32.xlu0 %v6348
        %v6350 = vpop.xlane.xlu0 %6349
        %v6351 = vsub.f32 %v5625, %v6257
        %v6352 = vsub.f32 %v5628, %v6260
        %v6353 = vsub.f32 %v5633, %v6263
        %v6354 = vsub.f32 %v5636, %v6266
        %v6355 = vsub.f32 %v5641, %v6269
        %v6356 = vsub.f32 %v5644, %v6272
        %v6357 = vsub.f32 %v5649, %v6275
        %v6358 = vsub.f32 %v5652, %v6278
        %v6359 = vsub.f32 %v5825, %v6281
        %v6360 = vsub.f32 %v5828, %v6284
        %v6361 = vsub.f32 %v5833, %v6287
        %v6362 = vsub.f32 %v5836, %v6290
        %v6363 = vsub.f32 %v5841, %v6293
        %v6364 = vsub.f32 %v5844, %v6296
        %v6365 = vsub.f32 %v5849, %v6299
        %v6366 = vsub.f32 %v5852, %v6302
        %v6367 = vsub.f32 %v6025, %v6305
        %v6368 = vsub.f32 %v6028, %v6308
        %v6369 = vsub.f32 %v6033, %v6311
        %v6370 = vsub.f32 %v6036, %v6314
        %v6371 = vsub.f32 %v6041, %v6317
        %v6372 = vsub.f32 %v6044, %v6320
        %v6373 = vsub.f32 %v6049, %v6323
        %v6374 = vsub.f32 %v6052, %v6326
        %v6375 = vsub.f32 %v6225, %v6329
        %v6376 = vsub.f32 %v6228, %v6332
        %v6377 = vsub.f32 %v6233, %v6335
        %v6378 = vsub.f32 %v6236, %v6338
        %v6379 = vsub.f32 %v6241, %v6341
        %v6380 = vsub.f32 %v6244, %v6344
        %v6381 = vsub.f32 %v6249, %v6347
        %v6382 = vsub.f32 %v6252, %v6350
        %v6383 = vmul.f32 %v6351, 1.442695
        %v6384 = vpow.pop %v6383
        %v6385 = vmul.f32 %v6352, 1.442695
        %v6386 = vpow.pop %v6385
        %v6387 = vmul.f32 %v6353, 1.442695
        %v6388 = vpow.pop %v6387
        %v6389 = vmul.f32 %v6354, 1.442695
        %v6390 = vpow.pop %v6389
        %v6391 = vmul.f32 %v6355, 1.442695
        %v6392 = vpow.pop %v6391
        %v6393 = vmul.f32 %v6356, 1.442695
        %v6394 = vpow.pop %v6393
        %v6395 = vmul.f32 %v6357, 1.442695
        %v6396 = vpow.pop %v6395
        %v6397 = vmul.f32 %v6358, 1.442695
        %v6398 = vpow.pop %v6397
        %v6399 = vmul.f32 %v6359, 1.442695
        %v6400 = vpow.pop %v6399
        %v6401 = vmul.f32 %v6360, 1.442695
        %v6402 = vpow.pop %v6401
        %v6403 = vmul.f32 %v6361, 1.442695
        %v6404 = vpow.pop %v6403
        %v6405 = vmul.f32 %v6362, 1.442695
        %v6406 = vpow.pop %v6405
        %v6407 = vmul.f32 %v6363, 1.442695
        %v6408 = vpow.pop %v6407
        %v6409 = vmul.f32 %v6364, 1.442695
        %v6410 = vpow.pop %v6409
        %v6411 = vmul.f32 %v6365, 1.442695
        %v6412 = vpow.pop %v6411
        %v6413 = vmul.f32 %v6366, 1.442695
        %v6414 = vpow.pop %v6413
        %v6415 = vmul.f32 %v6367, 1.442695
        %v6416 = vpow.pop %v6415
        %v6417 = vmul.f32 %v6368, 1.442695
        %v6418 = vpow.pop %v6417
        %v6419 = vmul.f32 %v6369, 1.442695
        %v6420 = vpow.pop %v6419
        %v6421 = vmul.f32 %v6370, 1.442695
        %v6422 = vpow.pop %v6421
        %v6423 = vmul.f32 %v6371, 1.442695
        %v6424 = vpow.pop %v6423
        %v6425 = vmul.f32 %v6372, 1.442695
        %v6426 = vpow.pop %v6425
        %v6427 = vmul.f32 %v6373, 1.442695
        %v6428 = vpow.pop %v6427
        %v6429 = vmul.f32 %v6374, 1.442695
        %v6430 = vpow.pop %v6429
        %v6431 = vmul.f32 %v6375, 1.442695
        %v6432 = vpow.pop %v6431
        %v6433 = vmul.f32 %v6376, 1.442695
        %v6434 = vpow.pop %v6433
        %v6435 = vmul.f32 %v6377, 1.442695
        %v6436 = vpow.pop %v6435
        %v6437 = vmul.f32 %v6378, 1.442695
        %v6438 = vpow.pop %v6437
        %v6439 = vmul.f32 %v6379, 1.442695
        %v6440 = vpow.pop %v6439
        %v6441 = vmul.f32 %v6380, 1.442695
        %v6442 = vpow.pop %v6441
        %v6443 = vmul.f32 %v6381, 1.442695
        %v6444 = vpow.pop %v6443
        %v6445 = vmul.f32 %v6382, 1.442695
        %v6446 = vpow.pop %v6445
        %v6447 = vpack.c.bf16 %v6386, %v6384
        %v6448 = vpack.c.bf16 %v6390, %v6388
        %v6449 = vpack.c.bf16 %v6394, %v6392
        %v6450 = vpack.c.bf16 %v6398, %v6396
        %v6451 = vpack.c.bf16 %v6402, %v6400
        %v6452 = vpack.c.bf16 %v6406, %v6404
        %v6453 = vpack.c.bf16 %v6410, %v6408
        %v6454 = vpack.c.bf16 %v6414, %v6412
        %v6455 = vpack.c.bf16 %v6418, %v6416
        %v6456 = vpack.c.bf16 %v6422, %v6420
        %v6457 = vpack.c.bf16 %v6426, %v6424
        %v6458 = vpack.c.bf16 %v6430, %v6428
        %v6459 = vpack.c.bf16 %v6434, %v6432
        %v6460 = vpack.c.bf16 %v6438, %v6436
        %v6461 = vpack.c.bf16 %v6442, %v6440
        %v6462 = vpack.c.bf16 %v6446, %v6444
        %v6464 = vsel %vm1050, %v6447, 0
        %v6467 = vsel %vm1050, %v6448, 0
        %v6470 = vsel %vm1050, %v6449, 0
        %v6473 = vsel %vm1050, %v6450, 0
        %v6476 = vsel %vm1050, %v6451, 0
        %v6479 = vsel %vm1050, %v6452, 0
        %v6482 = vsel %vm1050, %v6453, 0
        %v6485 = vsel %vm1050, %v6454, 0
        %v6488 = vsel %vm1050, %v6455, 0
        %v6491 = vsel %vm1050, %v6456, 0
        %v6494 = vsel %vm1050, %v6457, 0
        %v6497 = vsel %vm1050, %v6458, 0
        %v6500 = vsel %vm1050, %v6459, 0
        %v6503 = vsel %vm1050, %v6460, 0
        %v6506 = vsel %vm1050, %v6461, 0
        %v6509 = vsel %vm1050, %v6462, 0
        %6511 = vmatprep.subr.bf16.mxu0 0
        %6512 = vmatpush1.bf16.msra.mxu0 %v2410
        %6513 = vmatprep.subr.bf16.mxu0 0
        %6514 = vmatpush1.bf16.msra.mxu0 %v2411
        %6515 = vmatprep.subr.bf16.mxu0 0
        %6516 = vmatpush1.bf16.msra.mxu0 %v2412
        %6517 = vmatprep.subr.bf16.mxu0 0
        %6518 = vmatpush1.bf16.msra.mxu0 0
        %6519 = vmatprep.subr.bf16.mxu0 0
        %6520 = vmatpush1.bf16.msra.mxu0 0
        %6521 = vmatprep.subr.bf16.mxu0 0
        %6522 = vmatpush1.bf16.msra.mxu0 0
        %6523 = vmatprep.subr.bf16.mxu0 0
        %6524 = vmatpush1.bf16.msra.mxu0 0
        %6525 = vmatprep.subr.bf16.mxu0 0
        %6526 = vmatpush1.bf16.msra.mxu0 0
        %6527 = vmatprep.subr.bf16.mxu0 0
        %6528 = vmatpush1.bf16.msra.mxu0 0
        %6529 = vmatprep.subr.bf16.mxu0 0
        %6530 = vmatpush1.bf16.msra.mxu0 0
        %6531 = vmatprep.subr.bf16.mxu0 0
        %6532 = vmatpush1.bf16.msra.mxu0 0
        %6533 = vmatprep.subr.bf16.mxu0 0
        %6534 = vmatpush1.bf16.msra.mxu0 0
        %6535 = vmatprep.subr.bf16.mxu0 0
        %6536 = vmatpush1.bf16.msra.mxu0 0
        %6537 = vmatprep.subr.bf16.mxu0 0
        %6538 = vmatpush1.bf16.msra.mxu0 0
        %6539 = vmatprep.subr.bf16.mxu0 0
        %6540 = vmatpush1.bf16.msra.mxu0 0
        %6541 = vmatprep.subr.bf16.mxu0 0
        %6542 = vmatpush1.bf16.msra.mxu0 0
        %6543 = vmatprep.mubr.bf16.mxu0 0
        %6544 = vmatmul.mubr.bf16.gmra.mrb[0].mxu0 %v6464
        %v6545 = vpop.f32.mrb[0].mxu0
        %v6546 = vadd.f32 0.0, %v6545
        %v6547 = vpop.f32.mrb[0].mxu0
        %v6548 = vpop.f32.mrb[0].mxu0
        %v6549 = vadd.f32 0.0, %v6548
        %v6550 = vpop.f32.mrb[0].mxu0
        %6551 = vmatprep.mubr.bf16.mxu0 0
        %6552 = vmatmul.mubr.bf16.gmra.mrb[0].mxu0 %v6467
        %v6553 = vpop.f32.mrb[0].mxu0
        %v6554 = vadd.f32 0.0, %v6553
        %v6555 = vpop.f32.mrb[0].mxu0
        %v6556 = vpop.f32.mrb[0].mxu0
        %v6557 = vadd.f32 0.0, %v6556
        %v6558 = vpop.f32.mrb[0].mxu0
        %6559 = vmatprep.mubr.bf16.mxu0 0
        %6560 = vmatmul.mubr.bf16.gmra.mrb[0].mxu0 %v6470
        %v6561 = vpop.f32.mrb[0].mxu0
        %v6562 = vadd.f32 0.0, %v6561
        %v6563 = vpop.f32.mrb[0].mxu0
        %v6564 = vpop.f32.mrb[0].mxu0
        %v6565 = vadd.f32 0.0, %v6564
        %v6566 = vpop.f32.mrb[0].mxu0
        %6567 = vmatprep.mubr.bf16.mxu0 0
        %6568 = vmatmul.mubr.bf16.gmra.mrb[0].mxu0 %v6473
        %v6569 = vpop.f32.mrb[0].mxu0
        %v6570 = vadd.f32 0.0, %v6569
        %v6571 = vpop.f32.mrb[0].mxu0
        %v6572 = vpop.f32.mrb[0].mxu0
        %v6573 = vadd.f32 0.0, %v6572
        %v6574 = vpop.f32.mrb[0].mxu0
        %6575 = vmatprep.mubr.bf16.mxu0 0
        %6576 = vmatmul.mubr.bf16.gmra.mrb[0].mxu0 %v6476
        %v6577 = vpop.f32.mrb[0].mxu0
        %v6578 = vadd.f32 0.0, %v6577
        %v6579 = vpop.f32.mrb[0].mxu0
        %v6580 = vpop.f32.mrb[0].mxu0
        %v6581 = vadd.f32 0.0, %v6580
        %v6582 = vpop.f32.mrb[0].mxu0
        %6583 = vmatprep.mubr.bf16.mxu0 0
        %6584 = vmatmul.mubr.bf16.gmra.mrb[0].mxu0 %v6479
        %v6585 = vpop.f32.mrb[0].mxu0
        %v6586 = vadd.f32 0.0, %v6585
        %v6587 = vpop.f32.mrb[0].mxu0
        %v6588 = vpop.f32.mrb[0].mxu0
        %v6589 = vadd.f32 0.0, %v6588
        %v6590 = vpop.f32.mrb[0].mxu0
        %6591 = vmatprep.mubr.bf16.mxu0 0
        %6592 = vmatmul.mubr.bf16.gmra.mrb[0].mxu0 %v6482
        %v6593 = vpop.f32.mrb[0].mxu0
        %v6594 = vadd.f32 0.0, %v6593
        %v6595 = vpop.f32.mrb[0].mxu0
        %v6596 = vpop.f32.mrb[0].mxu0
        %v6597 = vadd.f32 0.0, %v6596
        %v6598 = vpop.f32.mrb[0].mxu0
        %6599 = vmatprep.mubr.bf16.mxu0 0
        %6600 = vmatmul.mubr.bf16.gmra.mrb[0].mxu0 %v6485
        %v6601 = vpop.f32.mrb[0].mxu0
        %v6602 = vadd.f32 0.0, %v6601
        %v6603 = vpop.f32.mrb[0].mxu0
        %v6604 = vpop.f32.mrb[0].mxu0
        %v6605 = vadd.f32 0.0, %v6604
        %v6606 = vpop.f32.mrb[0].mxu0
        %6607 = vmatprep.mubr.bf16.mxu0 0
        %6608 = vmatmul.mubr.bf16.gmra.mrb[0].mxu0 %v6488
        %v6609 = vpop.f32.mrb[0].mxu0
        %v6610 = vadd.f32 0.0, %v6609
        %v6611 = vpop.f32.mrb[0].mxu0
        %v6612 = vpop.f32.mrb[0].mxu0
        %v6613 = vadd.f32 0.0, %v6612
        %v6614 = vpop.f32.mrb[0].mxu0
        %6615 = vmatprep.mubr.bf16.mxu0 0
        %6616 = vmatmul.mubr.bf16.gmra.mrb[0].mxu0 %v6491
        %v6617 = vpop.f32.mrb[0].mxu0
        %v6618 = vadd.f32 0.0, %v6617
        %v6619 = vpop.f32.mrb[0].mxu0
        %v6620 = vpop.f32.mrb[0].mxu0
        %v6621 = vadd.f32 0.0, %v6620
        %v6622 = vpop.f32.mrb[0].mxu0
        %6623 = vmatprep.mubr.bf16.mxu0 0
        %6624 = vmatmul.mubr.bf16.gmra.mrb[0].mxu0 %v6494
        %v6625 = vpop.f32.mrb[0].mxu0
        %v6626 = vadd.f32 0.0, %v6625
        %v6627 = vpop.f32.mrb[0].mxu0
        %v6628 = vpop.f32.mrb[0].mxu0
        %v6629 = vadd.f32 0.0, %v6628
        %v6630 = vpop.f32.mrb[0].mxu0
        %6631 = vmatprep.mubr.bf16.mxu0 0
        %6632 = vmatmul.mubr.bf16.gmra.mrb[0].mxu0 %v6497
        %v6633 = vpop.f32.mrb[0].mxu0
        %v6634 = vadd.f32 0.0, %v6633
        %v6635 = vpop.f32.mrb[0].mxu0
        %v6636 = vpop.f32.mrb[0].mxu0
        %v6637 = vadd.f32 0.0, %v6636
        %v6638 = vpop.f32.mrb[0].mxu0
        %6639 = vmatprep.mubr.bf16.mxu0 0
        %6640 = vmatmul.mubr.bf16.gmra.mrb[0].mxu0 %v6500
        %v6641 = vpop.f32.mrb[0].mxu0
        %v6642 = vadd.f32 0.0, %v6641
        %v6643 = vpop.f32.mrb[0].mxu0
        %v6644 = vpop.f32.mrb[0].mxu0
        %v6645 = vadd.f32 0.0, %v6644
        %v6646 = vpop.f32.mrb[0].mxu0
        %6647 = vmatprep.mubr.bf16.mxu0 0
        %6648 = vmatmul.mubr.bf16.gmra.mrb[0].mxu0 %v6503
        %v6649 = vpop.f32.mrb[0].mxu0
        %v6650 = vadd.f32 0.0, %v6649
        %v6651 = vpop.f32.mrb[0].mxu0
        %v6652 = vpop.f32.mrb[0].mxu0
        %v6653 = vadd.f32 0.0, %v6652
        %v6654 = vpop.f32.mrb[0].mxu0
        %6655 = vmatprep.mubr.bf16.mxu0 0
        %6656 = vmatmul.mubr.bf16.gmra.mrb[0].mxu0 %v6506
        %v6657 = vpop.f32.mrb[0].mxu0
        %v6658 = vadd.f32 0.0, %v6657
        %v6659 = vpop.f32.mrb[0].mxu0
        %v6660 = vpop.f32.mrb[0].mxu0
        %v6661 = vadd.f32 0.0, %v6660
        %v6662 = vpop.f32.mrb[0].mxu0
        %6663 = vmatprep.mubr.bf16.mxu0 0
        %6664 = vmatmul.mubr.bf16.gmra.mrb[0].mxu0 %v6509
        %v6665 = vpop.f32.mrb[0].mxu0
        %v6666 = vadd.f32 0.0, %v6665
        %v6667 = vpop.f32.mrb[0].mxu0
        %v6668 = vpop.f32.mrb[0].mxu0
        %v6669 = vadd.f32 0.0, %v6668
        %v6670 = vpop.f32.mrb[0].mxu0
        %6671 = vdwg.mxu0
        %v6672 = vmax.f32 %v6546, 1e-30
        %v6673 = vmax.f32 %v6549, 1e-30
        %v6674 = vmax.f32 %v6554, 1e-30
        %v6675 = vmax.f32 %v6557, 1e-30
        %v6676 = vmax.f32 %v6562, 1e-30
        %v6677 = vmax.f32 %v6565, 1e-30
        %v6678 = vmax.f32 %v6570, 1e-30
        %v6679 = vmax.f32 %v6573, 1e-30
        %v6680 = vmax.f32 %v6578, 1e-30
        %v6681 = vmax.f32 %v6581, 1e-30
        %v6682 = vmax.f32 %v6586, 1e-30
        %v6683 = vmax.f32 %v6589, 1e-30
        %v6684 = vmax.f32 %v6594, 1e-30
        %v6685 = vmax.f32 %v6597, 1e-30
        %v6686 = vmax.f32 %v6602, 1e-30
        %v6687 = vmax.f32 %v6605, 1e-30
        %v6688 = vmax.f32 %v6610, 1e-30
        %v6689 = vmax.f32 %v6613, 1e-30
        %v6690 = vmax.f32 %v6618, 1e-30
        %v6691 = vmax.f32 %v6621, 1e-30
        %v6692 = vmax.f32 %v6626, 1e-30
        %v6693 = vmax.f32 %v6629, 1e-30
        %v6694 = vmax.f32 %v6634, 1e-30
        %v6695 = vmax.f32 %v6637, 1e-30
        %v6696 = vmax.f32 %v6642, 1e-30
        %v6697 = vmax.f32 %v6645, 1e-30
        %v6698 = vmax.f32 %v6650, 1e-30
        %v6699 = vmax.f32 %v6653, 1e-30
        %v6700 = vmax.f32 %v6658, 1e-30
        %v6701 = vmax.f32 %v6661, 1e-30
        %v6702 = vmax.f32 %v6666, 1e-30
        %v6703 = vmax.f32 %v6669, 1e-30
        %v6704 = vrcp.pop %v6672
        %v6705 = vrcp.pop %v6673
        %v6706 = vrcp.pop %v6674
        %v6707 = vrcp.pop %v6675
        %v6708 = vrcp.pop %v6676
        %v6709 = vrcp.pop %v6677
        %v6710 = vrcp.pop %v6678
        %v6711 = vrcp.pop %v6679
        %v6712 = vrcp.pop %v6680
        %v6713 = vrcp.pop %v6681
        %v6714 = vrcp.pop %v6682
        %v6715 = vrcp.pop %v6683
        %v6716 = vrcp.pop %v6684
        %v6717 = vrcp.pop %v6685
        %v6718 = vrcp.pop %v6686
        %v6719 = vrcp.pop %v6687
        %v6720 = vrcp.pop %v6688
        %v6721 = vrcp.pop %v6689
        %v6722 = vrcp.pop %v6690
        %v6723 = vrcp.pop %v6691
        %v6724 = vrcp.pop %v6692
        %v6725 = vrcp.pop %v6693
        %v6726 = vrcp.pop %v6694
        %v6727 = vrcp.pop %v6695
        %v6728 = vrcp.pop %v6696
        %v6729 = vrcp.pop %v6697
        %v6730 = vrcp.pop %v6698
        %v6731 = vrcp.pop %v6699
        %v6732 = vrcp.pop %v6700
        %v6733 = vrcp.pop %v6701
        %v6734 = vrcp.pop %v6702
        %v6735 = vrcp.pop %v6703
        %v6736 = vmul.f32 %v6384, %v6704
        %v6737 = vmul.f32 %v6386, %v6705
        %v6738 = vmul.f32 %v6388, %v6706
        %v6739 = vmul.f32 %v6390, %v6707
        %v6740 = vmul.f32 %v6392, %v6708
        %v6741 = vmul.f32 %v6394, %v6709
        %v6742 = vmul.f32 %v6396, %v6710
        %v6743 = vmul.f32 %v6398, %v6711
        %v6744 = vmul.f32 %v6400, %v6712
        %v6745 = vmul.f32 %v6402, %v6713
        %v6746 = vmul.f32 %v6404, %v6714
        %v6747 = vmul.f32 %v6406, %v6715
        %v6748 = vmul.f32 %v6408, %v6716
        %v6749 = vmul.f32 %v6410, %v6717
        %v6750 = vmul.f32 %v6412, %v6718
        %v6751 = vmul.f32 %v6414, %v6719
        %v6752 = vmul.f32 %v6416, %v6720
        %v6753 = vmul.f32 %v6418, %v6721
        %v6754 = vmul.f32 %v6420, %v6722
        %v6755 = vmul.f32 %v6422, %v6723
        %v6756 = vmul.f32 %v6424, %v6724
        %v6757 = vmul.f32 %v6426, %v6725
        %v6758 = vmul.f32 %v6428, %v6726
        %v6759 = vmul.f32 %v6430, %v6727
        %v6760 = vmul.f32 %v6432, %v6728
        %v6761 = vmul.f32 %v6434, %v6729
        %v6762 = vmul.f32 %v6436, %v6730
        %v6763 = vmul.f32 %v6438, %v6731
        %v6764 = vmul.f32 %v6440, %v6732
        %v6765 = vmul.f32 %v6442, %v6733
        %v6766 = vmul.f32 %v6444, %v6734
        %v6767 = vmul.f32 %v6446, %v6735
        %v6768 = vpack.c.bf16 %v6737, %v6736
        %v6769 = vpack.c.bf16 %v6739, %v6738
        %v6770 = vpack.c.bf16 %v6741, %v6740
        %v6771 = vpack.c.bf16 %v6743, %v6742
        %6775 = vrot.lane.b32.xlu0 %v5566, 80
        %v6776 = vpop.permute.xlu0 %6775
        %6777 = vrot.lane.b32.xlu0 %v5567, 80
        %v6778 = vpop.permute.xlu0 %6777
        %6779 = vrot.lane.b32.xlu0 %v5568, 80
        %v6780 = vpop.permute.xlu0 %6779
        %v6785 = vsel %vm1050, %v6768, 0
        %v6788 = vsel %vm1050, %v6769, 0
        %v6791 = vsel %vm1050, %v6770, 0
        %v6794 = vsel %vm1050, %v6771, 0
        %6796 = vmatprep.subr.bf16.mxu0 0
        %6797 = vmatpush1.bf16.msra.mxu0 %v6776
        %6798 = vmatprep.subr.bf16.mxu0 0
        %6799 = vmatpush1.bf16.msra.mxu0 %v6778
        %6800 = vmatprep.subr.bf16.mxu0 0
        %6801 = vmatpush1.bf16.msra.mxu0 %v6780
        %6802 = vmatprep.subr.bf16.mxu0 0
        %6803 = vmatpush1.bf16.msra.mxu0 0
        %6804 = vmatprep.subr.bf16.mxu0 0
        %6805 = vmatpush1.bf16.msra.mxu0 0
        %6806 = vmatprep.subr.bf16.mxu0 0
        %6807 = vmatpush1.bf16.msra.mxu0 0
        %6808 = vmatprep.subr.bf16.mxu0 0
        %6809 = vmatpush1.bf16.msra.mxu0 0
        %6810 = vmatprep.subr.bf16.mxu0 0
        %6811 = vmatpush1.bf16.msra.mxu0 0
        %6812 = vmatprep.subr.bf16.mxu0 0
        %6813 = vmatpush1.bf16.msra.mxu0 0
        %6814 = vmatprep.subr.bf16.mxu0 0
        %6815 = vmatpush1.bf16.msra.mxu0 0
        %6816 = vmatprep.subr.bf16.mxu0 0
        %6817 = vmatpush1.bf16.msra.mxu0 0
        %6818 = vmatprep.subr.bf16.mxu0 0
        %6819 = vmatpush1.bf16.msra.mxu0 0
        %6820 = vmatprep.subr.bf16.mxu0 0
        %6821 = vmatpush1.bf16.msra.mxu0 0
        %6822 = vmatprep.subr.bf16.mxu0 0
        %6823 = vmatpush1.bf16.msra.mxu0 0
        %6824 = vmatprep.subr.bf16.mxu0 0
        %6825 = vmatpush1.bf16.msra.mxu0 0
        %6826 = vmatprep.subr.bf16.mxu0 0
        %6827 = vmatpush1.bf16.msra.mxu0 0
        %6828 = vmatprep.mubr.bf16.mxu0 0
        %6829 = vmatmul.mubr.bf16.gmra.mrb[0].mxu0 %v6785
        %v6830 = vpop.f32.mrb[0].mxu0
        %v6831 = vadd.f32 0.0, %v6830
        %v6832 = vpop.f32.mrb[0].mxu0
        %v6833 = vpop.f32.mrb[0].mxu0
        %v6834 = vadd.f32 0.0, %v6833
        %v6835 = vpop.f32.mrb[0].mxu0
        %6836 = vmatprep.mubr.bf16.mxu0 0
        %6837 = vmatmul.mubr.bf16.gmra.mrb[0].mxu0 %v6788
        %v6838 = vpop.f32.mrb[0].mxu0
        %v6839 = vadd.f32 0.0, %v6838
        %v6840 = vpop.f32.mrb[0].mxu0
        %v6841 = vpop.f32.mrb[0].mxu0
        %v6842 = vadd.f32 0.0, %v6841
        %v6843 = vpop.f32.mrb[0].mxu0
        %6844 = vmatprep.mubr.bf16.mxu0 0
        %6845 = vmatmul.mubr.bf16.gmra.mrb[0].mxu0 %v6791
        %v6846 = vpop.f32.mrb[0].mxu0
        %v6847 = vadd.f32 0.0, %v6846
        %v6848 = vpop.f32.mrb[0].mxu0
        %v6849 = vpop.f32.mrb[0].mxu0
        %v6850 = vadd.f32 0.0, %v6849
        %v6851 = vpop.f32.mrb[0].mxu0
        %6852 = vmatprep.mubr.bf16.mxu0 0
        %6853 = vmatmul.mubr.bf16.gmra.mrb[0].mxu0 %v6794
        %v6854 = vpop.f32.mrb[0].mxu0
        %v6855 = vadd.f32 0.0, %v6854
        %v6856 = vpop.f32.mrb[0].mxu0
        %v6857 = vpop.f32.mrb[0].mxu0
        %v6858 = vadd.f32 0.0, %v6857
        %v6859 = vpop.f32.mrb[0].mxu0
        %6860 = vdwg.mxu0
        %v6861 = vpack.c.bf16 %v6745, %v6744
        %v6862 = vpack.c.bf16 %v6747, %v6746
        %v6863 = vpack.c.bf16 %v6749, %v6748
        %v6864 = vpack.c.bf16 %v6751, %v6750
        %6868 = vrot.lane.b32.xlu0 %v5766, 80
        %v6869 = vpop.permute.xlu0 %6868
        %6870 = vrot.lane.b32.xlu0 %v5767, 80
        %v6871 = vpop.permute.xlu0 %6870
        %6872 = vrot.lane.b32.xlu0 %v5768, 80
        %v6873 = vpop.permute.xlu0 %6872
        %v6878 = vsel %vm1050, %v6861, 0
        %v6881 = vsel %vm1050, %v6862, 0
        %v6884 = vsel %vm1050, %v6863, 0
        %v6887 = vsel %vm1050, %v6864, 0
        %6889 = vmatprep.subr.bf16.mxu0 0
        %6890 = vmatpush1.bf16.msra.mxu0 %v6869
        %6891 = vmatprep.subr.bf16.mxu0 0
        %6892 = vmatpush1.bf16.msra.mxu0 %v6871
        %6893 = vmatprep.subr.bf16.mxu0 0
        %6894 = vmatpush1.bf16.msra.mxu0 %v6873
        %6895 = vmatprep.subr.bf16.mxu0 0
        %6896 = vmatpush1.bf16.msra.mxu0 0
        %6897 = vmatprep.subr.bf16.mxu0 0
        %6898 = vmatpush1.bf16.msra.mxu0 0
        %6899 = vmatprep.subr.bf16.mxu0 0
        %6900 = vmatpush1.bf16.msra.mxu0 0
        %6901 = vmatprep.subr.bf16.mxu0 0
        %6902 = vmatpush1.bf16.msra.mxu0 0
        %6903 = vmatprep.subr.bf16.mxu0 0
        %6904 = vmatpush1.bf16.msra.mxu0 0
        %6905 = vmatprep.subr.bf16.mxu0 0
        %6906 = vmatpush1.bf16.msra.mxu0 0
        %6907 = vmatprep.subr.bf16.mxu0 0
        %6908 = vmatpush1.bf16.msra.mxu0 0
        %6909 = vmatprep.subr.bf16.mxu0 0
        %6910 = vmatpush1.bf16.msra.mxu0 0
        %6911 = vmatprep.subr.bf16.mxu0 0
        %6912 = vmatpush1.bf16.msra.mxu0 0
        %6913 = vmatprep.subr.bf16.mxu0 0
        %6914 = vmatpush1.bf16.msra.mxu0 0
        %6915 = vmatprep.subr.bf16.mxu0 0
        %6916 = vmatpush1.bf16.msra.mxu0 0
        %6917 = vmatprep.subr.bf16.mxu0 0
        %6918 = vmatpush1.bf16.msra.mxu0 0
        %6919 = vmatprep.subr.bf16.mxu0 0
        %6920 = vmatpush1.bf16.msra.mxu0 0
        %6921 = vmatprep.mubr.bf16.mxu0 0
        %6922 = vmatmul.mubr.bf16.gmra.mrb[0].mxu0 %v6878
        %v6923 = vpop.f32.mrb[0].mxu0
        %v6924 = vadd.f32 0.0, %v6923
        %v6925 = vpop.f32.mrb[0].mxu0
        %v6926 = vpop.f32.mrb[0].mxu0
        %v6927 = vadd.f32 0.0, %v6926
        %v6928 = vpop.f32.mrb[0].mxu0
        %6929 = vmatprep.mubr.bf16.mxu0 0
        %6930 = vmatmul.mubr.bf16.gmra.mrb[0].mxu0 %v6881
        %v6931 = vpop.f32.mrb[0].mxu0
        %v6932 = vadd.f32 0.0, %v6931
        %v6933 = vpop.f32.mrb[0].mxu0
        %v6934 = vpop.f32.mrb[0].mxu0
        %v6935 = vadd.f32 0.0, %v6934
        %v6936 = vpop.f32.mrb[0].mxu0
        %6937 = vmatprep.mubr.bf16.mxu0 0
        %6938 = vmatmul.mubr.bf16.gmra.mrb[0].mxu0 %v6884
        %v6939 = vpop.f32.mrb[0].mxu0
        %v6940 = vadd.f32 0.0, %v6939
        %v6941 = vpop.f32.mrb[0].mxu0
        %v6942 = vpop.f32.mrb[0].mxu0
        %v6943 = vadd.f32 0.0, %v6942
        %v6944 = vpop.f32.mrb[0].mxu0
        %6945 = vmatprep.mubr.bf16.mxu0 0
        %6946 = vmatmul.mubr.bf16.gmra.mrb[0].mxu0 %v6887
        %v6947 = vpop.f32.mrb[0].mxu0
        %v6948 = vadd.f32 0.0, %v6947
        %v6949 = vpop.f32.mrb[0].mxu0
        %v6950 = vpop.f32.mrb[0].mxu0
        %v6951 = vadd.f32 0.0, %v6950
        %v6952 = vpop.f32.mrb[0].mxu0
        %6953 = vdwg.mxu0
        %v6954 = vpack.c.bf16 %v6753, %v6752
        %v6955 = vpack.c.bf16 %v6755, %v6754
        %v6956 = vpack.c.bf16 %v6757, %v6756
        %v6957 = vpack.c.bf16 %v6759, %v6758
        %6961 = vrot.lane.b32.xlu0 %v5966, 80
        %v6962 = vpop.permute.xlu0 %6961
        %6963 = vrot.lane.b32.xlu0 %v5967, 80
        %v6964 = vpop.permute.xlu0 %6963
        %6965 = vrot.lane.b32.xlu0 %v5968, 80
        %v6966 = vpop.permute.xlu0 %6965
        %v6971 = vsel %vm1050, %v6954, 0
        %v6974 = vsel %vm1050, %v6955, 0
        %v6977 = vsel %vm1050, %v6956, 0
        %v6980 = vsel %vm1050, %v6957, 0
        %6982 = vmatprep.subr.bf16.mxu0 0
        %6983 = vmatpush1.bf16.msra.mxu0 %v6962
        %6984 = vmatprep.subr.bf16.mxu0 0
        %6985 = vmatpush1.bf16.msra.mxu0 %v6964
        %6986 = vmatprep.subr.bf16.mxu0 0
        %6987 = vmatpush1.bf16.msra.mxu0 %v6966
        %6988 = vmatprep.subr.bf16.mxu0 0
        %6989 = vmatpush1.bf16.msra.mxu0 0
        %6990 = vmatprep.subr.bf16.mxu0 0
        %6991 = vmatpush1.bf16.msra.mxu0 0
        %6992 = vmatprep.subr.bf16.mxu0 0
        %6993 = vmatpush1.bf16.msra.mxu0 0
        %6994 = vmatprep.subr.bf16.mxu0 0
        %6995 = vmatpush1.bf16.msra.mxu0 0
        %6996 = vmatprep.subr.bf16.mxu0 0
        %6997 = vmatpush1.bf16.msra.mxu0 0
        %6998 = vmatprep.subr.bf16.mxu0 0
        %6999 = vmatpush1.bf16.msra.mxu0 0
        %7000 = vmatprep.subr.bf16.mxu0 0
        %7001 = vmatpush1.bf16.msra.mxu0 0
        %7002 = vmatprep.subr.bf16.mxu0 0
        %7003 = vmatpush1.bf16.msra.mxu0 0
        %7004 = vmatprep.subr.bf16.mxu0 0
        %7005 = vmatpush1.bf16.msra.mxu0 0
        %7006 = vmatprep.subr.bf16.mxu0 0
        %7007 = vmatpush1.bf16.msra.mxu0 0
        %7008 = vmatprep.subr.bf16.mxu0 0
        %7009 = vmatpush1.bf16.msra.mxu0 0
        %7010 = vmatprep.subr.bf16.mxu0 0
        %7011 = vmatpush1.bf16.msra.mxu0 0
        %7012 = vmatprep.subr.bf16.mxu0 0
        %7013 = vmatpush1.bf16.msra.mxu0 0
        %7014 = vmatprep.mubr.bf16.mxu0 0
        %7015 = vmatmul.mubr.bf16.gmra.mrb[0].mxu0 %v6971
        %v7016 = vpop.f32.mrb[0].mxu0
        %v7017 = vadd.f32 0.0, %v7016
        %v7018 = vpop.f32.mrb[0].mxu0
        %v7019 = vpop.f32.mrb[0].mxu0
        %v7020 = vadd.f32 0.0, %v7019
        %v7021 = vpop.f32.mrb[0].mxu0
        %7022 = vmatprep.mubr.bf16.mxu0 0
        %7023 = vmatmul.mubr.bf16.gmra.mrb[0].mxu0 %v6974
        %v7024 = vpop.f32.mrb[0].mxu0
        %v7025 = vadd.f32 0.0, %v7024
        %v7026 = vpop.f32.mrb[0].mxu0
        %v7027 = vpop.f32.mrb[0].mxu0
        %v7028 = vadd.f32 0.0, %v7027
        %v7029 = vpop.f32.mrb[0].mxu0
        %7030 = vmatprep.mubr.bf16.mxu0 0
        %7031 = vmatmul.mubr.bf16.gmra.mrb[0].mxu0 %v6977
        %v7032 = vpop.f32.mrb[0].mxu0
        %v7033 = vadd.f32 0.0, %v7032
        %v7034 = vpop.f32.mrb[0].mxu0
        %v7035 = vpop.f32.mrb[0].mxu0
        %v7036 = vadd.f32 0.0, %v7035
        %v7037 = vpop.f32.mrb[0].mxu0
        %7038 = vmatprep.mubr.bf16.mxu0 0
        %7039 = vmatmul.mubr.bf16.gmra.mrb[0].mxu0 %v6980
        %v7040 = vpop.f32.mrb[0].mxu0
        %v7041 = vadd.f32 0.0, %v7040
        %v7042 = vpop.f32.mrb[0].mxu0
        %v7043 = vpop.f32.mrb[0].mxu0
        %v7044 = vadd.f32 0.0, %v7043
        %v7045 = vpop.f32.mrb[0].mxu0
        %7046 = vdwg.mxu0
        %v7047 = vpack.c.bf16 %v6761, %v6760
        %v7048 = vpack.c.bf16 %v6763, %v6762
        %v7049 = vpack.c.bf16 %v6765, %v6764
        %v7050 = vpack.c.bf16 %v6767, %v6766
        %7054 = vrot.lane.b32.xlu0 %v6166, 80
        %v7055 = vpop.permute.xlu0 %7054
        %7056 = vrot.lane.b32.xlu0 %v6167, 80
        %v7057 = vpop.permute.xlu0 %7056
        %7058 = vrot.lane.b32.xlu0 %v6168, 80
        %v7059 = vpop.permute.xlu0 %7058
        %v7064 = vsel %vm1050, %v7047, 0
        %v7067 = vsel %vm1050, %v7048, 0
        %v7070 = vsel %vm1050, %v7049, 0
        %v7073 = vsel %vm1050, %v7050, 0
        %7075 = vmatprep.subr.bf16.mxu0 0
        %7076 = vmatpush1.bf16.msra.mxu0 %v7055
        %7077 = vmatprep.subr.bf16.mxu0 0
        %7078 = vmatpush1.bf16.msra.mxu0 %v7057
        %7079 = vmatprep.subr.bf16.mxu0 0
        %7080 = vmatpush1.bf16.msra.mxu0 %v7059
        %7081 = vmatprep.subr.bf16.mxu0 0
        %7082 = vmatpush1.bf16.msra.mxu0 0
        %7083 = vmatprep.subr.bf16.mxu0 0
        %7084 = vmatpush1.bf16.msra.mxu0 0
        %7085 = vmatprep.subr.bf16.mxu0 0
        %7086 = vmatpush1.bf16.msra.mxu0 0
        %7087 = vmatprep.subr.bf16.mxu0 0
        %7088 = vmatpush1.bf16.msra.mxu0 0
        %7089 = vmatprep.subr.bf16.mxu0 0
        %7090 = vmatpush1.bf16.msra.mxu0 0
        %7091 = vmatprep.subr.bf16.mxu0 0
        %7092 = vmatpush1.bf16.msra.mxu0 0
        %7093 = vmatprep.subr.bf16.mxu0 0
        %7094 = vmatpush1.bf16.msra.mxu0 0
        %7095 = vmatprep.subr.bf16.mxu0 0
        %7096 = vmatpush1.bf16.msra.mxu0 0
        %7097 = vmatprep.subr.bf16.mxu0 0
        %7098 = vmatpush1.bf16.msra.mxu0 0
        %7099 = vmatprep.subr.bf16.mxu0 0
        %7100 = vmatpush1.bf16.msra.mxu0 0
        %7101 = vmatprep.subr.bf16.mxu0 0
        %7102 = vmatpush1.bf16.msra.mxu0 0
        %7103 = vmatprep.subr.bf16.mxu0 0
        %7104 = vmatpush1.bf16.msra.mxu0 0
        %7105 = vmatprep.subr.bf16.mxu0 0
        %7106 = vmatpush1.bf16.msra.mxu0 0
        %7107 = vmatprep.mubr.bf16.mxu0 0
        %7108 = vmatmul.mubr.bf16.gmra.mrb[0].mxu0 %v7064
        %v7109 = vpop.f32.mrb[0].mxu0
        %v7110 = vadd.f32 0.0, %v7109
        %v7111 = vpop.f32.mrb[0].mxu0
        %v7112 = vpop.f32.mrb[0].mxu0
        %v7113 = vadd.f32 0.0, %v7112
        %v7114 = vpop.f32.mrb[0].mxu0
        %7115 = vmatprep.mubr.bf16.mxu0 0
        %7116 = vmatmul.mubr.bf16.gmra.mrb[0].mxu0 %v7067
        %v7117 = vpop.f32.mrb[0].mxu0
        %v7118 = vadd.f32 0.0, %v7117
        %v7119 = vpop.f32.mrb[0].mxu0
        %v7120 = vpop.f32.mrb[0].mxu0
        %v7121 = vadd.f32 0.0, %v7120
        %v7122 = vpop.f32.mrb[0].mxu0
        %7123 = vmatprep.mubr.bf16.mxu0 0
        %7124 = vmatmul.mubr.bf16.gmra.mrb[0].mxu0 %v7070
        %v7125 = vpop.f32.mrb[0].mxu0
        %v7126 = vadd.f32 0.0, %v7125
        %v7127 = vpop.f32.mrb[0].mxu0
        %v7128 = vpop.f32.mrb[0].mxu0
        %v7129 = vadd.f32 0.0, %v7128
        %v7130 = vpop.f32.mrb[0].mxu0
        %7131 = vmatprep.mubr.bf16.mxu0 0
        %7132 = vmatmul.mubr.bf16.gmra.mrb[0].mxu0 %v7073
        %v7133 = vpop.f32.mrb[0].mxu0
        %v7134 = vadd.f32 0.0, %v7133
        %v7135 = vpop.f32.mrb[0].mxu0
        %v7136 = vpop.f32.mrb[0].mxu0
        %v7137 = vadd.f32 0.0, %v7136
        %v7138 = vpop.f32.mrb[0].mxu0
        %7139 = vdwg.mxu0
        %s7140 = scalar_lea.vmem %s6, 48
        %v7141 = vld [vmem:[%s7140] sm:$0xff]
        %v7142 = vld [vmem:[%s7140 + $0x8] sm:$0xff]
        %v7143 = vld [vmem:[%s7140 + $0x10] sm:$0xff]
        %v7144 = vld [vmem:[%s7140 + $0x18] sm:$0xff]
        %v7145 = vld [vmem:[%s7140 + $0x20] sm:$0xff]
        %v7146 = vld [vmem:[%s7140 + $0x28] sm:$0xff]
        %v7147 = vpack.c.bf16 %v6834, %v6831
        %v7148 = vpack.c.bf16 %v6842, %v6839
        %v7149 = vpack.c.bf16 %v6850, %v6847
        %v7150 = vpack.c.bf16 %v6858, %v6855
        %v7151 = vpack.c.bf16 %v6927, %v6924
        %v7152 = vpack.c.bf16 %v6935, %v6932
        %v7153 = vpack.c.bf16 %v6943, %v6940
        %v7154 = vpack.c.bf16 %v6951, %v6948
        %v7155 = vpack.c.bf16 %v7020, %v7017
        %v7156 = vpack.c.bf16 %v7028, %v7025
        %v7157 = vpack.c.bf16 %v7036, %v7033
        %v7158 = vpack.c.bf16 %v7044, %v7041
        %v7159 = vpack.c.bf16 %v7113, %v7110
        %v7160 = vpack.c.bf16 %v7121, %v7118
        %v7161 = vpack.c.bf16 %v7129, %v7126
        %v7162 = vpack.c.bf16 %v7137, %v7134
        %v7163 = vpack.c.bf16 %v7142, %v7141
        %v7164 = vpack.c.bf16 %v7144, %v7143
        %v7165 = vpack.c.bf16 %v7146, %v7145
        %v7167 = vsel %vm1050, %v7147, 0
        %v7170 = vsel %vm1050, %v7148, 0
        %v7173 = vsel %vm1050, %v7149, 0
        %v7176 = vsel %vm1050, %v7150, 0
        %v7179 = vsel %vm1050, %v7151, 0
        %v7182 = vsel %vm1050, %v7152, 0
        %v7185 = vsel %vm1050, %v7153, 0
        %v7188 = vsel %vm1050, %v7154, 0
        %v7191 = vsel %vm1050, %v7155, 0
        %v7194 = vsel %vm1050, %v7156, 0
        %v7197 = vsel %vm1050, %v7157, 0
        %v7200 = vsel %vm1050, %v7158, 0
        %v7203 = vsel %vm1050, %v7159, 0
        %v7206 = vsel %vm1050, %v7160, 0
        %v7209 = vsel %vm1050, %v7161, 0
        %v7212 = vsel %vm1050, %v7162, 0
        %7214 = vmatprep.subr.bf16.mxu0 0
        %7215 = vmatpush1.bf16.msra.mxu0 %v7163
        %7216 = vmatprep.subr.bf16.mxu0 0
        %7217 = vmatpush1.bf16.msra.mxu0 %v7164
        %7218 = vmatprep.subr.bf16.mxu0 0
        %7219 = vmatpush1.bf16.msra.mxu0 %v7165
        %7220 = vmatprep.subr.bf16.mxu0 0
        %7221 = vmatpush1.bf16.msra.mxu0 0
        %7222 = vmatprep.subr.bf16.mxu0 0
        %7223 = vmatpush1.bf16.msra.mxu0 0
        %7224 = vmatprep.subr.bf16.mxu0 0
        %7225 = vmatpush1.bf16.msra.mxu0 0
        %7226 = vmatprep.subr.bf16.mxu0 0
        %7227 = vmatpush1.bf16.msra.mxu0 0
        %7228 = vmatprep.subr.bf16.mxu0 0
        %7229 = vmatpush1.bf16.msra.mxu0 0
        %7230 = vmatprep.subr.bf16.mxu0 0
        %7231 = vmatpush1.bf16.msra.mxu0 0
        %7232 = vmatprep.subr.bf16.mxu0 0
        %7233 = vmatpush1.bf16.msra.mxu0 0
        %7234 = vmatprep.subr.bf16.mxu0 0
        %7235 = vmatpush1.bf16.msra.mxu0 0
        %7236 = vmatprep.subr.bf16.mxu0 0
        %7237 = vmatpush1.bf16.msra.mxu0 0
        %7238 = vmatprep.subr.bf16.mxu0 0
        %7239 = vmatpush1.bf16.msra.mxu0 0
        %7240 = vmatprep.subr.bf16.mxu0 0
        %7241 = vmatpush1.bf16.msra.mxu0 0
        %7242 = vmatprep.subr.bf16.mxu0 0
        %7243 = vmatpush1.bf16.msra.mxu0 0
        %7244 = vmatprep.subr.bf16.mxu0 0
        %7245 = vmatpush1.bf16.msra.mxu0 0
        %7246 = vmatprep.mubr.bf16.mxu0 0
        %7247 = vmatmul.mubr.bf16.gmra.mrb[0].mxu0 %v7167
        %v7248 = vpop.f32.mrb[0].mxu0
        %v7249 = vadd.f32 0.0, %v7248
        %v7250 = vpop.f32.mrb[0].mxu0
        %v7251 = vpop.f32.mrb[0].mxu0
        %v7252 = vadd.f32 0.0, %v7251
        %v7253 = vpop.f32.mrb[0].mxu0
        %7254 = vmatprep.mubr.bf16.mxu0 0
        %7255 = vmatmul.mubr.bf16.gmra.mrb[0].mxu0 %v7170
        %v7256 = vpop.f32.mrb[0].mxu0
        %v7257 = vadd.f32 0.0, %v7256
        %v7258 = vpop.f32.mrb[0].mxu0
        %v7259 = vpop.f32.mrb[0].mxu0
        %v7260 = vadd.f32 0.0, %v7259
        %v7261 = vpop.f32.mrb[0].mxu0
        %7262 = vmatprep.mubr.bf16.mxu0 0
        %7263 = vmatmul.mubr.bf16.gmra.mrb[0].mxu0 %v7173
        %v7264 = vpop.f32.mrb[0].mxu0
        %v7265 = vadd.f32 0.0, %v7264
        %v7266 = vpop.f32.mrb[0].mxu0
        %v7267 = vpop.f32.mrb[0].mxu0
        %v7268 = vadd.f32 0.0, %v7267
        %v7269 = vpop.f32.mrb[0].mxu0
        %7270 = vmatprep.mubr.bf16.mxu0 0
        %7271 = vmatmul.mubr.bf16.gmra.mrb[0].mxu0 %v7176
        %v7272 = vpop.f32.mrb[0].mxu0
        %v7273 = vadd.f32 0.0, %v7272
        %v7274 = vpop.f32.mrb[0].mxu0
        %v7275 = vpop.f32.mrb[0].mxu0
        %v7276 = vadd.f32 0.0, %v7275
        %v7277 = vpop.f32.mrb[0].mxu0
        %7278 = vmatprep.mubr.bf16.mxu0 0
        %7279 = vmatmul.mubr.bf16.gmra.mrb[0].mxu0 %v7179
        %v7280 = vpop.f32.mrb[0].mxu0
        %v7281 = vadd.f32 0.0, %v7280
        %v7282 = vpop.f32.mrb[0].mxu0
        %v7283 = vpop.f32.mrb[0].mxu0
        %v7284 = vadd.f32 0.0, %v7283
        %v7285 = vpop.f32.mrb[0].mxu0
        %7286 = vmatprep.mubr.bf16.mxu0 0
        %7287 = vmatmul.mubr.bf16.gmra.mrb[0].mxu0 %v7182
        %v7288 = vpop.f32.mrb[0].mxu0
        %v7289 = vadd.f32 0.0, %v7288
        %v7290 = vpop.f32.mrb[0].mxu0
        %v7291 = vpop.f32.mrb[0].mxu0
        %v7292 = vadd.f32 0.0, %v7291
        %v7293 = vpop.f32.mrb[0].mxu0
        %7294 = vmatprep.mubr.bf16.mxu0 0
        %7295 = vmatmul.mubr.bf16.gmra.mrb[0].mxu0 %v7185
        %v7296 = vpop.f32.mrb[0].mxu0
        %v7297 = vadd.f32 0.0, %v7296
        %v7298 = vpop.f32.mrb[0].mxu0
        %v7299 = vpop.f32.mrb[0].mxu0
        %v7300 = vadd.f32 0.0, %v7299
        %v7301 = vpop.f32.mrb[0].mxu0
        %7302 = vmatprep.mubr.bf16.mxu0 0
        %7303 = vmatmul.mubr.bf16.gmra.mrb[0].mxu0 %v7188
        %v7304 = vpop.f32.mrb[0].mxu0
        %v7305 = vadd.f32 0.0, %v7304
        %v7306 = vpop.f32.mrb[0].mxu0
        %v7307 = vpop.f32.mrb[0].mxu0
        %v7308 = vadd.f32 0.0, %v7307
        %v7309 = vpop.f32.mrb[0].mxu0
        %7310 = vmatprep.mubr.bf16.mxu0 0
        %7311 = vmatmul.mubr.bf16.gmra.mrb[0].mxu0 %v7191
        %v7312 = vpop.f32.mrb[0].mxu0
        %v7313 = vadd.f32 0.0, %v7312
        %v7314 = vpop.f32.mrb[0].mxu0
        %v7315 = vpop.f32.mrb[0].mxu0
        %v7316 = vadd.f32 0.0, %v7315
        %v7317 = vpop.f32.mrb[0].mxu0
        %7318 = vmatprep.mubr.bf16.mxu0 0
        %7319 = vmatmul.mubr.bf16.gmra.mrb[0].mxu0 %v7194
        %v7320 = vpop.f32.mrb[0].mxu0
        %v7321 = vadd.f32 0.0, %v7320
        %v7322 = vpop.f32.mrb[0].mxu0
        %v7323 = vpop.f32.mrb[0].mxu0
        %v7324 = vadd.f32 0.0, %v7323
        %v7325 = vpop.f32.mrb[0].mxu0
        %7326 = vmatprep.mubr.bf16.mxu0 0
        %7327 = vmatmul.mubr.bf16.gmra.mrb[0].mxu0 %v7197
        %v7328 = vpop.f32.mrb[0].mxu0
        %v7329 = vadd.f32 0.0, %v7328
        %v7330 = vpop.f32.mrb[0].mxu0
        %v7331 = vpop.f32.mrb[0].mxu0
        %v7332 = vadd.f32 0.0, %v7331
        %v7333 = vpop.f32.mrb[0].mxu0
        %7334 = vmatprep.mubr.bf16.mxu0 0
        %7335 = vmatmul.mubr.bf16.gmra.mrb[0].mxu0 %v7200
        %v7336 = vpop.f32.mrb[0].mxu0
        %v7337 = vadd.f32 0.0, %v7336
        %v7338 = vpop.f32.mrb[0].mxu0
        %v7339 = vpop.f32.mrb[0].mxu0
        %v7340 = vadd.f32 0.0, %v7339
        %v7341 = vpop.f32.mrb[0].mxu0
        %7342 = vmatprep.mubr.bf16.mxu0 0
        %7343 = vmatmul.mubr.bf16.gmra.mrb[0].mxu0 %v7203
        %v7344 = vpop.f32.mrb[0].mxu0
        %v7345 = vadd.f32 0.0, %v7344
        %v7346 = vpop.f32.mrb[0].mxu0
        %v7347 = vpop.f32.mrb[0].mxu0
        %v7348 = vadd.f32 0.0, %v7347
        %v7349 = vpop.f32.mrb[0].mxu0
        %7350 = vmatprep.mubr.bf16.mxu0 0
        %7351 = vmatmul.mubr.bf16.gmra.mrb[0].mxu0 %v7206
        %v7352 = vpop.f32.mrb[0].mxu0
        %v7353 = vadd.f32 0.0, %v7352
        %v7354 = vpop.f32.mrb[0].mxu0
        %v7355 = vpop.f32.mrb[0].mxu0
        %v7356 = vadd.f32 0.0, %v7355
        %v7357 = vpop.f32.mrb[0].mxu0
        %7358 = vmatprep.mubr.bf16.mxu0 0
        %7359 = vmatmul.mubr.bf16.gmra.mrb[0].mxu0 %v7209
        %v7360 = vpop.f32.mrb[0].mxu0
        %v7361 = vadd.f32 0.0, %v7360
        %v7362 = vpop.f32.mrb[0].mxu0
        %v7363 = vpop.f32.mrb[0].mxu0
        %v7364 = vadd.f32 0.0, %v7363
        %v7365 = vpop.f32.mrb[0].mxu0
        %7366 = vmatprep.mubr.bf16.mxu0 0
        %7367 = vmatmul.mubr.bf16.gmra.mrb[0].mxu0 %v7212
        %v7368 = vpop.f32.mrb[0].mxu0
        %v7369 = vadd.f32 0.0, %v7368
        %v7370 = vpop.f32.mrb[0].mxu0
        %v7371 = vpop.f32.mrb[0].mxu0
        %v7372 = vadd.f32 0.0, %v7371
        %v7373 = vpop.f32.mrb[0].mxu0
        %7374 = vdwg.mxu0
        %v7375 = vadd.f32 %v4691, %v7249
        %v7376 = vadd.f32 %v4692, %v7252
        %v7377 = vadd.f32 %v4693, %v7257
        %v7378 = vadd.f32 %v4694, %v7260
        %v7379 = vadd.f32 %v4695, %v7265
        %v7380 = vadd.f32 %v4696, %v7268
        %v7381 = vadd.f32 %v4697, %v7273
        %v7382 = vadd.f32 %v4698, %v7276
        %v7383 = vadd.f32 %v4699, %v7281
        %v7384 = vadd.f32 %v4700, %v7284
        %v7385 = vadd.f32 %v4701, %v7289
        %v7386 = vadd.f32 %v4702, %v7292
        %v7387 = vadd.f32 %v4703, %v7297
        %v7388 = vadd.f32 %v4704, %v7300
        %v7389 = vadd.f32 %v4705, %v7305
        %v7390 = vadd.f32 %v4706, %v7308
        %v7391 = vadd.f32 %v4707, %v7313
        %v7392 = vadd.f32 %v4708, %v7316
        %v7393 = vadd.f32 %v4709, %v7321
        %v7394 = vadd.f32 %v4710, %v7324
        %v7395 = vadd.f32 %v4711, %v7329
        %v7396 = vadd.f32 %v4712, %v7332
        %v7397 = vadd.f32 %v4713, %v7337
        %v7398 = vadd.f32 %v4714, %v7340
        %v7399 = vadd.f32 %v4715, %v7345
        %v7400 = vadd.f32 %v4716, %v7348
        %v7401 = vadd.f32 %v4717, %v7353
        %v7402 = vadd.f32 %v4718, %v7356
        %v7403 = vadd.f32 %v4719, %v7361
        %v7404 = vadd.f32 %v4720, %v7364
        %v7405 = vadd.f32 %v4721, %v7369
        %v7406 = vadd.f32 %v4722, %v7372
        %v7407 = vld [vmem:[%s16 + $0xb] sm:$0x1]
        %v7408 = vlaneseq
        %v7409 = vshrl.u32 %v7408, 7
        %v7410 = vsub.s32 0, %v7409
        %v7411 = vrot.slane %v7407, %v7410
        %v7412 = vadd.f32 %v7375, %v7411
        %v7413 = vadd.f32 %v7376, %v7411
        %v7414 = vadd.f32 %v7377, %v7411
        %v7415 = vadd.f32 %v7378, %v7411
        %v7416 = vadd.f32 %v7379, %v7411
        %v7417 = vadd.f32 %v7380, %v7411
        %v7418 = vadd.f32 %v7381, %v7411
        %v7419 = vadd.f32 %v7382, %v7411
        %v7420 = vadd.f32 %v7383, %v7411
        %v7421 = vadd.f32 %v7384, %v7411
        %v7422 = vadd.f32 %v7385, %v7411
        %v7423 = vadd.f32 %v7386, %v7411
        %v7424 = vadd.f32 %v7387, %v7411
        %v7425 = vadd.f32 %v7388, %v7411
        %v7426 = vadd.f32 %v7389, %v7411
        %v7427 = vadd.f32 %v7390, %v7411
        %v7428 = vadd.f32 %v7391, %v7411
        %v7429 = vadd.f32 %v7392, %v7411
        %v7430 = vadd.f32 %v7393, %v7411
        %v7431 = vadd.f32 %v7394, %v7411
        %v7432 = vadd.f32 %v7395, %v7411
        %v7433 = vadd.f32 %v7396, %v7411
        %v7434 = vadd.f32 %v7397, %v7411
        %v7435 = vadd.f32 %v7398, %v7411
        %v7436 = vadd.f32 %v7399, %v7411
        %v7437 = vadd.f32 %v7400, %v7411
        %v7438 = vadd.f32 %v7401, %v7411
        %v7439 = vadd.f32 %v7402, %v7411
        %v7440 = vadd.f32 %v7403, %v7411
        %v7441 = vadd.f32 %v7404, %v7411
        %v7442 = vadd.f32 %v7405, %v7411
        %v7443 = vadd.f32 %v7406, %v7411
        %v7444 = vld [vmem:[%s16 + $0xc] sm:$0x1]
        %v7445 = vld [vmem:[%s16 + $0xd] sm:$0x1]
        %v7446 = vsel %vm1050, %v7412, 0.0
        %7447 = vadd.xlane.f32.xlu0 %v7446
        %v7448 = vpop.xlane.xlu0 %7447
        %v7449 = vsel %vm1050, %v7413, 0.0
        %7450 = vadd.xlane.f32.xlu0 %v7449
        %v7451 = vpop.xlane.xlu0 %7450
        %v7452 = vsel %vm1050, %v7414, 0.0
        %7453 = vadd.xlane.f32.xlu0 %v7452
        %v7454 = vpop.xlane.xlu0 %7453
        %v7455 = vsel %vm1050, %v7415, 0.0
        %7456 = vadd.xlane.f32.xlu0 %v7455
        %v7457 = vpop.xlane.xlu0 %7456
        %v7458 = vsel %vm1050, %v7416, 0.0
        %7459 = vadd.xlane.f32.xlu0 %v7458
        %v7460 = vpop.xlane.xlu0 %7459
        %v7461 = vsel %vm1050, %v7417, 0.0
        %7462 = vadd.xlane.f32.xlu0 %v7461
        %v7463 = vpop.xlane.xlu0 %7462
        %v7464 = vsel %vm1050, %v7418, 0.0
        %7465 = vadd.xlane.f32.xlu0 %v7464
        %v7466 = vpop.xlane.xlu0 %7465
        %v7467 = vsel %vm1050, %v7419, 0.0
        %7468 = vadd.xlane.f32.xlu0 %v7467
        %v7469 = vpop.xlane.xlu0 %7468
        %v7470 = vsel %vm1050, %v7420, 0.0
        %7471 = vadd.xlane.f32.xlu0 %v7470
        %v7472 = vpop.xlane.xlu0 %7471
        %v7473 = vsel %vm1050, %v7421, 0.0
        %7474 = vadd.xlane.f32.xlu0 %v7473
        %v7475 = vpop.xlane.xlu0 %7474
        %v7476 = vsel %vm1050, %v7422, 0.0
        %7477 = vadd.xlane.f32.xlu0 %v7476
        %v7478 = vpop.xlane.xlu0 %7477
        %v7479 = vsel %vm1050, %v7423, 0.0
        %7480 = vadd.xlane.f32.xlu0 %v7479
        %v7481 = vpop.xlane.xlu0 %7480
        %v7482 = vsel %vm1050, %v7424, 0.0
        %7483 = vadd.xlane.f32.xlu0 %v7482
        %v7484 = vpop.xlane.xlu0 %7483
        %v7485 = vsel %vm1050, %v7425, 0.0
        %7486 = vadd.xlane.f32.xlu0 %v7485
        %v7487 = vpop.xlane.xlu0 %7486
        %v7488 = vsel %vm1050, %v7426, 0.0
        %7489 = vadd.xlane.f32.xlu0 %v7488
        %v7490 = vpop.xlane.xlu0 %7489
        %v7491 = vsel %vm1050, %v7427, 0.0
        %7492 = vadd.xlane.f32.xlu0 %v7491
        %v7493 = vpop.xlane.xlu0 %7492
        %v7494 = vsel %vm1050, %v7428, 0.0
        %7495 = vadd.xlane.f32.xlu0 %v7494
        %v7496 = vpop.xlane.xlu0 %7495
        %v7497 = vsel %vm1050, %v7429, 0.0
        %7498 = vadd.xlane.f32.xlu0 %v7497
        %v7499 = vpop.xlane.xlu0 %7498
        %v7500 = vsel %vm1050, %v7430, 0.0
        %7501 = vadd.xlane.f32.xlu0 %v7500
        %v7502 = vpop.xlane.xlu0 %7501
        %v7503 = vsel %vm1050, %v7431, 0.0
        %7504 = vadd.xlane.f32.xlu0 %v7503
        %v7505 = vpop.xlane.xlu0 %7504
        %v7506 = vsel %vm1050, %v7432, 0.0
        %7507 = vadd.xlane.f32.xlu0 %v7506
        %v7508 = vpop.xlane.xlu0 %7507
        %v7509 = vsel %vm1050, %v7433, 0.0
        %7510 = vadd.xlane.f32.xlu0 %v7509
        %v7511 = vpop.xlane.xlu0 %7510
        %v7512 = vsel %vm1050, %v7434, 0.0
        %7513 = vadd.xlane.f32.xlu0 %v7512
        %v7514 = vpop.xlane.xlu0 %7513
        %v7515 = vsel %vm1050, %v7435, 0.0
        %7516 = vadd.xlane.f32.xlu0 %v7515
        %v7517 = vpop.xlane.xlu0 %7516
        %v7518 = vsel %vm1050, %v7436, 0.0
        %7519 = vadd.xlane.f32.xlu0 %v7518
        %v7520 = vpop.xlane.xlu0 %7519
        %v7521 = vsel %vm1050, %v7437, 0.0
        %7522 = vadd.xlane.f32.xlu0 %v7521
        %v7523 = vpop.xlane.xlu0 %7522
        %v7524 = vsel %vm1050, %v7438, 0.0
        %7525 = vadd.xlane.f32.xlu0 %v7524
        %v7526 = vpop.xlane.xlu0 %7525
        %v7527 = vsel %vm1050, %v7439, 0.0
        %7528 = vadd.xlane.f32.xlu0 %v7527
        %v7529 = vpop.xlane.xlu0 %7528
        %v7530 = vsel %vm1050, %v7440, 0.0
        %7531 = vadd.xlane.f32.xlu0 %v7530
        %v7532 = vpop.xlane.xlu0 %7531
        %v7533 = vsel %vm1050, %v7441, 0.0
        %7534 = vadd.xlane.f32.xlu0 %v7533
        %v7535 = vpop.xlane.xlu0 %7534
        %v7536 = vsel %vm1050, %v7442, 0.0
        %7537 = vadd.xlane.f32.xlu0 %v7536
        %v7538 = vpop.xlane.xlu0 %7537
        %v7539 = vsel %vm1050, %v7443, 0.0
        %7540 = vadd.xlane.f32.xlu0 %v7539
        %v7541 = vpop.xlane.xlu0 %7540
        %v7542 = vmul.f32 %v7448, %v1075
        %v7543 = vmul.f32 %v7451, %v1075
        %v7544 = vmul.f32 %v7454, %v1075
        %v7545 = vmul.f32 %v7457, %v1075
        %v7546 = vmul.f32 %v7460, %v1075
        %v7547 = vmul.f32 %v7463, %v1075
        %v7548 = vmul.f32 %v7466, %v1075
        %v7549 = vmul.f32 %v7469, %v1075
        %v7550 = vmul.f32 %v7472, %v1075
        %v7551 = vmul.f32 %v7475, %v1075
        %v7552 = vmul.f32 %v7478, %v1075
        %v7553 = vmul.f32 %v7481, %v1075
        %v7554 = vmul.f32 %v7484, %v1075
        %v7555 = vmul.f32 %v7487, %v1075
        %v7556 = vmul.f32 %v7490, %v1075
        %v7557 = vmul.f32 %v7493, %v1075
        %v7558 = vmul.f32 %v7496, %v1075
        %v7559 = vmul.f32 %v7499, %v1075
        %v7560 = vmul.f32 %v7502, %v1075
        %v7561 = vmul.f32 %v7505, %v1075
        %v7562 = vmul.f32 %v7508, %v1075
        %v7563 = vmul.f32 %v7511, %v1075
        %v7564 = vmul.f32 %v7514, %v1075
        %v7565 = vmul.f32 %v7517, %v1075
        %v7566 = vmul.f32 %v7520, %v1075
        %v7567 = vmul.f32 %v7523, %v1075
        %v7568 = vmul.f32 %v7526, %v1075
        %v7569 = vmul.f32 %v7529, %v1075
        %v7570 = vmul.f32 %v7532, %v1075
        %v7571 = vmul.f32 %v7535, %v1075
        %v7572 = vmul.f32 %v7538, %v1075
        %v7573 = vmul.f32 %v7541, %v1075
        %v7574 = vsub.f32 %v7412, %v7542
        %v7575 = vsub.f32 %v7413, %v7543
        %v7576 = vsub.f32 %v7414, %v7544
        %v7577 = vsub.f32 %v7415, %v7545
        %v7578 = vsub.f32 %v7416, %v7546
        %v7579 = vsub.f32 %v7417, %v7547
        %v7580 = vsub.f32 %v7418, %v7548
        %v7581 = vsub.f32 %v7419, %v7549
        %v7582 = vsub.f32 %v7420, %v7550
        %v7583 = vsub.f32 %v7421, %v7551
        %v7584 = vsub.f32 %v7422, %v7552
        %v7585 = vsub.f32 %v7423, %v7553
        %v7586 = vsub.f32 %v7424, %v7554
        %v7587 = vsub.f32 %v7425, %v7555
        %v7588 = vsub.f32 %v7426, %v7556
        %v7589 = vsub.f32 %v7427, %v7557
        %v7590 = vsub.f32 %v7428, %v7558
        %v7591 = vsub.f32 %v7429, %v7559
        %v7592 = vsub.f32 %v7430, %v7560
        %v7593 = vsub.f32 %v7431, %v7561
        %v7594 = vsub.f32 %v7432, %v7562
        %v7595 = vsub.f32 %v7433, %v7563
        %v7596 = vsub.f32 %v7434, %v7564
        %v7597 = vsub.f32 %v7435, %v7565
        %v7598 = vsub.f32 %v7436, %v7566
        %v7599 = vsub.f32 %v7437, %v7567
        %v7600 = vsub.f32 %v7438, %v7568
        %v7601 = vsub.f32 %v7439, %v7569
        %v7602 = vsub.f32 %v7440, %v7570
        %v7603 = vsub.f32 %v7441, %v7571
        %v7604 = vsub.f32 %v7442, %v7572
        %v7605 = vsub.f32 %v7443, %v7573
        %v7606 = vmul.f32 %v7574, %v7574
        %v7607 = vmul.f32 %v7575, %v7575
        %v7608 = vmul.f32 %v7576, %v7576
        %v7609 = vmul.f32 %v7577, %v7577
        %v7610 = vmul.f32 %v7578, %v7578
        %v7611 = vmul.f32 %v7579, %v7579
        %v7612 = vmul.f32 %v7580, %v7580
        %v7613 = vmul.f32 %v7581, %v7581
        %v7614 = vmul.f32 %v7582, %v7582
        %v7615 = vmul.f32 %v7583, %v7583
        %v7616 = vmul.f32 %v7584, %v7584
        %v7617 = vmul.f32 %v7585, %v7585
        %v7618 = vmul.f32 %v7586, %v7586
        %v7619 = vmul.f32 %v7587, %v7587
        %v7620 = vmul.f32 %v7588, %v7588
        %v7621 = vmul.f32 %v7589, %v7589
        %v7622 = vmul.f32 %v7590, %v7590
        %v7623 = vmul.f32 %v7591, %v7591
        %v7624 = vmul.f32 %v7592, %v7592
        %v7625 = vmul.f32 %v7593, %v7593
        %v7626 = vmul.f32 %v7594, %v7594
        %v7627 = vmul.f32 %v7595, %v7595
        %v7628 = vmul.f32 %v7596, %v7596
        %v7629 = vmul.f32 %v7597, %v7597
        %v7630 = vmul.f32 %v7598, %v7598
        %v7631 = vmul.f32 %v7599, %v7599
        %v7632 = vmul.f32 %v7600, %v7600
        %v7633 = vmul.f32 %v7601, %v7601
        %v7634 = vmul.f32 %v7602, %v7602
        %v7635 = vmul.f32 %v7603, %v7603
        %v7636 = vmul.f32 %v7604, %v7604
        %v7637 = vmul.f32 %v7605, %v7605
        %v7638 = vsel %vm1050, %v7606, 0.0
        %7639 = vadd.xlane.f32.xlu0 %v7638
        %v7640 = vpop.xlane.xlu0 %7639
        %v7641 = vsel %vm1050, %v7607, 0.0
        %7642 = vadd.xlane.f32.xlu0 %v7641
        %v7643 = vpop.xlane.xlu0 %7642
        %v7644 = vsel %vm1050, %v7608, 0.0
        %7645 = vadd.xlane.f32.xlu0 %v7644
        %v7646 = vpop.xlane.xlu0 %7645
        %v7647 = vsel %vm1050, %v7609, 0.0
        %7648 = vadd.xlane.f32.xlu0 %v7647
        %v7649 = vpop.xlane.xlu0 %7648
        %v7650 = vsel %vm1050, %v7610, 0.0
        %7651 = vadd.xlane.f32.xlu0 %v7650
        %v7652 = vpop.xlane.xlu0 %7651
        %v7653 = vsel %vm1050, %v7611, 0.0
        %7654 = vadd.xlane.f32.xlu0 %v7653
        %v7655 = vpop.xlane.xlu0 %7654
        %v7656 = vsel %vm1050, %v7612, 0.0
        %7657 = vadd.xlane.f32.xlu0 %v7656
        %v7658 = vpop.xlane.xlu0 %7657
        %v7659 = vsel %vm1050, %v7613, 0.0
        %7660 = vadd.xlane.f32.xlu0 %v7659
        %v7661 = vpop.xlane.xlu0 %7660
        %v7662 = vsel %vm1050, %v7614, 0.0
        %7663 = vadd.xlane.f32.xlu0 %v7662
        %v7664 = vpop.xlane.xlu0 %7663
        %v7665 = vsel %vm1050, %v7615, 0.0
        %7666 = vadd.xlane.f32.xlu0 %v7665
        %v7667 = vpop.xlane.xlu0 %7666
        %v7668 = vsel %vm1050, %v7616, 0.0
        %7669 = vadd.xlane.f32.xlu0 %v7668
        %v7670 = vpop.xlane.xlu0 %7669
        %v7671 = vsel %vm1050, %v7617, 0.0
        %7672 = vadd.xlane.f32.xlu0 %v7671
        %v7673 = vpop.xlane.xlu0 %7672
        %v7674 = vsel %vm1050, %v7618, 0.0
        %7675 = vadd.xlane.f32.xlu0 %v7674
        %v7676 = vpop.xlane.xlu0 %7675
        %v7677 = vsel %vm1050, %v7619, 0.0
        %7678 = vadd.xlane.f32.xlu0 %v7677
        %v7679 = vpop.xlane.xlu0 %7678
        %v7680 = vsel %vm1050, %v7620, 0.0
        %7681 = vadd.xlane.f32.xlu0 %v7680
        %v7682 = vpop.xlane.xlu0 %7681
        %v7683 = vsel %vm1050, %v7621, 0.0
        %7684 = vadd.xlane.f32.xlu0 %v7683
        %v7685 = vpop.xlane.xlu0 %7684
        %v7686 = vsel %vm1050, %v7622, 0.0
        %7687 = vadd.xlane.f32.xlu0 %v7686
        %v7688 = vpop.xlane.xlu0 %7687
        %v7689 = vsel %vm1050, %v7623, 0.0
        %7690 = vadd.xlane.f32.xlu0 %v7689
        %v7691 = vpop.xlane.xlu0 %7690
        %v7692 = vsel %vm1050, %v7624, 0.0
        %7693 = vadd.xlane.f32.xlu0 %v7692
        %v7694 = vpop.xlane.xlu0 %7693
        %v7695 = vsel %vm1050, %v7625, 0.0
        %7696 = vadd.xlane.f32.xlu0 %v7695
        %v7697 = vpop.xlane.xlu0 %7696
        %v7698 = vsel %vm1050, %v7626, 0.0
        %7699 = vadd.xlane.f32.xlu0 %v7698
        %v7700 = vpop.xlane.xlu0 %7699
        %v7701 = vsel %vm1050, %v7627, 0.0
        %7702 = vadd.xlane.f32.xlu0 %v7701
        %v7703 = vpop.xlane.xlu0 %7702
        %v7704 = vsel %vm1050, %v7628, 0.0
        %7705 = vadd.xlane.f32.xlu0 %v7704
        %v7706 = vpop.xlane.xlu0 %7705
        %v7707 = vsel %vm1050, %v7629, 0.0
        %7708 = vadd.xlane.f32.xlu0 %v7707
        %v7709 = vpop.xlane.xlu0 %7708
        %v7710 = vsel %vm1050, %v7630, 0.0
        %7711 = vadd.xlane.f32.xlu0 %v7710
        %v7712 = vpop.xlane.xlu0 %7711
        %v7713 = vsel %vm1050, %v7631, 0.0
        %7714 = vadd.xlane.f32.xlu0 %v7713
        %v7715 = vpop.xlane.xlu0 %7714
        %v7716 = vsel %vm1050, %v7632, 0.0
        %7717 = vadd.xlane.f32.xlu0 %v7716
        %v7718 = vpop.xlane.xlu0 %7717
        %v7719 = vsel %vm1050, %v7633, 0.0
        %7720 = vadd.xlane.f32.xlu0 %v7719
        %v7721 = vpop.xlane.xlu0 %7720
        %v7722 = vsel %vm1050, %v7634, 0.0
        %7723 = vadd.xlane.f32.xlu0 %v7722
        %v7724 = vpop.xlane.xlu0 %7723
        %v7725 = vsel %vm1050, %v7635, 0.0
        %7726 = vadd.xlane.f32.xlu0 %v7725
        %v7727 = vpop.xlane.xlu0 %7726
        %v7728 = vsel %vm1050, %v7636, 0.0
        %7729 = vadd.xlane.f32.xlu0 %v7728
        %v7730 = vpop.xlane.xlu0 %7729
        %v7731 = vsel %vm1050, %v7637, 0.0
        %7732 = vadd.xlane.f32.xlu0 %v7731
        %v7733 = vpop.xlane.xlu0 %7732
        %v7734 = vmul.f32 %v7640, %v1075
        %v7735 = vmul.f32 %v7643, %v1075
        %v7736 = vmul.f32 %v7646, %v1075
        %v7737 = vmul.f32 %v7649, %v1075
        %v7738 = vmul.f32 %v7652, %v1075
        %v7739 = vmul.f32 %v7655, %v1075
        %v7740 = vmul.f32 %v7658, %v1075
        %v7741 = vmul.f32 %v7661, %v1075
        %v7742 = vmul.f32 %v7664, %v1075
        %v7743 = vmul.f32 %v7667, %v1075
        %v7744 = vmul.f32 %v7670, %v1075
        %v7745 = vmul.f32 %v7673, %v1075
        %v7746 = vmul.f32 %v7676, %v1075
        %v7747 = vmul.f32 %v7679, %v1075
        %v7748 = vmul.f32 %v7682, %v1075
        %v7749 = vmul.f32 %v7685, %v1075
        %v7750 = vmul.f32 %v7688, %v1075
        %v7751 = vmul.f32 %v7691, %v1075
        %v7752 = vmul.f32 %v7694, %v1075
        %v7753 = vmul.f32 %v7697, %v1075
        %v7754 = vmul.f32 %v7700, %v1075
        %v7755 = vmul.f32 %v7703, %v1075
        %v7756 = vmul.f32 %v7706, %v1075
        %v7757 = vmul.f32 %v7709, %v1075
        %v7758 = vmul.f32 %v7712, %v1075
        %v7759 = vmul.f32 %v7715, %v1075
        %v7760 = vmul.f32 %v7718, %v1075
        %v7761 = vmul.f32 %v7721, %v1075
        %v7762 = vmul.f32 %v7724, %v1075
        %v7763 = vmul.f32 %v7727, %v1075
        %v7764 = vmul.f32 %v7730, %v1075
        %v7765 = vmul.f32 %v7733, %v1075
        %v7766 = vadd.f32 %v7734, 1e-05
        %v7767 = vadd.f32 %v7735, 1e-05
        %v7768 = vadd.f32 %v7736, 1e-05
        %v7769 = vadd.f32 %v7737, 1e-05
        %v7770 = vadd.f32 %v7738, 1e-05
        %v7771 = vadd.f32 %v7739, 1e-05
        %v7772 = vadd.f32 %v7740, 1e-05
        %v7773 = vadd.f32 %v7741, 1e-05
        %v7774 = vadd.f32 %v7742, 1e-05
        %v7775 = vadd.f32 %v7743, 1e-05
        %v7776 = vadd.f32 %v7744, 1e-05
        %v7777 = vadd.f32 %v7745, 1e-05
        %v7778 = vadd.f32 %v7746, 1e-05
        %v7779 = vadd.f32 %v7747, 1e-05
        %v7780 = vadd.f32 %v7748, 1e-05
        %v7781 = vadd.f32 %v7749, 1e-05
        %v7782 = vadd.f32 %v7750, 1e-05
        %v7783 = vadd.f32 %v7751, 1e-05
        %v7784 = vadd.f32 %v7752, 1e-05
        %v7785 = vadd.f32 %v7753, 1e-05
        %v7786 = vadd.f32 %v7754, 1e-05
        %v7787 = vadd.f32 %v7755, 1e-05
        %v7788 = vadd.f32 %v7756, 1e-05
        %v7789 = vadd.f32 %v7757, 1e-05
        %v7790 = vadd.f32 %v7758, 1e-05
        %v7791 = vadd.f32 %v7759, 1e-05
        %v7792 = vadd.f32 %v7760, 1e-05
        %v7793 = vadd.f32 %v7761, 1e-05
        %v7794 = vadd.f32 %v7762, 1e-05
        %v7795 = vadd.f32 %v7763, 1e-05
        %v7796 = vadd.f32 %v7764, 1e-05
        %v7797 = vadd.f32 %v7765, 1e-05
        %v7798 = vrsqrt.pop %v7766
        %v7799 = vrsqrt.pop %v7767
        %v7800 = vrsqrt.pop %v7768
        %v7801 = vrsqrt.pop %v7769
        %v7802 = vrsqrt.pop %v7770
        %v7803 = vrsqrt.pop %v7771
        %v7804 = vrsqrt.pop %v7772
        %v7805 = vrsqrt.pop %v7773
        %v7806 = vrsqrt.pop %v7774
        %v7807 = vrsqrt.pop %v7775
        %v7808 = vrsqrt.pop %v7776
        %v7809 = vrsqrt.pop %v7777
        %v7810 = vrsqrt.pop %v7778
        %v7811 = vrsqrt.pop %v7779
        %v7812 = vrsqrt.pop %v7780
        %v7813 = vrsqrt.pop %v7781
        %v7814 = vrsqrt.pop %v7782
        %v7815 = vrsqrt.pop %v7783
        %v7816 = vrsqrt.pop %v7784
        %v7817 = vrsqrt.pop %v7785
        %v7818 = vrsqrt.pop %v7786
        %v7819 = vrsqrt.pop %v7787
        %v7820 = vrsqrt.pop %v7788
        %v7821 = vrsqrt.pop %v7789
        %v7822 = vrsqrt.pop %v7790
        %v7823 = vrsqrt.pop %v7791
        %v7824 = vrsqrt.pop %v7792
        %v7825 = vrsqrt.pop %v7793
        %v7826 = vrsqrt.pop %v7794
        %v7827 = vrsqrt.pop %v7795
        %v7828 = vrsqrt.pop %v7796
        %v7829 = vrsqrt.pop %v7797
        %v7830 = vmul.f32 %v7574, %v7798
        %v7831 = vmul.f32 %v7575, %v7799
        %v7832 = vmul.f32 %v7576, %v7800
        %v7833 = vmul.f32 %v7577, %v7801
        %v7834 = vmul.f32 %v7578, %v7802
        %v7835 = vmul.f32 %v7579, %v7803
        %v7836 = vmul.f32 %v7580, %v7804
        %v7837 = vmul.f32 %v7581, %v7805
        %v7838 = vmul.f32 %v7582, %v7806
        %v7839 = vmul.f32 %v7583, %v7807
        %v7840 = vmul.f32 %v7584, %v7808
        %v7841 = vmul.f32 %v7585, %v7809
        %v7842 = vmul.f32 %v7586, %v7810
        %v7843 = vmul.f32 %v7587, %v7811
        %v7844 = vmul.f32 %v7588, %v7812
        %v7845 = vmul.f32 %v7589, %v7813
        %v7846 = vmul.f32 %v7590, %v7814
        %v7847 = vmul.f32 %v7591, %v7815
        %v7848 = vmul.f32 %v7592, %v7816
        %v7849 = vmul.f32 %v7593, %v7817
        %v7850 = vmul.f32 %v7594, %v7818
        %v7851 = vmul.f32 %v7595, %v7819
        %v7852 = vmul.f32 %v7596, %v7820
        %v7853 = vmul.f32 %v7597, %v7821
        %v7854 = vmul.f32 %v7598, %v7822
        %v7855 = vmul.f32 %v7599, %v7823
        %v7856 = vmul.f32 %v7600, %v7824
        %v7857 = vmul.f32 %v7601, %v7825
        %v7858 = vmul.f32 %v7602, %v7826
        %v7859 = vmul.f32 %v7603, %v7827
        %v7860 = vmul.f32 %v7604, %v7828
        %v7861 = vmul.f32 %v7605, %v7829
        %v7862 = vlaneseq
        %v7863 = vshrl.u32 %v7862, 7
        %v7864 = vsub.s32 0, %v7863
        %v7865 = vrot.slane %v7444, %v7864
        %v7866 = vmul.f32 %v7830, %v7865
        %v7867 = vmul.f32 %v7831, %v7865
        %v7868 = vmul.f32 %v7832, %v7865
        %v7869 = vmul.f32 %v7833, %v7865
        %v7870 = vmul.f32 %v7834, %v7865
        %v7871 = vmul.f32 %v7835, %v7865
        %v7872 = vmul.f32 %v7836, %v7865
        %v7873 = vmul.f32 %v7837, %v7865
        %v7874 = vmul.f32 %v7838, %v7865
        %v7875 = vmul.f32 %v7839, %v7865
        %v7876 = vmul.f32 %v7840, %v7865
        %v7877 = vmul.f32 %v7841, %v7865
        %v7878 = vmul.f32 %v7842, %v7865
        %v7879 = vmul.f32 %v7843, %v7865
        %v7880 = vmul.f32 %v7844, %v7865
        %v7881 = vmul.f32 %v7845, %v7865
        %v7882 = vmul.f32 %v7846, %v7865
        %v7883 = vmul.f32 %v7847, %v7865
        %v7884 = vmul.f32 %v7848, %v7865
        %v7885 = vmul.f32 %v7849, %v7865
        %v7886 = vmul.f32 %v7850, %v7865
        %v7887 = vmul.f32 %v7851, %v7865
        %v7888 = vmul.f32 %v7852, %v7865
        %v7889 = vmul.f32 %v7853, %v7865
        %v7890 = vmul.f32 %v7854, %v7865
        %v7891 = vmul.f32 %v7855, %v7865
        %v7892 = vmul.f32 %v7856, %v7865
        %v7893 = vmul.f32 %v7857, %v7865
        %v7894 = vmul.f32 %v7858, %v7865
        %v7895 = vmul.f32 %v7859, %v7865
        %v7896 = vmul.f32 %v7860, %v7865
        %v7897 = vmul.f32 %v7861, %v7865
        %v7898 = vlaneseq
        %v7899 = vshrl.u32 %v7898, 7
        %v7900 = vsub.s32 0, %v7899
        %v7901 = vrot.slane %v7445, %v7900
        %v7902 = vadd.f32 %v7866, %v7901
        %v7903 = vadd.f32 %v7867, %v7901
        %v7904 = vadd.f32 %v7868, %v7901
        %v7905 = vadd.f32 %v7869, %v7901
        %v7906 = vadd.f32 %v7870, %v7901
        %v7907 = vadd.f32 %v7871, %v7901
        %v7908 = vadd.f32 %v7872, %v7901
        %v7909 = vadd.f32 %v7873, %v7901
        %v7910 = vadd.f32 %v7874, %v7901
        %v7911 = vadd.f32 %v7875, %v7901
        %v7912 = vadd.f32 %v7876, %v7901
        %v7913 = vadd.f32 %v7877, %v7901
        %v7914 = vadd.f32 %v7878, %v7901
        %v7915 = vadd.f32 %v7879, %v7901
        %v7916 = vadd.f32 %v7880, %v7901
        %v7917 = vadd.f32 %v7881, %v7901
        %v7918 = vadd.f32 %v7882, %v7901
        %v7919 = vadd.f32 %v7883, %v7901
        %v7920 = vadd.f32 %v7884, %v7901
        %v7921 = vadd.f32 %v7885, %v7901
        %v7922 = vadd.f32 %v7886, %v7901
        %v7923 = vadd.f32 %v7887, %v7901
        %v7924 = vadd.f32 %v7888, %v7901
        %v7925 = vadd.f32 %v7889, %v7901
        %v7926 = vadd.f32 %v7890, %v7901
        %v7927 = vadd.f32 %v7891, %v7901
        %v7928 = vadd.f32 %v7892, %v7901
        %v7929 = vadd.f32 %v7893, %v7901
        %v7930 = vadd.f32 %v7894, %v7901
        %v7931 = vadd.f32 %v7895, %v7901
        %v7932 = vadd.f32 %v7896, %v7901
        %v7933 = vadd.f32 %v7897, %v7901
        %s7934 = scalar_lea.vmem %s7, 48
        %v7935 = vld [vmem:[%s7934] sm:$0xff]
        %v7936 = vld [vmem:[%s7934 + $0x8] sm:$0xff]
        %v7937 = vld [vmem:[%s7934 + $0x10] sm:$0xff]
        %v7938 = vld [vmem:[%s7934 + $0x18] sm:$0xff]
        %v7939 = vld [vmem:[%s7934 + $0x20] sm:$0xff]
        %v7940 = vld [vmem:[%s7934 + $0x28] sm:$0xff]
        %v7941 = vpack.c.bf16 %v7903, %v7902
        %v7942 = vpack.c.bf16 %v7905, %v7904
        %v7943 = vpack.c.bf16 %v7907, %v7906
        %v7944 = vpack.c.bf16 %v7909, %v7908
        %v7945 = vpack.c.bf16 %v7911, %v7910
        %v7946 = vpack.c.bf16 %v7913, %v7912
        %v7947 = vpack.c.bf16 %v7915, %v7914
        %v7948 = vpack.c.bf16 %v7917, %v7916
        %v7949 = vpack.c.bf16 %v7919, %v7918
        %v7950 = vpack.c.bf16 %v7921, %v7920
        %v7951 = vpack.c.bf16 %v7923, %v7922
        %v7952 = vpack.c.bf16 %v7925, %v7924
        %v7953 = vpack.c.bf16 %v7927, %v7926
        %v7954 = vpack.c.bf16 %v7929, %v7928
        %v7955 = vpack.c.bf16 %v7931, %v7930
        %v7956 = vpack.c.bf16 %v7933, %v7932
        %v7957 = vpack.c.bf16 %v7936, %v7935
        %v7958 = vpack.c.bf16 %v7938, %v7937
        %v7959 = vpack.c.bf16 %v7940, %v7939
        %v7960 = vld [vmem:[%s16 + $0xe] sm:$0x1]
        %v7961 = vlaneseq
        %v7962 = vshrl.u32 %v7961, 7
        %v7963 = vsub.s32 0, %v7962
        %v7964 = vrot.slane %v7960, %v7963
        %v7966 = vsel %vm1050, %v7941, 0
        %v7969 = vsel %vm1050, %v7942, 0
        %v7972 = vsel %vm1050, %v7943, 0
        %v7975 = vsel %vm1050, %v7944, 0
        %v7978 = vsel %vm1050, %v7945, 0
        %v7981 = vsel %vm1050, %v7946, 0
        %v7984 = vsel %vm1050, %v7947, 0
        %v7987 = vsel %vm1050, %v7948, 0
        %v7990 = vsel %vm1050, %v7949, 0
        %v7993 = vsel %vm1050, %v7950, 0
        %v7996 = vsel %vm1050, %v7951, 0
        %v7999 = vsel %vm1050, %v7952, 0
        %v8002 = vsel %vm1050, %v7953, 0
        %v8005 = vsel %vm1050, %v7954, 0
        %v8008 = vsel %vm1050, %v7955, 0
        %v8011 = vsel %vm1050, %v7956, 0
        %8013 = vmatprep.subr.bf16.mxu0 0
        %8014 = vmatpush1.bf16.msra.mxu0 %v7957
        %8015 = vmatprep.subr.bf16.mxu0 0
        %8016 = vmatpush1.bf16.msra.mxu0 %v7958
        %8017 = vmatprep.subr.bf16.mxu0 0
        %8018 = vmatpush1.bf16.msra.mxu0 %v7959
        %8019 = vmatprep.subr.bf16.mxu0 0
        %8020 = vmatpush1.bf16.msra.mxu0 0
        %8021 = vmatprep.subr.bf16.mxu0 0
        %8022 = vmatpush1.bf16.msra.mxu0 0
        %8023 = vmatprep.subr.bf16.mxu0 0
        %8024 = vmatpush1.bf16.msra.mxu0 0
        %8025 = vmatprep.subr.bf16.mxu0 0
        %8026 = vmatpush1.bf16.msra.mxu0 0
        %8027 = vmatprep.subr.bf16.mxu0 0
        %8028 = vmatpush1.bf16.msra.mxu0 0
        %8029 = vmatprep.subr.bf16.mxu0 0
        %8030 = vmatpush1.bf16.msra.mxu0 0
        %8031 = vmatprep.subr.bf16.mxu0 0
        %8032 = vmatpush1.bf16.msra.mxu0 0
        %8033 = vmatprep.subr.bf16.mxu0 0
        %8034 = vmatpush1.bf16.msra.mxu0 0
        %8035 = vmatprep.subr.bf16.mxu0 0
        %8036 = vmatpush1.bf16.msra.mxu0 0
        %8037 = vmatprep.subr.bf16.mxu0 0
        %8038 = vmatpush1.bf16.msra.mxu0 0
        %8039 = vmatprep.subr.bf16.mxu0 0
        %8040 = vmatpush1.bf16.msra.mxu0 0
        %8041 = vmatprep.subr.bf16.mxu0 0
        %8042 = vmatpush1.bf16.msra.mxu0 0
        %8043 = vmatprep.subr.bf16.mxu0 0
        %8044 = vmatpush1.bf16.msra.mxu0 0
        %8045 = vmatprep.mubr.bf16.mxu0 0
        %8046 = vmatmul.mubr.bf16.gmra.mrb[0].mxu0 %v7966
        %v8047 = vpop.f32.mrb[0].mxu0
        %v8048 = vadd.f32 %v7964, %v8047
        %v8049 = vpop.f32.mrb[0].mxu0
        %v8050 = vpop.f32.mrb[0].mxu0
        %v8051 = vadd.f32 %v7964, %v8050
        %v8052 = vpop.f32.mrb[0].mxu0
        %8053 = vmatprep.mubr.bf16.mxu0 0
        %8054 = vmatmul.mubr.bf16.gmra.mrb[0].mxu0 %v7969
        %v8055 = vpop.f32.mrb[0].mxu0
        %v8056 = vadd.f32 %v7964, %v8055
        %v8057 = vpop.f32.mrb[0].mxu0
        %v8058 = vpop.f32.mrb[0].mxu0
        %v8059 = vadd.f32 %v7964, %v8058
        %v8060 = vpop.f32.mrb[0].mxu0
        %8061 = vmatprep.mubr.bf16.mxu0 0
        %8062 = vmatmul.mubr.bf16.gmra.mrb[0].mxu0 %v7972
        %v8063 = vpop.f32.mrb[0].mxu0
        %v8064 = vadd.f32 %v7964, %v8063
        %v8065 = vpop.f32.mrb[0].mxu0
        %v8066 = vpop.f32.mrb[0].mxu0
        %v8067 = vadd.f32 %v7964, %v8066
        %v8068 = vpop.f32.mrb[0].mxu0
        %8069 = vmatprep.mubr.bf16.mxu0 0
        %8070 = vmatmul.mubr.bf16.gmra.mrb[0].mxu0 %v7975
        %v8071 = vpop.f32.mrb[0].mxu0
        %v8072 = vadd.f32 %v7964, %v8071
        %v8073 = vpop.f32.mrb[0].mxu0
        %v8074 = vpop.f32.mrb[0].mxu0
        %v8075 = vadd.f32 %v7964, %v8074
        %v8076 = vpop.f32.mrb[0].mxu0
        %8077 = vmatprep.mubr.bf16.mxu0 0
        %8078 = vmatmul.mubr.bf16.gmra.mrb[0].mxu0 %v7978
        %v8079 = vpop.f32.mrb[0].mxu0
        %v8080 = vadd.f32 %v7964, %v8079
        %v8081 = vpop.f32.mrb[0].mxu0
        %v8082 = vpop.f32.mrb[0].mxu0
        %v8083 = vadd.f32 %v7964, %v8082
        %v8084 = vpop.f32.mrb[0].mxu0
        %8085 = vmatprep.mubr.bf16.mxu0 0
        %8086 = vmatmul.mubr.bf16.gmra.mrb[0].mxu0 %v7981
        %v8087 = vpop.f32.mrb[0].mxu0
        %v8088 = vadd.f32 %v7964, %v8087
        %v8089 = vpop.f32.mrb[0].mxu0
        %v8090 = vpop.f32.mrb[0].mxu0
        %v8091 = vadd.f32 %v7964, %v8090
        %v8092 = vpop.f32.mrb[0].mxu0
        %8093 = vmatprep.mubr.bf16.mxu0 0
        %8094 = vmatmul.mubr.bf16.gmra.mrb[0].mxu0 %v7984
        %v8095 = vpop.f32.mrb[0].mxu0
        %v8096 = vadd.f32 %v7964, %v8095
        %v8097 = vpop.f32.mrb[0].mxu0
        %v8098 = vpop.f32.mrb[0].mxu0
        %v8099 = vadd.f32 %v7964, %v8098
        %v8100 = vpop.f32.mrb[0].mxu0
        %8101 = vmatprep.mubr.bf16.mxu0 0
        %8102 = vmatmul.mubr.bf16.gmra.mrb[0].mxu0 %v7987
        %v8103 = vpop.f32.mrb[0].mxu0
        %v8104 = vadd.f32 %v7964, %v8103
        %v8105 = vpop.f32.mrb[0].mxu0
        %v8106 = vpop.f32.mrb[0].mxu0
        %v8107 = vadd.f32 %v7964, %v8106
        %v8108 = vpop.f32.mrb[0].mxu0
        %8109 = vmatprep.mubr.bf16.mxu0 0
        %8110 = vmatmul.mubr.bf16.gmra.mrb[0].mxu0 %v7990
        %v8111 = vpop.f32.mrb[0].mxu0
        %v8112 = vadd.f32 %v7964, %v8111
        %v8113 = vpop.f32.mrb[0].mxu0
        %v8114 = vpop.f32.mrb[0].mxu0
        %v8115 = vadd.f32 %v7964, %v8114
        %v8116 = vpop.f32.mrb[0].mxu0
        %8117 = vmatprep.mubr.bf16.mxu0 0
        %8118 = vmatmul.mubr.bf16.gmra.mrb[0].mxu0 %v7993
        %v8119 = vpop.f32.mrb[0].mxu0
        %v8120 = vadd.f32 %v7964, %v8119
        %v8121 = vpop.f32.mrb[0].mxu0
        %v8122 = vpop.f32.mrb[0].mxu0
        %v8123 = vadd.f32 %v7964, %v8122
        %v8124 = vpop.f32.mrb[0].mxu0
        %8125 = vmatprep.mubr.bf16.mxu0 0
        %8126 = vmatmul.mubr.bf16.gmra.mrb[0].mxu0 %v7996
        %v8127 = vpop.f32.mrb[0].mxu0
        %v8128 = vadd.f32 %v7964, %v8127
        %v8129 = vpop.f32.mrb[0].mxu0
        %v8130 = vpop.f32.mrb[0].mxu0
        %v8131 = vadd.f32 %v7964, %v8130
        %v8132 = vpop.f32.mrb[0].mxu0
        %8133 = vmatprep.mubr.bf16.mxu0 0
        %8134 = vmatmul.mubr.bf16.gmra.mrb[0].mxu0 %v7999
        %v8135 = vpop.f32.mrb[0].mxu0
        %v8136 = vadd.f32 %v7964, %v8135
        %v8137 = vpop.f32.mrb[0].mxu0
        %v8138 = vpop.f32.mrb[0].mxu0
        %v8139 = vadd.f32 %v7964, %v8138
        %v8140 = vpop.f32.mrb[0].mxu0
        %8141 = vmatprep.mubr.bf16.mxu0 0
        %8142 = vmatmul.mubr.bf16.gmra.mrb[0].mxu0 %v8002
        %v8143 = vpop.f32.mrb[0].mxu0
        %v8144 = vadd.f32 %v7964, %v8143
        %v8145 = vpop.f32.mrb[0].mxu0
        %v8146 = vpop.f32.mrb[0].mxu0
        %v8147 = vadd.f32 %v7964, %v8146
        %v8148 = vpop.f32.mrb[0].mxu0
        %8149 = vmatprep.mubr.bf16.mxu0 0
        %8150 = vmatmul.mubr.bf16.gmra.mrb[0].mxu0 %v8005
        %v8151 = vpop.f32.mrb[0].mxu0
        %v8152 = vadd.f32 %v7964, %v8151
        %v8153 = vpop.f32.mrb[0].mxu0
        %v8154 = vpop.f32.mrb[0].mxu0
        %v8155 = vadd.f32 %v7964, %v8154
        %v8156 = vpop.f32.mrb[0].mxu0
        %8157 = vmatprep.mubr.bf16.mxu0 0
        %8158 = vmatmul.mubr.bf16.gmra.mrb[0].mxu0 %v8008
        %v8159 = vpop.f32.mrb[0].mxu0
        %v8160 = vadd.f32 %v7964, %v8159
        %v8161 = vpop.f32.mrb[0].mxu0
        %v8162 = vpop.f32.mrb[0].mxu0
        %v8163 = vadd.f32 %v7964, %v8162
        %v8164 = vpop.f32.mrb[0].mxu0
        %8165 = vmatprep.mubr.bf16.mxu0 0
        %8166 = vmatmul.mubr.bf16.gmra.mrb[0].mxu0 %v8011
        %v8167 = vpop.f32.mrb[0].mxu0
        %v8168 = vadd.f32 %v7964, %v8167
        %v8169 = vpop.f32.mrb[0].mxu0
        %v8170 = vpop.f32.mrb[0].mxu0
        %v8171 = vadd.f32 %v7964, %v8170
        %v8172 = vpop.f32.mrb[0].mxu0
        %8173 = vdwg.mxu0
        %v8174 = vmul.f32 %v8048, 0.5
        %v8175 = vmul.f32 %v8051, 0.5
        %v8176 = vmul.f32 %v8056, 0.5
        %v8177 = vmul.f32 %v8059, 0.5
        %v8178 = vmul.f32 %v8064, 0.5
        %v8179 = vmul.f32 %v8067, 0.5
        %v8180 = vmul.f32 %v8072, 0.5
        %v8181 = vmul.f32 %v8075, 0.5
        %v8182 = vmul.f32 %v8080, 0.5
        %v8183 = vmul.f32 %v8083, 0.5
        %v8184 = vmul.f32 %v8088, 0.5
        %v8185 = vmul.f32 %v8091, 0.5
        %v8186 = vmul.f32 %v8096, 0.5
        %v8187 = vmul.f32 %v8099, 0.5
        %v8188 = vmul.f32 %v8104, 0.5
        %v8189 = vmul.f32 %v8107, 0.5
        %v8190 = vmul.f32 %v8112, 0.5
        %v8191 = vmul.f32 %v8115, 0.5
        %v8192 = vmul.f32 %v8120, 0.5
        %v8193 = vmul.f32 %v8123, 0.5
        %v8194 = vmul.f32 %v8128, 0.5
        %v8195 = vmul.f32 %v8131, 0.5
        %v8196 = vmul.f32 %v8136, 0.5
        %v8197 = vmul.f32 %v8139, 0.5
        %v8198 = vmul.f32 %v8144, 0.5
        %v8199 = vmul.f32 %v8147, 0.5
        %v8200 = vmul.f32 %v8152, 0.5
        %v8201 = vmul.f32 %v8155, 0.5
        %v8202 = vmul.f32 %v8160, 0.5
        %v8203 = vmul.f32 %v8163, 0.5
        %v8204 = vmul.f32 %v8168, 0.5
        %v8205 = vmul.f32 %v8171, 0.5
        %v8206 = vmul.f32 %v8048, 0.044715
        %v8207 = vmul.f32 %v8051, 0.044715
        %v8208 = vmul.f32 %v8056, 0.044715
        %v8209 = vmul.f32 %v8059, 0.044715
        %v8210 = vmul.f32 %v8064, 0.044715
        %v8211 = vmul.f32 %v8067, 0.044715
        %v8212 = vmul.f32 %v8072, 0.044715
        %v8213 = vmul.f32 %v8075, 0.044715
        %v8214 = vmul.f32 %v8080, 0.044715
        %v8215 = vmul.f32 %v8083, 0.044715
        %v8216 = vmul.f32 %v8088, 0.044715
        %v8217 = vmul.f32 %v8091, 0.044715
        %v8218 = vmul.f32 %v8096, 0.044715
        %v8219 = vmul.f32 %v8099, 0.044715
        %v8220 = vmul.f32 %v8104, 0.044715
        %v8221 = vmul.f32 %v8107, 0.044715
        %v8222 = vmul.f32 %v8112, 0.044715
        %v8223 = vmul.f32 %v8115, 0.044715
        %v8224 = vmul.f32 %v8120, 0.044715
        %v8225 = vmul.f32 %v8123, 0.044715
        %v8226 = vmul.f32 %v8128, 0.044715
        %v8227 = vmul.f32 %v8131, 0.044715
        %v8228 = vmul.f32 %v8136, 0.044715
        %v8229 = vmul.f32 %v8139, 0.044715
        %v8230 = vmul.f32 %v8144, 0.044715
        %v8231 = vmul.f32 %v8147, 0.044715
        %v8232 = vmul.f32 %v8152, 0.044715
        %v8233 = vmul.f32 %v8155, 0.044715
        %v8234 = vmul.f32 %v8160, 0.044715
        %v8235 = vmul.f32 %v8163, 0.044715
        %v8236 = vmul.f32 %v8168, 0.044715
        %v8237 = vmul.f32 %v8171, 0.044715
        %v8238 = vmul.f32 %v8206, %v8048
        %v8239 = vmul.f32 %v8207, %v8051
        %v8240 = vmul.f32 %v8208, %v8056
        %v8241 = vmul.f32 %v8209, %v8059
        %v8242 = vmul.f32 %v8210, %v8064
        %v8243 = vmul.f32 %v8211, %v8067
        %v8244 = vmul.f32 %v8212, %v8072
        %v8245 = vmul.f32 %v8213, %v8075
        %v8246 = vmul.f32 %v8214, %v8080
        %v8247 = vmul.f32 %v8215, %v8083
        %v8248 = vmul.f32 %v8216, %v8088
        %v8249 = vmul.f32 %v8217, %v8091
        %v8250 = vmul.f32 %v8218, %v8096
        %v8251 = vmul.f32 %v8219, %v8099
        %v8252 = vmul.f32 %v8220, %v8104
        %v8253 = vmul.f32 %v8221, %v8107
        %v8254 = vmul.f32 %v8222, %v8112
        %v8255 = vmul.f32 %v8223, %v8115
        %v8256 = vmul.f32 %v8224, %v8120
        %v8257 = vmul.f32 %v8225, %v8123
        %v8258 = vmul.f32 %v8226, %v8128
        %v8259 = vmul.f32 %v8227, %v8131
        %v8260 = vmul.f32 %v8228, %v8136
        %v8261 = vmul.f32 %v8229, %v8139
        %v8262 = vmul.f32 %v8230, %v8144
        %v8263 = vmul.f32 %v8231, %v8147
        %v8264 = vmul.f32 %v8232, %v8152
        %v8265 = vmul.f32 %v8233, %v8155
        %v8266 = vmul.f32 %v8234, %v8160
        %v8267 = vmul.f32 %v8235, %v8163
        %v8268 = vmul.f32 %v8236, %v8168
        %v8269 = vmul.f32 %v8237, %v8171
        %v8270 = vmul.f32 %v8238, %v8048
        %v8271 = vmul.f32 %v8239, %v8051
        %v8272 = vmul.f32 %v8240, %v8056
        %v8273 = vmul.f32 %v8241, %v8059
        %v8274 = vmul.f32 %v8242, %v8064
        %v8275 = vmul.f32 %v8243, %v8067
        %v8276 = vmul.f32 %v8244, %v8072
        %v8277 = vmul.f32 %v8245, %v8075
        %v8278 = vmul.f32 %v8246, %v8080
        %v8279 = vmul.f32 %v8247, %v8083
        %v8280 = vmul.f32 %v8248, %v8088
        %v8281 = vmul.f32 %v8249, %v8091
        %v8282 = vmul.f32 %v8250, %v8096
        %v8283 = vmul.f32 %v8251, %v8099
        %v8284 = vmul.f32 %v8252, %v8104
        %v8285 = vmul.f32 %v8253, %v8107
        %v8286 = vmul.f32 %v8254, %v8112
        %v8287 = vmul.f32 %v8255, %v8115
        %v8288 = vmul.f32 %v8256, %v8120
        %v8289 = vmul.f32 %v8257, %v8123
        %v8290 = vmul.f32 %v8258, %v8128
        %v8291 = vmul.f32 %v8259, %v8131
        %v8292 = vmul.f32 %v8260, %v8136
        %v8293 = vmul.f32 %v8261, %v8139
        %v8294 = vmul.f32 %v8262, %v8144
        %v8295 = vmul.f32 %v8263, %v8147
        %v8296 = vmul.f32 %v8264, %v8152
        %v8297 = vmul.f32 %v8265, %v8155
        %v8298 = vmul.f32 %v8266, %v8160
        %v8299 = vmul.f32 %v8267, %v8163
        %v8300 = vmul.f32 %v8268, %v8168
        %v8301 = vmul.f32 %v8269, %v8171
        %v8302 = vadd.f32 %v8048, %v8270
        %v8303 = vadd.f32 %v8051, %v8271
        %v8304 = vadd.f32 %v8056, %v8272
        %v8305 = vadd.f32 %v8059, %v8273
        %v8306 = vadd.f32 %v8064, %v8274
        %v8307 = vadd.f32 %v8067, %v8275
        %v8308 = vadd.f32 %v8072, %v8276
        %v8309 = vadd.f32 %v8075, %v8277
        %v8310 = vadd.f32 %v8080, %v8278
        %v8311 = vadd.f32 %v8083, %v8279
        %v8312 = vadd.f32 %v8088, %v8280
        %v8313 = vadd.f32 %v8091, %v8281
        %v8314 = vadd.f32 %v8096, %v8282
        %v8315 = vadd.f32 %v8099, %v8283
        %v8316 = vadd.f32 %v8104, %v8284
        %v8317 = vadd.f32 %v8107, %v8285
        %v8318 = vadd.f32 %v8112, %v8286
        %v8319 = vadd.f32 %v8115, %v8287
        %v8320 = vadd.f32 %v8120, %v8288
        %v8321 = vadd.f32 %v8123, %v8289
        %v8322 = vadd.f32 %v8128, %v8290
        %v8323 = vadd.f32 %v8131, %v8291
        %v8324 = vadd.f32 %v8136, %v8292
        %v8325 = vadd.f32 %v8139, %v8293
        %v8326 = vadd.f32 %v8144, %v8294
        %v8327 = vadd.f32 %v8147, %v8295
        %v8328 = vadd.f32 %v8152, %v8296
        %v8329 = vadd.f32 %v8155, %v8297
        %v8330 = vadd.f32 %v8160, %v8298
        %v8331 = vadd.f32 %v8163, %v8299
        %v8332 = vadd.f32 %v8168, %v8300
        %v8333 = vadd.f32 %v8171, %v8301
        %v8334 = vmul.f32 %v8302, 0.7978846
        %v8335 = vmul.f32 %v8303, 0.7978846
        %v8336 = vmul.f32 %v8304, 0.7978846
        %v8337 = vmul.f32 %v8305, 0.7978846
        %v8338 = vmul.f32 %v8306, 0.7978846
        %v8339 = vmul.f32 %v8307, 0.7978846
        %v8340 = vmul.f32 %v8308, 0.7978846
        %v8341 = vmul.f32 %v8309, 0.7978846
        %v8342 = vmul.f32 %v8310, 0.7978846
        %v8343 = vmul.f32 %v8311, 0.7978846
        %v8344 = vmul.f32 %v8312, 0.7978846
        %v8345 = vmul.f32 %v8313, 0.7978846
        %v8346 = vmul.f32 %v8314, 0.7978846
        %v8347 = vmul.f32 %v8315, 0.7978846
        %v8348 = vmul.f32 %v8316, 0.7978846
        %v8349 = vmul.f32 %v8317, 0.7978846
        %v8350 = vmul.f32 %v8318, 0.7978846
        %v8351 = vmul.f32 %v8319, 0.7978846
        %v8352 = vmul.f32 %v8320, 0.7978846
        %v8353 = vmul.f32 %v8321, 0.7978846
        %v8354 = vmul.f32 %v8322, 0.7978846
        %v8355 = vmul.f32 %v8323, 0.7978846
        %v8356 = vmul.f32 %v8324, 0.7978846
        %v8357 = vmul.f32 %v8325, 0.7978846
        %v8358 = vmul.f32 %v8326, 0.7978846
        %v8359 = vmul.f32 %v8327, 0.7978846
        %v8360 = vmul.f32 %v8328, 0.7978846
        %v8361 = vmul.f32 %v8329, 0.7978846
        %v8362 = vmul.f32 %v8330, 0.7978846
        %v8363 = vmul.f32 %v8331, 0.7978846
        %v8364 = vmul.f32 %v8332, 0.7978846
        %v8365 = vmul.f32 %v8333, 0.7978846
        %v8366 = vtanh.pop %v8334
        %v8367 = vtanh.pop %v8335
        %v8368 = vtanh.pop %v8336
        %v8369 = vtanh.pop %v8337
        %v8370 = vtanh.pop %v8338
        %v8371 = vtanh.pop %v8339
        %v8372 = vtanh.pop %v8340
        %v8373 = vtanh.pop %v8341
        %v8374 = vtanh.pop %v8342
        %v8375 = vtanh.pop %v8343
        %v8376 = vtanh.pop %v8344
        %v8377 = vtanh.pop %v8345
        %v8378 = vtanh.pop %v8346
        %v8379 = vtanh.pop %v8347
        %v8380 = vtanh.pop %v8348
        %v8381 = vtanh.pop %v8349
        %v8382 = vtanh.pop %v8350
        %v8383 = vtanh.pop %v8351
        %v8384 = vtanh.pop %v8352
        %v8385 = vtanh.pop %v8353
        %v8386 = vtanh.pop %v8354
        %v8387 = vtanh.pop %v8355
        %v8388 = vtanh.pop %v8356
        %v8389 = vtanh.pop %v8357
        %v8390 = vtanh.pop %v8358
        %v8391 = vtanh.pop %v8359
        %v8392 = vtanh.pop %v8360
        %v8393 = vtanh.pop %v8361
        %v8394 = vtanh.pop %v8362
        %v8395 = vtanh.pop %v8363
        %v8396 = vtanh.pop %v8364
        %v8397 = vtanh.pop %v8365
        %v8398 = vadd.f32 %v8366, 1.0
        %v8399 = vadd.f32 %v8367, 1.0
        %v8400 = vadd.f32 %v8368, 1.0
        %v8401 = vadd.f32 %v8369, 1.0
        %v8402 = vadd.f32 %v8370, 1.0
        %v8403 = vadd.f32 %v8371, 1.0
        %v8404 = vadd.f32 %v8372, 1.0
        %v8405 = vadd.f32 %v8373, 1.0
        %v8406 = vadd.f32 %v8374, 1.0
        %v8407 = vadd.f32 %v8375, 1.0
        %v8408 = vadd.f32 %v8376, 1.0
        %v8409 = vadd.f32 %v8377, 1.0
        %v8410 = vadd.f32 %v8378, 1.0
        %v8411 = vadd.f32 %v8379, 1.0
        %v8412 = vadd.f32 %v8380, 1.0
        %v8413 = vadd.f32 %v8381, 1.0
        %v8414 = vadd.f32 %v8382, 1.0
        %v8415 = vadd.f32 %v8383, 1.0
        %v8416 = vadd.f32 %v8384, 1.0
        %v8417 = vadd.f32 %v8385, 1.0
        %v8418 = vadd.f32 %v8386, 1.0
        %v8419 = vadd.f32 %v8387, 1.0
        %v8420 = vadd.f32 %v8388, 1.0
        %v8421 = vadd.f32 %v8389, 1.0
        %v8422 = vadd.f32 %v8390, 1.0
        %v8423 = vadd.f32 %v8391, 1.0
        %v8424 = vadd.f32 %v8392, 1.0
        %v8425 = vadd.f32 %v8393, 1.0
        %v8426 = vadd.f32 %v8394, 1.0
        %v8427 = vadd.f32 %v8395, 1.0
        %v8428 = vadd.f32 %v8396, 1.0
        %v8429 = vadd.f32 %v8397, 1.0
        %v8430 = vmul.f32 %v8174, %v8398
        %v8431 = vmul.f32 %v8175, %v8399
        %v8432 = vmul.f32 %v8176, %v8400
        %v8433 = vmul.f32 %v8177, %v8401
        %v8434 = vmul.f32 %v8178, %v8402
        %v8435 = vmul.f32 %v8179, %v8403
        %v8436 = vmul.f32 %v8180, %v8404
        %v8437 = vmul.f32 %v8181, %v8405
        %v8438 = vmul.f32 %v8182, %v8406
        %v8439 = vmul.f32 %v8183, %v8407
        %v8440 = vmul.f32 %v8184, %v8408
        %v8441 = vmul.f32 %v8185, %v8409
        %v8442 = vmul.f32 %v8186, %v8410
        %v8443 = vmul.f32 %v8187, %v8411
        %v8444 = vmul.f32 %v8188, %v8412
        %v8445 = vmul.f32 %v8189, %v8413
        %v8446 = vmul.f32 %v8190, %v8414
        %v8447 = vmul.f32 %v8191, %v8415
        %v8448 = vmul.f32 %v8192, %v8416
        %v8449 = vmul.f32 %v8193, %v8417
        %v8450 = vmul.f32 %v8194, %v8418
        %v8451 = vmul.f32 %v8195, %v8419
        %v8452 = vmul.f32 %v8196, %v8420
        %v8453 = vmul.f32 %v8197, %v8421
        %v8454 = vmul.f32 %v8198, %v8422
        %v8455 = vmul.f32 %v8199, %v8423
        %v8456 = vmul.f32 %v8200, %v8424
        %v8457 = vmul.f32 %v8201, %v8425
        %v8458 = vmul.f32 %v8202, %v8426
        %v8459 = vmul.f32 %v8203, %v8427
        %v8460 = vmul.f32 %v8204, %v8428
        %v8461 = vmul.f32 %v8205, %v8429
        %s8462 = scalar_lea.vmem %s8, 96
        %v8463 = vld [vmem:[%s8462] sm:$0xff]
        %v8464 = vld [vmem:[%s8462 + $0x8] sm:$0xff]
        %v8465 = vld [vmem:[%s8462 + $0x10] sm:$0xff]
        %v8466 = vld [vmem:[%s8462 + $0x18] sm:$0xff]
        %v8467 = vld [vmem:[%s8462 + $0x20] sm:$0xff]
        %v8468 = vld [vmem:[%s8462 + $0x28] sm:$0xff]
        %v8469 = vld [vmem:[%s8462 + $0x30] sm:$0xff]
        %v8470 = vld [vmem:[%s8462 + $0x38] sm:$0xff]
        %v8471 = vld [vmem:[%s8462 + $0x40] sm:$0xff]
        %v8472 = vld [vmem:[%s8462 + $0x48] sm:$0xff]
        %v8473 = vld [vmem:[%s8462 + $0x50] sm:$0xff]
        %v8474 = vld [vmem:[%s8462 + $0x58] sm:$0xff]
        %v8475 = vpack.c.bf16 %v8431, %v8430
        %v8476 = vpack.c.bf16 %v8433, %v8432
        %v8477 = vpack.c.bf16 %v8435, %v8434
        %v8478 = vpack.c.bf16 %v8437, %v8436
        %v8479 = vpack.c.bf16 %v8439, %v8438
        %v8480 = vpack.c.bf16 %v8441, %v8440
        %v8481 = vpack.c.bf16 %v8443, %v8442
        %v8482 = vpack.c.bf16 %v8445, %v8444
        %v8483 = vpack.c.bf16 %v8447, %v8446
        %v8484 = vpack.c.bf16 %v8449, %v8448
        %v8485 = vpack.c.bf16 %v8451, %v8450
        %v8486 = vpack.c.bf16 %v8453, %v8452
        %v8487 = vpack.c.bf16 %v8455, %v8454
        %v8488 = vpack.c.bf16 %v8457, %v8456
        %v8489 = vpack.c.bf16 %v8459, %v8458
        %v8490 = vpack.c.bf16 %v8461, %v8460
        %v8491 = vpack.c.bf16 %v8464, %v8463
        %v8492 = vpack.c.bf16 %v8466, %v8465
        %v8493 = vpack.c.bf16 %v8468, %v8467
        %v8494 = vpack.c.bf16 %v8470, %v8469
        %v8495 = vpack.c.bf16 %v8472, %v8471
        %v8496 = vpack.c.bf16 %v8474, %v8473
        %v8498 = vsel %vm4444, %v8475, 0
        %v8501 = vsel %vm4444, %v8476, 0
        %v8504 = vsel %vm4444, %v8477, 0
        %v8507 = vsel %vm4444, %v8478, 0
        %v8510 = vsel %vm4444, %v8479, 0
        %v8513 = vsel %vm4444, %v8480, 0
        %v8516 = vsel %vm4444, %v8481, 0
        %v8519 = vsel %vm4444, %v8482, 0
        %v8522 = vsel %vm4444, %v8483, 0
        %v8525 = vsel %vm4444, %v8484, 0
        %v8528 = vsel %vm4444, %v8485, 0
        %v8531 = vsel %vm4444, %v8486, 0
        %v8534 = vsel %vm4444, %v8487, 0
        %v8537 = vsel %vm4444, %v8488, 0
        %v8540 = vsel %vm4444, %v8489, 0
        %v8543 = vsel %vm4444, %v8490, 0
        %8545 = vmatprep.subr.bf16.mxu0 0
        %8546 = vmatpush1.bf16.msra.mxu0 %v8491
        %8547 = vmatprep.subr.bf16.mxu0 0
        %8548 = vmatpush1.bf16.msra.mxu0 %v8492
        %8549 = vmatprep.subr.bf16.mxu0 0
        %8550 = vmatpush1.bf16.msra.mxu0 %v8493
        %8551 = vmatprep.subr.bf16.mxu0 0
        %8552 = vmatpush1.bf16.msra.mxu0 %v8494
        %8553 = vmatprep.subr.bf16.mxu0 0
        %8554 = vmatpush1.bf16.msra.mxu0 %v8495
        %8555 = vmatprep.subr.bf16.mxu0 0
        %8556 = vmatpush1.bf16.msra.mxu0 %v8496
        %8557 = vmatprep.subr.bf16.mxu0 0
        %8558 = vmatpush1.bf16.msra.mxu0 0
        %8559 = vmatprep.subr.bf16.mxu0 0
        %8560 = vmatpush1.bf16.msra.mxu0 0
        %8561 = vmatprep.subr.bf16.mxu0 0
        %8562 = vmatpush1.bf16.msra.mxu0 0
        %8563 = vmatprep.subr.bf16.mxu0 0
        %8564 = vmatpush1.bf16.msra.mxu0 0
        %8565 = vmatprep.subr.bf16.mxu0 0
        %8566 = vmatpush1.bf16.msra.mxu0 0
        %8567 = vmatprep.subr.bf16.mxu0 0
        %8568 = vmatpush1.bf16.msra.mxu0 0
        %8569 = vmatprep.subr.bf16.mxu0 0
        %8570 = vmatpush1.bf16.msra.mxu0 0
        %8571 = vmatprep.subr.bf16.mxu0 0
        %8572 = vmatpush1.bf16.msra.mxu0 0
        %8573 = vmatprep.subr.bf16.mxu0 0
        %8574 = vmatpush1.bf16.msra.mxu0 0
        %8575 = vmatprep.subr.bf16.mxu0 0
        %8576 = vmatpush1.bf16.msra.mxu0 0
        %8577 = vmatprep.mubr.bf16.mxu0 0
        %8578 = vmatmul.mubr.bf16.gmra.mrb[0].mxu0 %v8498
        %v8579 = vpop.f32.mrb[0].mxu0
        %v8580 = vadd.f32 0.0, %v8579
        %v8581 = vpop.f32.mrb[0].mxu0
        %v8582 = vpop.f32.mrb[0].mxu0
        %v8583 = vadd.f32 0.0, %v8582
        %v8584 = vpop.f32.mrb[0].mxu0
        %8585 = vmatprep.mubr.bf16.mxu0 0
        %8586 = vmatmul.mubr.bf16.gmra.mrb[0].mxu0 %v8501
        %v8587 = vpop.f32.mrb[0].mxu0
        %v8588 = vadd.f32 0.0, %v8587
        %v8589 = vpop.f32.mrb[0].mxu0
        %v8590 = vpop.f32.mrb[0].mxu0
        %v8591 = vadd.f32 0.0, %v8590
        %v8592 = vpop.f32.mrb[0].mxu0
        %8593 = vmatprep.mubr.bf16.mxu0 0
        %8594 = vmatmul.mubr.bf16.gmra.mrb[0].mxu0 %v8504
        %v8595 = vpop.f32.mrb[0].mxu0
        %v8596 = vadd.f32 0.0, %v8595
        %v8597 = vpop.f32.mrb[0].mxu0
        %v8598 = vpop.f32.mrb[0].mxu0
        %v8599 = vadd.f32 0.0, %v8598
        %v8600 = vpop.f32.mrb[0].mxu0
        %8601 = vmatprep.mubr.bf16.mxu0 0
        %8602 = vmatmul.mubr.bf16.gmra.mrb[0].mxu0 %v8507
        %v8603 = vpop.f32.mrb[0].mxu0
        %v8604 = vadd.f32 0.0, %v8603
        %v8605 = vpop.f32.mrb[0].mxu0
        %v8606 = vpop.f32.mrb[0].mxu0
        %v8607 = vadd.f32 0.0, %v8606
        %v8608 = vpop.f32.mrb[0].mxu0
        %8609 = vmatprep.mubr.bf16.mxu0 0
        %8610 = vmatmul.mubr.bf16.gmra.mrb[0].mxu0 %v8510
        %v8611 = vpop.f32.mrb[0].mxu0
        %v8612 = vadd.f32 0.0, %v8611
        %v8613 = vpop.f32.mrb[0].mxu0
        %v8614 = vpop.f32.mrb[0].mxu0
        %v8615 = vadd.f32 0.0, %v8614
        %v8616 = vpop.f32.mrb[0].mxu0
        %8617 = vmatprep.mubr.bf16.mxu0 0
        %8618 = vmatmul.mubr.bf16.gmra.mrb[0].mxu0 %v8513
        %v8619 = vpop.f32.mrb[0].mxu0
        %v8620 = vadd.f32 0.0, %v8619
        %v8621 = vpop.f32.mrb[0].mxu0
        %v8622 = vpop.f32.mrb[0].mxu0
        %v8623 = vadd.f32 0.0, %v8622
        %v8624 = vpop.f32.mrb[0].mxu0
        %8625 = vmatprep.mubr.bf16.mxu0 0
        %8626 = vmatmul.mubr.bf16.gmra.mrb[0].mxu0 %v8516
        %v8627 = vpop.f32.mrb[0].mxu0
        %v8628 = vadd.f32 0.0, %v8627
        %v8629 = vpop.f32.mrb[0].mxu0
        %v8630 = vpop.f32.mrb[0].mxu0
        %v8631 = vadd.f32 0.0, %v8630
        %v8632 = vpop.f32.mrb[0].mxu0
        %8633 = vmatprep.mubr.bf16.mxu0 0
        %8634 = vmatmul.mubr.bf16.gmra.mrb[0].mxu0 %v8519
        %v8635 = vpop.f32.mrb[0].mxu0
        %v8636 = vadd.f32 0.0, %v8635
        %v8637 = vpop.f32.mrb[0].mxu0
        %v8638 = vpop.f32.mrb[0].mxu0
        %v8639 = vadd.f32 0.0, %v8638
        %v8640 = vpop.f32.mrb[0].mxu0
        %8641 = vmatprep.mubr.bf16.mxu0 0
        %8642 = vmatmul.mubr.bf16.gmra.mrb[0].mxu0 %v8522
        %v8643 = vpop.f32.mrb[0].mxu0
        %v8644 = vadd.f32 0.0, %v8643
        %v8645 = vpop.f32.mrb[0].mxu0
        %v8646 = vpop.f32.mrb[0].mxu0
        %v8647 = vadd.f32 0.0, %v8646
        %v8648 = vpop.f32.mrb[0].mxu0
        %8649 = vmatprep.mubr.bf16.mxu0 0
        %8650 = vmatmul.mubr.bf16.gmra.mrb[0].mxu0 %v8525
        %v8651 = vpop.f32.mrb[0].mxu0
        %v8652 = vadd.f32 0.0, %v8651
        %v8653 = vpop.f32.mrb[0].mxu0
        %v8654 = vpop.f32.mrb[0].mxu0
        %v8655 = vadd.f32 0.0, %v8654
        %v8656 = vpop.f32.mrb[0].mxu0
        %8657 = vmatprep.mubr.bf16.mxu0 0
        %8658 = vmatmul.mubr.bf16.gmra.mrb[0].mxu0 %v8528
        %v8659 = vpop.f32.mrb[0].mxu0
        %v8660 = vadd.f32 0.0, %v8659
        %v8661 = vpop.f32.mrb[0].mxu0
        %v8662 = vpop.f32.mrb[0].mxu0
        %v8663 = vadd.f32 0.0, %v8662
        %v8664 = vpop.f32.mrb[0].mxu0
        %8665 = vmatprep.mubr.bf16.mxu0 0
        %8666 = vmatmul.mubr.bf16.gmra.mrb[0].mxu0 %v8531
        %v8667 = vpop.f32.mrb[0].mxu0
        %v8668 = vadd.f32 0.0, %v8667
        %v8669 = vpop.f32.mrb[0].mxu0
        %v8670 = vpop.f32.mrb[0].mxu0
        %v8671 = vadd.f32 0.0, %v8670
        %v8672 = vpop.f32.mrb[0].mxu0
        %8673 = vmatprep.mubr.bf16.mxu0 0
        %8674 = vmatmul.mubr.bf16.gmra.mrb[0].mxu0 %v8534
        %v8675 = vpop.f32.mrb[0].mxu0
        %v8676 = vadd.f32 0.0, %v8675
        %v8677 = vpop.f32.mrb[0].mxu0
        %v8678 = vpop.f32.mrb[0].mxu0
        %v8679 = vadd.f32 0.0, %v8678
        %v8680 = vpop.f32.mrb[0].mxu0
        %8681 = vmatprep.mubr.bf16.mxu0 0
        %8682 = vmatmul.mubr.bf16.gmra.mrb[0].mxu0 %v8537
        %v8683 = vpop.f32.mrb[0].mxu0
        %v8684 = vadd.f32 0.0, %v8683
        %v8685 = vpop.f32.mrb[0].mxu0
        %v8686 = vpop.f32.mrb[0].mxu0
        %v8687 = vadd.f32 0.0, %v8686
        %v8688 = vpop.f32.mrb[0].mxu0
        %8689 = vmatprep.mubr.bf16.mxu0 0
        %8690 = vmatmul.mubr.bf16.gmra.mrb[0].mxu0 %v8540
        %v8691 = vpop.f32.mrb[0].mxu0
        %v8692 = vadd.f32 0.0, %v8691
        %v8693 = vpop.f32.mrb[0].mxu0
        %v8694 = vpop.f32.mrb[0].mxu0
        %v8695 = vadd.f32 0.0, %v8694
        %v8696 = vpop.f32.mrb[0].mxu0
        %8697 = vmatprep.mubr.bf16.mxu0 0
        %8698 = vmatmul.mubr.bf16.gmra.mrb[0].mxu0 %v8543
        %v8699 = vpop.f32.mrb[0].mxu0
        %v8700 = vadd.f32 0.0, %v8699
        %v8701 = vpop.f32.mrb[0].mxu0
        %v8702 = vpop.f32.mrb[0].mxu0
        %v8703 = vadd.f32 0.0, %v8702
        %v8704 = vpop.f32.mrb[0].mxu0
        %8705 = vdwg.mxu0
        %v8706 = vadd.f32 %v7412, %v8580
        %v8707 = vadd.f32 %v7413, %v8583
        %v8708 = vadd.f32 %v7414, %v8588
        %v8709 = vadd.f32 %v7415, %v8591
        %v8710 = vadd.f32 %v7416, %v8596
        %v8711 = vadd.f32 %v7417, %v8599
        %v8712 = vadd.f32 %v7418, %v8604
        %v8713 = vadd.f32 %v7419, %v8607
        %v8714 = vadd.f32 %v7420, %v8612
        %v8715 = vadd.f32 %v7421, %v8615
        %v8716 = vadd.f32 %v7422, %v8620
        %v8717 = vadd.f32 %v7423, %v8623
        %v8718 = vadd.f32 %v7424, %v8628
        %v8719 = vadd.f32 %v7425, %v8631
        %v8720 = vadd.f32 %v7426, %v8636
        %v8721 = vadd.f32 %v7427, %v8639
        %v8722 = vadd.f32 %v7428, %v8644
        %v8723 = vadd.f32 %v7429, %v8647
        %v8724 = vadd.f32 %v7430, %v8652
        %v8725 = vadd.f32 %v7431, %v8655
        %v8726 = vadd.f32 %v7432, %v8660
        %v8727 = vadd.f32 %v7433, %v8663
        %v8728 = vadd.f32 %v7434, %v8668
        %v8729 = vadd.f32 %v7435, %v8671
        %v8730 = vadd.f32 %v7436, %v8676
        %v8731 = vadd.f32 %v7437, %v8679
        %v8732 = vadd.f32 %v7438, %v8684
        %v8733 = vadd.f32 %v7439, %v8687
        %v8734 = vadd.f32 %v7440, %v8692
        %v8735 = vadd.f32 %v7441, %v8695
        %v8736 = vadd.f32 %v7442, %v8700
        %v8737 = vadd.f32 %v7443, %v8703
        %v8738 = vld [vmem:[%s16 + $0xf] sm:$0x1]
        %v8739 = vlaneseq
        %v8740 = vshrl.u32 %v8739, 7
        %v8741 = vsub.s32 0, %v8740
        %v8742 = vrot.slane %v8738, %v8741
        %v8743 = vadd.f32 %v8706, %v8742
        %v8744 = vadd.f32 %v8707, %v8742
        %v8745 = vadd.f32 %v8708, %v8742
        %v8746 = vadd.f32 %v8709, %v8742
        %v8747 = vadd.f32 %v8710, %v8742
        %v8748 = vadd.f32 %v8711, %v8742
        %v8749 = vadd.f32 %v8712, %v8742
        %v8750 = vadd.f32 %v8713, %v8742
        %v8751 = vadd.f32 %v8714, %v8742
        %v8752 = vadd.f32 %v8715, %v8742
        %v8753 = vadd.f32 %v8716, %v8742
        %v8754 = vadd.f32 %v8717, %v8742
        %v8755 = vadd.f32 %v8718, %v8742
        %v8756 = vadd.f32 %v8719, %v8742
        %v8757 = vadd.f32 %v8720, %v8742
        %v8758 = vadd.f32 %v8721, %v8742
        %v8759 = vadd.f32 %v8722, %v8742
        %v8760 = vadd.f32 %v8723, %v8742
        %v8761 = vadd.f32 %v8724, %v8742
        %v8762 = vadd.f32 %v8725, %v8742
        %v8763 = vadd.f32 %v8726, %v8742
        %v8764 = vadd.f32 %v8727, %v8742
        %v8765 = vadd.f32 %v8728, %v8742
        %v8766 = vadd.f32 %v8729, %v8742
        %v8767 = vadd.f32 %v8730, %v8742
        %v8768 = vadd.f32 %v8731, %v8742
        %v8769 = vadd.f32 %v8732, %v8742
        %v8770 = vadd.f32 %v8733, %v8742
        %v8771 = vadd.f32 %v8734, %v8742
        %v8772 = vadd.f32 %v8735, %v8742
        %v8773 = vadd.f32 %v8736, %v8742
        %v8774 = vadd.f32 %v8737, %v8742
        %v8775 = vld [vmem:[%s9] sm:$0xff]
        %v8776 = vld [vmem:[%s9 + $0x8] sm:$0xff]
        %v8777 = vld [vmem:[%s9 + $0x10] sm:$0xff]
        %v8778 = vld [vmem:[%s9 + $0x18] sm:$0xff]
        %v8779 = vld [vmem:[%s9 + $0x20] sm:$0xff]
        %v8780 = vld [vmem:[%s9 + $0x28] sm:$0xff]
        %v8781 = vpack.c.bf16 %v8744, %v8743
        %v8782 = vpack.c.bf16 %v8746, %v8745
        %v8783 = vpack.c.bf16 %v8748, %v8747
        %v8784 = vpack.c.bf16 %v8750, %v8749
        %v8785 = vpack.c.bf16 %v8752, %v8751
        %v8786 = vpack.c.bf16 %v8754, %v8753
        %v8787 = vpack.c.bf16 %v8756, %v8755
        %v8788 = vpack.c.bf16 %v8758, %v8757
        %v8789 = vpack.c.bf16 %v8760, %v8759
        %v8790 = vpack.c.bf16 %v8762, %v8761
        %v8791 = vpack.c.bf16 %v8764, %v8763
        %v8792 = vpack.c.bf16 %v8766, %v8765
        %v8793 = vpack.c.bf16 %v8768, %v8767
        %v8794 = vpack.c.bf16 %v8770, %v8769
        %v8795 = vpack.c.bf16 %v8772, %v8771
        %v8796 = vpack.c.bf16 %v8774, %v8773
        %v8797 = vpack.c.bf16 %v8776, %v8775
        %v8798 = vpack.c.bf16 %v8778, %v8777
        %v8799 = vpack.c.bf16 %v8780, %v8779
        %v8800 = vld [vmem:[%s16 + $0x10] sm:$0x1]
        %v8801 = vlaneseq
        %v8802 = vshrl.u32 %v8801, 7
        %v8803 = vsub.s32 0, %v8802
        %v8804 = vrot.slane %v8800, %v8803
        %v8806 = vsel %vm1050, %v8781, 0
        %v8809 = vsel %vm1050, %v8782, 0
        %v8812 = vsel %vm1050, %v8783, 0
        %v8815 = vsel %vm1050, %v8784, 0
        %v8818 = vsel %vm1050, %v8785, 0
        %v8821 = vsel %vm1050, %v8786, 0
        %v8824 = vsel %vm1050, %v8787, 0
        %v8827 = vsel %vm1050, %v8788, 0
        %v8830 = vsel %vm1050, %v8789, 0
        %v8833 = vsel %vm1050, %v8790, 0
        %v8836 = vsel %vm1050, %v8791, 0
        %v8839 = vsel %vm1050, %v8792, 0
        %v8842 = vsel %vm1050, %v8793, 0
        %v8845 = vsel %vm1050, %v8794, 0
        %v8848 = vsel %vm1050, %v8795, 0
        %v8851 = vsel %vm1050, %v8796, 0
        %8853 = vmatprep.subr.bf16.mxu0 0
        %8854 = vmatpush1.bf16.msra.mxu0 %v8797
        %8855 = vmatprep.subr.bf16.mxu0 0
        %8856 = vmatpush1.bf16.msra.mxu0 %v8798
        %8857 = vmatprep.subr.bf16.mxu0 0
        %8858 = vmatpush1.bf16.msra.mxu0 %v8799
        %8859 = vmatprep.subr.bf16.mxu0 0
        %8860 = vmatpush1.bf16.msra.mxu0 0
        %8861 = vmatprep.subr.bf16.mxu0 0
        %8862 = vmatpush1.bf16.msra.mxu0 0
        %8863 = vmatprep.subr.bf16.mxu0 0
        %8864 = vmatpush1.bf16.msra.mxu0 0
        %8865 = vmatprep.subr.bf16.mxu0 0
        %8866 = vmatpush1.bf16.msra.mxu0 0
        %8867 = vmatprep.subr.bf16.mxu0 0
        %8868 = vmatpush1.bf16.msra.mxu0 0
        %8869 = vmatprep.subr.bf16.mxu0 0
        %8870 = vmatpush1.bf16.msra.mxu0 0
        %8871 = vmatprep.subr.bf16.mxu0 0
        %8872 = vmatpush1.bf16.msra.mxu0 0
        %8873 = vmatprep.subr.bf16.mxu0 0
        %8874 = vmatpush1.bf16.msra.mxu0 0
        %8875 = vmatprep.subr.bf16.mxu0 0
        %8876 = vmatpush1.bf16.msra.mxu0 0
        %8877 = vmatprep.subr.bf16.mxu0 0
        %8878 = vmatpush1.bf16.msra.mxu0 0
        %8879 = vmatprep.subr.bf16.mxu0 0
        %8880 = vmatpush1.bf16.msra.mxu0 0
        %8881 = vmatprep.subr.bf16.mxu0 0
        %8882 = vmatpush1.bf16.msra.mxu0 0
        %8883 = vmatprep.subr.bf16.mxu0 0
        %8884 = vmatpush1.bf16.msra.mxu0 0
        %8885 = vmatprep.mubr.bf16.mxu0 0
        %8886 = vmatmul.mubr.bf16.gmra.mrb[0].mxu0 %v8806
        %v8887 = vpop.f32.mrb[0].mxu0
        %v8888 = vadd.f32 %v8804, %v8887
        %v8889 = vpop.f32.mrb[0].mxu0
        %v8890 = vpop.f32.mrb[0].mxu0
        %v8891 = vadd.f32 %v8804, %v8890
        %v8892 = vpop.f32.mrb[0].mxu0
        %8893 = vmatprep.mubr.bf16.mxu0 0
        %8894 = vmatmul.mubr.bf16.gmra.mrb[0].mxu0 %v8809
        %v8895 = vpop.f32.mrb[0].mxu0
        %v8896 = vadd.f32 %v8804, %v8895
        %v8897 = vpop.f32.mrb[0].mxu0
        %v8898 = vpop.f32.mrb[0].mxu0
        %v8899 = vadd.f32 %v8804, %v8898
        %v8900 = vpop.f32.mrb[0].mxu0
        %8901 = vmatprep.mubr.bf16.mxu0 0
        %8902 = vmatmul.mubr.bf16.gmra.mrb[0].mxu0 %v8812
        %v8903 = vpop.f32.mrb[0].mxu0
        %v8904 = vadd.f32 %v8804, %v8903
        %v8905 = vpop.f32.mrb[0].mxu0
        %v8906 = vpop.f32.mrb[0].mxu0
        %v8907 = vadd.f32 %v8804, %v8906
        %v8908 = vpop.f32.mrb[0].mxu0
        %8909 = vmatprep.mubr.bf16.mxu0 0
        %8910 = vmatmul.mubr.bf16.gmra.mrb[0].mxu0 %v8815
        %v8911 = vpop.f32.mrb[0].mxu0
        %v8912 = vadd.f32 %v8804, %v8911
        %v8913 = vpop.f32.mrb[0].mxu0
        %v8914 = vpop.f32.mrb[0].mxu0
        %v8915 = vadd.f32 %v8804, %v8914
        %v8916 = vpop.f32.mrb[0].mxu0
        %8917 = vmatprep.mubr.bf16.mxu0 0
        %8918 = vmatmul.mubr.bf16.gmra.mrb[0].mxu0 %v8818
        %v8919 = vpop.f32.mrb[0].mxu0
        %v8920 = vadd.f32 %v8804, %v8919
        %v8921 = vpop.f32.mrb[0].mxu0
        %v8922 = vpop.f32.mrb[0].mxu0
        %v8923 = vadd.f32 %v8804, %v8922
        %v8924 = vpop.f32.mrb[0].mxu0
        %8925 = vmatprep.mubr.bf16.mxu0 0
        %8926 = vmatmul.mubr.bf16.gmra.mrb[0].mxu0 %v8821
        %v8927 = vpop.f32.mrb[0].mxu0
        %v8928 = vadd.f32 %v8804, %v8927
        %v8929 = vpop.f32.mrb[0].mxu0
        %v8930 = vpop.f32.mrb[0].mxu0
        %v8931 = vadd.f32 %v8804, %v8930
        %v8932 = vpop.f32.mrb[0].mxu0
        %8933 = vmatprep.mubr.bf16.mxu0 0
        %8934 = vmatmul.mubr.bf16.gmra.mrb[0].mxu0 %v8824
        %v8935 = vpop.f32.mrb[0].mxu0
        %v8936 = vadd.f32 %v8804, %v8935
        %v8937 = vpop.f32.mrb[0].mxu0
        %v8938 = vpop.f32.mrb[0].mxu0
        %v8939 = vadd.f32 %v8804, %v8938
        %v8940 = vpop.f32.mrb[0].mxu0
        %8941 = vmatprep.mubr.bf16.mxu0 0
        %8942 = vmatmul.mubr.bf16.gmra.mrb[0].mxu0 %v8827
        %v8943 = vpop.f32.mrb[0].mxu0
        %v8944 = vadd.f32 %v8804, %v8943
        %v8945 = vpop.f32.mrb[0].mxu0
        %v8946 = vpop.f32.mrb[0].mxu0
        %v8947 = vadd.f32 %v8804, %v8946
        %v8948 = vpop.f32.mrb[0].mxu0
        %8949 = vmatprep.mubr.bf16.mxu0 0
        %8950 = vmatmul.mubr.bf16.gmra.mrb[0].mxu0 %v8830
        %v8951 = vpop.f32.mrb[0].mxu0
        %v8952 = vadd.f32 %v8804, %v8951
        %v8953 = vpop.f32.mrb[0].mxu0
        %v8954 = vpop.f32.mrb[0].mxu0
        %v8955 = vadd.f32 %v8804, %v8954
        %v8956 = vpop.f32.mrb[0].mxu0
        %8957 = vmatprep.mubr.bf16.mxu0 0
        %8958 = vmatmul.mubr.bf16.gmra.mrb[0].mxu0 %v8833
        %v8959 = vpop.f32.mrb[0].mxu0
        %v8960 = vadd.f32 %v8804, %v8959
        %v8961 = vpop.f32.mrb[0].mxu0
        %v8962 = vpop.f32.mrb[0].mxu0
        %v8963 = vadd.f32 %v8804, %v8962
        %v8964 = vpop.f32.mrb[0].mxu0
        %8965 = vmatprep.mubr.bf16.mxu0 0
        %8966 = vmatmul.mubr.bf16.gmra.mrb[0].mxu0 %v8836
        %v8967 = vpop.f32.mrb[0].mxu0
        %v8968 = vadd.f32 %v8804, %v8967
        %v8969 = vpop.f32.mrb[0].mxu0
        %v8970 = vpop.f32.mrb[0].mxu0
        %v8971 = vadd.f32 %v8804, %v8970
        %v8972 = vpop.f32.mrb[0].mxu0
        %8973 = vmatprep.mubr.bf16.mxu0 0
        %8974 = vmatmul.mubr.bf16.gmra.mrb[0].mxu0 %v8839
        %v8975 = vpop.f32.mrb[0].mxu0
        %v8976 = vadd.f32 %v8804, %v8975
        %v8977 = vpop.f32.mrb[0].mxu0
        %v8978 = vpop.f32.mrb[0].mxu0
        %v8979 = vadd.f32 %v8804, %v8978
        %v8980 = vpop.f32.mrb[0].mxu0
        %8981 = vmatprep.mubr.bf16.mxu0 0
        %8982 = vmatmul.mubr.bf16.gmra.mrb[0].mxu0 %v8842
        %v8983 = vpop.f32.mrb[0].mxu0
        %v8984 = vadd.f32 %v8804, %v8983
        %v8985 = vpop.f32.mrb[0].mxu0
        %v8986 = vpop.f32.mrb[0].mxu0
        %v8987 = vadd.f32 %v8804, %v8986
        %v8988 = vpop.f32.mrb[0].mxu0
        %8989 = vmatprep.mubr.bf16.mxu0 0
        %8990 = vmatmul.mubr.bf16.gmra.mrb[0].mxu0 %v8845
        %v8991 = vpop.f32.mrb[0].mxu0
        %v8992 = vadd.f32 %v8804, %v8991
        %v8993 = vpop.f32.mrb[0].mxu0
        %v8994 = vpop.f32.mrb[0].mxu0
        %v8995 = vadd.f32 %v8804, %v8994
        %v8996 = vpop.f32.mrb[0].mxu0
        %8997 = vmatprep.mubr.bf16.mxu0 0
        %8998 = vmatmul.mubr.bf16.gmra.mrb[0].mxu0 %v8848
        %v8999 = vpop.f32.mrb[0].mxu0
        %v9000 = vadd.f32 %v8804, %v8999
        %v9001 = vpop.f32.mrb[0].mxu0
        %v9002 = vpop.f32.mrb[0].mxu0
        %v9003 = vadd.f32 %v8804, %v9002
        %v9004 = vpop.f32.mrb[0].mxu0
        %9005 = vmatprep.mubr.bf16.mxu0 0
        %9006 = vmatmul.mubr.bf16.gmra.mrb[0].mxu0 %v8851
        %v9007 = vpop.f32.mrb[0].mxu0
        %v9008 = vadd.f32 %v8804, %v9007
        %v9009 = vpop.f32.mrb[0].mxu0
        %v9010 = vpop.f32.mrb[0].mxu0
        %v9011 = vadd.f32 %v8804, %v9010
        %v9012 = vpop.f32.mrb[0].mxu0
        %9013 = vdwg.mxu0
        %v9014 = vmul.f32 %v8888, 0.5
        %v9015 = vmul.f32 %v8891, 0.5
        %v9016 = vmul.f32 %v8896, 0.5
        %v9017 = vmul.f32 %v8899, 0.5
        %v9018 = vmul.f32 %v8904, 0.5
        %v9019 = vmul.f32 %v8907, 0.5
        %v9020 = vmul.f32 %v8912, 0.5
        %v9021 = vmul.f32 %v8915, 0.5
        %v9022 = vmul.f32 %v8920, 0.5
        %v9023 = vmul.f32 %v8923, 0.5
        %v9024 = vmul.f32 %v8928, 0.5
        %v9025 = vmul.f32 %v8931, 0.5
        %v9026 = vmul.f32 %v8936, 0.5
        %v9027 = vmul.f32 %v8939, 0.5
        %v9028 = vmul.f32 %v8944, 0.5
        %v9029 = vmul.f32 %v8947, 0.5
        %v9030 = vmul.f32 %v8952, 0.5
        %v9031 = vmul.f32 %v8955, 0.5
        %v9032 = vmul.f32 %v8960, 0.5
        %v9033 = vmul.f32 %v8963, 0.5
        %v9034 = vmul.f32 %v8968, 0.5
        %v9035 = vmul.f32 %v8971, 0.5
        %v9036 = vmul.f32 %v8976, 0.5
        %v9037 = vmul.f32 %v8979, 0.5
        %v9038 = vmul.f32 %v8984, 0.5
        %v9039 = vmul.f32 %v8987, 0.5
        %v9040 = vmul.f32 %v8992, 0.5
        %v9041 = vmul.f32 %v8995, 0.5
        %v9042 = vmul.f32 %v9000, 0.5
        %v9043 = vmul.f32 %v9003, 0.5
        %v9044 = vmul.f32 %v9008, 0.5
        %v9045 = vmul.f32 %v9011, 0.5
        %v9046 = vmul.f32 %v8888, 0.044715
        %v9047 = vmul.f32 %v8891, 0.044715
        %v9048 = vmul.f32 %v8896, 0.044715
        %v9049 = vmul.f32 %v8899, 0.044715
        %v9050 = vmul.f32 %v8904, 0.044715
        %v9051 = vmul.f32 %v8907, 0.044715
        %v9052 = vmul.f32 %v8912, 0.044715
        %v9053 = vmul.f32 %v8915, 0.044715
        %v9054 = vmul.f32 %v8920, 0.044715
        %v9055 = vmul.f32 %v8923, 0.044715
        %v9056 = vmul.f32 %v8928, 0.044715
        %v9057 = vmul.f32 %v8931, 0.044715
        %v9058 = vmul.f32 %v8936, 0.044715
        %v9059 = vmul.f32 %v8939, 0.044715
        %v9060 = vmul.f32 %v8944, 0.044715
        %v9061 = vmul.f32 %v8947, 0.044715
        %v9062 = vmul.f32 %v8952, 0.044715
        %v9063 = vmul.f32 %v8955, 0.044715
        %v9064 = vmul.f32 %v8960, 0.044715
        %v9065 = vmul.f32 %v8963, 0.044715
        %v9066 = vmul.f32 %v8968, 0.044715
        %v9067 = vmul.f32 %v8971, 0.044715
        %v9068 = vmul.f32 %v8976, 0.044715
        %v9069 = vmul.f32 %v8979, 0.044715
        %v9070 = vmul.f32 %v8984, 0.044715
        %v9071 = vmul.f32 %v8987, 0.044715
        %v9072 = vmul.f32 %v8992, 0.044715
        %v9073 = vmul.f32 %v8995, 0.044715
        %v9074 = vmul.f32 %v9000, 0.044715
        %v9075 = vmul.f32 %v9003, 0.044715
        %v9076 = vmul.f32 %v9008, 0.044715
        %v9077 = vmul.f32 %v9011, 0.044715
        %v9078 = vmul.f32 %v9046, %v8888
        %v9079 = vmul.f32 %v9047, %v8891
        %v9080 = vmul.f32 %v9048, %v8896
        %v9081 = vmul.f32 %v9049, %v8899
        %v9082 = vmul.f32 %v9050, %v8904
        %v9083 = vmul.f32 %v9051, %v8907
        %v9084 = vmul.f32 %v9052, %v8912
        %v9085 = vmul.f32 %v9053, %v8915
        %v9086 = vmul.f32 %v9054, %v8920
        %v9087 = vmul.f32 %v9055, %v8923
        %v9088 = vmul.f32 %v9056, %v8928
        %v9089 = vmul.f32 %v9057, %v8931
        %v9090 = vmul.f32 %v9058, %v8936
        %v9091 = vmul.f32 %v9059, %v8939
        %v9092 = vmul.f32 %v9060, %v8944
        %v9093 = vmul.f32 %v9061, %v8947
        %v9094 = vmul.f32 %v9062, %v8952
        %v9095 = vmul.f32 %v9063, %v8955
        %v9096 = vmul.f32 %v9064, %v8960
        %v9097 = vmul.f32 %v9065, %v8963
        %v9098 = vmul.f32 %v9066, %v8968
        %v9099 = vmul.f32 %v9067, %v8971
        %v9100 = vmul.f32 %v9068, %v8976
        %v9101 = vmul.f32 %v9069, %v8979
        %v9102 = vmul.f32 %v9070, %v8984
        %v9103 = vmul.f32 %v9071, %v8987
        %v9104 = vmul.f32 %v9072, %v8992
        %v9105 = vmul.f32 %v9073, %v8995
        %v9106 = vmul.f32 %v9074, %v9000
        %v9107 = vmul.f32 %v9075, %v9003
        %v9108 = vmul.f32 %v9076, %v9008
        %v9109 = vmul.f32 %v9077, %v9011
        %v9110 = vmul.f32 %v9078, %v8888
        %v9111 = vmul.f32 %v9079, %v8891
        %v9112 = vmul.f32 %v9080, %v8896
        %v9113 = vmul.f32 %v9081, %v8899
        %v9114 = vmul.f32 %v9082, %v8904
        %v9115 = vmul.f32 %v9083, %v8907
        %v9116 = vmul.f32 %v9084, %v8912
        %v9117 = vmul.f32 %v9085, %v8915
        %v9118 = vmul.f32 %v9086, %v8920
        %v9119 = vmul.f32 %v9087, %v8923
        %v9120 = vmul.f32 %v9088, %v8928
        %v9121 = vmul.f32 %v9089, %v8931
        %v9122 = vmul.f32 %v9090, %v8936
        %v9123 = vmul.f32 %v9091, %v8939
        %v9124 = vmul.f32 %v9092, %v8944
        %v9125 = vmul.f32 %v9093, %v8947
        %v9126 = vmul.f32 %v9094, %v8952
        %v9127 = vmul.f32 %v9095, %v8955
        %v9128 = vmul.f32 %v9096, %v8960
        %v9129 = vmul.f32 %v9097, %v8963
        %v9130 = vmul.f32 %v9098, %v8968
        %v9131 = vmul.f32 %v9099, %v8971
        %v9132 = vmul.f32 %v9100, %v8976
        %v9133 = vmul.f32 %v9101, %v8979
        %v9134 = vmul.f32 %v9102, %v8984
        %v9135 = vmul.f32 %v9103, %v8987
        %v9136 = vmul.f32 %v9104, %v8992
        %v9137 = vmul.f32 %v9105, %v8995
        %v9138 = vmul.f32 %v9106, %v9000
        %v9139 = vmul.f32 %v9107, %v9003
        %v9140 = vmul.f32 %v9108, %v9008
        %v9141 = vmul.f32 %v9109, %v9011
        %v9142 = vadd.f32 %v8888, %v9110
        %v9143 = vadd.f32 %v8891, %v9111
        %v9144 = vadd.f32 %v8896, %v9112
        %v9145 = vadd.f32 %v8899, %v9113
        %v9146 = vadd.f32 %v8904, %v9114
        %v9147 = vadd.f32 %v8907, %v9115
        %v9148 = vadd.f32 %v8912, %v9116
        %v9149 = vadd.f32 %v8915, %v9117
        %v9150 = vadd.f32 %v8920, %v9118
        %v9151 = vadd.f32 %v8923, %v9119
        %v9152 = vadd.f32 %v8928, %v9120
        %v9153 = vadd.f32 %v8931, %v9121
        %v9154 = vadd.f32 %v8936, %v9122
        %v9155 = vadd.f32 %v8939, %v9123
        %v9156 = vadd.f32 %v8944, %v9124
        %v9157 = vadd.f32 %v8947, %v9125
        %v9158 = vadd.f32 %v8952, %v9126
        %v9159 = vadd.f32 %v8955, %v9127
        %v9160 = vadd.f32 %v8960, %v9128
        %v9161 = vadd.f32 %v8963, %v9129
        %v9162 = vadd.f32 %v8968, %v9130
        %v9163 = vadd.f32 %v8971, %v9131
        %v9164 = vadd.f32 %v8976, %v9132
        %v9165 = vadd.f32 %v8979, %v9133
        %v9166 = vadd.f32 %v8984, %v9134
        %v9167 = vadd.f32 %v8987, %v9135
        %v9168 = vadd.f32 %v8992, %v9136
        %v9169 = vadd.f32 %v8995, %v9137
        %v9170 = vadd.f32 %v9000, %v9138
        %v9171 = vadd.f32 %v9003, %v9139
        %v9172 = vadd.f32 %v9008, %v9140
        %v9173 = vadd.f32 %v9011, %v9141
        %v9174 = vmul.f32 %v9142, 0.7978846
        %v9175 = vmul.f32 %v9143, 0.7978846
        %v9176 = vmul.f32 %v9144, 0.7978846
        %v9177 = vmul.f32 %v9145, 0.7978846
        %v9178 = vmul.f32 %v9146, 0.7978846
        %v9179 = vmul.f32 %v9147, 0.7978846
        %v9180 = vmul.f32 %v9148, 0.7978846
        %v9181 = vmul.f32 %v9149, 0.7978846
        %v9182 = vmul.f32 %v9150, 0.7978846
        %v9183 = vmul.f32 %v9151, 0.7978846
        %v9184 = vmul.f32 %v9152, 0.7978846
        %v9185 = vmul.f32 %v9153, 0.7978846
        %v9186 = vmul.f32 %v9154, 0.7978846
        %v9187 = vmul.f32 %v9155, 0.7978846
        %v9188 = vmul.f32 %v9156, 0.7978846
        %v9189 = vmul.f32 %v9157, 0.7978846
        %v9190 = vmul.f32 %v9158, 0.7978846
        %v9191 = vmul.f32 %v9159, 0.7978846
        %v9192 = vmul.f32 %v9160, 0.7978846
        %v9193 = vmul.f32 %v9161, 0.7978846
        %v9194 = vmul.f32 %v9162, 0.7978846
        %v9195 = vmul.f32 %v9163, 0.7978846
        %v9196 = vmul.f32 %v9164, 0.7978846
        %v9197 = vmul.f32 %v9165, 0.7978846
        %v9198 = vmul.f32 %v9166, 0.7978846
        %v9199 = vmul.f32 %v9167, 0.7978846
        %v9200 = vmul.f32 %v9168, 0.7978846
        %v9201 = vmul.f32 %v9169, 0.7978846
        %v9202 = vmul.f32 %v9170, 0.7978846
        %v9203 = vmul.f32 %v9171, 0.7978846
        %v9204 = vmul.f32 %v9172, 0.7978846
        %v9205 = vmul.f32 %v9173, 0.7978846
        %v9206 = vtanh.pop %v9174
        %v9207 = vtanh.pop %v9175
        %v9208 = vtanh.pop %v9176
        %v9209 = vtanh.pop %v9177
        %v9210 = vtanh.pop %v9178
        %v9211 = vtanh.pop %v9179
        %v9212 = vtanh.pop %v9180
        %v9213 = vtanh.pop %v9181
        %v9214 = vtanh.pop %v9182
        %v9215 = vtanh.pop %v9183
        %v9216 = vtanh.pop %v9184
        %v9217 = vtanh.pop %v9185
        %v9218 = vtanh.pop %v9186
        %v9219 = vtanh.pop %v9187
        %v9220 = vtanh.pop %v9188
        %v9221 = vtanh.pop %v9189
        %v9222 = vtanh.pop %v9190
        %v9223 = vtanh.pop %v9191
        %v9224 = vtanh.pop %v9192
        %v9225 = vtanh.pop %v9193
        %v9226 = vtanh.pop %v9194
        %v9227 = vtanh.pop %v9195
        %v9228 = vtanh.pop %v9196
        %v9229 = vtanh.pop %v9197
        %v9230 = vtanh.pop %v9198
        %v9231 = vtanh.pop %v9199
        %v9232 = vtanh.pop %v9200
        %v9233 = vtanh.pop %v9201
        %v9234 = vtanh.pop %v9202
        %v9235 = vtanh.pop %v9203
        %v9236 = vtanh.pop %v9204
        %v9237 = vtanh.pop %v9205
        %v9238 = vadd.f32 %v9206, 1.0
        %v9239 = vadd.f32 %v9207, 1.0
        %v9240 = vadd.f32 %v9208, 1.0
        %v9241 = vadd.f32 %v9209, 1.0
        %v9242 = vadd.f32 %v9210, 1.0
        %v9243 = vadd.f32 %v9211, 1.0
        %v9244 = vadd.f32 %v9212, 1.0
        %v9245 = vadd.f32 %v9213, 1.0
        %v9246 = vadd.f32 %v9214, 1.0
        %v9247 = vadd.f32 %v9215, 1.0
        %v9248 = vadd.f32 %v9216, 1.0
        %v9249 = vadd.f32 %v9217, 1.0
        %v9250 = vadd.f32 %v9218, 1.0
        %v9251 = vadd.f32 %v9219, 1.0
        %v9252 = vadd.f32 %v9220, 1.0
        %v9253 = vadd.f32 %v9221, 1.0
        %v9254 = vadd.f32 %v9222, 1.0
        %v9255 = vadd.f32 %v9223, 1.0
        %v9256 = vadd.f32 %v9224, 1.0
        %v9257 = vadd.f32 %v9225, 1.0
        %v9258 = vadd.f32 %v9226, 1.0
        %v9259 = vadd.f32 %v9227, 1.0
        %v9260 = vadd.f32 %v9228, 1.0
        %v9261 = vadd.f32 %v9229, 1.0
        %v9262 = vadd.f32 %v9230, 1.0
        %v9263 = vadd.f32 %v9231, 1.0
        %v9264 = vadd.f32 %v9232, 1.0
        %v9265 = vadd.f32 %v9233, 1.0
        %v9266 = vadd.f32 %v9234, 1.0
        %v9267 = vadd.f32 %v9235, 1.0
        %v9268 = vadd.f32 %v9236, 1.0
        %v9269 = vadd.f32 %v9237, 1.0
        %v9270 = vmul.f32 %v9014, %v9238
        %v9271 = vmul.f32 %v9015, %v9239
        %v9272 = vmul.f32 %v9016, %v9240
        %v9273 = vmul.f32 %v9017, %v9241
        %v9274 = vmul.f32 %v9018, %v9242
        %v9275 = vmul.f32 %v9019, %v9243
        %v9276 = vmul.f32 %v9020, %v9244
        %v9277 = vmul.f32 %v9021, %v9245
        %v9278 = vmul.f32 %v9022, %v9246
        %v9279 = vmul.f32 %v9023, %v9247
        %v9280 = vmul.f32 %v9024, %v9248
        %v9281 = vmul.f32 %v9025, %v9249
        %v9282 = vmul.f32 %v9026, %v9250
        %v9283 = vmul.f32 %v9027, %v9251
        %v9284 = vmul.f32 %v9028, %v9252
        %v9285 = vmul.f32 %v9029, %v9253
        %v9286 = vmul.f32 %v9030, %v9254
        %v9287 = vmul.f32 %v9031, %v9255
        %v9288 = vmul.f32 %v9032, %v9256
        %v9289 = vmul.f32 %v9033, %v9257
        %v9290 = vmul.f32 %v9034, %v9258
        %v9291 = vmul.f32 %v9035, %v9259
        %v9292 = vmul.f32 %v9036, %v9260
        %v9293 = vmul.f32 %v9037, %v9261
        %v9294 = vmul.f32 %v9038, %v9262
        %v9295 = vmul.f32 %v9039, %v9263
        %v9296 = vmul.f32 %v9040, %v9264
        %v9297 = vmul.f32 %v9041, %v9265
        %v9298 = vmul.f32 %v9042, %v9266
        %v9299 = vmul.f32 %v9043, %v9267
        %v9300 = vmul.f32 %v9044, %v9268
        %v9301 = vmul.f32 %v9045, %v9269
        %v9302 = vld [vmem:[%s10] sm:$0xff]
        %v9303 = vld [vmem:[%s10 + $0x8] sm:$0xff]
        %v9304 = vld [vmem:[%s10 + $0x10] sm:$0xff]
        %v9305 = vld [vmem:[%s10 + $0x18] sm:$0xff]
        %v9306 = vld [vmem:[%s10 + $0x20] sm:$0xff]
        %v9307 = vld [vmem:[%s10 + $0x28] sm:$0xff]
        %v9308 = vpack.c.bf16 %v9271, %v9270
        %v9309 = vpack.c.bf16 %v9273, %v9272
        %v9310 = vpack.c.bf16 %v9275, %v9274
        %v9311 = vpack.c.bf16 %v9277, %v9276
        %v9312 = vpack.c.bf16 %v9279, %v9278
        %v9313 = vpack.c.bf16 %v9281, %v9280
        %v9314 = vpack.c.bf16 %v9283, %v9282
        %v9315 = vpack.c.bf16 %v9285, %v9284
        %v9316 = vpack.c.bf16 %v9287, %v9286
        %v9317 = vpack.c.bf16 %v9289, %v9288
        %v9318 = vpack.c.bf16 %v9291, %v9290
        %v9319 = vpack.c.bf16 %v9293, %v9292
        %v9320 = vpack.c.bf16 %v9295, %v9294
        %v9321 = vpack.c.bf16 %v9297, %v9296
        %v9322 = vpack.c.bf16 %v9299, %v9298
        %v9323 = vpack.c.bf16 %v9301, %v9300
        %v9324 = vpack.c.bf16 %v9303, %v9302
        %v9325 = vpack.c.bf16 %v9305, %v9304
        %v9326 = vpack.c.bf16 %v9307, %v9306
        %v9327 = vld [vmem:[%s16 + $0x11] sm:$0x1]
        %v9328 = vlaneseq
        %v9329 = vshrl.u32 %v9328, 7
        %v9330 = vsub.s32 0, %v9329
        %v9331 = vrot.slane %v9327, %v9330
        %v9333 = vsel %vm1050, %v9308, 0
        %v9336 = vsel %vm1050, %v9309, 0
        %v9339 = vsel %vm1050, %v9310, 0
        %v9342 = vsel %vm1050, %v9311, 0
        %v9345 = vsel %vm1050, %v9312, 0
        %v9348 = vsel %vm1050, %v9313, 0
        %v9351 = vsel %vm1050, %v9314, 0
        %v9354 = vsel %vm1050, %v9315, 0
        %v9357 = vsel %vm1050, %v9316, 0
        %v9360 = vsel %vm1050, %v9317, 0
        %v9363 = vsel %vm1050, %v9318, 0
        %v9366 = vsel %vm1050, %v9319, 0
        %v9369 = vsel %vm1050, %v9320, 0
        %v9372 = vsel %vm1050, %v9321, 0
        %v9375 = vsel %vm1050, %v9322, 0
        %v9378 = vsel %vm1050, %v9323, 0
        %9380 = vmatprep.subr.bf16.mxu0 0
        %9381 = vmatpush1.bf16.msra.mxu0 %v9324
        %9382 = vmatprep.subr.bf16.mxu0 0
        %9383 = vmatpush1.bf16.msra.mxu0 %v9325
        %9384 = vmatprep.subr.bf16.mxu0 0
        %9385 = vmatpush1.bf16.msra.mxu0 %v9326
        %9386 = vmatprep.subr.bf16.mxu0 0
        %9387 = vmatpush1.bf16.msra.mxu0 0
        %9388 = vmatprep.subr.bf16.mxu0 0
        %9389 = vmatpush1.bf16.msra.mxu0 0
        %9390 = vmatprep.subr.bf16.mxu0 0
        %9391 = vmatpush1.bf16.msra.mxu0 0
        %9392 = vmatprep.subr.bf16.mxu0 0
        %9393 = vmatpush1.bf16.msra.mxu0 0
        %9394 = vmatprep.subr.bf16.mxu0 0
        %9395 = vmatpush1.bf16.msra.mxu0 0
        %9396 = vmatprep.subr.bf16.mxu0 0
        %9397 = vmatpush1.bf16.msra.mxu0 0
        %9398 = vmatprep.subr.bf16.mxu0 0
        %9399 = vmatpush1.bf16.msra.mxu0 0
        %9400 = vmatprep.subr.bf16.mxu0 0
        %9401 = vmatpush1.bf16.msra.mxu0 0
        %9402 = vmatprep.subr.bf16.mxu0 0
        %9403 = vmatpush1.bf16.msra.mxu0 0
        %9404 = vmatprep.subr.bf16.mxu0 0
        %9405 = vmatpush1.bf16.msra.mxu0 0
        %9406 = vmatprep.subr.bf16.mxu0 0
        %9407 = vmatpush1.bf16.msra.mxu0 0
        %9408 = vmatprep.subr.bf16.mxu0 0
        %9409 = vmatpush1.bf16.msra.mxu0 0
        %9410 = vmatprep.subr.bf16.mxu0 0
        %9411 = vmatpush1.bf16.msra.mxu0 0
        %9412 = vmatprep.mubr.bf16.mxu0 0
        %9413 = vmatmul.mubr.bf16.gmra.mrb[0].mxu0 %v9333
        %v9414 = vpop.f32.mrb[0].mxu0
        %v9415 = vadd.f32 %v9331, %v9414
        %v9416 = vpop.f32.mrb[0].mxu0
        %v9417 = vpop.f32.mrb[0].mxu0
        %v9418 = vadd.f32 %v9331, %v9417
        %v9419 = vpop.f32.mrb[0].mxu0
        %9420 = vmatprep.mubr.bf16.mxu0 0
        %9421 = vmatmul.mubr.bf16.gmra.mrb[0].mxu0 %v9336
        %v9422 = vpop.f32.mrb[0].mxu0
        %v9423 = vadd.f32 %v9331, %v9422
        %v9424 = vpop.f32.mrb[0].mxu0
        %v9425 = vpop.f32.mrb[0].mxu0
        %v9426 = vadd.f32 %v9331, %v9425
        %v9427 = vpop.f32.mrb[0].mxu0
        %9428 = vmatprep.mubr.bf16.mxu0 0
        %9429 = vmatmul.mubr.bf16.gmra.mrb[0].mxu0 %v9339
        %v9430 = vpop.f32.mrb[0].mxu0
        %v9431 = vadd.f32 %v9331, %v9430
        %v9432 = vpop.f32.mrb[0].mxu0
        %v9433 = vpop.f32.mrb[0].mxu0
        %v9434 = vadd.f32 %v9331, %v9433
        %v9435 = vpop.f32.mrb[0].mxu0
        %9436 = vmatprep.mubr.bf16.mxu0 0
        %9437 = vmatmul.mubr.bf16.gmra.mrb[0].mxu0 %v9342
        %v9438 = vpop.f32.mrb[0].mxu0
        %v9439 = vadd.f32 %v9331, %v9438
        %v9440 = vpop.f32.mrb[0].mxu0
        %v9441 = vpop.f32.mrb[0].mxu0
        %v9442 = vadd.f32 %v9331, %v9441
        %v9443 = vpop.f32.mrb[0].mxu0
        %9444 = vmatprep.mubr.bf16.mxu0 0
        %9445 = vmatmul.mubr.bf16.gmra.mrb[0].mxu0 %v9345
        %v9446 = vpop.f32.mrb[0].mxu0
        %v9447 = vadd.f32 %v9331, %v9446
        %v9448 = vpop.f32.mrb[0].mxu0
        %v9449 = vpop.f32.mrb[0].mxu0
        %v9450 = vadd.f32 %v9331, %v9449
        %v9451 = vpop.f32.mrb[0].mxu0
        %9452 = vmatprep.mubr.bf16.mxu0 0
        %9453 = vmatmul.mubr.bf16.gmra.mrb[0].mxu0 %v9348
        %v9454 = vpop.f32.mrb[0].mxu0
        %v9455 = vadd.f32 %v9331, %v9454
        %v9456 = vpop.f32.mrb[0].mxu0
        %v9457 = vpop.f32.mrb[0].mxu0
        %v9458 = vadd.f32 %v9331, %v9457
        %v9459 = vpop.f32.mrb[0].mxu0
        %9460 = vmatprep.mubr.bf16.mxu0 0
        %9461 = vmatmul.mubr.bf16.gmra.mrb[0].mxu0 %v9351
        %v9462 = vpop.f32.mrb[0].mxu0
        %v9463 = vadd.f32 %v9331, %v9462
        %v9464 = vpop.f32.mrb[0].mxu0
        %v9465 = vpop.f32.mrb[0].mxu0
        %v9466 = vadd.f32 %v9331, %v9465
        %v9467 = vpop.f32.mrb[0].mxu0
        %9468 = vmatprep.mubr.bf16.mxu0 0
        %9469 = vmatmul.mubr.bf16.gmra.mrb[0].mxu0 %v9354
        %v9470 = vpop.f32.mrb[0].mxu0
        %v9471 = vadd.f32 %v9331, %v9470
        %v9472 = vpop.f32.mrb[0].mxu0
        %v9473 = vpop.f32.mrb[0].mxu0
        %v9474 = vadd.f32 %v9331, %v9473
        %v9475 = vpop.f32.mrb[0].mxu0
        %9476 = vmatprep.mubr.bf16.mxu0 0
        %9477 = vmatmul.mubr.bf16.gmra.mrb[0].mxu0 %v9357
        %v9478 = vpop.f32.mrb[0].mxu0
        %v9479 = vadd.f32 %v9331, %v9478
        %v9480 = vpop.f32.mrb[0].mxu0
        %v9481 = vpop.f32.mrb[0].mxu0
        %v9482 = vadd.f32 %v9331, %v9481
        %v9483 = vpop.f32.mrb[0].mxu0
        %9484 = vmatprep.mubr.bf16.mxu0 0
        %9485 = vmatmul.mubr.bf16.gmra.mrb[0].mxu0 %v9360
        %v9486 = vpop.f32.mrb[0].mxu0
        %v9487 = vadd.f32 %v9331, %v9486
        %v9488 = vpop.f32.mrb[0].mxu0
        %v9489 = vpop.f32.mrb[0].mxu0
        %v9490 = vadd.f32 %v9331, %v9489
        %v9491 = vpop.f32.mrb[0].mxu0
        %9492 = vmatprep.mubr.bf16.mxu0 0
        %9493 = vmatmul.mubr.bf16.gmra.mrb[0].mxu0 %v9363
        %v9494 = vpop.f32.mrb[0].mxu0
        %v9495 = vadd.f32 %v9331, %v9494
        %v9496 = vpop.f32.mrb[0].mxu0
        %v9497 = vpop.f32.mrb[0].mxu0
        %v9498 = vadd.f32 %v9331, %v9497
        %v9499 = vpop.f32.mrb[0].mxu0
        %9500 = vmatprep.mubr.bf16.mxu0 0
        %9501 = vmatmul.mubr.bf16.gmra.mrb[0].mxu0 %v9366
        %v9502 = vpop.f32.mrb[0].mxu0
        %v9503 = vadd.f32 %v9331, %v9502
        %v9504 = vpop.f32.mrb[0].mxu0
        %v9505 = vpop.f32.mrb[0].mxu0
        %v9506 = vadd.f32 %v9331, %v9505
        %v9507 = vpop.f32.mrb[0].mxu0
        %9508 = vmatprep.mubr.bf16.mxu0 0
        %9509 = vmatmul.mubr.bf16.gmra.mrb[0].mxu0 %v9369
        %v9510 = vpop.f32.mrb[0].mxu0
        %v9511 = vadd.f32 %v9331, %v9510
        %v9512 = vpop.f32.mrb[0].mxu0
        %v9513 = vpop.f32.mrb[0].mxu0
        %v9514 = vadd.f32 %v9331, %v9513
        %v9515 = vpop.f32.mrb[0].mxu0
        %9516 = vmatprep.mubr.bf16.mxu0 0
        %9517 = vmatmul.mubr.bf16.gmra.mrb[0].mxu0 %v9372
        %v9518 = vpop.f32.mrb[0].mxu0
        %v9519 = vadd.f32 %v9331, %v9518
        %v9520 = vpop.f32.mrb[0].mxu0
        %v9521 = vpop.f32.mrb[0].mxu0
        %v9522 = vadd.f32 %v9331, %v9521
        %v9523 = vpop.f32.mrb[0].mxu0
        %9524 = vmatprep.mubr.bf16.mxu0 0
        %9525 = vmatmul.mubr.bf16.gmra.mrb[0].mxu0 %v9375
        %v9526 = vpop.f32.mrb[0].mxu0
        %v9527 = vadd.f32 %v9331, %v9526
        %v9528 = vpop.f32.mrb[0].mxu0
        %v9529 = vpop.f32.mrb[0].mxu0
        %v9530 = vadd.f32 %v9331, %v9529
        %v9531 = vpop.f32.mrb[0].mxu0
        %9532 = vmatprep.mubr.bf16.mxu0 0
        %9533 = vmatmul.mubr.bf16.gmra.mrb[0].mxu0 %v9378
        %v9534 = vpop.f32.mrb[0].mxu0
        %v9535 = vadd.f32 %v9331, %v9534
        %v9536 = vpop.f32.mrb[0].mxu0
        %v9537 = vpop.f32.mrb[0].mxu0
        %v9538 = vadd.f32 %v9331, %v9537
        %v9539 = vpop.f32.mrb[0].mxu0
        %9540 = vdwg.mxu0
        %v9541 = vmul.f32 %v9415, 0.5
        %v9542 = vmul.f32 %v9418, 0.5
        %v9543 = vmul.f32 %v9423, 0.5
        %v9544 = vmul.f32 %v9426, 0.5
        %v9545 = vmul.f32 %v9431, 0.5
        %v9546 = vmul.f32 %v9434, 0.5
        %v9547 = vmul.f32 %v9439, 0.5
        %v9548 = vmul.f32 %v9442, 0.5
        %v9549 = vmul.f32 %v9447, 0.5
        %v9550 = vmul.f32 %v9450, 0.5
        %v9551 = vmul.f32 %v9455, 0.5
        %v9552 = vmul.f32 %v9458, 0.5
        %v9553 = vmul.f32 %v9463, 0.5
        %v9554 = vmul.f32 %v9466, 0.5
        %v9555 = vmul.f32 %v9471, 0.5
        %v9556 = vmul.f32 %v9474, 0.5
        %v9557 = vmul.f32 %v9479, 0.5
        %v9558 = vmul.f32 %v9482, 0.5
        %v9559 = vmul.f32 %v9487, 0.5
        %v9560 = vmul.f32 %v9490, 0.5
        %v9561 = vmul.f32 %v9495, 0.5
        %v9562 = vmul.f32 %v9498, 0.5
        %v9563 = vmul.f32 %v9503, 0.5
        %v9564 = vmul.f32 %v9506, 0.5
        %v9565 = vmul.f32 %v9511, 0.5
        %v9566 = vmul.f32 %v9514, 0.5
        %v9567 = vmul.f32 %v9519, 0.5
        %v9568 = vmul.f32 %v9522, 0.5
        %v9569 = vmul.f32 %v9527, 0.5
        %v9570 = vmul.f32 %v9530, 0.5
        %v9571 = vmul.f32 %v9535, 0.5
        %v9572 = vmul.f32 %v9538, 0.5
        %v9573 = vmul.f32 %v9415, 0.044715
        %v9574 = vmul.f32 %v9418, 0.044715
        %v9575 = vmul.f32 %v9423, 0.044715
        %v9576 = vmul.f32 %v9426, 0.044715
        %v9577 = vmul.f32 %v9431, 0.044715
        %v9578 = vmul.f32 %v9434, 0.044715
        %v9579 = vmul.f32 %v9439, 0.044715
        %v9580 = vmul.f32 %v9442, 0.044715
        %v9581 = vmul.f32 %v9447, 0.044715
        %v9582 = vmul.f32 %v9450, 0.044715
        %v9583 = vmul.f32 %v9455, 0.044715
        %v9584 = vmul.f32 %v9458, 0.044715
        %v9585 = vmul.f32 %v9463, 0.044715
        %v9586 = vmul.f32 %v9466, 0.044715
        %v9587 = vmul.f32 %v9471, 0.044715
        %v9588 = vmul.f32 %v9474, 0.044715
        %v9589 = vmul.f32 %v9479, 0.044715
        %v9590 = vmul.f32 %v9482, 0.044715
        %v9591 = vmul.f32 %v9487, 0.044715
        %v9592 = vmul.f32 %v9490, 0.044715
        %v9593 = vmul.f32 %v9495, 0.044715
        %v9594 = vmul.f32 %v9498, 0.044715
        %v9595 = vmul.f32 %v9503, 0.044715
        %v9596 = vmul.f32 %v9506, 0.044715
        %v9597 = vmul.f32 %v9511, 0.044715
        %v9598 = vmul.f32 %v9514, 0.044715
        %v9599 = vmul.f32 %v9519, 0.044715
        %v9600 = vmul.f32 %v9522, 0.044715
        %v9601 = vmul.f32 %v9527, 0.044715
        %v9602 = vmul.f32 %v9530, 0.044715
        %v9603 = vmul.f32 %v9535, 0.044715
        %v9604 = vmul.f32 %v9538, 0.044715
        %v9605 = vmul.f32 %v9573, %v9415
        %v9606 = vmul.f32 %v9574, %v9418
        %v9607 = vmul.f32 %v9575, %v9423
        %v9608 = vmul.f32 %v9576, %v9426
        %v9609 = vmul.f32 %v9577, %v9431
        %v9610 = vmul.f32 %v9578, %v9434
        %v9611 = vmul.f32 %v9579, %v9439
        %v9612 = vmul.f32 %v9580, %v9442
        %v9613 = vmul.f32 %v9581, %v9447
        %v9614 = vmul.f32 %v9582, %v9450
        %v9615 = vmul.f32 %v9583, %v9455
        %v9616 = vmul.f32 %v9584, %v9458
        %v9617 = vmul.f32 %v9585, %v9463
        %v9618 = vmul.f32 %v9586, %v9466
        %v9619 = vmul.f32 %v9587, %v9471
        %v9620 = vmul.f32 %v9588, %v9474
        %v9621 = vmul.f32 %v9589, %v9479
        %v9622 = vmul.f32 %v9590, %v9482
        %v9623 = vmul.f32 %v9591, %v9487
        %v9624 = vmul.f32 %v9592, %v9490
        %v9625 = vmul.f32 %v9593, %v9495
        %v9626 = vmul.f32 %v9594, %v9498
        %v9627 = vmul.f32 %v9595, %v9503
        %v9628 = vmul.f32 %v9596, %v9506
        %v9629 = vmul.f32 %v9597, %v9511
        %v9630 = vmul.f32 %v9598, %v9514
        %v9631 = vmul.f32 %v9599, %v9519
        %v9632 = vmul.f32 %v9600, %v9522
        %v9633 = vmul.f32 %v9601, %v9527
        %v9634 = vmul.f32 %v9602, %v9530
        %v9635 = vmul.f32 %v9603, %v9535
        %v9636 = vmul.f32 %v9604, %v9538
        %v9637 = vmul.f32 %v9605, %v9415
        %v9638 = vmul.f32 %v9606, %v9418
        %v9639 = vmul.f32 %v9607, %v9423
        %v9640 = vmul.f32 %v9608, %v9426
        %v9641 = vmul.f32 %v9609, %v9431
        %v9642 = vmul.f32 %v9610, %v9434
        %v9643 = vmul.f32 %v9611, %v9439
        %v9644 = vmul.f32 %v9612, %v9442
        %v9645 = vmul.f32 %v9613, %v9447
        %v9646 = vmul.f32 %v9614, %v9450
        %v9647 = vmul.f32 %v9615, %v9455
        %v9648 = vmul.f32 %v9616, %v9458
        %v9649 = vmul.f32 %v9617, %v9463
        %v9650 = vmul.f32 %v9618, %v9466
        %v9651 = vmul.f32 %v9619, %v9471
        %v9652 = vmul.f32 %v9620, %v9474
        %v9653 = vmul.f32 %v9621, %v9479
        %v9654 = vmul.f32 %v9622, %v9482
        %v9655 = vmul.f32 %v9623, %v9487
        %v9656 = vmul.f32 %v9624, %v9490
        %v9657 = vmul.f32 %v9625, %v9495
        %v9658 = vmul.f32 %v9626, %v9498
        %v9659 = vmul.f32 %v9627, %v9503
        %v9660 = vmul.f32 %v9628, %v9506
        %v9661 = vmul.f32 %v9629, %v9511
        %v9662 = vmul.f32 %v9630, %v9514
        %v9663 = vmul.f32 %v9631, %v9519
        %v9664 = vmul.f32 %v9632, %v9522
        %v9665 = vmul.f32 %v9633, %v9527
        %v9666 = vmul.f32 %v9634, %v9530
        %v9667 = vmul.f32 %v9635, %v9535
        %v9668 = vmul.f32 %v9636, %v9538
        %v9669 = vadd.f32 %v9415, %v9637
        %v9670 = vadd.f32 %v9418, %v9638
        %v9671 = vadd.f32 %v9423, %v9639
        %v9672 = vadd.f32 %v9426, %v9640
        %v9673 = vadd.f32 %v9431, %v9641
        %v9674 = vadd.f32 %v9434, %v9642
        %v9675 = vadd.f32 %v9439, %v9643
        %v9676 = vadd.f32 %v9442, %v9644
        %v9677 = vadd.f32 %v9447, %v9645
        %v9678 = vadd.f32 %v9450, %v9646
        %v9679 = vadd.f32 %v9455, %v9647
        %v9680 = vadd.f32 %v9458, %v9648
        %v9681 = vadd.f32 %v9463, %v9649
        %v9682 = vadd.f32 %v9466, %v9650
        %v9683 = vadd.f32 %v9471, %v9651
        %v9684 = vadd.f32 %v9474, %v9652
        %v9685 = vadd.f32 %v9479, %v9653
        %v9686 = vadd.f32 %v9482, %v9654
        %v9687 = vadd.f32 %v9487, %v9655
        %v9688 = vadd.f32 %v9490, %v9656
        %v9689 = vadd.f32 %v9495, %v9657
        %v9690 = vadd.f32 %v9498, %v9658
        %v9691 = vadd.f32 %v9503, %v9659
        %v9692 = vadd.f32 %v9506, %v9660
        %v9693 = vadd.f32 %v9511, %v9661
        %v9694 = vadd.f32 %v9514, %v9662
        %v9695 = vadd.f32 %v9519, %v9663
        %v9696 = vadd.f32 %v9522, %v9664
        %v9697 = vadd.f32 %v9527, %v9665
        %v9698 = vadd.f32 %v9530, %v9666
        %v9699 = vadd.f32 %v9535, %v9667
        %v9700 = vadd.f32 %v9538, %v9668
        %v9701 = vmul.f32 %v9669, 0.7978846
        %v9702 = vmul.f32 %v9670, 0.7978846
        %v9703 = vmul.f32 %v9671, 0.7978846
        %v9704 = vmul.f32 %v9672, 0.7978846
        %v9705 = vmul.f32 %v9673, 0.7978846
        %v9706 = vmul.f32 %v9674, 0.7978846
        %v9707 = vmul.f32 %v9675, 0.7978846
        %v9708 = vmul.f32 %v9676, 0.7978846
        %v9709 = vmul.f32 %v9677, 0.7978846
        %v9710 = vmul.f32 %v9678, 0.7978846
        %v9711 = vmul.f32 %v9679, 0.7978846
        %v9712 = vmul.f32 %v9680, 0.7978846
        %v9713 = vmul.f32 %v9681, 0.7978846
        %v9714 = vmul.f32 %v9682, 0.7978846
        %v9715 = vmul.f32 %v9683, 0.7978846
        %v9716 = vmul.f32 %v9684, 0.7978846
        %v9717 = vmul.f32 %v9685, 0.7978846
        %v9718 = vmul.f32 %v9686, 0.7978846
        %v9719 = vmul.f32 %v9687, 0.7978846
        %v9720 = vmul.f32 %v9688, 0.7978846
        %v9721 = vmul.f32 %v9689, 0.7978846
        %v9722 = vmul.f32 %v9690, 0.7978846
        %v9723 = vmul.f32 %v9691, 0.7978846
        %v9724 = vmul.f32 %v9692, 0.7978846
        %v9725 = vmul.f32 %v9693, 0.7978846
        %v9726 = vmul.f32 %v9694, 0.7978846
        %v9727 = vmul.f32 %v9695, 0.7978846
        %v9728 = vmul.f32 %v9696, 0.7978846
        %v9729 = vmul.f32 %v9697, 0.7978846
        %v9730 = vmul.f32 %v9698, 0.7978846
        %v9731 = vmul.f32 %v9699, 0.7978846
        %v9732 = vmul.f32 %v9700, 0.7978846
        %v9733 = vtanh.pop %v9701
        %v9734 = vtanh.pop %v9702
        %v9735 = vtanh.pop %v9703
        %v9736 = vtanh.pop %v9704
        %v9737 = vtanh.pop %v9705
        %v9738 = vtanh.pop %v9706
        %v9739 = vtanh.pop %v9707
        %v9740 = vtanh.pop %v9708
        %v9741 = vtanh.pop %v9709
        %v9742 = vtanh.pop %v9710
        %v9743 = vtanh.pop %v9711
        %v9744 = vtanh.pop %v9712
        %v9745 = vtanh.pop %v9713
        %v9746 = vtanh.pop %v9714
        %v9747 = vtanh.pop %v9715
        %v9748 = vtanh.pop %v9716
        %v9749 = vtanh.pop %v9717
        %v9750 = vtanh.pop %v9718
        %v9751 = vtanh.pop %v9719
        %v9752 = vtanh.pop %v9720
        %v9753 = vtanh.pop %v9721
        %v9754 = vtanh.pop %v9722
        %v9755 = vtanh.pop %v9723
        %v9756 = vtanh.pop %v9724
        %v9757 = vtanh.pop %v9725
        %v9758 = vtanh.pop %v9726
        %v9759 = vtanh.pop %v9727
        %v9760 = vtanh.pop %v9728
        %v9761 = vtanh.pop %v9729
        %v9762 = vtanh.pop %v9730
        %v9763 = vtanh.pop %v9731
        %v9764 = vtanh.pop %v9732
        %v9765 = vadd.f32 %v9733, 1.0
        %v9766 = vadd.f32 %v9734, 1.0
        %v9767 = vadd.f32 %v9735, 1.0
        %v9768 = vadd.f32 %v9736, 1.0
        %v9769 = vadd.f32 %v9737, 1.0
        %v9770 = vadd.f32 %v9738, 1.0
        %v9771 = vadd.f32 %v9739, 1.0
        %v9772 = vadd.f32 %v9740, 1.0
        %v9773 = vadd.f32 %v9741, 1.0
        %v9774 = vadd.f32 %v9742, 1.0
        %v9775 = vadd.f32 %v9743, 1.0
        %v9776 = vadd.f32 %v9744, 1.0
        %v9777 = vadd.f32 %v9745, 1.0
        %v9778 = vadd.f32 %v9746, 1.0
        %v9779 = vadd.f32 %v9747, 1.0
        %v9780 = vadd.f32 %v9748, 1.0
        %v9781 = vadd.f32 %v9749, 1.0
        %v9782 = vadd.f32 %v9750, 1.0
        %v9783 = vadd.f32 %v9751, 1.0
        %v9784 = vadd.f32 %v9752, 1.0
        %v9785 = vadd.f32 %v9753, 1.0
        %v9786 = vadd.f32 %v9754, 1.0
        %v9787 = vadd.f32 %v9755, 1.0
        %v9788 = vadd.f32 %v9756, 1.0
        %v9789 = vadd.f32 %v9757, 1.0
        %v9790 = vadd.f32 %v9758, 1.0
        %v9791 = vadd.f32 %v9759, 1.0
        %v9792 = vadd.f32 %v9760, 1.0
        %v9793 = vadd.f32 %v9761, 1.0
        %v9794 = vadd.f32 %v9762, 1.0
        %v9795 = vadd.f32 %v9763, 1.0
        %v9796 = vadd.f32 %v9764, 1.0
        %v9797 = vmul.f32 %v9541, %v9765
        %v9798 = vmul.f32 %v9542, %v9766
        %v9799 = vmul.f32 %v9543, %v9767
        %v9800 = vmul.f32 %v9544, %v9768
        %v9801 = vmul.f32 %v9545, %v9769
        %v9802 = vmul.f32 %v9546, %v9770
        %v9803 = vmul.f32 %v9547, %v9771
        %v9804 = vmul.f32 %v9548, %v9772
        %v9805 = vmul.f32 %v9549, %v9773
        %v9806 = vmul.f32 %v9550, %v9774
        %v9807 = vmul.f32 %v9551, %v9775
        %v9808 = vmul.f32 %v9552, %v9776
        %v9809 = vmul.f32 %v9553, %v9777
        %v9810 = vmul.f32 %v9554, %v9778
        %v9811 = vmul.f32 %v9555, %v9779
        %v9812 = vmul.f32 %v9556, %v9780
        %v9813 = vmul.f32 %v9557, %v9781
        %v9814 = vmul.f32 %v9558, %v9782
        %v9815 = vmul.f32 %v9559, %v9783
        %v9816 = vmul.f32 %v9560, %v9784
        %v9817 = vmul.f32 %v9561, %v9785
        %v9818 = vmul.f32 %v9562, %v9786
        %v9819 = vmul.f32 %v9563, %v9787
        %v9820 = vmul.f32 %v9564, %v9788
        %v9821 = vmul.f32 %v9565, %v9789
        %v9822 = vmul.f32 %v9566, %v9790
        %v9823 = vmul.f32 %v9567, %v9791
        %v9824 = vmul.f32 %v9568, %v9792
        %v9825 = vmul.f32 %v9569, %v9793
        %v9826 = vmul.f32 %v9570, %v9794
        %v9827 = vmul.f32 %v9571, %v9795
        %v9828 = vmul.f32 %v9572, %v9796
        %v9829 = vld [vmem:[#allocation6] sm:$0x7]
        %v9830 = vpack.c.bf16 %v9829, %v9829
        %v9831 = vpack.c.bf16 %v9798, %v9797
        %v9832 = vpack.c.bf16 %v9800, %v9799
        %v9833 = vpack.c.bf16 %v9802, %v9801
        %v9834 = vpack.c.bf16 %v9804, %v9803
        %v9835 = vpack.c.bf16 %v9806, %v9805
        %v9836 = vpack.c.bf16 %v9808, %v9807
        %v9837 = vpack.c.bf16 %v9810, %v9809
        %v9838 = vpack.c.bf16 %v9812, %v9811
        %v9839 = vpack.c.bf16 %v9814, %v9813
        %v9840 = vpack.c.bf16 %v9816, %v9815
        %v9841 = vpack.c.bf16 %v9818, %v9817
        %v9842 = vpack.c.bf16 %v9820, %v9819
        %v9843 = vpack.c.bf16 %v9822, %v9821
        %v9844 = vpack.c.bf16 %v9824, %v9823
        %v9845 = vpack.c.bf16 %v9826, %v9825
        %v9846 = vpack.c.bf16 %v9828, %v9827
        %v9847 = vld [vmem:[%s12] sm:$0x7]
        %9849 = vset.pattern.permute.xlu0 0
        %9850 = vperm.xlu0 %9849, %v9847
        %v9851 = vpop.permute.xlu0 %9850
        %v9854 = vsel %vm1050, %v9830, 0
        %v9857 = vsel %vm1050, %v9831, 0
        %v9860 = vsel %vm1050, %v9832, 0
        %v9863 = vsel %vm1050, %v9833, 0
        %v9866 = vsel %vm1050, %v9834, 0
        %v9869 = vsel %vm1050, %v9835, 0
        %v9872 = vsel %vm1050, %v9836, 0
        %v9875 = vsel %vm1050, %v9837, 0
        %v9878 = vsel %vm1050, %v9838, 0
        %v9881 = vsel %vm1050, %v9839, 0
        %v9884 = vsel %vm1050, %v9840, 0
        %v9887 = vsel %vm1050, %v9841, 0
        %v9890 = vsel %vm1050, %v9842, 0
        %v9893 = vsel %vm1050, %v9843, 0
        %v9896 = vsel %vm1050, %v9844, 0
        %v9899 = vsel %vm1050, %v9845, 0
        %v9902 = vsel %vm1050, %v9846, 0
        %9904 = vmatprep.subr.bf16.mxu0 0
        %9905 = vmatpush1.bf16.xpose.msra.mxu0 %v9857
        %9906 = vmatprep.subr.bf16.mxu0 0
        %9907 = vmatpush1.bf16.xpose.msra.mxu0 %v9860
        %9908 = vmatprep.subr.bf16.mxu0 0
        %9909 = vmatpush1.bf16.xpose.msra.mxu0 %v9863
        %9910 = vmatprep.subr.bf16.mxu0 0
        %9911 = vmatpush1.bf16.xpose.msra.mxu0 %v9866
        %9912 = vmatprep.subr.bf16.mxu0 0
        %9913 = vmatpush1.bf16.xpose.msra.mxu0 %v9869
        %9914 = vmatprep.subr.bf16.mxu0 0
        %9915 = vmatpush1.bf16.xpose.msra.mxu0 %v9872
        %9916 = vmatprep.subr.bf16.mxu0 0
        %9917 = vmatpush1.bf16.xpose.msra.mxu0 %v9875
        %9918 = vmatprep.subr.bf16.mxu0 0
        %9919 = vmatpush1.bf16.xpose.msra.mxu0 %v9878
        %9920 = vmatprep.subr.bf16.mxu0 0
        %9921 = vmatpush1.bf16.xpose.msra.mxu0 %v9881
        %9922 = vmatprep.subr.bf16.mxu0 0
        %9923 = vmatpush1.bf16.xpose.msra.mxu0 %v9884
        %9924 = vmatprep.subr.bf16.mxu0 0
        %9925 = vmatpush1.bf16.xpose.msra.mxu0 %v9887
        %9926 = vmatprep.subr.bf16.mxu0 0
        %9927 = vmatpush1.bf16.xpose.msra.mxu0 %v9890
        %9928 = vmatprep.subr.bf16.mxu0 0
        %9929 = vmatpush1.bf16.xpose.msra.mxu0 %v9893
        %9930 = vmatprep.subr.bf16.mxu0 0
        %9931 = vmatpush1.bf16.xpose.msra.mxu0 %v9896
        %9932 = vmatprep.subr.bf16.mxu0 0
        %9933 = vmatpush1.bf16.xpose.msra.mxu0 %v9899
        %9934 = vmatprep.subr.bf16.mxu0 0
        %9935 = vmatpush1.bf16.xpose.msra.mxu0 %v9902
        %9936 = vmatprep.mubr.bf16.mxu0 0
        %9937 = vmatmul.mubr.bf16.gmra.mrb[0].mxu0 %v9854
        %v9938 = vpop.f32.mrb[0].mxu0
        %v9939 = vadd.f32 %v9851, %v9938
        %v9940 = vpop.f32.mrb[0].mxu0
        %v9941 = vadd.f32 %v9851, %v9940
        %v9942 = vpop.f32.mrb[0].mxu0
        %v9943 = vpop.f32.mrb[0].mxu0
        %9944 = vdwg.mxu0
        %v9947 = vcombine.low %v9939, %v9941
        %9949 = vst [vmem:[%s596] sm:$0x77] %v9947
        %p9950 = scmp.lt.s32.totalorder %s32, 1
        %s9951 = scalar_select %p9950, %s32, 1
        %s9952 = smul.addr %s9951, 2
        %s9953 = smul.addr %s9952, 4
        %s9954 = scalar_lea.vmem %s17, %s9953
        // Predicated region
        $region101: #{tpu_custom_call.1} parent=87 // pred_check
          %p9955 = pneg %p412
        $region102: #{tpu_custom_call.1} parent=87 // pred_check_branch
          %9957 = sbr.rel (%p9955) target = $region104
        $region103: #{tpu_custom_call.1} parent=87 // pred_region
          _
        $region104: #{tpu_custom_call.1} parent=87 // pred_fallthru
          _
      $region88: #{tpu_custom_call.1} parent=5 // pred_fallthru
        _
      %p9958 = scmp.le.s32.totalorder 2, %s27
      // Predicated region
      $region105: #{tpu_custom_call.1} parent=5 // pred_check
        %p9959 = pneg %p9958
      $region106: #{tpu_custom_call.1} parent=5 // pred_check_branch
        %9961 = sbr.rel (%p9959) target = $region108
      $region107: #{tpu_custom_call.1} parent=5 // pred_region
        %s9962 = ssub.s32 %s27, 2
        // Predicated region
        $region109: #{tpu_custom_call.1} parent=107 // pred_check
          %p9963 = pneg %p418
        $region110: #{tpu_custom_call.1} parent=107 // pred_check_branch
          %9965 = sbr.rel (%p9963) target = $region112
        $region111: #{tpu_custom_call.1} parent=107 // pred_region
          %p9966 = scmp.lt.s32.totalorder %s33, 1
          %s9967 = scalar_select %p9966, %s33, 1
          %s9968 = smul.addr %s9967, 2
          %s9969 = smul.addr %s9968, 4
          %s9970 = scalar_lea.vmem %s17, %s9969
        $region112: #{tpu_custom_call.1} parent=107 // pred_fallthru
          _
      $region108: #{tpu_custom_call.1} parent=5 // pred_fallthru
        _
    $region6: #{tpu_custom_call.1} parent=1 // loop_footer
      %s31 = sadd.s32 1, %s27
    $region7: #{tpu_custom_call.1} parent=1 // loop_footer_branch
      %26 = sbr.rel target = $region3
    $region8: #{tpu_custom_call.1} parent=1 // loop_exit
      _
    %9971 = vsyncpa [#allocation3], 1
    %s9972 = scalar_lea.sflag [#allocation3], 1
    %9973 = vsyncpa %s9972, 1
    %9974 = vsyncpa [#allocation5], 1

</llo_original>
